<compile_context>
chip_gen: v7x
topology: tpu7x:2x2x1
jax: 0.10.0
libtpu: 0.0.40
codegen_flags: <defaults>
</compile_context>

<pallas_src>
import functools

import jax
import jax.numpy as jnp
from jax.experimental import pallas as pl
from jax.experimental.pallas import tpu as pltpu

# ----------------------------- model hyper-params -----------------------------
D_MODEL = 128                # stands in for EfficientNet's 1280-d feature
NHEAD = 8                    # heads exist in the module; seq-len-1 attention cancels them
DIM_FF = 2 * D_MODEL         # dim_feedforward = output_dim * 2
NUM_WORDS = 32
TEXT_MAX_LEN = 4
NUM_ENCODER_LAYERS = 6
NUM_DECODER_LAYERS = 1
SOS_IDX = 1                  # word2idx['<SOS>']
C_STEM = 8                   # synthetic conv stem channels
K_IM2COL = 3 * 9             # 3 input channels x 3x3 kernel
K_IM2COL_PAD = 32            # padded to a multiple of 8 for an aligned MXU K
LN_EPS = 1e-5
NEG_BIG = -1e30              # lane-padding mask value for the in-kernel argmax

# dec_vecs (16, 512) f32 row layout
_DV_SA_B, _DV_CA_B = 0, 1
_DV_LN1G, _DV_LN1B, _DV_LN2G, _DV_LN2B, _DV_LN3G, _DV_LN3B = 2, 3, 4, 5, 6, 7
_DV_DNG, _DV_DNB = 8, 9
_DV_B1, _DV_B2, _DV_LSTM_B, _DV_PROJ_B = 10, 11, 12, 13

# enc_vecs (6, 8, 256) f32 row layout
_EV_BVO, _EV_B1, _EV_B2, _EV_LN1G, _EV_LN1B, _EV_LN2G, _EV_LN2B = 0, 1, 2, 3, 4, 5, 6

# misc (8, 128) f32 row layout
_MV_CONV_B, _MV_STEM_B, _MV_ENCN_G, _MV_ENCN_B = 0, 1, 2, 3


# --------------------------- fused forward kernel ------------------------------
def _fused_kernel(batch, hw,
                  # regular (auto-DMA'd) inputs
                  cols_ref, conv_w_ref, stem_w_ref, misc_ref,
                  enc_wvo_ref, enc_w1_ref, enc_w2_ref, enc_vecs_ref,
                  # late-used inputs left in HBM (memory_space=pl.ANY)
                  sa_proj_hbm, ca_wvo_hbm, dec_w1_hbm, dec_w2_hbm,
                  lstm_w_hbm, embed_hbm, dec_vecs_hbm,
                  # output
                  out_ref,
                  # scratch
                  sa_proj_v, ca_wvo_v, dec_w1_v, dec_w2_v, lstm_w_v, embed_v,
                  dec_vecs_v, sem):
    f32 = jnp.float32
    bf16 = jnp.bfloat16
    D = D_MODEL

    def dotb(a, w):
        # bf16 x bf16 matmul, f32 accumulation.
        return jnp.dot(a.astype(bf16), w, preferred_element_type=f32)

    # ---- kick off decoder-side weight DMAs; they land behind the encoder ----
    copies = [
        pltpu.make_async_copy(sa_proj_hbm, sa_proj_v, sem.at[0]),
        pltpu.make_async_copy(ca_wvo_hbm, ca_wvo_v, sem.at[1]),
        pltpu.make_async_copy(dec_w1_hbm, dec_w1_v, sem.at[2]),
        pltpu.make_async_copy(dec_w2_hbm, dec_w2_v, sem.at[3]),
        pltpu.make_async_copy(lstm_w_hbm, lstm_w_v, sem.at[4]),
        pltpu.make_async_copy(embed_hbm, embed_v, sem.at[5]),
        pltpu.make_async_copy(dec_vecs_hbm, dec_vecs_v, sem.at[6]),
    ]
    for cp in copies:
        cp.start()

    # ---- synthetic CNN stem (im2col matmul + ReLU + avg-pool + linear) ----
    # TODO(synk): stand-in for the pretrained EfficientNet-b0 backbone.
    hcv = jnp.maximum(
        dotb(cols_ref[...], conv_w_ref[...]) + misc_ref[_MV_CONV_B:_MV_CONV_B + 1, :],
        0.0)                                                   # (B*HW, 128), pad lanes stay 0
    rows = batch * hw
    col = jax.lax.broadcasted_iota(jnp.int32, (batch, rows), 1)
    bid = jax.lax.broadcasted_iota(jnp.int32, (batch, rows), 0)
    pool = jnp.where((col >= bid * hw) & (col < (bid + 1) * hw), 1.0 / hw, 0.0)
    pooled = dotb(pool, hcv.astype(bf16))                      # (B, 128)
    feat = dotb(pooled, stem_w_ref[...]) + misc_ref[_MV_STEM_B:_MV_STEM_B + 1, :]

    # ---- LayerNorm with a single cross-lane reduction (sum of [x ; x*x]) ----
    def ln(x, g, b):
        s = jnp.sum(jnp.stack([x, x * x]), axis=-1, keepdims=True) * (1.0 / D)
        mu = s[0]
        var = jnp.maximum(s[1] - mu * mu, 0.0)
        return (x - mu) * jax.lax.rsqrt(var + LN_EPS) * g + b

    # ---- encoder: src is the same pooled feature repeated along seq, so every
    # self-attention collapses exactly to seq-len-1 (uniform softmax over
    # identical keys/values).  V.O is pre-folded on the host.
    x = feat
    for l in range(NUM_ENCODER_LAYERS):
        sa = dotb(x, enc_wvo_ref[l]) + enc_vecs_ref[l, _EV_BVO:_EV_BVO + 1, 0:D]
        x = ln(x + sa,
               enc_vecs_ref[l, _EV_LN1G:_EV_LN1G + 1, 0:D],
               enc_vecs_ref[l, _EV_LN1B:_EV_LN1B + 1, 0:D])
        hdn = jnp.maximum(
            dotb(x, enc_w1_ref[l]) + enc_vecs_ref[l, _EV_B1:_EV_B1 + 1, :], 0.0)
        ff = dotb(hdn, enc_w2_ref[l]) + enc_vecs_ref[l, _EV_B2:_EV_B2 + 1, 0:D]
        x = ln(x + ff,
               enc_vecs_ref[l, _EV_LN2G:_EV_LN2G + 1, 0:D],
               enc_vecs_ref[l, _EV_LN2B:_EV_LN2B + 1, 0:D])
    memory = ln(x, misc_ref[_MV_ENCN_G:_MV_ENCN_G + 1, :],
                misc_ref[_MV_ENCN_B:_MV_ENCN_B + 1, :])        # (B, D)

    # ---- wait for the decoder-side weights (overlapped with the encoder) ----
    for cp in copies:
        cp.wait()

    def dvec(r, n=D):
        return dec_vecs_v[r:r + 1, 0:n]

    # Cross-attention over a single memory token: weights == 1, so the result is
    # memory's folded V.O projection -> loop-invariant; compute once.
    ca = dotb(memory, ca_wvo_v[...]) + dvec(_DV_CA_B)

    # Hoisted iotas / masks (JAX does not CSE broadcast_in_dim across the unroll).
    col_d = jax.lax.broadcasted_iota(jnp.int32, (batch, D), 1)
    col_v = jax.lax.broadcasted_iota(jnp.int32, (batch, NUM_WORDS), 1)
    vocab_mask = jnp.where(
        jax.lax.broadcasted_iota(jnp.int32, (1, D), 1) < NUM_WORDS, 0.0, NEG_BIG)

    # <SOS> embedding via a one-hot MXU gather (keeps everything 2-D).
    sos_onehot = (jax.lax.broadcasted_iota(jnp.int32, (1, NUM_WORDS), 1)
                  == SOS_IDX).astype(bf16)
    inp = jnp.broadcast_to(
        jnp.dot(sos_onehot, embed_v[...], preferred_element_type=f32), (batch, D))

    pred_rows = [inp]                 # pred[0] = start embeddings (as in reference)
    h_t = feat                        # h0 = c0 = pooled feature (rnn_layers == 1)
    c_t = feat
    proj_b = dvec(_DV_PROJ_B)
    for _ in range(1, TEXT_MAX_LEN):
        # LSTM cell: one MXU matmul on [x ; h] with [W_ih ; W_hh], b_ih + b_hh.
        xh = jnp.concatenate([inp, h_t], axis=1)                       # (B, 2D)
        gates = dotb(xh, lstm_w_v[...]) + dvec(_DV_LSTM_B, 4 * D)      # (B, 4D)
        i_g = jax.nn.sigmoid(gates[:, 0:D])
        f_g = jax.nn.sigmoid(gates[:, D:2 * D])
        g_g = jnp.tanh(gates[:, 2 * D:3 * D])
        o_g = jax.nn.sigmoid(gates[:, 3 * D:4 * D])
        c_t = f_g * c_t + i_g * g_g
        h_t = o_g * jnp.tanh(c_t)
        out = h_t                                                      # LSTM output

        # Merged shared-LHS matmul: [self-attn V.O | vocab proj] in one shot.
        sp = dotb(out, sa_proj_v[...])                                 # (B, 2D)
        sa = sp[:, 0:D] + dvec(_DV_SA_B)
        logits = sp[:, D:2 * D] + proj_b + vocab_mask                  # feedback logits

        # Decoder layer, tgt seq len 1 (post-LN, like nn.TransformerDecoderLayer).
        y = ln(out + sa, dvec(_DV_LN1G), dvec(_DV_LN1B))
        y = ln(y + ca, dvec(_DV_LN2G), dvec(_DV_LN2B))
        hdn = jnp.maximum(dotb(y, dec_w1_v[...]) + dvec(_DV_B1, 2 * D), 0.0)
        ff = dotb(hdn, dec_w2_v[...]) + dvec(_DV_B2)
        y = ln(y + ff, dvec(_DV_LN3G), dvec(_DV_LN3B))
        dec_out = ln(y, dvec(_DV_DNG), dvec(_DV_DNB))                  # transformer out
        pred_rows.append(dec_out)

        # Greedy token feedback on proj(LSTM out) (reference projects `out`,
        # not the decoder output); lowest index wins ties.
        mx = jnp.max(logits, axis=-1, keepdims=True)
        tok = jnp.min(jnp.where(logits == mx, col_d, D), axis=-1, keepdims=True)
        onehot = (col_v == tok).astype(bf16)                           # (B, V)
        inp = jnp.dot(onehot, embed_v[...], preferred_element_type=f32)

    # Single deferred vocab projection of the whole pred stack (= reference's
    # res = proj(pred)); one dense (T*B, 128) store, lane- and sublane-aligned.
    pred = jnp.concatenate(pred_rows, axis=0)                          # (T*B, D)
    out_ref[...] = dotb(pred, sa_proj_v[:, D:2 * D]) + proj_b


# --------------------------- host-side parameter packing ------------------------
def pack_params(params):
    """Fold V.O attention products, cast matrices to bf16, and pack everything
    into a handful of contiguous slabs (few DMA descriptors)."""
    D = D_MODEL
    bf = jnp.bfloat16
    tf = params["tf"]

    def fold_vo(w_in, b_in, w_o, b_o, v_off):
        wv = w_in[:, v_off:v_off + D]
        bv = b_in[:, v_off:v_off + D]
        return wv @ w_o, bv @ w_o + b_o          # folded weight / bias (f32)

    def row(v, width):
        return jnp.pad(v, ((0, 0), (0, width - v.shape[1])))

    # ---- encoder slabs ----
    enc_layers = tf["enc"]
    wvo_l, bvo_l = [], []
    for l in enc_layers:
        wvo, bvo = fold_vo(l["attn"]["w_qkv"], l["attn"]["b_qkv"],
                           l["attn"]["w_o"], l["attn"]["b_o"], 2 * D)
        wvo_l.append(wvo)
        bvo_l.append(bvo)
    enc_wvo = jnp.stack(wvo_l).astype(bf)                              # (6,128,128)
    enc_w1 = jnp.stack([l["w1"] for l in enc_layers]).astype(bf)       # (6,128,256)
    enc_w2 = jnp.stack([l["w2"] for l in enc_layers]).astype(bf)       # (6,256,128)
    enc_vecs = jnp.stack([
        jnp.concatenate([
            row(bvo_l[i], DIM_FF), row(enc_layers[i]["b1"], DIM_FF),
            row(enc_layers[i]["b2"], DIM_FF),
            row(enc_layers[i]["ln1_g"], DIM_FF), row(enc_layers[i]["ln1_b"], DIM_FF),
            row(enc_layers[i]["ln2_g"], DIM_FF), row(enc_layers[i]["ln2_b"], DIM_FF),
            jnp.zeros((1, DIM_FF), jnp.float32),
        ], axis=0) for i in range(NUM_ENCODER_LAYERS)
    ])                                                                 # (6,8,256) f32

    # ---- decoder / LSTM / proj slabs ----
    dl = tf["dec"][0]
    sa_wvo, sa_bvo = fold_vo(dl["self_attn"]["w_qkv"], dl["self_attn"]["b_qkv"],
                             dl["self_attn"]["w_o"], dl["self_attn"]["b_o"], 2 * D)
    ca_wvo, ca_bvo = fold_vo(dl["cross_attn"]["w_kv"], dl["cross_attn"]["b_kv"],
                             dl["cross_attn"]["w_o"], dl["cross_attn"]["b_o"], D)
    proj_w = jnp.pad(params["proj_w"], ((0, 0), (0, D - NUM_WORDS)))   # (128,128)
    proj_b = jnp.pad(params["proj_b"], ((0, 0), (0, D - NUM_WORDS)))
    sa_proj = jnp.concatenate([sa_wvo, proj_w], axis=1).astype(bf)     # (128,256)
    lstm_w = jnp.concatenate(
        [params["lstm"]["w_ih"], params["lstm"]["w_hh"]], axis=0).astype(bf)
    lstm_b = params["lstm"]["b_ih"] + params["lstm"]["b_hh"]           # (1,512)
    W = 4 * D
    dec_vecs = jnp.concatenate([
        row(sa_bvo, W), row(ca_bvo, W),
        row(dl["ln1_g"], W), row(dl["ln1_b"], W),
        row(dl["ln2_g"], W), row(dl["ln2_b"], W),
        row(dl["ln3_g"], W), row(dl["ln3_b"], W),
        row(tf["dec_norm_g"], W), row(tf["dec_norm_b"], W),
        row(dl["b1"], W), row(dl["b2"], W),
        lstm_b, row(proj_b, W),
        jnp.zeros((2, W), jnp.float32),
    ], axis=0)                                                         # (16,512) f32

    # ---- synthetic stem slabs (lane-dense: N padded to 128, K padded to 32) ----
    conv_w = jnp.pad(params["cnn"]["conv_w"],
                     ((0, K_IM2COL_PAD - K_IM2COL), (0, D - C_STEM))).astype(bf)
    stem_w = jnp.pad(params["cnn"]["stem_w"], ((0, D - C_STEM), (0, 0))).astype(bf)
    misc = jnp.concatenate([
        jnp.pad(params["cnn"]["conv_b"], ((0, 0), (0, D - C_STEM))),
        params["cnn"]["stem_b"], tf["enc_norm_g"], tf["enc_norm_b"],
        jnp.zeros((4, D), jnp.float32),
    ], axis=0)                                                         # (8,128) f32

    return dict(conv_w=conv_w, stem_w=stem_w, misc=misc,
                enc_wvo=enc_wvo, enc_w1=enc_w1, enc_w2=enc_w2, enc_vecs=enc_vecs,
                sa_proj=sa_proj, ca_wvo=ca_wvo.astype(bf),
                dec_w1=dl["w1"].astype(bf), dec_w2=dl["w2"].astype(bf),
                lstm_w=lstm_w, embed=params["embed"].astype(bf), dec_vecs=dec_vecs)


# ------------------------------- full forward ----------------------------------
def model_forward(img, packed):
    batch, c, h, w = img.shape
    T = TEXT_MAX_LEN

    # im2col for the synthetic 3x3 stem (host/XLA side), K padded 27 -> 32, bf16.
    xp = jnp.pad(img, ((0, 0), (0, 0), (1, 1), (1, 1)))
    cols = jnp.stack(
        [xp[:, :, dh:dh + h, dw:dw + w] for dh in range(3) for dw in range(3)],
        axis=-1)                                                # (B, C, H, W, 9)
    cols = cols.transpose(0, 2, 3, 1, 4).reshape(batch * h * w, c * 9)
    cols = jnp.pad(cols, ((0, 0), (0, K_IM2COL_PAD - c * 9))).astype(jnp.bfloat16)

    reg = [cols, packed["conv_w"], packed["stem_w"], packed["misc"],
           packed["enc_wvo"], packed["enc_w1"], packed["enc_w2"], packed["enc_vecs"]]
    late = [packed["sa_proj"], packed["ca_wvo"], packed["dec_w1"], packed["dec_w2"],
            packed["lstm_w"], packed["embed"], packed["dec_vecs"]]

    in_specs = ([pl.BlockSpec(a.shape, lambda *_, n=a.ndim: (0,) * n) for a in reg]
                + [pl.BlockSpec(memory_space=pl.ANY) for _ in late])

    kernel = functools.partial(_fused_kernel, batch, h * w)
    out = pl.pallas_call(
        kernel,
        grid=(1,),
        out_shape=jax.ShapeDtypeStruct((T * batch, D_MODEL), jnp.float32),
        in_specs=in_specs,
        out_specs=pl.BlockSpec((T * batch, D_MODEL), lambda *_: (0, 0)),
        scratch_shapes=[
            pltpu.VMEM((D_MODEL, 2 * D_MODEL), jnp.bfloat16),   # sa_proj
            pltpu.VMEM((D_MODEL, D_MODEL), jnp.bfloat16),       # ca_wvo
            pltpu.VMEM((D_MODEL, 2 * D_MODEL), jnp.bfloat16),   # dec_w1
            pltpu.VMEM((2 * D_MODEL, D_MODEL), jnp.bfloat16),   # dec_w2
            pltpu.VMEM((2 * D_MODEL, 4 * D_MODEL), jnp.bfloat16),  # lstm_w
            pltpu.VMEM((NUM_WORDS, D_MODEL), jnp.bfloat16),     # embed
            pltpu.VMEM((16, 4 * D_MODEL), jnp.float32),         # dec_vecs
            pltpu.SemaphoreType.DMA((7,)),
        ],
        compiler_params=pltpu.CompilerParams(dimension_semantics=("arbitrary",)),
    )(*reg, *late)                                              # (T*B, 128)

    logits = out.reshape(T, batch, D_MODEL)[:, :, :NUM_WORDS]   # drop lane padding
    return logits.transpose(1, 2, 0)                            # (B, NUM_WORDS, T)


# ------------------------------ parameter init ----------------------------------
def init_params(key):
    keys = iter(jax.random.split(key, 256))

    def w(shape, scale=0.05):
        return jax.random.normal(next(keys), shape, jnp.float32) * scale

    def b2(n):
        return jnp.zeros((1, n), jnp.float32)

    def ones2(n):
        return jnp.ones((1, n), jnp.float32)

    def attn_self():
        # Full in_proj kept for fidelity; only the V slice can affect the output
        # because every attention in this model runs over sequence length 1.
        return dict(w_qkv=w((D_MODEL, 3 * D_MODEL)), b_qkv=b2(3 * D_MODEL),
                    w_o=w((D_MODEL, D_MODEL)), b_o=b2(D_MODEL))

    def attn_cross():
        return dict(w_q=w((D_MODEL, D_MODEL)), b_q=b2(D_MODEL),
                    w_kv=w((D_MODEL, 2 * D_MODEL)), b_kv=b2(2 * D_MODEL),
                    w_o=w((D_MODEL, D_MODEL)), b_o=b2(D_MODEL))

    def enc_layer():
        return dict(attn=attn_self(),
                    ln1_g=ones2(D_MODEL), ln1_b=b2(D_MODEL),
                    w1=w((D_MODEL, DIM_FF)), b1=b2(DIM_FF),
                    w2=w((DIM_FF, D_MODEL)), b2=b2(D_MODEL),
                    ln2_g=ones2(D_MODEL), ln2_b=b2(D_MODEL))

    def dec_layer():
        return dict(self_attn=attn_self(), cross_attn=attn_cross(),
                    ln1_g=ones2(D_MODEL), ln1_b=b2(D_MODEL),
                    ln2_g=ones2(D_MODEL), ln2_b=b2(D_MODEL),
                    ln3_g=ones2(D_MODEL), ln3_b=b2(D_MODEL),
                    w1=w((D_MODEL, DIM_FF)), b1=b2(DIM_FF),
                    w2=w((DIM_FF, D_MODEL)), b2=b2(D_MODEL))

    return dict(
        cnn=dict(conv_w=w((K_IM2COL, C_STEM)), conv_b=b2(C_STEM),
                 stem_w=w((C_STEM, D_MODEL)), stem_b=b2(D_MODEL)),
        tf=dict(enc=[enc_layer() for _ in range(NUM_ENCODER_LAYERS)],
                dec=[dec_layer() for _ in range(NUM_DECODER_LAYERS)],
                enc_norm_g=ones2(D_MODEL), enc_norm_b=b2(D_MODEL),
                dec_norm_g=ones2(D_MODEL), dec_norm_b=b2(D_MODEL)),
        lstm=dict(w_ih=w((D_MODEL, 4 * D_MODEL)), w_hh=w((D_MODEL, 4 * D_MODEL)),
                  b_ih=b2(4 * D_MODEL), b_hh=b2(4 * D_MODEL)),
        embed=w((NUM_WORDS, D_MODEL), scale=0.1),
        proj_w=w((D_MODEL, NUM_WORDS)),
        proj_b=b2(NUM_WORDS),
    )


# ------------------------------------ main ---------------------------------------
if __name__ == "__main__":
    key = jax.random.PRNGKey(0)
    pkey, xkey = jax.random.split(key)
    params = init_params(pkey)
    packed = pack_params(params)          # one-time host-side packing (bf16 + folds)

    img = jax.random.normal(xkey, (2, 3, 16, 16), jnp.float32)  # NCHW, like PyTorch

    fwd = jax.jit(model_forward)
    out = jax.block_until_ready(fwd(img, packed))

    assert out.shape == (2, NUM_WORDS, TEXT_MAX_LEN), out.shape
    assert out.dtype == jnp.float32
    assert bool(jnp.all(jnp.isfinite(out)))
    print("KERNEL_OK")
</pallas_src>

<mosaic_0001>
module attributes {stable_mosaic.version = 11 : i64} {
  func.func @_fused_kernel(%arg0: i32, %arg1: memref<512x32xbf16, #tpu.memory_space<vmem>>, %arg2: memref<32x128xbf16, #tpu.memory_space<vmem>>, %arg3: memref<128x128xbf16, #tpu.memory_space<vmem>>, %arg4: memref<8x128xf32, #tpu.memory_space<vmem>>, %arg5: memref<6x128x128xbf16, #tpu.memory_space<vmem>>, %arg6: memref<6x128x256xbf16, #tpu.memory_space<vmem>>, %arg7: memref<6x256x128xbf16, #tpu.memory_space<vmem>>, %arg8: memref<6x8x256xf32, #tpu.memory_space<vmem>>, %arg9: memref<128x256xbf16, #tpu.memory_space<any>>, %arg10: memref<128x128xbf16, #tpu.memory_space<any>>, %arg11: memref<128x256xbf16, #tpu.memory_space<any>>, %arg12: memref<256x128xbf16, #tpu.memory_space<any>>, %arg13: memref<256x512xbf16, #tpu.memory_space<any>>, %arg14: memref<32x128xbf16, #tpu.memory_space<any>>, %arg15: memref<16x512xf32, #tpu.memory_space<any>>, %arg16: memref<8x128xf32, #tpu.memory_space<vmem>>, %arg17: memref<128x256xbf16, #tpu.memory_space<vmem>>, %arg18: memref<128x128xbf16, #tpu.memory_space<vmem>>, %arg19: memref<128x256xbf16, #tpu.memory_space<vmem>>, %arg20: memref<256x128xbf16, #tpu.memory_space<vmem>>, %arg21: memref<256x512xbf16, #tpu.memory_space<vmem>>, %arg22: memref<32x128xbf16, #tpu.memory_space<vmem>>, %arg23: memref<16x512xf32, #tpu.memory_space<vmem>>, %arg24: memref<7x!tpu.dma_semaphore, #tpu.memory_space<semaphore_mem>>) attributes {dimension_semantics = [#tpu.dimension_semantics<arbitrary>], iteration_bounds = array<i64: 1>, scalar_prefetch = 0 : i64, scratch_operands = 8 : i64, tpu.core_type = #tpu.core_type<tc>, window_params = [{pipeline_mode = #tpu.pipeline_mode<synchronous>, transform_indices = @transform_0, window_bounds = array<i64: 512, 32>}, {pipeline_mode = #tpu.pipeline_mode<synchronous>, transform_indices = @transform_1, window_bounds = array<i64: 32, 128>}, {pipeline_mode = #tpu.pipeline_mode<synchronous>, transform_indices = @transform_2, window_bounds = array<i64: 128, 128>}, {pipeline_mode = #tpu.pipeline_mode<synchronous>, transform_indices = @transform_3, window_bounds = array<i64: 8, 128>}, {pipeline_mode = #tpu.pipeline_mode<synchronous>, transform_indices = @transform_4, window_bounds = array<i64: 6, 128, 128>}, {pipeline_mode = #tpu.pipeline_mode<synchronous>, transform_indices = @transform_5, window_bounds = array<i64: 6, 128, 256>}, {pipeline_mode = #tpu.pipeline_mode<synchronous>, transform_indices = @transform_6, window_bounds = array<i64: 6, 256, 128>}, {pipeline_mode = #tpu.pipeline_mode<synchronous>, transform_indices = @transform_7, window_bounds = array<i64: 6, 8, 256>}, {}, {}, {}, {}, {}, {}, {}, {pipeline_mode = #tpu.pipeline_mode<synchronous>, transform_indices = @transform_15, window_bounds = array<i64: 8, 128>}]} {
    %c0_i32 = arith.constant 0 : i32
    %0 = tpu.memref_slice %arg24[%c0_i32] : memref<7x!tpu.dma_semaphore, #tpu.memory_space<semaphore_mem>> -> memref<1x!tpu.dma_semaphore, #tpu.memory_space<semaphore_mem>>
    %1 = tpu.memref_squeeze %0 : memref<1x!tpu.dma_semaphore, #tpu.memory_space<semaphore_mem>> -> memref<!tpu.dma_semaphore, #tpu.memory_space<semaphore_mem>>
    tpu.enqueue_dma source(%arg9 : memref<128x256xbf16, #tpu.memory_space<any>>) target(%arg17 : memref<128x256xbf16, #tpu.memory_space<vmem>>) target_semaphore(%1 : memref<!tpu.dma_semaphore, #tpu.memory_space<semaphore_mem>>)
    %c1_i32 = arith.constant 1 : i32
    %2 = tpu.memref_slice %arg24[%c1_i32] : memref<7x!tpu.dma_semaphore, #tpu.memory_space<semaphore_mem>> -> memref<1x!tpu.dma_semaphore, #tpu.memory_space<semaphore_mem>>
    %3 = tpu.memref_squeeze %2 : memref<1x!tpu.dma_semaphore, #tpu.memory_space<semaphore_mem>> -> memref<!tpu.dma_semaphore, #tpu.memory_space<semaphore_mem>>
    tpu.enqueue_dma source(%arg10 : memref<128x128xbf16, #tpu.memory_space<any>>) target(%arg18 : memref<128x128xbf16, #tpu.memory_space<vmem>>) target_semaphore(%3 : memref<!tpu.dma_semaphore, #tpu.memory_space<semaphore_mem>>)
    %c2_i32 = arith.constant 2 : i32
    %4 = tpu.memref_slice %arg24[%c2_i32] : memref<7x!tpu.dma_semaphore, #tpu.memory_space<semaphore_mem>> -> memref<1x!tpu.dma_semaphore, #tpu.memory_space<semaphore_mem>>
    %5 = tpu.memref_squeeze %4 : memref<1x!tpu.dma_semaphore, #tpu.memory_space<semaphore_mem>> -> memref<!tpu.dma_semaphore, #tpu.memory_space<semaphore_mem>>
    tpu.enqueue_dma source(%arg11 : memref<128x256xbf16, #tpu.memory_space<any>>) target(%arg19 : memref<128x256xbf16, #tpu.memory_space<vmem>>) target_semaphore(%5 : memref<!tpu.dma_semaphore, #tpu.memory_space<semaphore_mem>>)
    %c3_i32 = arith.constant 3 : i32
    %6 = tpu.memref_slice %arg24[%c3_i32] : memref<7x!tpu.dma_semaphore, #tpu.memory_space<semaphore_mem>> -> memref<1x!tpu.dma_semaphore, #tpu.memory_space<semaphore_mem>>
    %7 = tpu.memref_squeeze %6 : memref<1x!tpu.dma_semaphore, #tpu.memory_space<semaphore_mem>> -> memref<!tpu.dma_semaphore, #tpu.memory_space<semaphore_mem>>
    tpu.enqueue_dma source(%arg12 : memref<256x128xbf16, #tpu.memory_space<any>>) target(%arg20 : memref<256x128xbf16, #tpu.memory_space<vmem>>) target_semaphore(%7 : memref<!tpu.dma_semaphore, #tpu.memory_space<semaphore_mem>>)
    %c4_i32 = arith.constant 4 : i32
    %8 = tpu.memref_slice %arg24[%c4_i32] : memref<7x!tpu.dma_semaphore, #tpu.memory_space<semaphore_mem>> -> memref<1x!tpu.dma_semaphore, #tpu.memory_space<semaphore_mem>>
    %9 = tpu.memref_squeeze %8 : memref<1x!tpu.dma_semaphore, #tpu.memory_space<semaphore_mem>> -> memref<!tpu.dma_semaphore, #tpu.memory_space<semaphore_mem>>
    tpu.enqueue_dma source(%arg13 : memref<256x512xbf16, #tpu.memory_space<any>>) target(%arg21 : memref<256x512xbf16, #tpu.memory_space<vmem>>) target_semaphore(%9 : memref<!tpu.dma_semaphore, #tpu.memory_space<semaphore_mem>>)
    %c5_i32 = arith.constant 5 : i32
    %10 = tpu.memref_slice %arg24[%c5_i32] : memref<7x!tpu.dma_semaphore, #tpu.memory_space<semaphore_mem>> -> memref<1x!tpu.dma_semaphore, #tpu.memory_space<semaphore_mem>>
    %11 = tpu.memref_squeeze %10 : memref<1x!tpu.dma_semaphore, #tpu.memory_space<semaphore_mem>> -> memref<!tpu.dma_semaphore, #tpu.memory_space<semaphore_mem>>
    tpu.enqueue_dma source(%arg14 : memref<32x128xbf16, #tpu.memory_space<any>>) target(%arg22 : memref<32x128xbf16, #tpu.memory_space<vmem>>) target_semaphore(%11 : memref<!tpu.dma_semaphore, #tpu.memory_space<semaphore_mem>>)
    %c6_i32 = arith.constant 6 : i32
    %12 = tpu.memref_slice %arg24[%c6_i32] : memref<7x!tpu.dma_semaphore, #tpu.memory_space<semaphore_mem>> -> memref<1x!tpu.dma_semaphore, #tpu.memory_space<semaphore_mem>>
    %13 = tpu.memref_squeeze %12 : memref<1x!tpu.dma_semaphore, #tpu.memory_space<semaphore_mem>> -> memref<!tpu.dma_semaphore, #tpu.memory_space<semaphore_mem>>
    tpu.enqueue_dma source(%arg15 : memref<16x512xf32, #tpu.memory_space<any>>) target(%arg23 : memref<16x512xf32, #tpu.memory_space<vmem>>) target_semaphore(%13 : memref<!tpu.dma_semaphore, #tpu.memory_space<semaphore_mem>>)
    %c0 = arith.constant 0 : index
    %c0_0 = arith.constant 0 : index
    %14 = vector.load %arg1[%c0, %c0_0] : memref<512x32xbf16, #tpu.memory_space<vmem>>, vector<512x32xbf16>
    %c0_1 = arith.constant 0 : index
    %c0_2 = arith.constant 0 : index
    %15 = vector.load %arg2[%c0_1, %c0_2] : memref<32x128xbf16, #tpu.memory_space<vmem>>, vector<32x128xbf16>
    %cst = arith.constant dense<0.000000e+00> : vector<512x128xf32>
    %16 = tpu.matmul %14, %15, %cst {dimension_numbers = #tpu.dot_dimension_numbers<[1], [0], [0], [1], [0, 0, 1, 1], [], []>} : vector<512x32xbf16>, vector<32x128xbf16>, vector<512x128xf32> -> vector<512x128xf32>
    %c0_3 = arith.constant 0 : index
    %c0_4 = arith.constant 0 : index
    %17 = vector.load %arg4[%c0_3, %c0_4] : memref<8x128xf32, #tpu.memory_space<vmem>>, vector<1x128xf32>
    %18 = vector.broadcast %17 : vector<1x128xf32> to vector<512x128xf32>
    %19 = arith.addf %16, %18 : vector<512x128xf32>
    %cst_5 = arith.constant 0.000000e+00 : f32
    %20 = vector.broadcast %cst_5 : f32 to vector<512x128xf32>
    %21 = arith.maximumf %19, %20 : vector<512x128xf32>
    %22 = tpu.iota {dimensions = array<i32: 1>} : vector<2x512xi32>
    %23 = tpu.iota {dimensions = array<i32: 0>} : vector<2x512xi32>
    %c256_i32 = arith.constant 256 : i32
    %24 = vector.broadcast %c256_i32 : i32 to vector<2x512xi32>
    %25 = arith.muli %23, %24 : vector<2x512xi32>
    %26 = arith.cmpi sge, %22, %25 : vector<2x512xi32>
    %c1_i32_6 = arith.constant 1 : i32
    %27 = vector.broadcast %c1_i32_6 : i32 to vector<2x512xi32>
    %28 = arith.addi %23, %27 : vector<2x512xi32>
    %c256_i32_7 = arith.constant 256 : i32
    %29 = vector.broadcast %c256_i32_7 : i32 to vector<2x512xi32>
    %30 = arith.muli %28, %29 : vector<2x512xi32>
    %31 = arith.cmpi slt, %22, %30 : vector<2x512xi32>
    %32 = arith.andi %26, %31 : vector<2x512xi1>
    %cst_8 = arith.constant 3.906250e-03 : f32
    %cst_9 = arith.constant 0.000000e+00 : f32
    %33 = vector.broadcast %cst_8 : f32 to vector<2x512xf32>
    %34 = vector.broadcast %cst_9 : f32 to vector<2x512xf32>
    %35 = arith.select %32, %33, %34 : vector<2x512xi1>, vector<2x512xf32>
    %36 = arith.truncf %21 : vector<512x128xf32> to vector<512x128xbf16>
    %37 = arith.truncf %35 : vector<2x512xf32> to vector<2x512xbf16>
    %cst_10 = arith.constant dense<0.000000e+00> : vector<2x128xf32>
    %38 = tpu.matmul %37, %36, %cst_10 {dimension_numbers = #tpu.dot_dimension_numbers<[1], [0], [0], [1], [0, 0, 1, 1], [], []>} : vector<2x512xbf16>, vector<512x128xbf16>, vector<2x128xf32> -> vector<2x128xf32>
    %c0_11 = arith.constant 0 : index
    %c0_12 = arith.constant 0 : index
    %39 = vector.load %arg3[%c0_11, %c0_12] : memref<128x128xbf16, #tpu.memory_space<vmem>>, vector<128x128xbf16>
    %40 = arith.truncf %38 : vector<2x128xf32> to vector<2x128xbf16>
    %cst_13 = arith.constant dense<0.000000e+00> : vector<2x128xf32>
    %41 = tpu.matmul %40, %39, %cst_13 {dimension_numbers = #tpu.dot_dimension_numbers<[1], [0], [0], [1], [0, 0, 1, 1], [], []>} : vector<2x128xbf16>, vector<128x128xbf16>, vector<2x128xf32> -> vector<2x128xf32>
    %c1 = arith.constant 1 : index
    %c0_14 = arith.constant 0 : index
    %42 = vector.load %arg4[%c1, %c0_14] : memref<8x128xf32, #tpu.memory_space<vmem>>, vector<1x128xf32>
    %43 = vector.broadcast %42 : vector<1x128xf32> to vector<2x128xf32>
    %44 = arith.addf %41, %43 : vector<2x128xf32>
    %c0_15 = arith.constant 0 : index
    %c0_16 = arith.constant 0 : index
    %c0_17 = arith.constant 0 : index
    %45 = vector.load %arg5[%c0_15, %c0_16, %c0_17] : memref<6x128x128xbf16, #tpu.memory_space<vmem>>, vector<1x128x128xbf16>
    %46 = vector.shape_cast %45 : vector<1x128x128xbf16> to vector<128x128xbf16>
    %47 = arith.truncf %44 : vector<2x128xf32> to vector<2x128xbf16>
    %cst_18 = arith.constant dense<0.000000e+00> : vector<2x128xf32>
    %48 = tpu.matmul %47, %46, %cst_18 {dimension_numbers = #tpu.dot_dimension_numbers<[1], [0], [0], [1], [0, 0, 1, 1], [], []>} : vector<2x128xbf16>, vector<128x128xbf16>, vector<2x128xf32> -> vector<2x128xf32>
    %c0_19 = arith.constant 0 : index
    %c0_20 = arith.constant 0 : index
    %c0_21 = arith.constant 0 : index
    %49 = vector.load %arg8[%c0_19, %c0_20, %c0_21] : memref<6x8x256xf32, #tpu.memory_space<vmem>>, vector<1x1x128xf32>
    %50 = vector.shape_cast %49 : vector<1x1x128xf32> to vector<1x128xf32>
    %51 = vector.broadcast %50 : vector<1x128xf32> to vector<2x128xf32>
    %52 = arith.addf %48, %51 : vector<2x128xf32>
    %53 = arith.addf %44, %52 : vector<2x128xf32>
    %c0_22 = arith.constant 0 : index
    %c3 = arith.constant 3 : index
    %c0_23 = arith.constant 0 : index
    %54 = vector.load %arg8[%c0_22, %c3, %c0_23] : memref<6x8x256xf32, #tpu.memory_space<vmem>>, vector<1x1x128xf32>
    %55 = vector.shape_cast %54 : vector<1x1x128xf32> to vector<1x128xf32>
    %c0_24 = arith.constant 0 : index
    %c4 = arith.constant 4 : index
    %c0_25 = arith.constant 0 : index
    %56 = vector.load %arg8[%c0_24, %c4, %c0_25] : memref<6x8x256xf32, #tpu.memory_space<vmem>>, vector<1x1x128xf32>
    %57 = vector.shape_cast %56 : vector<1x1x128xf32> to vector<1x128xf32>
    %58 = arith.mulf %53, %53 : vector<2x128xf32>
    %59 = vector.shape_cast %53 : vector<2x128xf32> to vector<1x2x128xf32>
    %60 = vector.shape_cast %58 : vector<2x128xf32> to vector<1x2x128xf32>
    %61 = tpu.concatenate %59, %60 in 0 : vector<1x2x128xf32>, vector<1x2x128xf32> -> vector<2x2x128xf32>
    %cst_26 = arith.constant dense<0.000000e+00> : vector<2x2xf32>
    %62 = vector.multi_reduction <add>, %61, %cst_26 [2] : vector<2x2x128xf32> to vector<2x2xf32>
    %63 = vector.shape_cast %62 : vector<2x2xf32> to vector<2x2x1xf32>
    %cst_27 = arith.constant 7.812500e-03 : f32
    %64 = vector.broadcast %cst_27 : f32 to vector<2x2x1xf32>
    %65 = arith.mulf %63, %64 : vector<2x2x1xf32>
    %66 = vector.extract_strided_slice %65 {offsets = [0, 0, 0], sizes = [1, 2, 1], strides = [1, 1, 1]} : vector<2x2x1xf32> to vector<1x2x1xf32>
    %67 = vector.shape_cast %66 : vector<1x2x1xf32> to vector<2x1xf32>
    %68 = vector.extract_strided_slice %65 {offsets = [1, 0, 0], sizes = [1, 2, 1], strides = [1, 1, 1]} : vector<2x2x1xf32> to vector<1x2x1xf32>
    %69 = vector.shape_cast %68 : vector<1x2x1xf32> to vector<2x1xf32>
    %70 = arith.mulf %67, %67 : vector<2x1xf32>
    %71 = arith.subf %69, %70 : vector<2x1xf32>
    %cst_28 = arith.constant 0.000000e+00 : f32
    %72 = vector.broadcast %cst_28 : f32 to vector<2x1xf32>
    %73 = arith.maximumf %71, %72 : vector<2x1xf32>
    %74 = vector.broadcast %67 : vector<2x1xf32> to vector<2x128xf32>
    %75 = arith.subf %53, %74 : vector<2x128xf32>
    %cst_29 = arith.constant 9.99999974E-6 : f32
    %76 = vector.broadcast %cst_29 : f32 to vector<2x1xf32>
    %77 = arith.addf %73, %76 : vector<2x1xf32>
    %78 = math.rsqrt %77 : vector<2x1xf32>
    %79 = vector.broadcast %78 : vector<2x1xf32> to vector<2x128xf32>
    %80 = arith.mulf %75, %79 : vector<2x128xf32>
    %81 = vector.broadcast %55 : vector<1x128xf32> to vector<2x128xf32>
    %82 = arith.mulf %80, %81 : vector<2x128xf32>
    %83 = vector.broadcast %57 : vector<1x128xf32> to vector<2x128xf32>
    %84 = arith.addf %82, %83 : vector<2x128xf32>
    %c0_30 = arith.constant 0 : index
    %c0_31 = arith.constant 0 : index
    %c0_32 = arith.constant 0 : index
    %85 = vector.load %arg6[%c0_30, %c0_31, %c0_32] : memref<6x128x256xbf16, #tpu.memory_space<vmem>>, vector<1x128x256xbf16>
    %86 = vector.shape_cast %85 : vector<1x128x256xbf16> to vector<128x256xbf16>
    %87 = arith.truncf %84 : vector<2x128xf32> to vector<2x128xbf16>
    %cst_33 = arith.constant dense<0.000000e+00> : vector<2x256xf32>
    %88 = tpu.matmul %87, %86, %cst_33 {dimension_numbers = #tpu.dot_dimension_numbers<[1], [0], [0], [1], [0, 0, 1, 1], [], []>} : vector<2x128xbf16>, vector<128x256xbf16>, vector<2x256xf32> -> vector<2x256xf32>
    %c0_34 = arith.constant 0 : index
    %c1_35 = arith.constant 1 : index
    %c0_36 = arith.constant 0 : index
    %89 = vector.load %arg8[%c0_34, %c1_35, %c0_36] : memref<6x8x256xf32, #tpu.memory_space<vmem>>, vector<1x1x256xf32>
    %90 = vector.shape_cast %89 : vector<1x1x256xf32> to vector<1x256xf32>
    %91 = vector.broadcast %90 : vector<1x256xf32> to vector<2x256xf32>
    %92 = arith.addf %88, %91 : vector<2x256xf32>
    %cst_37 = arith.constant 0.000000e+00 : f32
    %93 = vector.broadcast %cst_37 : f32 to vector<2x256xf32>
    %94 = arith.maximumf %92, %93 : vector<2x256xf32>
    %c0_38 = arith.constant 0 : index
    %c0_39 = arith.constant 0 : index
    %c0_40 = arith.constant 0 : index
    %95 = vector.load %arg7[%c0_38, %c0_39, %c0_40] : memref<6x256x128xbf16, #tpu.memory_space<vmem>>, vector<1x256x128xbf16>
    %96 = vector.shape_cast %95 : vector<1x256x128xbf16> to vector<256x128xbf16>
    %97 = arith.truncf %94 : vector<2x256xf32> to vector<2x256xbf16>
    %cst_41 = arith.constant dense<0.000000e+00> : vector<2x128xf32>
    %98 = tpu.matmul %97, %96, %cst_41 {dimension_numbers = #tpu.dot_dimension_numbers<[1], [0], [0], [1], [0, 0, 1, 1], [], []>} : vector<2x256xbf16>, vector<256x128xbf16>, vector<2x128xf32> -> vector<2x128xf32>
    %c0_42 = arith.constant 0 : index
    %c2 = arith.constant 2 : index
    %c0_43 = arith.constant 0 : index
    %99 = vector.load %arg8[%c0_42, %c2, %c0_43] : memref<6x8x256xf32, #tpu.memory_space<vmem>>, vector<1x1x128xf32>
    %100 = vector.shape_cast %99 : vector<1x1x128xf32> to vector<1x128xf32>
    %101 = vector.broadcast %100 : vector<1x128xf32> to vector<2x128xf32>
    %102 = arith.addf %98, %101 : vector<2x128xf32>
    %103 = arith.addf %84, %102 : vector<2x128xf32>
    %c0_44 = arith.constant 0 : index
    %c5 = arith.constant 5 : index
    %c0_45 = arith.constant 0 : index
    %104 = vector.load %arg8[%c0_44, %c5, %c0_45] : memref<6x8x256xf32, #tpu.memory_space<vmem>>, vector<1x1x128xf32>
    %105 = vector.shape_cast %104 : vector<1x1x128xf32> to vector<1x128xf32>
    %c0_46 = arith.constant 0 : index
    %c6 = arith.constant 6 : index
    %c0_47 = arith.constant 0 : index
    %106 = vector.load %arg8[%c0_46, %c6, %c0_47] : memref<6x8x256xf32, #tpu.memory_space<vmem>>, vector<1x1x128xf32>
    %107 = vector.shape_cast %106 : vector<1x1x128xf32> to vector<1x128xf32>
    %108 = arith.mulf %103, %103 : vector<2x128xf32>
    %109 = vector.shape_cast %103 : vector<2x128xf32> to vector<1x2x128xf32>
    %110 = vector.shape_cast %108 : vector<2x128xf32> to vector<1x2x128xf32>
    %111 = tpu.concatenate %109, %110 in 0 : vector<1x2x128xf32>, vector<1x2x128xf32> -> vector<2x2x128xf32>
    %cst_48 = arith.constant dense<0.000000e+00> : vector<2x2xf32>
    %112 = vector.multi_reduction <add>, %111, %cst_48 [2] : vector<2x2x128xf32> to vector<2x2xf32>
    %113 = vector.shape_cast %112 : vector<2x2xf32> to vector<2x2x1xf32>
    %cst_49 = arith.constant 7.812500e-03 : f32
    %114 = vector.broadcast %cst_49 : f32 to vector<2x2x1xf32>
    %115 = arith.mulf %113, %114 : vector<2x2x1xf32>
    %116 = vector.extract_strided_slice %115 {offsets = [0, 0, 0], sizes = [1, 2, 1], strides = [1, 1, 1]} : vector<2x2x1xf32> to vector<1x2x1xf32>
    %117 = vector.shape_cast %116 : vector<1x2x1xf32> to vector<2x1xf32>
    %118 = vector.extract_strided_slice %115 {offsets = [1, 0, 0], sizes = [1, 2, 1], strides = [1, 1, 1]} : vector<2x2x1xf32> to vector<1x2x1xf32>
    %119 = vector.shape_cast %118 : vector<1x2x1xf32> to vector<2x1xf32>
    %120 = arith.mulf %117, %117 : vector<2x1xf32>
    %121 = arith.subf %119, %120 : vector<2x1xf32>
    %cst_50 = arith.constant 0.000000e+00 : f32
    %122 = vector.broadcast %cst_50 : f32 to vector<2x1xf32>
    %123 = arith.maximumf %121, %122 : vector<2x1xf32>
    %124 = vector.broadcast %117 : vector<2x1xf32> to vector<2x128xf32>
    %125 = arith.subf %103, %124 : vector<2x128xf32>
    %cst_51 = arith.constant 9.99999974E-6 : f32
    %126 = vector.broadcast %cst_51 : f32 to vector<2x1xf32>
    %127 = arith.addf %123, %126 : vector<2x1xf32>
    %128 = math.rsqrt %127 : vector<2x1xf32>
    %129 = vector.broadcast %128 : vector<2x1xf32> to vector<2x128xf32>
    %130 = arith.mulf %125, %129 : vector<2x128xf32>
    %131 = vector.broadcast %105 : vector<1x128xf32> to vector<2x128xf32>
    %132 = arith.mulf %130, %131 : vector<2x128xf32>
    %133 = vector.broadcast %107 : vector<1x128xf32> to vector<2x128xf32>
    %134 = arith.addf %132, %133 : vector<2x128xf32>
    %c1_52 = arith.constant 1 : index
    %c0_53 = arith.constant 0 : index
    %c0_54 = arith.constant 0 : index
    %135 = vector.load %arg5[%c1_52, %c0_53, %c0_54] : memref<6x128x128xbf16, #tpu.memory_space<vmem>>, vector<1x128x128xbf16>
    %136 = vector.shape_cast %135 : vector<1x128x128xbf16> to vector<128x128xbf16>
    %137 = arith.truncf %134 : vector<2x128xf32> to vector<2x128xbf16>
    %cst_55 = arith.constant dense<0.000000e+00> : vector<2x128xf32>
    %138 = tpu.matmul %137, %136, %cst_55 {dimension_numbers = #tpu.dot_dimension_numbers<[1], [0], [0], [1], [0, 0, 1, 1], [], []>} : vector<2x128xbf16>, vector<128x128xbf16>, vector<2x128xf32> -> vector<2x128xf32>
    %c1_56 = arith.constant 1 : index
    %c0_57 = arith.constant 0 : index
    %c0_58 = arith.constant 0 : index
    %139 = vector.load %arg8[%c1_56, %c0_57, %c0_58] : memref<6x8x256xf32, #tpu.memory_space<vmem>>, vector<1x1x128xf32>
    %140 = vector.shape_cast %139 : vector<1x1x128xf32> to vector<1x128xf32>
    %141 = vector.broadcast %140 : vector<1x128xf32> to vector<2x128xf32>
    %142 = arith.addf %138, %141 : vector<2x128xf32>
    %143 = arith.addf %134, %142 : vector<2x128xf32>
    %c1_59 = arith.constant 1 : index
    %c3_60 = arith.constant 3 : index
    %c0_61 = arith.constant 0 : index
    %144 = vector.load %arg8[%c1_59, %c3_60, %c0_61] : memref<6x8x256xf32, #tpu.memory_space<vmem>>, vector<1x1x128xf32>
    %145 = vector.shape_cast %144 : vector<1x1x128xf32> to vector<1x128xf32>
    %c1_62 = arith.constant 1 : index
    %c4_63 = arith.constant 4 : index
    %c0_64 = arith.constant 0 : index
    %146 = vector.load %arg8[%c1_62, %c4_63, %c0_64] : memref<6x8x256xf32, #tpu.memory_space<vmem>>, vector<1x1x128xf32>
    %147 = vector.shape_cast %146 : vector<1x1x128xf32> to vector<1x128xf32>
    %148 = arith.mulf %143, %143 : vector<2x128xf32>
    %149 = vector.shape_cast %143 : vector<2x128xf32> to vector<1x2x128xf32>
    %150 = vector.shape_cast %148 : vector<2x128xf32> to vector<1x2x128xf32>
    %151 = tpu.concatenate %149, %150 in 0 : vector<1x2x128xf32>, vector<1x2x128xf32> -> vector<2x2x128xf32>
    %cst_65 = arith.constant dense<0.000000e+00> : vector<2x2xf32>
    %152 = vector.multi_reduction <add>, %151, %cst_65 [2] : vector<2x2x128xf32> to vector<2x2xf32>
    %153 = vector.shape_cast %152 : vector<2x2xf32> to vector<2x2x1xf32>
    %cst_66 = arith.constant 7.812500e-03 : f32
    %154 = vector.broadcast %cst_66 : f32 to vector<2x2x1xf32>
    %155 = arith.mulf %153, %154 : vector<2x2x1xf32>
    %156 = vector.extract_strided_slice %155 {offsets = [0, 0, 0], sizes = [1, 2, 1], strides = [1, 1, 1]} : vector<2x2x1xf32> to vector<1x2x1xf32>
    %157 = vector.shape_cast %156 : vector<1x2x1xf32> to vector<2x1xf32>
    %158 = vector.extract_strided_slice %155 {offsets = [1, 0, 0], sizes = [1, 2, 1], strides = [1, 1, 1]} : vector<2x2x1xf32> to vector<1x2x1xf32>
    %159 = vector.shape_cast %158 : vector<1x2x1xf32> to vector<2x1xf32>
    %160 = arith.mulf %157, %157 : vector<2x1xf32>
    %161 = arith.subf %159, %160 : vector<2x1xf32>
    %cst_67 = arith.constant 0.000000e+00 : f32
    %162 = vector.broadcast %cst_67 : f32 to vector<2x1xf32>
    %163 = arith.maximumf %161, %162 : vector<2x1xf32>
    %164 = vector.broadcast %157 : vector<2x1xf32> to vector<2x128xf32>
    %165 = arith.subf %143, %164 : vector<2x128xf32>
    %cst_68 = arith.constant 9.99999974E-6 : f32
    %166 = vector.broadcast %cst_68 : f32 to vector<2x1xf32>
    %167 = arith.addf %163, %166 : vector<2x1xf32>
    %168 = math.rsqrt %167 : vector<2x1xf32>
    %169 = vector.broadcast %168 : vector<2x1xf32> to vector<2x128xf32>
    %170 = arith.mulf %165, %169 : vector<2x128xf32>
    %171 = vector.broadcast %145 : vector<1x128xf32> to vector<2x128xf32>
    %172 = arith.mulf %170, %171 : vector<2x128xf32>
    %173 = vector.broadcast %147 : vector<1x128xf32> to vector<2x128xf32>
    %174 = arith.addf %172, %173 : vector<2x128xf32>
    %c1_69 = arith.constant 1 : index
    %c0_70 = arith.constant 0 : index
    %c0_71 = arith.constant 0 : index
    %175 = vector.load %arg6[%c1_69, %c0_70, %c0_71] : memref<6x128x256xbf16, #tpu.memory_space<vmem>>, vector<1x128x256xbf16>
    %176 = vector.shape_cast %175 : vector<1x128x256xbf16> to vector<128x256xbf16>
    %177 = arith.truncf %174 : vector<2x128xf32> to vector<2x128xbf16>
    %cst_72 = arith.constant dense<0.000000e+00> : vector<2x256xf32>
    %178 = tpu.matmul %177, %176, %cst_72 {dimension_numbers = #tpu.dot_dimension_numbers<[1], [0], [0], [1], [0, 0, 1, 1], [], []>} : vector<2x128xbf16>, vector<128x256xbf16>, vector<2x256xf32> -> vector<2x256xf32>
    %c1_73 = arith.constant 1 : index
    %c1_74 = arith.constant 1 : index
    %c0_75 = arith.constant 0 : index
    %179 = vector.load %arg8[%c1_73, %c1_74, %c0_75] : memref<6x8x256xf32, #tpu.memory_space<vmem>>, vector<1x1x256xf32>
    %180 = vector.shape_cast %179 : vector<1x1x256xf32> to vector<1x256xf32>
    %181 = vector.broadcast %180 : vector<1x256xf32> to vector<2x256xf32>
    %182 = arith.addf %178, %181 : vector<2x256xf32>
    %cst_76 = arith.constant 0.000000e+00 : f32
    %183 = vector.broadcast %cst_76 : f32 to vector<2x256xf32>
    %184 = arith.maximumf %182, %183 : vector<2x256xf32>
    %c1_77 = arith.constant 1 : index
    %c0_78 = arith.constant 0 : index
    %c0_79 = arith.constant 0 : index
    %185 = vector.load %arg7[%c1_77, %c0_78, %c0_79] : memref<6x256x128xbf16, #tpu.memory_space<vmem>>, vector<1x256x128xbf16>
    %186 = vector.shape_cast %185 : vector<1x256x128xbf16> to vector<256x128xbf16>
    %187 = arith.truncf %184 : vector<2x256xf32> to vector<2x256xbf16>
    %cst_80 = arith.constant dense<0.000000e+00> : vector<2x128xf32>
    %188 = tpu.matmul %187, %186, %cst_80 {dimension_numbers = #tpu.dot_dimension_numbers<[1], [0], [0], [1], [0, 0, 1, 1], [], []>} : vector<2x256xbf16>, vector<256x128xbf16>, vector<2x128xf32> -> vector<2x128xf32>
    %c1_81 = arith.constant 1 : index
    %c2_82 = arith.constant 2 : index
    %c0_83 = arith.constant 0 : index
    %189 = vector.load %arg8[%c1_81, %c2_82, %c0_83] : memref<6x8x256xf32, #tpu.memory_space<vmem>>, vector<1x1x128xf32>
    %190 = vector.shape_cast %189 : vector<1x1x128xf32> to vector<1x128xf32>
    %191 = vector.broadcast %190 : vector<1x128xf32> to vector<2x128xf32>
    %192 = arith.addf %188, %191 : vector<2x128xf32>
    %193 = arith.addf %174, %192 : vector<2x128xf32>
    %c1_84 = arith.constant 1 : index
    %c5_85 = arith.constant 5 : index
    %c0_86 = arith.constant 0 : index
    %194 = vector.load %arg8[%c1_84, %c5_85, %c0_86] : memref<6x8x256xf32, #tpu.memory_space<vmem>>, vector<1x1x128xf32>
    %195 = vector.shape_cast %194 : vector<1x1x128xf32> to vector<1x128xf32>
    %c1_87 = arith.constant 1 : index
    %c6_88 = arith.constant 6 : index
    %c0_89 = arith.constant 0 : index
    %196 = vector.load %arg8[%c1_87, %c6_88, %c0_89] : memref<6x8x256xf32, #tpu.memory_space<vmem>>, vector<1x1x128xf32>
    %197 = vector.shape_cast %196 : vector<1x1x128xf32> to vector<1x128xf32>
    %198 = arith.mulf %193, %193 : vector<2x128xf32>
    %199 = vector.shape_cast %193 : vector<2x128xf32> to vector<1x2x128xf32>
    %200 = vector.shape_cast %198 : vector<2x128xf32> to vector<1x2x128xf32>
    %201 = tpu.concatenate %199, %200 in 0 : vector<1x2x128xf32>, vector<1x2x128xf32> -> vector<2x2x128xf32>
    %cst_90 = arith.constant dense<0.000000e+00> : vector<2x2xf32>
    %202 = vector.multi_reduction <add>, %201, %cst_90 [2] : vector<2x2x128xf32> to vector<2x2xf32>
    %203 = vector.shape_cast %202 : vector<2x2xf32> to vector<2x2x1xf32>
    %cst_91 = arith.constant 7.812500e-03 : f32
    %204 = vector.broadcast %cst_91 : f32 to vector<2x2x1xf32>
    %205 = arith.mulf %203, %204 : vector<2x2x1xf32>
    %206 = vector.extract_strided_slice %205 {offsets = [0, 0, 0], sizes = [1, 2, 1], strides = [1, 1, 1]} : vector<2x2x1xf32> to vector<1x2x1xf32>
    %207 = vector.shape_cast %206 : vector<1x2x1xf32> to vector<2x1xf32>
    %208 = vector.extract_strided_slice %205 {offsets = [1, 0, 0], sizes = [1, 2, 1], strides = [1, 1, 1]} : vector<2x2x1xf32> to vector<1x2x1xf32>
    %209 = vector.shape_cast %208 : vector<1x2x1xf32> to vector<2x1xf32>
    %210 = arith.mulf %207, %207 : vector<2x1xf32>
    %211 = arith.subf %209, %210 : vector<2x1xf32>
    %cst_92 = arith.constant 0.000000e+00 : f32
    %212 = vector.broadcast %cst_92 : f32 to vector<2x1xf32>
    %213 = arith.maximumf %211, %212 : vector<2x1xf32>
    %214 = vector.broadcast %207 : vector<2x1xf32> to vector<2x128xf32>
    %215 = arith.subf %193, %214 : vector<2x128xf32>
    %cst_93 = arith.constant 9.99999974E-6 : f32
    %216 = vector.broadcast %cst_93 : f32 to vector<2x1xf32>
    %217 = arith.addf %213, %216 : vector<2x1xf32>
    %218 = math.rsqrt %217 : vector<2x1xf32>
    %219 = vector.broadcast %218 : vector<2x1xf32> to vector<2x128xf32>
    %220 = arith.mulf %215, %219 : vector<2x128xf32>
    %221 = vector.broadcast %195 : vector<1x128xf32> to vector<2x128xf32>
    %222 = arith.mulf %220, %221 : vector<2x128xf32>
    %223 = vector.broadcast %197 : vector<1x128xf32> to vector<2x128xf32>
    %224 = arith.addf %222, %223 : vector<2x128xf32>
    %c2_94 = arith.constant 2 : index
    %c0_95 = arith.constant 0 : index
    %c0_96 = arith.constant 0 : index
    %225 = vector.load %arg5[%c2_94, %c0_95, %c0_96] : memref<6x128x128xbf16, #tpu.memory_space<vmem>>, vector<1x128x128xbf16>
    %226 = vector.shape_cast %225 : vector<1x128x128xbf16> to vector<128x128xbf16>
    %227 = arith.truncf %224 : vector<2x128xf32> to vector<2x128xbf16>
    %cst_97 = arith.constant dense<0.000000e+00> : vector<2x128xf32>
    %228 = tpu.matmul %227, %226, %cst_97 {dimension_numbers = #tpu.dot_dimension_numbers<[1], [0], [0], [1], [0, 0, 1, 1], [], []>} : vector<2x128xbf16>, vector<128x128xbf16>, vector<2x128xf32> -> vector<2x128xf32>
    %c2_98 = arith.constant 2 : index
    %c0_99 = arith.constant 0 : index
    %c0_100 = arith.constant 0 : index
    %229 = vector.load %arg8[%c2_98, %c0_99, %c0_100] : memref<6x8x256xf32, #tpu.memory_space<vmem>>, vector<1x1x128xf32>
    %230 = vector.shape_cast %229 : vector<1x1x128xf32> to vector<1x128xf32>
    %231 = vector.broadcast %230 : vector<1x128xf32> to vector<2x128xf32>
    %232 = arith.addf %228, %231 : vector<2x128xf32>
    %233 = arith.addf %224, %232 : vector<2x128xf32>
    %c2_101 = arith.constant 2 : index
    %c3_102 = arith.constant 3 : index
    %c0_103 = arith.constant 0 : index
    %234 = vector.load %arg8[%c2_101, %c3_102, %c0_103] : memref<6x8x256xf32, #tpu.memory_space<vmem>>, vector<1x1x128xf32>
    %235 = vector.shape_cast %234 : vector<1x1x128xf32> to vector<1x128xf32>
    %c2_104 = arith.constant 2 : index
    %c4_105 = arith.constant 4 : index
    %c0_106 = arith.constant 0 : index
    %236 = vector.load %arg8[%c2_104, %c4_105, %c0_106] : memref<6x8x256xf32, #tpu.memory_space<vmem>>, vector<1x1x128xf32>
    %237 = vector.shape_cast %236 : vector<1x1x128xf32> to vector<1x128xf32>
    %238 = arith.mulf %233, %233 : vector<2x128xf32>
    %239 = vector.shape_cast %233 : vector<2x128xf32> to vector<1x2x128xf32>
    %240 = vector.shape_cast %238 : vector<2x128xf32> to vector<1x2x128xf32>
    %241 = tpu.concatenate %239, %240 in 0 : vector<1x2x128xf32>, vector<1x2x128xf32> -> vector<2x2x128xf32>
    %cst_107 = arith.constant dense<0.000000e+00> : vector<2x2xf32>
    %242 = vector.multi_reduction <add>, %241, %cst_107 [2] : vector<2x2x128xf32> to vector<2x2xf32>
    %243 = vector.shape_cast %242 : vector<2x2xf32> to vector<2x2x1xf32>
    %cst_108 = arith.constant 7.812500e-03 : f32
    %244 = vector.broadcast %cst_108 : f32 to vector<2x2x1xf32>
    %245 = arith.mulf %243, %244 : vector<2x2x1xf32>
    %246 = vector.extract_strided_slice %245 {offsets = [0, 0, 0], sizes = [1, 2, 1], strides = [1, 1, 1]} : vector<2x2x1xf32> to vector<1x2x1xf32>
    %247 = vector.shape_cast %246 : vector<1x2x1xf32> to vector<2x1xf32>
    %248 = vector.extract_strided_slice %245 {offsets = [1, 0, 0], sizes = [1, 2, 1], strides = [1, 1, 1]} : vector<2x2x1xf32> to vector<1x2x1xf32>
    %249 = vector.shape_cast %248 : vector<1x2x1xf32> to vector<2x1xf32>
    %250 = arith.mulf %247, %247 : vector<2x1xf32>
    %251 = arith.subf %249, %250 : vector<2x1xf32>
    %cst_109 = arith.constant 0.000000e+00 : f32
    %252 = vector.broadcast %cst_109 : f32 to vector<2x1xf32>
    %253 = arith.maximumf %251, %252 : vector<2x1xf32>
    %254 = vector.broadcast %247 : vector<2x1xf32> to vector<2x128xf32>
    %255 = arith.subf %233, %254 : vector<2x128xf32>
    %cst_110 = arith.constant 9.99999974E-6 : f32
    %256 = vector.broadcast %cst_110 : f32 to vector<2x1xf32>
    %257 = arith.addf %253, %256 : vector<2x1xf32>
    %258 = math.rsqrt %257 : vector<2x1xf32>
    %259 = vector.broadcast %258 : vector<2x1xf32> to vector<2x128xf32>
    %260 = arith.mulf %255, %259 : vector<2x128xf32>
    %261 = vector.broadcast %235 : vector<1x128xf32> to vector<2x128xf32>
    %262 = arith.mulf %260, %261 : vector<2x128xf32>
    %263 = vector.broadcast %237 : vector<1x128xf32> to vector<2x128xf32>
    %264 = arith.addf %262, %263 : vector<2x128xf32>
    %c2_111 = arith.constant 2 : index
    %c0_112 = arith.constant 0 : index
    %c0_113 = arith.constant 0 : index
    %265 = vector.load %arg6[%c2_111, %c0_112, %c0_113] : memref<6x128x256xbf16, #tpu.memory_space<vmem>>, vector<1x128x256xbf16>
    %266 = vector.shape_cast %265 : vector<1x128x256xbf16> to vector<128x256xbf16>
    %267 = arith.truncf %264 : vector<2x128xf32> to vector<2x128xbf16>
    %cst_114 = arith.constant dense<0.000000e+00> : vector<2x256xf32>
    %268 = tpu.matmul %267, %266, %cst_114 {dimension_numbers = #tpu.dot_dimension_numbers<[1], [0], [0], [1], [0, 0, 1, 1], [], []>} : vector<2x128xbf16>, vector<128x256xbf16>, vector<2x256xf32> -> vector<2x256xf32>
    %c2_115 = arith.constant 2 : index
    %c1_116 = arith.constant 1 : index
    %c0_117 = arith.constant 0 : index
    %269 = vector.load %arg8[%c2_115, %c1_116, %c0_117] : memref<6x8x256xf32, #tpu.memory_space<vmem>>, vector<1x1x256xf32>
    %270 = vector.shape_cast %269 : vector<1x1x256xf32> to vector<1x256xf32>
    %271 = vector.broadcast %270 : vector<1x256xf32> to vector<2x256xf32>
    %272 = arith.addf %268, %271 : vector<2x256xf32>
    %cst_118 = arith.constant 0.000000e+00 : f32
    %273 = vector.broadcast %cst_118 : f32 to vector<2x256xf32>
    %274 = arith.maximumf %272, %273 : vector<2x256xf32>
    %c2_119 = arith.constant 2 : index
    %c0_120 = arith.constant 0 : index
    %c0_121 = arith.constant 0 : index
    %275 = vector.load %arg7[%c2_119, %c0_120, %c0_121] : memref<6x256x128xbf16, #tpu.memory_space<vmem>>, vector<1x256x128xbf16>
    %276 = vector.shape_cast %275 : vector<1x256x128xbf16> to vector<256x128xbf16>
    %277 = arith.truncf %274 : vector<2x256xf32> to vector<2x256xbf16>
    %cst_122 = arith.constant dense<0.000000e+00> : vector<2x128xf32>
    %278 = tpu.matmul %277, %276, %cst_122 {dimension_numbers = #tpu.dot_dimension_numbers<[1], [0], [0], [1], [0, 0, 1, 1], [], []>} : vector<2x256xbf16>, vector<256x128xbf16>, vector<2x128xf32> -> vector<2x128xf32>
    %c2_123 = arith.constant 2 : index
    %c2_124 = arith.constant 2 : index
    %c0_125 = arith.constant 0 : index
    %279 = vector.load %arg8[%c2_123, %c2_124, %c0_125] : memref<6x8x256xf32, #tpu.memory_space<vmem>>, vector<1x1x128xf32>
    %280 = vector.shape_cast %279 : vector<1x1x128xf32> to vector<1x128xf32>
    %281 = vector.broadcast %280 : vector<1x128xf32> to vector<2x128xf32>
    %282 = arith.addf %278, %281 : vector<2x128xf32>
    %283 = arith.addf %264, %282 : vector<2x128xf32>
    %c2_126 = arith.constant 2 : index
    %c5_127 = arith.constant 5 : index
    %c0_128 = arith.constant 0 : index
    %284 = vector.load %arg8[%c2_126, %c5_127, %c0_128] : memref<6x8x256xf32, #tpu.memory_space<vmem>>, vector<1x1x128xf32>
    %285 = vector.shape_cast %284 : vector<1x1x128xf32> to vector<1x128xf32>
    %c2_129 = arith.constant 2 : index
    %c6_130 = arith.constant 6 : index
    %c0_131 = arith.constant 0 : index
    %286 = vector.load %arg8[%c2_129, %c6_130, %c0_131] : memref<6x8x256xf32, #tpu.memory_space<vmem>>, vector<1x1x128xf32>
    %287 = vector.shape_cast %286 : vector<1x1x128xf32> to vector<1x128xf32>
    %288 = arith.mulf %283, %283 : vector<2x128xf32>
    %289 = vector.shape_cast %283 : vector<2x128xf32> to vector<1x2x128xf32>
    %290 = vector.shape_cast %288 : vector<2x128xf32> to vector<1x2x128xf32>
    %291 = tpu.concatenate %289, %290 in 0 : vector<1x2x128xf32>, vector<1x2x128xf32> -> vector<2x2x128xf32>
    %cst_132 = arith.constant dense<0.000000e+00> : vector<2x2xf32>
    %292 = vector.multi_reduction <add>, %291, %cst_132 [2] : vector<2x2x128xf32> to vector<2x2xf32>
    %293 = vector.shape_cast %292 : vector<2x2xf32> to vector<2x2x1xf32>
    %cst_133 = arith.constant 7.812500e-03 : f32
    %294 = vector.broadcast %cst_133 : f32 to vector<2x2x1xf32>
    %295 = arith.mulf %293, %294 : vector<2x2x1xf32>
    %296 = vector.extract_strided_slice %295 {offsets = [0, 0, 0], sizes = [1, 2, 1], strides = [1, 1, 1]} : vector<2x2x1xf32> to vector<1x2x1xf32>
    %297 = vector.shape_cast %296 : vector<1x2x1xf32> to vector<2x1xf32>
    %298 = vector.extract_strided_slice %295 {offsets = [1, 0, 0], sizes = [1, 2, 1], strides = [1, 1, 1]} : vector<2x2x1xf32> to vector<1x2x1xf32>
    %299 = vector.shape_cast %298 : vector<1x2x1xf32> to vector<2x1xf32>
    %300 = arith.mulf %297, %297 : vector<2x1xf32>
    %301 = arith.subf %299, %300 : vector<2x1xf32>
    %cst_134 = arith.constant 0.000000e+00 : f32
    %302 = vector.broadcast %cst_134 : f32 to vector<2x1xf32>
    %303 = arith.maximumf %301, %302 : vector<2x1xf32>
    %304 = vector.broadcast %297 : vector<2x1xf32> to vector<2x128xf32>
    %305 = arith.subf %283, %304 : vector<2x128xf32>
    %cst_135 = arith.constant 9.99999974E-6 : f32
    %306 = vector.broadcast %cst_135 : f32 to vector<2x1xf32>
    %307 = arith.addf %303, %306 : vector<2x1xf32>
    %308 = math.rsqrt %307 : vector<2x1xf32>
    %309 = vector.broadcast %308 : vector<2x1xf32> to vector<2x128xf32>
    %310 = arith.mulf %305, %309 : vector<2x128xf32>
    %311 = vector.broadcast %285 : vector<1x128xf32> to vector<2x128xf32>
    %312 = arith.mulf %310, %311 : vector<2x128xf32>
    %313 = vector.broadcast %287 : vector<1x128xf32> to vector<2x128xf32>
    %314 = arith.addf %312, %313 : vector<2x128xf32>
    %c3_136 = arith.constant 3 : index
    %c0_137 = arith.constant 0 : index
    %c0_138 = arith.constant 0 : index
    %315 = vector.load %arg5[%c3_136, %c0_137, %c0_138] : memref<6x128x128xbf16, #tpu.memory_space<vmem>>, vector<1x128x128xbf16>
    %316 = vector.shape_cast %315 : vector<1x128x128xbf16> to vector<128x128xbf16>
    %317 = arith.truncf %314 : vector<2x128xf32> to vector<2x128xbf16>
    %cst_139 = arith.constant dense<0.000000e+00> : vector<2x128xf32>
    %318 = tpu.matmul %317, %316, %cst_139 {dimension_numbers = #tpu.dot_dimension_numbers<[1], [0], [0], [1], [0, 0, 1, 1], [], []>} : vector<2x128xbf16>, vector<128x128xbf16>, vector<2x128xf32> -> vector<2x128xf32>
    %c3_140 = arith.constant 3 : index
    %c0_141 = arith.constant 0 : index
    %c0_142 = arith.constant 0 : index
    %319 = vector.load %arg8[%c3_140, %c0_141, %c0_142] : memref<6x8x256xf32, #tpu.memory_space<vmem>>, vector<1x1x128xf32>
    %320 = vector.shape_cast %319 : vector<1x1x128xf32> to vector<1x128xf32>
    %321 = vector.broadcast %320 : vector<1x128xf32> to vector<2x128xf32>
    %322 = arith.addf %318, %321 : vector<2x128xf32>
    %323 = arith.addf %314, %322 : vector<2x128xf32>
    %c3_143 = arith.constant 3 : index
    %c3_144 = arith.constant 3 : index
    %c0_145 = arith.constant 0 : index
    %324 = vector.load %arg8[%c3_143, %c3_144, %c0_145] : memref<6x8x256xf32, #tpu.memory_space<vmem>>, vector<1x1x128xf32>
    %325 = vector.shape_cast %324 : vector<1x1x128xf32> to vector<1x128xf32>
    %c3_146 = arith.constant 3 : index
    %c4_147 = arith.constant 4 : index
    %c0_148 = arith.constant 0 : index
    %326 = vector.load %arg8[%c3_146, %c4_147, %c0_148] : memref<6x8x256xf32, #tpu.memory_space<vmem>>, vector<1x1x128xf32>
    %327 = vector.shape_cast %326 : vector<1x1x128xf32> to vector<1x128xf32>
    %328 = arith.mulf %323, %323 : vector<2x128xf32>
    %329 = vector.shape_cast %323 : vector<2x128xf32> to vector<1x2x128xf32>
    %330 = vector.shape_cast %328 : vector<2x128xf32> to vector<1x2x128xf32>
    %331 = tpu.concatenate %329, %330 in 0 : vector<1x2x128xf32>, vector<1x2x128xf32> -> vector<2x2x128xf32>
    %cst_149 = arith.constant dense<0.000000e+00> : vector<2x2xf32>
    %332 = vector.multi_reduction <add>, %331, %cst_149 [2] : vector<2x2x128xf32> to vector<2x2xf32>
    %333 = vector.shape_cast %332 : vector<2x2xf32> to vector<2x2x1xf32>
    %cst_150 = arith.constant 7.812500e-03 : f32
    %334 = vector.broadcast %cst_150 : f32 to vector<2x2x1xf32>
    %335 = arith.mulf %333, %334 : vector<2x2x1xf32>
    %336 = vector.extract_strided_slice %335 {offsets = [0, 0, 0], sizes = [1, 2, 1], strides = [1, 1, 1]} : vector<2x2x1xf32> to vector<1x2x1xf32>
    %337 = vector.shape_cast %336 : vector<1x2x1xf32> to vector<2x1xf32>
    %338 = vector.extract_strided_slice %335 {offsets = [1, 0, 0], sizes = [1, 2, 1], strides = [1, 1, 1]} : vector<2x2x1xf32> to vector<1x2x1xf32>
    %339 = vector.shape_cast %338 : vector<1x2x1xf32> to vector<2x1xf32>
    %340 = arith.mulf %337, %337 : vector<2x1xf32>
    %341 = arith.subf %339, %340 : vector<2x1xf32>
    %cst_151 = arith.constant 0.000000e+00 : f32
    %342 = vector.broadcast %cst_151 : f32 to vector<2x1xf32>
    %343 = arith.maximumf %341, %342 : vector<2x1xf32>
    %344 = vector.broadcast %337 : vector<2x1xf32> to vector<2x128xf32>
    %345 = arith.subf %323, %344 : vector<2x128xf32>
    %cst_152 = arith.constant 9.99999974E-6 : f32
    %346 = vector.broadcast %cst_152 : f32 to vector<2x1xf32>
    %347 = arith.addf %343, %346 : vector<2x1xf32>
    %348 = math.rsqrt %347 : vector<2x1xf32>
    %349 = vector.broadcast %348 : vector<2x1xf32> to vector<2x128xf32>
    %350 = arith.mulf %345, %349 : vector<2x128xf32>
    %351 = vector.broadcast %325 : vector<1x128xf32> to vector<2x128xf32>
    %352 = arith.mulf %350, %351 : vector<2x128xf32>
    %353 = vector.broadcast %327 : vector<1x128xf32> to vector<2x128xf32>
    %354 = arith.addf %352, %353 : vector<2x128xf32>
    %c3_153 = arith.constant 3 : index
    %c0_154 = arith.constant 0 : index
    %c0_155 = arith.constant 0 : index
    %355 = vector.load %arg6[%c3_153, %c0_154, %c0_155] : memref<6x128x256xbf16, #tpu.memory_space<vmem>>, vector<1x128x256xbf16>
    %356 = vector.shape_cast %355 : vector<1x128x256xbf16> to vector<128x256xbf16>
    %357 = arith.truncf %354 : vector<2x128xf32> to vector<2x128xbf16>
    %cst_156 = arith.constant dense<0.000000e+00> : vector<2x256xf32>
    %358 = tpu.matmul %357, %356, %cst_156 {dimension_numbers = #tpu.dot_dimension_numbers<[1], [0], [0], [1], [0, 0, 1, 1], [], []>} : vector<2x128xbf16>, vector<128x256xbf16>, vector<2x256xf32> -> vector<2x256xf32>
    %c3_157 = arith.constant 3 : index
    %c1_158 = arith.constant 1 : index
    %c0_159 = arith.constant 0 : index
    %359 = vector.load %arg8[%c3_157, %c1_158, %c0_159] : memref<6x8x256xf32, #tpu.memory_space<vmem>>, vector<1x1x256xf32>
    %360 = vector.shape_cast %359 : vector<1x1x256xf32> to vector<1x256xf32>
    %361 = vector.broadcast %360 : vector<1x256xf32> to vector<2x256xf32>
    %362 = arith.addf %358, %361 : vector<2x256xf32>
    %cst_160 = arith.constant 0.000000e+00 : f32
    %363 = vector.broadcast %cst_160 : f32 to vector<2x256xf32>
    %364 = arith.maximumf %362, %363 : vector<2x256xf32>
    %c3_161 = arith.constant 3 : index
    %c0_162 = arith.constant 0 : index
    %c0_163 = arith.constant 0 : index
    %365 = vector.load %arg7[%c3_161, %c0_162, %c0_163] : memref<6x256x128xbf16, #tpu.memory_space<vmem>>, vector<1x256x128xbf16>
    %366 = vector.shape_cast %365 : vector<1x256x128xbf16> to vector<256x128xbf16>
    %367 = arith.truncf %364 : vector<2x256xf32> to vector<2x256xbf16>
    %cst_164 = arith.constant dense<0.000000e+00> : vector<2x128xf32>
    %368 = tpu.matmul %367, %366, %cst_164 {dimension_numbers = #tpu.dot_dimension_numbers<[1], [0], [0], [1], [0, 0, 1, 1], [], []>} : vector<2x256xbf16>, vector<256x128xbf16>, vector<2x128xf32> -> vector<2x128xf32>
    %c3_165 = arith.constant 3 : index
    %c2_166 = arith.constant 2 : index
    %c0_167 = arith.constant 0 : index
    %369 = vector.load %arg8[%c3_165, %c2_166, %c0_167] : memref<6x8x256xf32, #tpu.memory_space<vmem>>, vector<1x1x128xf32>
    %370 = vector.shape_cast %369 : vector<1x1x128xf32> to vector<1x128xf32>
    %371 = vector.broadcast %370 : vector<1x128xf32> to vector<2x128xf32>
    %372 = arith.addf %368, %371 : vector<2x128xf32>
    %373 = arith.addf %354, %372 : vector<2x128xf32>
    %c3_168 = arith.constant 3 : index
    %c5_169 = arith.constant 5 : index
    %c0_170 = arith.constant 0 : index
    %374 = vector.load %arg8[%c3_168, %c5_169, %c0_170] : memref<6x8x256xf32, #tpu.memory_space<vmem>>, vector<1x1x128xf32>
    %375 = vector.shape_cast %374 : vector<1x1x128xf32> to vector<1x128xf32>
    %c3_171 = arith.constant 3 : index
    %c6_172 = arith.constant 6 : index
    %c0_173 = arith.constant 0 : index
    %376 = vector.load %arg8[%c3_171, %c6_172, %c0_173] : memref<6x8x256xf32, #tpu.memory_space<vmem>>, vector<1x1x128xf32>
    %377 = vector.shape_cast %376 : vector<1x1x128xf32> to vector<1x128xf32>
    %378 = arith.mulf %373, %373 : vector<2x128xf32>
    %379 = vector.shape_cast %373 : vector<2x128xf32> to vector<1x2x128xf32>
    %380 = vector.shape_cast %378 : vector<2x128xf32> to vector<1x2x128xf32>
    %381 = tpu.concatenate %379, %380 in 0 : vector<1x2x128xf32>, vector<1x2x128xf32> -> vector<2x2x128xf32>
    %cst_174 = arith.constant dense<0.000000e+00> : vector<2x2xf32>
    %382 = vector.multi_reduction <add>, %381, %cst_174 [2] : vector<2x2x128xf32> to vector<2x2xf32>
    %383 = vector.shape_cast %382 : vector<2x2xf32> to vector<2x2x1xf32>
    %cst_175 = arith.constant 7.812500e-03 : f32
    %384 = vector.broadcast %cst_175 : f32 to vector<2x2x1xf32>
    %385 = arith.mulf %383, %384 : vector<2x2x1xf32>
    %386 = vector.extract_strided_slice %385 {offsets = [0, 0, 0], sizes = [1, 2, 1], strides = [1, 1, 1]} : vector<2x2x1xf32> to vector<1x2x1xf32>
    %387 = vector.shape_cast %386 : vector<1x2x1xf32> to vector<2x1xf32>
    %388 = vector.extract_strided_slice %385 {offsets = [1, 0, 0], sizes = [1, 2, 1], strides = [1, 1, 1]} : vector<2x2x1xf32> to vector<1x2x1xf32>
    %389 = vector.shape_cast %388 : vector<1x2x1xf32> to vector<2x1xf32>
    %390 = arith.mulf %387, %387 : vector<2x1xf32>
    %391 = arith.subf %389, %390 : vector<2x1xf32>
    %cst_176 = arith.constant 0.000000e+00 : f32
    %392 = vector.broadcast %cst_176 : f32 to vector<2x1xf32>
    %393 = arith.maximumf %391, %392 : vector<2x1xf32>
    %394 = vector.broadcast %387 : vector<2x1xf32> to vector<2x128xf32>
    %395 = arith.subf %373, %394 : vector<2x128xf32>
    %cst_177 = arith.constant 9.99999974E-6 : f32
    %396 = vector.broadcast %cst_177 : f32 to vector<2x1xf32>
    %397 = arith.addf %393, %396 : vector<2x1xf32>
    %398 = math.rsqrt %397 : vector<2x1xf32>
    %399 = vector.broadcast %398 : vector<2x1xf32> to vector<2x128xf32>
    %400 = arith.mulf %395, %399 : vector<2x128xf32>
    %401 = vector.broadcast %375 : vector<1x128xf32> to vector<2x128xf32>
    %402 = arith.mulf %400, %401 : vector<2x128xf32>
    %403 = vector.broadcast %377 : vector<1x128xf32> to vector<2x128xf32>
    %404 = arith.addf %402, %403 : vector<2x128xf32>
    %c4_178 = arith.constant 4 : index
    %c0_179 = arith.constant 0 : index
    %c0_180 = arith.constant 0 : index
    %405 = vector.load %arg5[%c4_178, %c0_179, %c0_180] : memref<6x128x128xbf16, #tpu.memory_space<vmem>>, vector<1x128x128xbf16>
    %406 = vector.shape_cast %405 : vector<1x128x128xbf16> to vector<128x128xbf16>
    %407 = arith.truncf %404 : vector<2x128xf32> to vector<2x128xbf16>
    %cst_181 = arith.constant dense<0.000000e+00> : vector<2x128xf32>
    %408 = tpu.matmul %407, %406, %cst_181 {dimension_numbers = #tpu.dot_dimension_numbers<[1], [0], [0], [1], [0, 0, 1, 1], [], []>} : vector<2x128xbf16>, vector<128x128xbf16>, vector<2x128xf32> -> vector<2x128xf32>
    %c4_182 = arith.constant 4 : index
    %c0_183 = arith.constant 0 : index
    %c0_184 = arith.constant 0 : index
    %409 = vector.load %arg8[%c4_182, %c0_183, %c0_184] : memref<6x8x256xf32, #tpu.memory_space<vmem>>, vector<1x1x128xf32>
    %410 = vector.shape_cast %409 : vector<1x1x128xf32> to vector<1x128xf32>
    %411 = vector.broadcast %410 : vector<1x128xf32> to vector<2x128xf32>
    %412 = arith.addf %408, %411 : vector<2x128xf32>
    %413 = arith.addf %404, %412 : vector<2x128xf32>
    %c4_185 = arith.constant 4 : index
    %c3_186 = arith.constant 3 : index
    %c0_187 = arith.constant 0 : index
    %414 = vector.load %arg8[%c4_185, %c3_186, %c0_187] : memref<6x8x256xf32, #tpu.memory_space<vmem>>, vector<1x1x128xf32>
    %415 = vector.shape_cast %414 : vector<1x1x128xf32> to vector<1x128xf32>
    %c4_188 = arith.constant 4 : index
    %c4_189 = arith.constant 4 : index
    %c0_190 = arith.constant 0 : index
    %416 = vector.load %arg8[%c4_188, %c4_189, %c0_190] : memref<6x8x256xf32, #tpu.memory_space<vmem>>, vector<1x1x128xf32>
    %417 = vector.shape_cast %416 : vector<1x1x128xf32> to vector<1x128xf32>
    %418 = arith.mulf %413, %413 : vector<2x128xf32>
    %419 = vector.shape_cast %413 : vector<2x128xf32> to vector<1x2x128xf32>
    %420 = vector.shape_cast %418 : vector<2x128xf32> to vector<1x2x128xf32>
    %421 = tpu.concatenate %419, %420 in 0 : vector<1x2x128xf32>, vector<1x2x128xf32> -> vector<2x2x128xf32>
    %cst_191 = arith.constant dense<0.000000e+00> : vector<2x2xf32>
    %422 = vector.multi_reduction <add>, %421, %cst_191 [2] : vector<2x2x128xf32> to vector<2x2xf32>
    %423 = vector.shape_cast %422 : vector<2x2xf32> to vector<2x2x1xf32>
    %cst_192 = arith.constant 7.812500e-03 : f32
    %424 = vector.broadcast %cst_192 : f32 to vector<2x2x1xf32>
    %425 = arith.mulf %423, %424 : vector<2x2x1xf32>
    %426 = vector.extract_strided_slice %425 {offsets = [0, 0, 0], sizes = [1, 2, 1], strides = [1, 1, 1]} : vector<2x2x1xf32> to vector<1x2x1xf32>
    %427 = vector.shape_cast %426 : vector<1x2x1xf32> to vector<2x1xf32>
    %428 = vector.extract_strided_slice %425 {offsets = [1, 0, 0], sizes = [1, 2, 1], strides = [1, 1, 1]} : vector<2x2x1xf32> to vector<1x2x1xf32>
    %429 = vector.shape_cast %428 : vector<1x2x1xf32> to vector<2x1xf32>
    %430 = arith.mulf %427, %427 : vector<2x1xf32>
    %431 = arith.subf %429, %430 : vector<2x1xf32>
    %cst_193 = arith.constant 0.000000e+00 : f32
    %432 = vector.broadcast %cst_193 : f32 to vector<2x1xf32>
    %433 = arith.maximumf %431, %432 : vector<2x1xf32>
    %434 = vector.broadcast %427 : vector<2x1xf32> to vector<2x128xf32>
    %435 = arith.subf %413, %434 : vector<2x128xf32>
    %cst_194 = arith.constant 9.99999974E-6 : f32
    %436 = vector.broadcast %cst_194 : f32 to vector<2x1xf32>
    %437 = arith.addf %433, %436 : vector<2x1xf32>
    %438 = math.rsqrt %437 : vector<2x1xf32>
    %439 = vector.broadcast %438 : vector<2x1xf32> to vector<2x128xf32>
    %440 = arith.mulf %435, %439 : vector<2x128xf32>
    %441 = vector.broadcast %415 : vector<1x128xf32> to vector<2x128xf32>
    %442 = arith.mulf %440, %441 : vector<2x128xf32>
    %443 = vector.broadcast %417 : vector<1x128xf32> to vector<2x128xf32>
    %444 = arith.addf %442, %443 : vector<2x128xf32>
    %c4_195 = arith.constant 4 : index
    %c0_196 = arith.constant 0 : index
    %c0_197 = arith.constant 0 : index
    %445 = vector.load %arg6[%c4_195, %c0_196, %c0_197] : memref<6x128x256xbf16, #tpu.memory_space<vmem>>, vector<1x128x256xbf16>
    %446 = vector.shape_cast %445 : vector<1x128x256xbf16> to vector<128x256xbf16>
    %447 = arith.truncf %444 : vector<2x128xf32> to vector<2x128xbf16>
    %cst_198 = arith.constant dense<0.000000e+00> : vector<2x256xf32>
    %448 = tpu.matmul %447, %446, %cst_198 {dimension_numbers = #tpu.dot_dimension_numbers<[1], [0], [0], [1], [0, 0, 1, 1], [], []>} : vector<2x128xbf16>, vector<128x256xbf16>, vector<2x256xf32> -> vector<2x256xf32>
    %c4_199 = arith.constant 4 : index
    %c1_200 = arith.constant 1 : index
    %c0_201 = arith.constant 0 : index
    %449 = vector.load %arg8[%c4_199, %c1_200, %c0_201] : memref<6x8x256xf32, #tpu.memory_space<vmem>>, vector<1x1x256xf32>
    %450 = vector.shape_cast %449 : vector<1x1x256xf32> to vector<1x256xf32>
    %451 = vector.broadcast %450 : vector<1x256xf32> to vector<2x256xf32>
    %452 = arith.addf %448, %451 : vector<2x256xf32>
    %cst_202 = arith.constant 0.000000e+00 : f32
    %453 = vector.broadcast %cst_202 : f32 to vector<2x256xf32>
    %454 = arith.maximumf %452, %453 : vector<2x256xf32>
    %c4_203 = arith.constant 4 : index
    %c0_204 = arith.constant 0 : index
    %c0_205 = arith.constant 0 : index
    %455 = vector.load %arg7[%c4_203, %c0_204, %c0_205] : memref<6x256x128xbf16, #tpu.memory_space<vmem>>, vector<1x256x128xbf16>
    %456 = vector.shape_cast %455 : vector<1x256x128xbf16> to vector<256x128xbf16>
    %457 = arith.truncf %454 : vector<2x256xf32> to vector<2x256xbf16>
    %cst_206 = arith.constant dense<0.000000e+00> : vector<2x128xf32>
    %458 = tpu.matmul %457, %456, %cst_206 {dimension_numbers = #tpu.dot_dimension_numbers<[1], [0], [0], [1], [0, 0, 1, 1], [], []>} : vector<2x256xbf16>, vector<256x128xbf16>, vector<2x128xf32> -> vector<2x128xf32>
    %c4_207 = arith.constant 4 : index
    %c2_208 = arith.constant 2 : index
    %c0_209 = arith.constant 0 : index
    %459 = vector.load %arg8[%c4_207, %c2_208, %c0_209] : memref<6x8x256xf32, #tpu.memory_space<vmem>>, vector<1x1x128xf32>
    %460 = vector.shape_cast %459 : vector<1x1x128xf32> to vector<1x128xf32>
    %461 = vector.broadcast %460 : vector<1x128xf32> to vector<2x128xf32>
    %462 = arith.addf %458, %461 : vector<2x128xf32>
    %463 = arith.addf %444, %462 : vector<2x128xf32>
    %c4_210 = arith.constant 4 : index
    %c5_211 = arith.constant 5 : index
    %c0_212 = arith.constant 0 : index
    %464 = vector.load %arg8[%c4_210, %c5_211, %c0_212] : memref<6x8x256xf32, #tpu.memory_space<vmem>>, vector<1x1x128xf32>
    %465 = vector.shape_cast %464 : vector<1x1x128xf32> to vector<1x128xf32>
    %c4_213 = arith.constant 4 : index
    %c6_214 = arith.constant 6 : index
    %c0_215 = arith.constant 0 : index
    %466 = vector.load %arg8[%c4_213, %c6_214, %c0_215] : memref<6x8x256xf32, #tpu.memory_space<vmem>>, vector<1x1x128xf32>
    %467 = vector.shape_cast %466 : vector<1x1x128xf32> to vector<1x128xf32>
    %468 = arith.mulf %463, %463 : vector<2x128xf32>
    %469 = vector.shape_cast %463 : vector<2x128xf32> to vector<1x2x128xf32>
    %470 = vector.shape_cast %468 : vector<2x128xf32> to vector<1x2x128xf32>
    %471 = tpu.concatenate %469, %470 in 0 : vector<1x2x128xf32>, vector<1x2x128xf32> -> vector<2x2x128xf32>
    %cst_216 = arith.constant dense<0.000000e+00> : vector<2x2xf32>
    %472 = vector.multi_reduction <add>, %471, %cst_216 [2] : vector<2x2x128xf32> to vector<2x2xf32>
    %473 = vector.shape_cast %472 : vector<2x2xf32> to vector<2x2x1xf32>
    %cst_217 = arith.constant 7.812500e-03 : f32
    %474 = vector.broadcast %cst_217 : f32 to vector<2x2x1xf32>
    %475 = arith.mulf %473, %474 : vector<2x2x1xf32>
    %476 = vector.extract_strided_slice %475 {offsets = [0, 0, 0], sizes = [1, 2, 1], strides = [1, 1, 1]} : vector<2x2x1xf32> to vector<1x2x1xf32>
    %477 = vector.shape_cast %476 : vector<1x2x1xf32> to vector<2x1xf32>
    %478 = vector.extract_strided_slice %475 {offsets = [1, 0, 0], sizes = [1, 2, 1], strides = [1, 1, 1]} : vector<2x2x1xf32> to vector<1x2x1xf32>
    %479 = vector.shape_cast %478 : vector<1x2x1xf32> to vector<2x1xf32>
    %480 = arith.mulf %477, %477 : vector<2x1xf32>
    %481 = arith.subf %479, %480 : vector<2x1xf32>
    %cst_218 = arith.constant 0.000000e+00 : f32
    %482 = vector.broadcast %cst_218 : f32 to vector<2x1xf32>
    %483 = arith.maximumf %481, %482 : vector<2x1xf32>
    %484 = vector.broadcast %477 : vector<2x1xf32> to vector<2x128xf32>
    %485 = arith.subf %463, %484 : vector<2x128xf32>
    %cst_219 = arith.constant 9.99999974E-6 : f32
    %486 = vector.broadcast %cst_219 : f32 to vector<2x1xf32>
    %487 = arith.addf %483, %486 : vector<2x1xf32>
    %488 = math.rsqrt %487 : vector<2x1xf32>
    %489 = vector.broadcast %488 : vector<2x1xf32> to vector<2x128xf32>
    %490 = arith.mulf %485, %489 : vector<2x128xf32>
    %491 = vector.broadcast %465 : vector<1x128xf32> to vector<2x128xf32>
    %492 = arith.mulf %490, %491 : vector<2x128xf32>
    %493 = vector.broadcast %467 : vector<1x128xf32> to vector<2x128xf32>
    %494 = arith.addf %492, %493 : vector<2x128xf32>
    %c5_220 = arith.constant 5 : index
    %c0_221 = arith.constant 0 : index
    %c0_222 = arith.constant 0 : index
    %495 = vector.load %arg5[%c5_220, %c0_221, %c0_222] : memref<6x128x128xbf16, #tpu.memory_space<vmem>>, vector<1x128x128xbf16>
    %496 = vector.shape_cast %495 : vector<1x128x128xbf16> to vector<128x128xbf16>
    %497 = arith.truncf %494 : vector<2x128xf32> to vector<2x128xbf16>
    %cst_223 = arith.constant dense<0.000000e+00> : vector<2x128xf32>
    %498 = tpu.matmul %497, %496, %cst_223 {dimension_numbers = #tpu.dot_dimension_numbers<[1], [0], [0], [1], [0, 0, 1, 1], [], []>} : vector<2x128xbf16>, vector<128x128xbf16>, vector<2x128xf32> -> vector<2x128xf32>
    %c5_224 = arith.constant 5 : index
    %c0_225 = arith.constant 0 : index
    %c0_226 = arith.constant 0 : index
    %499 = vector.load %arg8[%c5_224, %c0_225, %c0_226] : memref<6x8x256xf32, #tpu.memory_space<vmem>>, vector<1x1x128xf32>
    %500 = vector.shape_cast %499 : vector<1x1x128xf32> to vector<1x128xf32>
    %501 = vector.broadcast %500 : vector<1x128xf32> to vector<2x128xf32>
    %502 = arith.addf %498, %501 : vector<2x128xf32>
    %503 = arith.addf %494, %502 : vector<2x128xf32>
    %c5_227 = arith.constant 5 : index
    %c3_228 = arith.constant 3 : index
    %c0_229 = arith.constant 0 : index
    %504 = vector.load %arg8[%c5_227, %c3_228, %c0_229] : memref<6x8x256xf32, #tpu.memory_space<vmem>>, vector<1x1x128xf32>
    %505 = vector.shape_cast %504 : vector<1x1x128xf32> to vector<1x128xf32>
    %c5_230 = arith.constant 5 : index
    %c4_231 = arith.constant 4 : index
    %c0_232 = arith.constant 0 : index
    %506 = vector.load %arg8[%c5_230, %c4_231, %c0_232] : memref<6x8x256xf32, #tpu.memory_space<vmem>>, vector<1x1x128xf32>
    %507 = vector.shape_cast %506 : vector<1x1x128xf32> to vector<1x128xf32>
    %508 = arith.mulf %503, %503 : vector<2x128xf32>
    %509 = vector.shape_cast %503 : vector<2x128xf32> to vector<1x2x128xf32>
    %510 = vector.shape_cast %508 : vector<2x128xf32> to vector<1x2x128xf32>
    %511 = tpu.concatenate %509, %510 in 0 : vector<1x2x128xf32>, vector<1x2x128xf32> -> vector<2x2x128xf32>
    %cst_233 = arith.constant dense<0.000000e+00> : vector<2x2xf32>
    %512 = vector.multi_reduction <add>, %511, %cst_233 [2] : vector<2x2x128xf32> to vector<2x2xf32>
    %513 = vector.shape_cast %512 : vector<2x2xf32> to vector<2x2x1xf32>
    %cst_234 = arith.constant 7.812500e-03 : f32
    %514 = vector.broadcast %cst_234 : f32 to vector<2x2x1xf32>
    %515 = arith.mulf %513, %514 : vector<2x2x1xf32>
    %516 = vector.extract_strided_slice %515 {offsets = [0, 0, 0], sizes = [1, 2, 1], strides = [1, 1, 1]} : vector<2x2x1xf32> to vector<1x2x1xf32>
    %517 = vector.shape_cast %516 : vector<1x2x1xf32> to vector<2x1xf32>
    %518 = vector.extract_strided_slice %515 {offsets = [1, 0, 0], sizes = [1, 2, 1], strides = [1, 1, 1]} : vector<2x2x1xf32> to vector<1x2x1xf32>
    %519 = vector.shape_cast %518 : vector<1x2x1xf32> to vector<2x1xf32>
    %520 = arith.mulf %517, %517 : vector<2x1xf32>
    %521 = arith.subf %519, %520 : vector<2x1xf32>
    %cst_235 = arith.constant 0.000000e+00 : f32
    %522 = vector.broadcast %cst_235 : f32 to vector<2x1xf32>
    %523 = arith.maximumf %521, %522 : vector<2x1xf32>
    %524 = vector.broadcast %517 : vector<2x1xf32> to vector<2x128xf32>
    %525 = arith.subf %503, %524 : vector<2x128xf32>
    %cst_236 = arith.constant 9.99999974E-6 : f32
    %526 = vector.broadcast %cst_236 : f32 to vector<2x1xf32>
    %527 = arith.addf %523, %526 : vector<2x1xf32>
    %528 = math.rsqrt %527 : vector<2x1xf32>
    %529 = vector.broadcast %528 : vector<2x1xf32> to vector<2x128xf32>
    %530 = arith.mulf %525, %529 : vector<2x128xf32>
    %531 = vector.broadcast %505 : vector<1x128xf32> to vector<2x128xf32>
    %532 = arith.mulf %530, %531 : vector<2x128xf32>
    %533 = vector.broadcast %507 : vector<1x128xf32> to vector<2x128xf32>
    %534 = arith.addf %532, %533 : vector<2x128xf32>
    %c5_237 = arith.constant 5 : index
    %c0_238 = arith.constant 0 : index
    %c0_239 = arith.constant 0 : index
    %535 = vector.load %arg6[%c5_237, %c0_238, %c0_239] : memref<6x128x256xbf16, #tpu.memory_space<vmem>>, vector<1x128x256xbf16>
    %536 = vector.shape_cast %535 : vector<1x128x256xbf16> to vector<128x256xbf16>
    %537 = arith.truncf %534 : vector<2x128xf32> to vector<2x128xbf16>
    %cst_240 = arith.constant dense<0.000000e+00> : vector<2x256xf32>
    %538 = tpu.matmul %537, %536, %cst_240 {dimension_numbers = #tpu.dot_dimension_numbers<[1], [0], [0], [1], [0, 0, 1, 1], [], []>} : vector<2x128xbf16>, vector<128x256xbf16>, vector<2x256xf32> -> vector<2x256xf32>
    %c5_241 = arith.constant 5 : index
    %c1_242 = arith.constant 1 : index
    %c0_243 = arith.constant 0 : index
    %539 = vector.load %arg8[%c5_241, %c1_242, %c0_243] : memref<6x8x256xf32, #tpu.memory_space<vmem>>, vector<1x1x256xf32>
    %540 = vector.shape_cast %539 : vector<1x1x256xf32> to vector<1x256xf32>
    %541 = vector.broadcast %540 : vector<1x256xf32> to vector<2x256xf32>
    %542 = arith.addf %538, %541 : vector<2x256xf32>
    %cst_244 = arith.constant 0.000000e+00 : f32
    %543 = vector.broadcast %cst_244 : f32 to vector<2x256xf32>
    %544 = arith.maximumf %542, %543 : vector<2x256xf32>
    %c5_245 = arith.constant 5 : index
    %c0_246 = arith.constant 0 : index
    %c0_247 = arith.constant 0 : index
    %545 = vector.load %arg7[%c5_245, %c0_246, %c0_247] : memref<6x256x128xbf16, #tpu.memory_space<vmem>>, vector<1x256x128xbf16>
    %546 = vector.shape_cast %545 : vector<1x256x128xbf16> to vector<256x128xbf16>
    %547 = arith.truncf %544 : vector<2x256xf32> to vector<2x256xbf16>
    %cst_248 = arith.constant dense<0.000000e+00> : vector<2x128xf32>
    %548 = tpu.matmul %547, %546, %cst_248 {dimension_numbers = #tpu.dot_dimension_numbers<[1], [0], [0], [1], [0, 0, 1, 1], [], []>} : vector<2x256xbf16>, vector<256x128xbf16>, vector<2x128xf32> -> vector<2x128xf32>
    %c5_249 = arith.constant 5 : index
    %c2_250 = arith.constant 2 : index
    %c0_251 = arith.constant 0 : index
    %549 = vector.load %arg8[%c5_249, %c2_250, %c0_251] : memref<6x8x256xf32, #tpu.memory_space<vmem>>, vector<1x1x128xf32>
    %550 = vector.shape_cast %549 : vector<1x1x128xf32> to vector<1x128xf32>
    %551 = vector.broadcast %550 : vector<1x128xf32> to vector<2x128xf32>
    %552 = arith.addf %548, %551 : vector<2x128xf32>
    %553 = arith.addf %534, %552 : vector<2x128xf32>
    %c5_252 = arith.constant 5 : index
    %c5_253 = arith.constant 5 : index
    %c0_254 = arith.constant 0 : index
    %554 = vector.load %arg8[%c5_252, %c5_253, %c0_254] : memref<6x8x256xf32, #tpu.memory_space<vmem>>, vector<1x1x128xf32>
    %555 = vector.shape_cast %554 : vector<1x1x128xf32> to vector<1x128xf32>
    %c5_255 = arith.constant 5 : index
    %c6_256 = arith.constant 6 : index
    %c0_257 = arith.constant 0 : index
    %556 = vector.load %arg8[%c5_255, %c6_256, %c0_257] : memref<6x8x256xf32, #tpu.memory_space<vmem>>, vector<1x1x128xf32>
    %557 = vector.shape_cast %556 : vector<1x1x128xf32> to vector<1x128xf32>
    %558 = arith.mulf %553, %553 : vector<2x128xf32>
    %559 = vector.shape_cast %553 : vector<2x128xf32> to vector<1x2x128xf32>
    %560 = vector.shape_cast %558 : vector<2x128xf32> to vector<1x2x128xf32>
    %561 = tpu.concatenate %559, %560 in 0 : vector<1x2x128xf32>, vector<1x2x128xf32> -> vector<2x2x128xf32>
    %cst_258 = arith.constant dense<0.000000e+00> : vector<2x2xf32>
    %562 = vector.multi_reduction <add>, %561, %cst_258 [2] : vector<2x2x128xf32> to vector<2x2xf32>
    %563 = vector.shape_cast %562 : vector<2x2xf32> to vector<2x2x1xf32>
    %cst_259 = arith.constant 7.812500e-03 : f32
    %564 = vector.broadcast %cst_259 : f32 to vector<2x2x1xf32>
    %565 = arith.mulf %563, %564 : vector<2x2x1xf32>
    %566 = vector.extract_strided_slice %565 {offsets = [0, 0, 0], sizes = [1, 2, 1], strides = [1, 1, 1]} : vector<2x2x1xf32> to vector<1x2x1xf32>
    %567 = vector.shape_cast %566 : vector<1x2x1xf32> to vector<2x1xf32>
    %568 = vector.extract_strided_slice %565 {offsets = [1, 0, 0], sizes = [1, 2, 1], strides = [1, 1, 1]} : vector<2x2x1xf32> to vector<1x2x1xf32>
    %569 = vector.shape_cast %568 : vector<1x2x1xf32> to vector<2x1xf32>
    %570 = arith.mulf %567, %567 : vector<2x1xf32>
    %571 = arith.subf %569, %570 : vector<2x1xf32>
    %cst_260 = arith.constant 0.000000e+00 : f32
    %572 = vector.broadcast %cst_260 : f32 to vector<2x1xf32>
    %573 = arith.maximumf %571, %572 : vector<2x1xf32>
    %574 = vector.broadcast %567 : vector<2x1xf32> to vector<2x128xf32>
    %575 = arith.subf %553, %574 : vector<2x128xf32>
    %cst_261 = arith.constant 9.99999974E-6 : f32
    %576 = vector.broadcast %cst_261 : f32 to vector<2x1xf32>
    %577 = arith.addf %573, %576 : vector<2x1xf32>
    %578 = math.rsqrt %577 : vector<2x1xf32>
    %579 = vector.broadcast %578 : vector<2x1xf32> to vector<2x128xf32>
    %580 = arith.mulf %575, %579 : vector<2x128xf32>
    %581 = vector.broadcast %555 : vector<1x128xf32> to vector<2x128xf32>
    %582 = arith.mulf %580, %581 : vector<2x128xf32>
    %583 = vector.broadcast %557 : vector<1x128xf32> to vector<2x128xf32>
    %584 = arith.addf %582, %583 : vector<2x128xf32>
    %c2_262 = arith.constant 2 : index
    %c0_263 = arith.constant 0 : index
    %585 = vector.load %arg4[%c2_262, %c0_263] : memref<8x128xf32, #tpu.memory_space<vmem>>, vector<1x128xf32>
    %c3_264 = arith.constant 3 : index
    %c0_265 = arith.constant 0 : index
    %586 = vector.load %arg4[%c3_264, %c0_265] : memref<8x128xf32, #tpu.memory_space<vmem>>, vector<1x128xf32>
    %587 = arith.mulf %584, %584 : vector<2x128xf32>
    %588 = vector.shape_cast %584 : vector<2x128xf32> to vector<1x2x128xf32>
    %589 = vector.shape_cast %587 : vector<2x128xf32> to vector<1x2x128xf32>
    %590 = tpu.concatenate %588, %589 in 0 : vector<1x2x128xf32>, vector<1x2x128xf32> -> vector<2x2x128xf32>
    %cst_266 = arith.constant dense<0.000000e+00> : vector<2x2xf32>
    %591 = vector.multi_reduction <add>, %590, %cst_266 [2] : vector<2x2x128xf32> to vector<2x2xf32>
    %592 = vector.shape_cast %591 : vector<2x2xf32> to vector<2x2x1xf32>
    %cst_267 = arith.constant 7.812500e-03 : f32
    %593 = vector.broadcast %cst_267 : f32 to vector<2x2x1xf32>
    %594 = arith.mulf %592, %593 : vector<2x2x1xf32>
    %595 = vector.extract_strided_slice %594 {offsets = [0, 0, 0], sizes = [1, 2, 1], strides = [1, 1, 1]} : vector<2x2x1xf32> to vector<1x2x1xf32>
    %596 = vector.shape_cast %595 : vector<1x2x1xf32> to vector<2x1xf32>
    %597 = vector.extract_strided_slice %594 {offsets = [1, 0, 0], sizes = [1, 2, 1], strides = [1, 1, 1]} : vector<2x2x1xf32> to vector<1x2x1xf32>
    %598 = vector.shape_cast %597 : vector<1x2x1xf32> to vector<2x1xf32>
    %599 = arith.mulf %596, %596 : vector<2x1xf32>
    %600 = arith.subf %598, %599 : vector<2x1xf32>
    %cst_268 = arith.constant 0.000000e+00 : f32
    %601 = vector.broadcast %cst_268 : f32 to vector<2x1xf32>
    %602 = arith.maximumf %600, %601 : vector<2x1xf32>
    %603 = vector.broadcast %596 : vector<2x1xf32> to vector<2x128xf32>
    %604 = arith.subf %584, %603 : vector<2x128xf32>
    %cst_269 = arith.constant 9.99999974E-6 : f32
    %605 = vector.broadcast %cst_269 : f32 to vector<2x1xf32>
    %606 = arith.addf %602, %605 : vector<2x1xf32>
    %607 = math.rsqrt %606 : vector<2x1xf32>
    %608 = vector.broadcast %607 : vector<2x1xf32> to vector<2x128xf32>
    %609 = arith.mulf %604, %608 : vector<2x128xf32>
    %610 = vector.broadcast %585 : vector<1x128xf32> to vector<2x128xf32>
    %611 = arith.mulf %609, %610 : vector<2x128xf32>
    %612 = vector.broadcast %586 : vector<1x128xf32> to vector<2x128xf32>
    %613 = arith.addf %611, %612 : vector<2x128xf32>
    %c0_i32_270 = arith.constant 0 : i32
    %614 = tpu.memref_slice %arg24[%c0_i32_270] : memref<7x!tpu.dma_semaphore, #tpu.memory_space<semaphore_mem>> -> memref<1x!tpu.dma_semaphore, #tpu.memory_space<semaphore_mem>>
    %615 = tpu.memref_squeeze %614 : memref<1x!tpu.dma_semaphore, #tpu.memory_space<semaphore_mem>> -> memref<!tpu.dma_semaphore, #tpu.memory_space<semaphore_mem>>
    tpu.wait_dma2 semaphore(%615 : memref<!tpu.dma_semaphore, #tpu.memory_space<semaphore_mem>>) src(%arg9 : memref<128x256xbf16, #tpu.memory_space<any>>) dst(%arg17 : memref<128x256xbf16, #tpu.memory_space<vmem>>)
    %c1_i32_271 = arith.constant 1 : i32
    %616 = tpu.memref_slice %arg24[%c1_i32_271] : memref<7x!tpu.dma_semaphore, #tpu.memory_space<semaphore_mem>> -> memref<1x!tpu.dma_semaphore, #tpu.memory_space<semaphore_mem>>
    %617 = tpu.memref_squeeze %616 : memref<1x!tpu.dma_semaphore, #tpu.memory_space<semaphore_mem>> -> memref<!tpu.dma_semaphore, #tpu.memory_space<semaphore_mem>>
    tpu.wait_dma2 semaphore(%617 : memref<!tpu.dma_semaphore, #tpu.memory_space<semaphore_mem>>) src(%arg10 : memref<128x128xbf16, #tpu.memory_space<any>>) dst(%arg18 : memref<128x128xbf16, #tpu.memory_space<vmem>>)
    %c2_i32_272 = arith.constant 2 : i32
    %618 = tpu.memref_slice %arg24[%c2_i32_272] : memref<7x!tpu.dma_semaphore, #tpu.memory_space<semaphore_mem>> -> memref<1x!tpu.dma_semaphore, #tpu.memory_space<semaphore_mem>>
    %619 = tpu.memref_squeeze %618 : memref<1x!tpu.dma_semaphore, #tpu.memory_space<semaphore_mem>> -> memref<!tpu.dma_semaphore, #tpu.memory_space<semaphore_mem>>
    tpu.wait_dma2 semaphore(%619 : memref<!tpu.dma_semaphore, #tpu.memory_space<semaphore_mem>>) src(%arg11 : memref<128x256xbf16, #tpu.memory_space<any>>) dst(%arg19 : memref<128x256xbf16, #tpu.memory_space<vmem>>)
    %c3_i32_273 = arith.constant 3 : i32
    %620 = tpu.memref_slice %arg24[%c3_i32_273] : memref<7x!tpu.dma_semaphore, #tpu.memory_space<semaphore_mem>> -> memref<1x!tpu.dma_semaphore, #tpu.memory_space<semaphore_mem>>
    %621 = tpu.memref_squeeze %620 : memref<1x!tpu.dma_semaphore, #tpu.memory_space<semaphore_mem>> -> memref<!tpu.dma_semaphore, #tpu.memory_space<semaphore_mem>>
    tpu.wait_dma2 semaphore(%621 : memref<!tpu.dma_semaphore, #tpu.memory_space<semaphore_mem>>) src(%arg12 : memref<256x128xbf16, #tpu.memory_space<any>>) dst(%arg20 : memref<256x128xbf16, #tpu.memory_space<vmem>>)
    %c4_i32_274 = arith.constant 4 : i32
    %622 = tpu.memref_slice %arg24[%c4_i32_274] : memref<7x!tpu.dma_semaphore, #tpu.memory_space<semaphore_mem>> -> memref<1x!tpu.dma_semaphore, #tpu.memory_space<semaphore_mem>>
    %623 = tpu.memref_squeeze %622 : memref<1x!tpu.dma_semaphore, #tpu.memory_space<semaphore_mem>> -> memref<!tpu.dma_semaphore, #tpu.memory_space<semaphore_mem>>
    tpu.wait_dma2 semaphore(%623 : memref<!tpu.dma_semaphore, #tpu.memory_space<semaphore_mem>>) src(%arg13 : memref<256x512xbf16, #tpu.memory_space<any>>) dst(%arg21 : memref<256x512xbf16, #tpu.memory_space<vmem>>)
    %c5_i32_275 = arith.constant 5 : i32
    %624 = tpu.memref_slice %arg24[%c5_i32_275] : memref<7x!tpu.dma_semaphore, #tpu.memory_space<semaphore_mem>> -> memref<1x!tpu.dma_semaphore, #tpu.memory_space<semaphore_mem>>
    %625 = tpu.memref_squeeze %624 : memref<1x!tpu.dma_semaphore, #tpu.memory_space<semaphore_mem>> -> memref<!tpu.dma_semaphore, #tpu.memory_space<semaphore_mem>>
    tpu.wait_dma2 semaphore(%625 : memref<!tpu.dma_semaphore, #tpu.memory_space<semaphore_mem>>) src(%arg14 : memref<32x128xbf16, #tpu.memory_space<any>>) dst(%arg22 : memref<32x128xbf16, #tpu.memory_space<vmem>>)
    %c6_i32_276 = arith.constant 6 : i32
    %626 = tpu.memref_slice %arg24[%c6_i32_276] : memref<7x!tpu.dma_semaphore, #tpu.memory_space<semaphore_mem>> -> memref<1x!tpu.dma_semaphore, #tpu.memory_space<semaphore_mem>>
    %627 = tpu.memref_squeeze %626 : memref<1x!tpu.dma_semaphore, #tpu.memory_space<semaphore_mem>> -> memref<!tpu.dma_semaphore, #tpu.memory_space<semaphore_mem>>
    tpu.wait_dma2 semaphore(%627 : memref<!tpu.dma_semaphore, #tpu.memory_space<semaphore_mem>>) src(%arg15 : memref<16x512xf32, #tpu.memory_space<any>>) dst(%arg23 : memref<16x512xf32, #tpu.memory_space<vmem>>)
    %c0_277 = arith.constant 0 : index
    %c0_278 = arith.constant 0 : index
    %628 = vector.load %arg18[%c0_277, %c0_278] : memref<128x128xbf16, #tpu.memory_space<vmem>>, vector<128x128xbf16>
    %629 = arith.truncf %613 : vector<2x128xf32> to vector<2x128xbf16>
    %cst_279 = arith.constant dense<0.000000e+00> : vector<2x128xf32>
    %630 = tpu.matmul %629, %628, %cst_279 {dimension_numbers = #tpu.dot_dimension_numbers<[1], [0], [0], [1], [0, 0, 1, 1], [], []>} : vector<2x128xbf16>, vector<128x128xbf16>, vector<2x128xf32> -> vector<2x128xf32>
    %c1_280 = arith.constant 1 : index
    %c0_281 = arith.constant 0 : index
    %631 = vector.load %arg23[%c1_280, %c0_281] : memref<16x512xf32, #tpu.memory_space<vmem>>, vector<1x128xf32>
    %632 = vector.broadcast %631 : vector<1x128xf32> to vector<2x128xf32>
    %633 = arith.addf %630, %632 : vector<2x128xf32>
    %634 = tpu.iota {dimensions = array<i32: 1>} : vector<2x128xi32>
    %635 = tpu.iota {dimensions = array<i32: 1>} : vector<2x32xi32>
    %636 = tpu.iota {dimensions = array<i32: 1>} : vector<1x128xi32>
    %c32_i32 = arith.constant 32 : i32
    %637 = vector.broadcast %c32_i32 : i32 to vector<1x128xi32>
    %638 = arith.cmpi slt, %636, %637 : vector<1x128xi32>
    %cst_282 = arith.constant 0.000000e+00 : f32
    %cst_283 = arith.constant -1.000000e+30 : f32
    %639 = vector.broadcast %cst_282 : f32 to vector<1x128xf32>
    %640 = vector.broadcast %cst_283 : f32 to vector<1x128xf32>
    %641 = arith.select %638, %639, %640 : vector<1x128xi1>, vector<1x128xf32>
    %642 = tpu.iota {dimensions = array<i32: 1>} : vector<1x32xi32>
    %c1_i32_284 = arith.constant 1 : i32
    %643 = vector.broadcast %c1_i32_284 : i32 to vector<1x32xi32>
    %644 = arith.cmpi eq, %642, %643 : vector<1x32xi32>
    %645 = arith.extui %644 : vector<1x32xi1> to vector<1x32xi32>
    %646 = arith.sitofp %645 : vector<1x32xi32> to vector<1x32xf32>
    %647 = arith.truncf %646 : vector<1x32xf32> to vector<1x32xbf16>
    %c0_285 = arith.constant 0 : index
    %c0_286 = arith.constant 0 : index
    %648 = vector.load %arg22[%c0_285, %c0_286] : memref<32x128xbf16, #tpu.memory_space<vmem>>, vector<32x128xbf16>
    %cst_287 = arith.constant dense<0.000000e+00> : vector<1x128xf32>
    %649 = tpu.matmul %647, %648, %cst_287 {dimension_numbers = #tpu.dot_dimension_numbers<[1], [0], [0], [1], [0, 0, 1, 1], [], []>} : vector<1x32xbf16>, vector<32x128xbf16>, vector<1x128xf32> -> vector<1x128xf32>
    %650 = vector.shape_cast %649 : vector<1x128xf32> to vector<1x128xf32>
    %651 = vector.broadcast %650 : vector<1x128xf32> to vector<2x128xf32>
    %c13 = arith.constant 13 : index
    %c0_288 = arith.constant 0 : index
    %652 = vector.load %arg23[%c13, %c0_288] : memref<16x512xf32, #tpu.memory_space<vmem>>, vector<1x128xf32>
    %653 = tpu.concatenate %651, %44 in 1 : vector<2x128xf32>, vector<2x128xf32> -> vector<2x256xf32>
    %c0_289 = arith.constant 0 : index
    %c0_290 = arith.constant 0 : index
    %654 = vector.load %arg21[%c0_289, %c0_290] : memref<256x512xbf16, #tpu.memory_space<vmem>>, vector<256x512xbf16>
    %655 = arith.truncf %653 : vector<2x256xf32> to vector<2x256xbf16>
    %cst_291 = arith.constant dense<0.000000e+00> : vector<2x512xf32>
    %656 = tpu.matmul %655, %654, %cst_291 {dimension_numbers = #tpu.dot_dimension_numbers<[1], [0], [0], [1], [0, 0, 1, 1], [], []>} : vector<2x256xbf16>, vector<256x512xbf16>, vector<2x512xf32> -> vector<2x512xf32>
    %c12 = arith.constant 12 : index
    %c0_292 = arith.constant 0 : index
    %657 = vector.load %arg23[%c12, %c0_292] : memref<16x512xf32, #tpu.memory_space<vmem>>, vector<1x512xf32>
    %658 = vector.broadcast %657 : vector<1x512xf32> to vector<2x512xf32>
    %659 = arith.addf %656, %658 : vector<2x512xf32>
    %660 = vector.extract_strided_slice %659 {offsets = [0, 0], sizes = [2, 128], strides = [1, 1]} : vector<2x512xf32> to vector<2x128xf32>
    %661 = arith.negf %660 : vector<2x128xf32>
    %662 = math.exp %661 : vector<2x128xf32>
    %cst_293 = arith.constant 1.000000e+00 : f32
    %663 = vector.broadcast %cst_293 : f32 to vector<2x128xf32>
    %664 = arith.addf %663, %662 : vector<2x128xf32>
    %665 = arith.divf %663, %664 : vector<2x128xf32>
    %666 = vector.extract_strided_slice %659 {offsets = [0, 128], sizes = [2, 128], strides = [1, 1]} : vector<2x512xf32> to vector<2x128xf32>
    %667 = arith.negf %666 : vector<2x128xf32>
    %668 = math.exp %667 : vector<2x128xf32>
    %cst_294 = arith.constant 1.000000e+00 : f32
    %669 = vector.broadcast %cst_294 : f32 to vector<2x128xf32>
    %670 = arith.addf %669, %668 : vector<2x128xf32>
    %671 = arith.divf %669, %670 : vector<2x128xf32>
    %672 = vector.extract_strided_slice %659 {offsets = [0, 256], sizes = [2, 128], strides = [1, 1]} : vector<2x512xf32> to vector<2x128xf32>
    %673 = math.tanh %672 : vector<2x128xf32>
    %674 = vector.extract_strided_slice %659 {offsets = [0, 384], sizes = [2, 128], strides = [1, 1]} : vector<2x512xf32> to vector<2x128xf32>
    %675 = arith.negf %674 : vector<2x128xf32>
    %676 = math.exp %675 : vector<2x128xf32>
    %cst_295 = arith.constant 1.000000e+00 : f32
    %677 = vector.broadcast %cst_295 : f32 to vector<2x128xf32>
    %678 = arith.addf %677, %676 : vector<2x128xf32>
    %679 = arith.divf %677, %678 : vector<2x128xf32>
    %680 = arith.mulf %671, %44 : vector<2x128xf32>
    %681 = arith.mulf %665, %673 : vector<2x128xf32>
    %682 = arith.addf %680, %681 : vector<2x128xf32>
    %683 = math.tanh %682 : vector<2x128xf32>
    %684 = arith.mulf %679, %683 : vector<2x128xf32>
    %c0_296 = arith.constant 0 : index
    %c0_297 = arith.constant 0 : index
    %685 = vector.load %arg17[%c0_296, %c0_297] : memref<128x256xbf16, #tpu.memory_space<vmem>>, vector<128x256xbf16>
    %686 = arith.truncf %684 : vector<2x128xf32> to vector<2x128xbf16>
    %cst_298 = arith.constant dense<0.000000e+00> : vector<2x256xf32>
    %687 = tpu.matmul %686, %685, %cst_298 {dimension_numbers = #tpu.dot_dimension_numbers<[1], [0], [0], [1], [0, 0, 1, 1], [], []>} : vector<2x128xbf16>, vector<128x256xbf16>, vector<2x256xf32> -> vector<2x256xf32>
    %688 = vector.extract_strided_slice %687 {offsets = [0, 0], sizes = [2, 128], strides = [1, 1]} : vector<2x256xf32> to vector<2x128xf32>
    %c0_299 = arith.constant 0 : index
    %c0_300 = arith.constant 0 : index
    %689 = vector.load %arg23[%c0_299, %c0_300] : memref<16x512xf32, #tpu.memory_space<vmem>>, vector<1x128xf32>
    %690 = vector.broadcast %689 : vector<1x128xf32> to vector<2x128xf32>
    %691 = arith.addf %688, %690 : vector<2x128xf32>
    %692 = vector.extract_strided_slice %687 {offsets = [0, 128], sizes = [2, 128], strides = [1, 1]} : vector<2x256xf32> to vector<2x128xf32>
    %693 = vector.broadcast %652 : vector<1x128xf32> to vector<2x128xf32>
    %694 = arith.addf %692, %693 : vector<2x128xf32>
    %695 = vector.broadcast %641 : vector<1x128xf32> to vector<2x128xf32>
    %696 = arith.addf %694, %695 : vector<2x128xf32>
    %697 = arith.addf %684, %691 : vector<2x128xf32>
    %c2_301 = arith.constant 2 : index
    %c0_302 = arith.constant 0 : index
    %698 = vector.load %arg23[%c2_301, %c0_302] : memref<16x512xf32, #tpu.memory_space<vmem>>, vector<1x128xf32>
    %c3_303 = arith.constant 3 : index
    %c0_304 = arith.constant 0 : index
    %699 = vector.load %arg23[%c3_303, %c0_304] : memref<16x512xf32, #tpu.memory_space<vmem>>, vector<1x128xf32>
    %700 = arith.mulf %697, %697 : vector<2x128xf32>
    %701 = vector.shape_cast %697 : vector<2x128xf32> to vector<1x2x128xf32>
    %702 = vector.shape_cast %700 : vector<2x128xf32> to vector<1x2x128xf32>
    %703 = tpu.concatenate %701, %702 in 0 : vector<1x2x128xf32>, vector<1x2x128xf32> -> vector<2x2x128xf32>
    %cst_305 = arith.constant dense<0.000000e+00> : vector<2x2xf32>
    %704 = vector.multi_reduction <add>, %703, %cst_305 [2] : vector<2x2x128xf32> to vector<2x2xf32>
    %705 = vector.shape_cast %704 : vector<2x2xf32> to vector<2x2x1xf32>
    %cst_306 = arith.constant 7.812500e-03 : f32
    %706 = vector.broadcast %cst_306 : f32 to vector<2x2x1xf32>
    %707 = arith.mulf %705, %706 : vector<2x2x1xf32>
    %708 = vector.extract_strided_slice %707 {offsets = [0, 0, 0], sizes = [1, 2, 1], strides = [1, 1, 1]} : vector<2x2x1xf32> to vector<1x2x1xf32>
    %709 = vector.shape_cast %708 : vector<1x2x1xf32> to vector<2x1xf32>
    %710 = vector.extract_strided_slice %707 {offsets = [1, 0, 0], sizes = [1, 2, 1], strides = [1, 1, 1]} : vector<2x2x1xf32> to vector<1x2x1xf32>
    %711 = vector.shape_cast %710 : vector<1x2x1xf32> to vector<2x1xf32>
    %712 = arith.mulf %709, %709 : vector<2x1xf32>
    %713 = arith.subf %711, %712 : vector<2x1xf32>
    %cst_307 = arith.constant 0.000000e+00 : f32
    %714 = vector.broadcast %cst_307 : f32 to vector<2x1xf32>
    %715 = arith.maximumf %713, %714 : vector<2x1xf32>
    %716 = vector.broadcast %709 : vector<2x1xf32> to vector<2x128xf32>
    %717 = arith.subf %697, %716 : vector<2x128xf32>
    %cst_308 = arith.constant 9.99999974E-6 : f32
    %718 = vector.broadcast %cst_308 : f32 to vector<2x1xf32>
    %719 = arith.addf %715, %718 : vector<2x1xf32>
    %720 = math.rsqrt %719 : vector<2x1xf32>
    %721 = vector.broadcast %720 : vector<2x1xf32> to vector<2x128xf32>
    %722 = arith.mulf %717, %721 : vector<2x128xf32>
    %723 = vector.broadcast %698 : vector<1x128xf32> to vector<2x128xf32>
    %724 = arith.mulf %722, %723 : vector<2x128xf32>
    %725 = vector.broadcast %699 : vector<1x128xf32> to vector<2x128xf32>
    %726 = arith.addf %724, %725 : vector<2x128xf32>
    %727 = arith.addf %726, %633 : vector<2x128xf32>
    %c4_309 = arith.constant 4 : index
    %c0_310 = arith.constant 0 : index
    %728 = vector.load %arg23[%c4_309, %c0_310] : memref<16x512xf32, #tpu.memory_space<vmem>>, vector<1x128xf32>
    %c5_311 = arith.constant 5 : index
    %c0_312 = arith.constant 0 : index
    %729 = vector.load %arg23[%c5_311, %c0_312] : memref<16x512xf32, #tpu.memory_space<vmem>>, vector<1x128xf32>
    %730 = arith.mulf %727, %727 : vector<2x128xf32>
    %731 = vector.shape_cast %727 : vector<2x128xf32> to vector<1x2x128xf32>
    %732 = vector.shape_cast %730 : vector<2x128xf32> to vector<1x2x128xf32>
    %733 = tpu.concatenate %731, %732 in 0 : vector<1x2x128xf32>, vector<1x2x128xf32> -> vector<2x2x128xf32>
    %cst_313 = arith.constant dense<0.000000e+00> : vector<2x2xf32>
    %734 = vector.multi_reduction <add>, %733, %cst_313 [2] : vector<2x2x128xf32> to vector<2x2xf32>
    %735 = vector.shape_cast %734 : vector<2x2xf32> to vector<2x2x1xf32>
    %cst_314 = arith.constant 7.812500e-03 : f32
    %736 = vector.broadcast %cst_314 : f32 to vector<2x2x1xf32>
    %737 = arith.mulf %735, %736 : vector<2x2x1xf32>
    %738 = vector.extract_strided_slice %737 {offsets = [0, 0, 0], sizes = [1, 2, 1], strides = [1, 1, 1]} : vector<2x2x1xf32> to vector<1x2x1xf32>
    %739 = vector.shape_cast %738 : vector<1x2x1xf32> to vector<2x1xf32>
    %740 = vector.extract_strided_slice %737 {offsets = [1, 0, 0], sizes = [1, 2, 1], strides = [1, 1, 1]} : vector<2x2x1xf32> to vector<1x2x1xf32>
    %741 = vector.shape_cast %740 : vector<1x2x1xf32> to vector<2x1xf32>
    %742 = arith.mulf %739, %739 : vector<2x1xf32>
    %743 = arith.subf %741, %742 : vector<2x1xf32>
    %cst_315 = arith.constant 0.000000e+00 : f32
    %744 = vector.broadcast %cst_315 : f32 to vector<2x1xf32>
    %745 = arith.maximumf %743, %744 : vector<2x1xf32>
    %746 = vector.broadcast %739 : vector<2x1xf32> to vector<2x128xf32>
    %747 = arith.subf %727, %746 : vector<2x128xf32>
    %cst_316 = arith.constant 9.99999974E-6 : f32
    %748 = vector.broadcast %cst_316 : f32 to vector<2x1xf32>
    %749 = arith.addf %745, %748 : vector<2x1xf32>
    %750 = math.rsqrt %749 : vector<2x1xf32>
    %751 = vector.broadcast %750 : vector<2x1xf32> to vector<2x128xf32>
    %752 = arith.mulf %747, %751 : vector<2x128xf32>
    %753 = vector.broadcast %728 : vector<1x128xf32> to vector<2x128xf32>
    %754 = arith.mulf %752, %753 : vector<2x128xf32>
    %755 = vector.broadcast %729 : vector<1x128xf32> to vector<2x128xf32>
    %756 = arith.addf %754, %755 : vector<2x128xf32>
    %c0_317 = arith.constant 0 : index
    %c0_318 = arith.constant 0 : index
    %757 = vector.load %arg19[%c0_317, %c0_318] : memref<128x256xbf16, #tpu.memory_space<vmem>>, vector<128x256xbf16>
    %758 = arith.truncf %756 : vector<2x128xf32> to vector<2x128xbf16>
    %cst_319 = arith.constant dense<0.000000e+00> : vector<2x256xf32>
    %759 = tpu.matmul %758, %757, %cst_319 {dimension_numbers = #tpu.dot_dimension_numbers<[1], [0], [0], [1], [0, 0, 1, 1], [], []>} : vector<2x128xbf16>, vector<128x256xbf16>, vector<2x256xf32> -> vector<2x256xf32>
    %c10 = arith.constant 10 : index
    %c0_320 = arith.constant 0 : index
    %760 = vector.load %arg23[%c10, %c0_320] : memref<16x512xf32, #tpu.memory_space<vmem>>, vector<1x256xf32>
    %761 = vector.broadcast %760 : vector<1x256xf32> to vector<2x256xf32>
    %762 = arith.addf %759, %761 : vector<2x256xf32>
    %cst_321 = arith.constant 0.000000e+00 : f32
    %763 = vector.broadcast %cst_321 : f32 to vector<2x256xf32>
    %764 = arith.maximumf %762, %763 : vector<2x256xf32>
    %c0_322 = arith.constant 0 : index
    %c0_323 = arith.constant 0 : index
    %765 = vector.load %arg20[%c0_322, %c0_323] : memref<256x128xbf16, #tpu.memory_space<vmem>>, vector<256x128xbf16>
    %766 = arith.truncf %764 : vector<2x256xf32> to vector<2x256xbf16>
    %cst_324 = arith.constant dense<0.000000e+00> : vector<2x128xf32>
    %767 = tpu.matmul %766, %765, %cst_324 {dimension_numbers = #tpu.dot_dimension_numbers<[1], [0], [0], [1], [0, 0, 1, 1], [], []>} : vector<2x256xbf16>, vector<256x128xbf16>, vector<2x128xf32> -> vector<2x128xf32>
    %c11 = arith.constant 11 : index
    %c0_325 = arith.constant 0 : index
    %768 = vector.load %arg23[%c11, %c0_325] : memref<16x512xf32, #tpu.memory_space<vmem>>, vector<1x128xf32>
    %769 = vector.broadcast %768 : vector<1x128xf32> to vector<2x128xf32>
    %770 = arith.addf %767, %769 : vector<2x128xf32>
    %771 = arith.addf %756, %770 : vector<2x128xf32>
    %c6_326 = arith.constant 6 : index
    %c0_327 = arith.constant 0 : index
    %772 = vector.load %arg23[%c6_326, %c0_327] : memref<16x512xf32, #tpu.memory_space<vmem>>, vector<1x128xf32>
    %c7 = arith.constant 7 : index
    %c0_328 = arith.constant 0 : index
    %773 = vector.load %arg23[%c7, %c0_328] : memref<16x512xf32, #tpu.memory_space<vmem>>, vector<1x128xf32>
    %774 = arith.mulf %771, %771 : vector<2x128xf32>
    %775 = vector.shape_cast %771 : vector<2x128xf32> to vector<1x2x128xf32>
    %776 = vector.shape_cast %774 : vector<2x128xf32> to vector<1x2x128xf32>
    %777 = tpu.concatenate %775, %776 in 0 : vector<1x2x128xf32>, vector<1x2x128xf32> -> vector<2x2x128xf32>
    %cst_329 = arith.constant dense<0.000000e+00> : vector<2x2xf32>
    %778 = vector.multi_reduction <add>, %777, %cst_329 [2] : vector<2x2x128xf32> to vector<2x2xf32>
    %779 = vector.shape_cast %778 : vector<2x2xf32> to vector<2x2x1xf32>
    %cst_330 = arith.constant 7.812500e-03 : f32
    %780 = vector.broadcast %cst_330 : f32 to vector<2x2x1xf32>
    %781 = arith.mulf %779, %780 : vector<2x2x1xf32>
    %782 = vector.extract_strided_slice %781 {offsets = [0, 0, 0], sizes = [1, 2, 1], strides = [1, 1, 1]} : vector<2x2x1xf32> to vector<1x2x1xf32>
    %783 = vector.shape_cast %782 : vector<1x2x1xf32> to vector<2x1xf32>
    %784 = vector.extract_strided_slice %781 {offsets = [1, 0, 0], sizes = [1, 2, 1], strides = [1, 1, 1]} : vector<2x2x1xf32> to vector<1x2x1xf32>
    %785 = vector.shape_cast %784 : vector<1x2x1xf32> to vector<2x1xf32>
    %786 = arith.mulf %783, %783 : vector<2x1xf32>
    %787 = arith.subf %785, %786 : vector<2x1xf32>
    %cst_331 = arith.constant 0.000000e+00 : f32
    %788 = vector.broadcast %cst_331 : f32 to vector<2x1xf32>
    %789 = arith.maximumf %787, %788 : vector<2x1xf32>
    %790 = vector.broadcast %783 : vector<2x1xf32> to vector<2x128xf32>
    %791 = arith.subf %771, %790 : vector<2x128xf32>
    %cst_332 = arith.constant 9.99999974E-6 : f32
    %792 = vector.broadcast %cst_332 : f32 to vector<2x1xf32>
    %793 = arith.addf %789, %792 : vector<2x1xf32>
    %794 = math.rsqrt %793 : vector<2x1xf32>
    %795 = vector.broadcast %794 : vector<2x1xf32> to vector<2x128xf32>
    %796 = arith.mulf %791, %795 : vector<2x128xf32>
    %797 = vector.broadcast %772 : vector<1x128xf32> to vector<2x128xf32>
    %798 = arith.mulf %796, %797 : vector<2x128xf32>
    %799 = vector.broadcast %773 : vector<1x128xf32> to vector<2x128xf32>
    %800 = arith.addf %798, %799 : vector<2x128xf32>
    %c8 = arith.constant 8 : index
    %c0_333 = arith.constant 0 : index
    %801 = vector.load %arg23[%c8, %c0_333] : memref<16x512xf32, #tpu.memory_space<vmem>>, vector<1x128xf32>
    %c9 = arith.constant 9 : index
    %c0_334 = arith.constant 0 : index
    %802 = vector.load %arg23[%c9, %c0_334] : memref<16x512xf32, #tpu.memory_space<vmem>>, vector<1x128xf32>
    %803 = arith.mulf %800, %800 : vector<2x128xf32>
    %804 = vector.shape_cast %800 : vector<2x128xf32> to vector<1x2x128xf32>
    %805 = vector.shape_cast %803 : vector<2x128xf32> to vector<1x2x128xf32>
    %806 = tpu.concatenate %804, %805 in 0 : vector<1x2x128xf32>, vector<1x2x128xf32> -> vector<2x2x128xf32>
    %cst_335 = arith.constant dense<0.000000e+00> : vector<2x2xf32>
    %807 = vector.multi_reduction <add>, %806, %cst_335 [2] : vector<2x2x128xf32> to vector<2x2xf32>
    %808 = vector.shape_cast %807 : vector<2x2xf32> to vector<2x2x1xf32>
    %cst_336 = arith.constant 7.812500e-03 : f32
    %809 = vector.broadcast %cst_336 : f32 to vector<2x2x1xf32>
    %810 = arith.mulf %808, %809 : vector<2x2x1xf32>
    %811 = vector.extract_strided_slice %810 {offsets = [0, 0, 0], sizes = [1, 2, 1], strides = [1, 1, 1]} : vector<2x2x1xf32> to vector<1x2x1xf32>
    %812 = vector.shape_cast %811 : vector<1x2x1xf32> to vector<2x1xf32>
    %813 = vector.extract_strided_slice %810 {offsets = [1, 0, 0], sizes = [1, 2, 1], strides = [1, 1, 1]} : vector<2x2x1xf32> to vector<1x2x1xf32>
    %814 = vector.shape_cast %813 : vector<1x2x1xf32> to vector<2x1xf32>
    %815 = arith.mulf %812, %812 : vector<2x1xf32>
    %816 = arith.subf %814, %815 : vector<2x1xf32>
    %cst_337 = arith.constant 0.000000e+00 : f32
    %817 = vector.broadcast %cst_337 : f32 to vector<2x1xf32>
    %818 = arith.maximumf %816, %817 : vector<2x1xf32>
    %819 = vector.broadcast %812 : vector<2x1xf32> to vector<2x128xf32>
    %820 = arith.subf %800, %819 : vector<2x128xf32>
    %cst_338 = arith.constant 9.99999974E-6 : f32
    %821 = vector.broadcast %cst_338 : f32 to vector<2x1xf32>
    %822 = arith.addf %818, %821 : vector<2x1xf32>
    %823 = math.rsqrt %822 : vector<2x1xf32>
    %824 = vector.broadcast %823 : vector<2x1xf32> to vector<2x128xf32>
    %825 = arith.mulf %820, %824 : vector<2x128xf32>
    %826 = vector.broadcast %801 : vector<1x128xf32> to vector<2x128xf32>
    %827 = arith.mulf %825, %826 : vector<2x128xf32>
    %828 = vector.broadcast %802 : vector<1x128xf32> to vector<2x128xf32>
    %829 = arith.addf %827, %828 : vector<2x128xf32>
    %cst_339 = arith.constant dense<0xFF800000> : vector<2xf32>
    %830 = vector.multi_reduction <maximumf>, %696, %cst_339 [1] : vector<2x128xf32> to vector<2xf32>
    %831 = vector.shape_cast %830 : vector<2xf32> to vector<2x1xf32>
    %832 = vector.broadcast %831 : vector<2x1xf32> to vector<2x128xf32>
    %833 = arith.cmpf oeq, %696, %832 : vector<2x128xf32>
    %c128_i32 = arith.constant 128 : i32
    %834 = vector.broadcast %c128_i32 : i32 to vector<2x128xi32>
    %835 = arith.select %833, %634, %834 : vector<2x128xi1>, vector<2x128xi32>
    %cst_340 = arith.constant dense<2147483647> : vector<2xi32>
    %836 = vector.multi_reduction <minsi>, %835, %cst_340 [1] : vector<2x128xi32> to vector<2xi32>
    %837 = vector.shape_cast %836 : vector<2xi32> to vector<2x1xi32>
    %838 = vector.broadcast %837 : vector<2x1xi32> to vector<2x32xi32>
    %839 = arith.cmpi eq, %635, %838 : vector<2x32xi32>
    %840 = arith.extui %839 : vector<2x32xi1> to vector<2x32xi32>
    %841 = arith.sitofp %840 : vector<2x32xi32> to vector<2x32xf32>
    %842 = arith.truncf %841 : vector<2x32xf32> to vector<2x32xbf16>
    %c0_341 = arith.constant 0 : index
    %c0_342 = arith.constant 0 : index
    %843 = vector.load %arg22[%c0_341, %c0_342] : memref<32x128xbf16, #tpu.memory_space<vmem>>, vector<32x128xbf16>
    %cst_343 = arith.constant dense<0.000000e+00> : vector<2x128xf32>
    %844 = tpu.matmul %842, %843, %cst_343 {dimension_numbers = #tpu.dot_dimension_numbers<[1], [0], [0], [1], [0, 0, 1, 1], [], []>} : vector<2x32xbf16>, vector<32x128xbf16>, vector<2x128xf32> -> vector<2x128xf32>
    %845 = tpu.concatenate %844, %684 in 1 : vector<2x128xf32>, vector<2x128xf32> -> vector<2x256xf32>
    %c0_344 = arith.constant 0 : index
    %c0_345 = arith.constant 0 : index
    %846 = vector.load %arg21[%c0_344, %c0_345] : memref<256x512xbf16, #tpu.memory_space<vmem>>, vector<256x512xbf16>
    %847 = arith.truncf %845 : vector<2x256xf32> to vector<2x256xbf16>
    %cst_346 = arith.constant dense<0.000000e+00> : vector<2x512xf32>
    %848 = tpu.matmul %847, %846, %cst_346 {dimension_numbers = #tpu.dot_dimension_numbers<[1], [0], [0], [1], [0, 0, 1, 1], [], []>} : vector<2x256xbf16>, vector<256x512xbf16>, vector<2x512xf32> -> vector<2x512xf32>
    %c12_347 = arith.constant 12 : index
    %c0_348 = arith.constant 0 : index
    %849 = vector.load %arg23[%c12_347, %c0_348] : memref<16x512xf32, #tpu.memory_space<vmem>>, vector<1x512xf32>
    %850 = vector.broadcast %849 : vector<1x512xf32> to vector<2x512xf32>
    %851 = arith.addf %848, %850 : vector<2x512xf32>
    %852 = vector.extract_strided_slice %851 {offsets = [0, 0], sizes = [2, 128], strides = [1, 1]} : vector<2x512xf32> to vector<2x128xf32>
    %853 = arith.negf %852 : vector<2x128xf32>
    %854 = math.exp %853 : vector<2x128xf32>
    %cst_349 = arith.constant 1.000000e+00 : f32
    %855 = vector.broadcast %cst_349 : f32 to vector<2x128xf32>
    %856 = arith.addf %855, %854 : vector<2x128xf32>
    %857 = arith.divf %855, %856 : vector<2x128xf32>
    %858 = vector.extract_strided_slice %851 {offsets = [0, 128], sizes = [2, 128], strides = [1, 1]} : vector<2x512xf32> to vector<2x128xf32>
    %859 = arith.negf %858 : vector<2x128xf32>
    %860 = math.exp %859 : vector<2x128xf32>
    %cst_350 = arith.constant 1.000000e+00 : f32
    %861 = vector.broadcast %cst_350 : f32 to vector<2x128xf32>
    %862 = arith.addf %861, %860 : vector<2x128xf32>
    %863 = arith.divf %861, %862 : vector<2x128xf32>
    %864 = vector.extract_strided_slice %851 {offsets = [0, 256], sizes = [2, 128], strides = [1, 1]} : vector<2x512xf32> to vector<2x128xf32>
    %865 = math.tanh %864 : vector<2x128xf32>
    %866 = vector.extract_strided_slice %851 {offsets = [0, 384], sizes = [2, 128], strides = [1, 1]} : vector<2x512xf32> to vector<2x128xf32>
    %867 = arith.negf %866 : vector<2x128xf32>
    %868 = math.exp %867 : vector<2x128xf32>
    %cst_351 = arith.constant 1.000000e+00 : f32
    %869 = vector.broadcast %cst_351 : f32 to vector<2x128xf32>
    %870 = arith.addf %869, %868 : vector<2x128xf32>
    %871 = arith.divf %869, %870 : vector<2x128xf32>
    %872 = arith.mulf %863, %682 : vector<2x128xf32>
    %873 = arith.mulf %857, %865 : vector<2x128xf32>
    %874 = arith.addf %872, %873 : vector<2x128xf32>
    %875 = math.tanh %874 : vector<2x128xf32>
    %876 = arith.mulf %871, %875 : vector<2x128xf32>
    %c0_352 = arith.constant 0 : index
    %c0_353 = arith.constant 0 : index
    %877 = vector.load %arg17[%c0_352, %c0_353] : memref<128x256xbf16, #tpu.memory_space<vmem>>, vector<128x256xbf16>
    %878 = arith.truncf %876 : vector<2x128xf32> to vector<2x128xbf16>
    %cst_354 = arith.constant dense<0.000000e+00> : vector<2x256xf32>
    %879 = tpu.matmul %878, %877, %cst_354 {dimension_numbers = #tpu.dot_dimension_numbers<[1], [0], [0], [1], [0, 0, 1, 1], [], []>} : vector<2x128xbf16>, vector<128x256xbf16>, vector<2x256xf32> -> vector<2x256xf32>
    %880 = vector.extract_strided_slice %879 {offsets = [0, 0], sizes = [2, 128], strides = [1, 1]} : vector<2x256xf32> to vector<2x128xf32>
    %c0_355 = arith.constant 0 : index
    %c0_356 = arith.constant 0 : index
    %881 = vector.load %arg23[%c0_355, %c0_356] : memref<16x512xf32, #tpu.memory_space<vmem>>, vector<1x128xf32>
    %882 = vector.broadcast %881 : vector<1x128xf32> to vector<2x128xf32>
    %883 = arith.addf %880, %882 : vector<2x128xf32>
    %884 = vector.extract_strided_slice %879 {offsets = [0, 128], sizes = [2, 128], strides = [1, 1]} : vector<2x256xf32> to vector<2x128xf32>
    %885 = vector.broadcast %652 : vector<1x128xf32> to vector<2x128xf32>
    %886 = arith.addf %884, %885 : vector<2x128xf32>
    %887 = vector.broadcast %641 : vector<1x128xf32> to vector<2x128xf32>
    %888 = arith.addf %886, %887 : vector<2x128xf32>
    %889 = arith.addf %876, %883 : vector<2x128xf32>
    %c2_357 = arith.constant 2 : index
    %c0_358 = arith.constant 0 : index
    %890 = vector.load %arg23[%c2_357, %c0_358] : memref<16x512xf32, #tpu.memory_space<vmem>>, vector<1x128xf32>
    %c3_359 = arith.constant 3 : index
    %c0_360 = arith.constant 0 : index
    %891 = vector.load %arg23[%c3_359, %c0_360] : memref<16x512xf32, #tpu.memory_space<vmem>>, vector<1x128xf32>
    %892 = arith.mulf %889, %889 : vector<2x128xf32>
    %893 = vector.shape_cast %889 : vector<2x128xf32> to vector<1x2x128xf32>
    %894 = vector.shape_cast %892 : vector<2x128xf32> to vector<1x2x128xf32>
    %895 = tpu.concatenate %893, %894 in 0 : vector<1x2x128xf32>, vector<1x2x128xf32> -> vector<2x2x128xf32>
    %cst_361 = arith.constant dense<0.000000e+00> : vector<2x2xf32>
    %896 = vector.multi_reduction <add>, %895, %cst_361 [2] : vector<2x2x128xf32> to vector<2x2xf32>
    %897 = vector.shape_cast %896 : vector<2x2xf32> to vector<2x2x1xf32>
    %cst_362 = arith.constant 7.812500e-03 : f32
    %898 = vector.broadcast %cst_362 : f32 to vector<2x2x1xf32>
    %899 = arith.mulf %897, %898 : vector<2x2x1xf32>
    %900 = vector.extract_strided_slice %899 {offsets = [0, 0, 0], sizes = [1, 2, 1], strides = [1, 1, 1]} : vector<2x2x1xf32> to vector<1x2x1xf32>
    %901 = vector.shape_cast %900 : vector<1x2x1xf32> to vector<2x1xf32>
    %902 = vector.extract_strided_slice %899 {offsets = [1, 0, 0], sizes = [1, 2, 1], strides = [1, 1, 1]} : vector<2x2x1xf32> to vector<1x2x1xf32>
    %903 = vector.shape_cast %902 : vector<1x2x1xf32> to vector<2x1xf32>
    %904 = arith.mulf %901, %901 : vector<2x1xf32>
    %905 = arith.subf %903, %904 : vector<2x1xf32>
    %cst_363 = arith.constant 0.000000e+00 : f32
    %906 = vector.broadcast %cst_363 : f32 to vector<2x1xf32>
    %907 = arith.maximumf %905, %906 : vector<2x1xf32>
    %908 = vector.broadcast %901 : vector<2x1xf32> to vector<2x128xf32>
    %909 = arith.subf %889, %908 : vector<2x128xf32>
    %cst_364 = arith.constant 9.99999974E-6 : f32
    %910 = vector.broadcast %cst_364 : f32 to vector<2x1xf32>
    %911 = arith.addf %907, %910 : vector<2x1xf32>
    %912 = math.rsqrt %911 : vector<2x1xf32>
    %913 = vector.broadcast %912 : vector<2x1xf32> to vector<2x128xf32>
    %914 = arith.mulf %909, %913 : vector<2x128xf32>
    %915 = vector.broadcast %890 : vector<1x128xf32> to vector<2x128xf32>
    %916 = arith.mulf %914, %915 : vector<2x128xf32>
    %917 = vector.broadcast %891 : vector<1x128xf32> to vector<2x128xf32>
    %918 = arith.addf %916, %917 : vector<2x128xf32>
    %919 = arith.addf %918, %633 : vector<2x128xf32>
    %c4_365 = arith.constant 4 : index
    %c0_366 = arith.constant 0 : index
    %920 = vector.load %arg23[%c4_365, %c0_366] : memref<16x512xf32, #tpu.memory_space<vmem>>, vector<1x128xf32>
    %c5_367 = arith.constant 5 : index
    %c0_368 = arith.constant 0 : index
    %921 = vector.load %arg23[%c5_367, %c0_368] : memref<16x512xf32, #tpu.memory_space<vmem>>, vector<1x128xf32>
    %922 = arith.mulf %919, %919 : vector<2x128xf32>
    %923 = vector.shape_cast %919 : vector<2x128xf32> to vector<1x2x128xf32>
    %924 = vector.shape_cast %922 : vector<2x128xf32> to vector<1x2x128xf32>
    %925 = tpu.concatenate %923, %924 in 0 : vector<1x2x128xf32>, vector<1x2x128xf32> -> vector<2x2x128xf32>
    %cst_369 = arith.constant dense<0.000000e+00> : vector<2x2xf32>
    %926 = vector.multi_reduction <add>, %925, %cst_369 [2] : vector<2x2x128xf32> to vector<2x2xf32>
    %927 = vector.shape_cast %926 : vector<2x2xf32> to vector<2x2x1xf32>
    %cst_370 = arith.constant 7.812500e-03 : f32
    %928 = vector.broadcast %cst_370 : f32 to vector<2x2x1xf32>
    %929 = arith.mulf %927, %928 : vector<2x2x1xf32>
    %930 = vector.extract_strided_slice %929 {offsets = [0, 0, 0], sizes = [1, 2, 1], strides = [1, 1, 1]} : vector<2x2x1xf32> to vector<1x2x1xf32>
    %931 = vector.shape_cast %930 : vector<1x2x1xf32> to vector<2x1xf32>
    %932 = vector.extract_strided_slice %929 {offsets = [1, 0, 0], sizes = [1, 2, 1], strides = [1, 1, 1]} : vector<2x2x1xf32> to vector<1x2x1xf32>
    %933 = vector.shape_cast %932 : vector<1x2x1xf32> to vector<2x1xf32>
    %934 = arith.mulf %931, %931 : vector<2x1xf32>
    %935 = arith.subf %933, %934 : vector<2x1xf32>
    %cst_371 = arith.constant 0.000000e+00 : f32
    %936 = vector.broadcast %cst_371 : f32 to vector<2x1xf32>
    %937 = arith.maximumf %935, %936 : vector<2x1xf32>
    %938 = vector.broadcast %931 : vector<2x1xf32> to vector<2x128xf32>
    %939 = arith.subf %919, %938 : vector<2x128xf32>
    %cst_372 = arith.constant 9.99999974E-6 : f32
    %940 = vector.broadcast %cst_372 : f32 to vector<2x1xf32>
    %941 = arith.addf %937, %940 : vector<2x1xf32>
    %942 = math.rsqrt %941 : vector<2x1xf32>
    %943 = vector.broadcast %942 : vector<2x1xf32> to vector<2x128xf32>
    %944 = arith.mulf %939, %943 : vector<2x128xf32>
    %945 = vector.broadcast %920 : vector<1x128xf32> to vector<2x128xf32>
    %946 = arith.mulf %944, %945 : vector<2x128xf32>
    %947 = vector.broadcast %921 : vector<1x128xf32> to vector<2x128xf32>
    %948 = arith.addf %946, %947 : vector<2x128xf32>
    %c0_373 = arith.constant 0 : index
    %c0_374 = arith.constant 0 : index
    %949 = vector.load %arg19[%c0_373, %c0_374] : memref<128x256xbf16, #tpu.memory_space<vmem>>, vector<128x256xbf16>
    %950 = arith.truncf %948 : vector<2x128xf32> to vector<2x128xbf16>
    %cst_375 = arith.constant dense<0.000000e+00> : vector<2x256xf32>
    %951 = tpu.matmul %950, %949, %cst_375 {dimension_numbers = #tpu.dot_dimension_numbers<[1], [0], [0], [1], [0, 0, 1, 1], [], []>} : vector<2x128xbf16>, vector<128x256xbf16>, vector<2x256xf32> -> vector<2x256xf32>
    %c10_376 = arith.constant 10 : index
    %c0_377 = arith.constant 0 : index
    %952 = vector.load %arg23[%c10_376, %c0_377] : memref<16x512xf32, #tpu.memory_space<vmem>>, vector<1x256xf32>
    %953 = vector.broadcast %952 : vector<1x256xf32> to vector<2x256xf32>
    %954 = arith.addf %951, %953 : vector<2x256xf32>
    %cst_378 = arith.constant 0.000000e+00 : f32
    %955 = vector.broadcast %cst_378 : f32 to vector<2x256xf32>
    %956 = arith.maximumf %954, %955 : vector<2x256xf32>
    %c0_379 = arith.constant 0 : index
    %c0_380 = arith.constant 0 : index
    %957 = vector.load %arg20[%c0_379, %c0_380] : memref<256x128xbf16, #tpu.memory_space<vmem>>, vector<256x128xbf16>
    %958 = arith.truncf %956 : vector<2x256xf32> to vector<2x256xbf16>
    %cst_381 = arith.constant dense<0.000000e+00> : vector<2x128xf32>
    %959 = tpu.matmul %958, %957, %cst_381 {dimension_numbers = #tpu.dot_dimension_numbers<[1], [0], [0], [1], [0, 0, 1, 1], [], []>} : vector<2x256xbf16>, vector<256x128xbf16>, vector<2x128xf32> -> vector<2x128xf32>
    %c11_382 = arith.constant 11 : index
    %c0_383 = arith.constant 0 : index
    %960 = vector.load %arg23[%c11_382, %c0_383] : memref<16x512xf32, #tpu.memory_space<vmem>>, vector<1x128xf32>
    %961 = vector.broadcast %960 : vector<1x128xf32> to vector<2x128xf32>
    %962 = arith.addf %959, %961 : vector<2x128xf32>
    %963 = arith.addf %948, %962 : vector<2x128xf32>
    %c6_384 = arith.constant 6 : index
    %c0_385 = arith.constant 0 : index
    %964 = vector.load %arg23[%c6_384, %c0_385] : memref<16x512xf32, #tpu.memory_space<vmem>>, vector<1x128xf32>
    %c7_386 = arith.constant 7 : index
    %c0_387 = arith.constant 0 : index
    %965 = vector.load %arg23[%c7_386, %c0_387] : memref<16x512xf32, #tpu.memory_space<vmem>>, vector<1x128xf32>
    %966 = arith.mulf %963, %963 : vector<2x128xf32>
    %967 = vector.shape_cast %963 : vector<2x128xf32> to vector<1x2x128xf32>
    %968 = vector.shape_cast %966 : vector<2x128xf32> to vector<1x2x128xf32>
    %969 = tpu.concatenate %967, %968 in 0 : vector<1x2x128xf32>, vector<1x2x128xf32> -> vector<2x2x128xf32>
    %cst_388 = arith.constant dense<0.000000e+00> : vector<2x2xf32>
    %970 = vector.multi_reduction <add>, %969, %cst_388 [2] : vector<2x2x128xf32> to vector<2x2xf32>
    %971 = vector.shape_cast %970 : vector<2x2xf32> to vector<2x2x1xf32>
    %cst_389 = arith.constant 7.812500e-03 : f32
    %972 = vector.broadcast %cst_389 : f32 to vector<2x2x1xf32>
    %973 = arith.mulf %971, %972 : vector<2x2x1xf32>
    %974 = vector.extract_strided_slice %973 {offsets = [0, 0, 0], sizes = [1, 2, 1], strides = [1, 1, 1]} : vector<2x2x1xf32> to vector<1x2x1xf32>
    %975 = vector.shape_cast %974 : vector<1x2x1xf32> to vector<2x1xf32>
    %976 = vector.extract_strided_slice %973 {offsets = [1, 0, 0], sizes = [1, 2, 1], strides = [1, 1, 1]} : vector<2x2x1xf32> to vector<1x2x1xf32>
    %977 = vector.shape_cast %976 : vector<1x2x1xf32> to vector<2x1xf32>
    %978 = arith.mulf %975, %975 : vector<2x1xf32>
    %979 = arith.subf %977, %978 : vector<2x1xf32>
    %cst_390 = arith.constant 0.000000e+00 : f32
    %980 = vector.broadcast %cst_390 : f32 to vector<2x1xf32>
    %981 = arith.maximumf %979, %980 : vector<2x1xf32>
    %982 = vector.broadcast %975 : vector<2x1xf32> to vector<2x128xf32>
    %983 = arith.subf %963, %982 : vector<2x128xf32>
    %cst_391 = arith.constant 9.99999974E-6 : f32
    %984 = vector.broadcast %cst_391 : f32 to vector<2x1xf32>
    %985 = arith.addf %981, %984 : vector<2x1xf32>
    %986 = math.rsqrt %985 : vector<2x1xf32>
    %987 = vector.broadcast %986 : vector<2x1xf32> to vector<2x128xf32>
    %988 = arith.mulf %983, %987 : vector<2x128xf32>
    %989 = vector.broadcast %964 : vector<1x128xf32> to vector<2x128xf32>
    %990 = arith.mulf %988, %989 : vector<2x128xf32>
    %991 = vector.broadcast %965 : vector<1x128xf32> to vector<2x128xf32>
    %992 = arith.addf %990, %991 : vector<2x128xf32>
    %c8_392 = arith.constant 8 : index
    %c0_393 = arith.constant 0 : index
    %993 = vector.load %arg23[%c8_392, %c0_393] : memref<16x512xf32, #tpu.memory_space<vmem>>, vector<1x128xf32>
    %c9_394 = arith.constant 9 : index
    %c0_395 = arith.constant 0 : index
    %994 = vector.load %arg23[%c9_394, %c0_395] : memref<16x512xf32, #tpu.memory_space<vmem>>, vector<1x128xf32>
    %995 = arith.mulf %992, %992 : vector<2x128xf32>
    %996 = vector.shape_cast %992 : vector<2x128xf32> to vector<1x2x128xf32>
    %997 = vector.shape_cast %995 : vector<2x128xf32> to vector<1x2x128xf32>
    %998 = tpu.concatenate %996, %997 in 0 : vector<1x2x128xf32>, vector<1x2x128xf32> -> vector<2x2x128xf32>
    %cst_396 = arith.constant dense<0.000000e+00> : vector<2x2xf32>
    %999 = vector.multi_reduction <add>, %998, %cst_396 [2] : vector<2x2x128xf32> to vector<2x2xf32>
    %1000 = vector.shape_cast %999 : vector<2x2xf32> to vector<2x2x1xf32>
    %cst_397 = arith.constant 7.812500e-03 : f32
    %1001 = vector.broadcast %cst_397 : f32 to vector<2x2x1xf32>
    %1002 = arith.mulf %1000, %1001 : vector<2x2x1xf32>
    %1003 = vector.extract_strided_slice %1002 {offsets = [0, 0, 0], sizes = [1, 2, 1], strides = [1, 1, 1]} : vector<2x2x1xf32> to vector<1x2x1xf32>
    %1004 = vector.shape_cast %1003 : vector<1x2x1xf32> to vector<2x1xf32>
    %1005 = vector.extract_strided_slice %1002 {offsets = [1, 0, 0], sizes = [1, 2, 1], strides = [1, 1, 1]} : vector<2x2x1xf32> to vector<1x2x1xf32>
    %1006 = vector.shape_cast %1005 : vector<1x2x1xf32> to vector<2x1xf32>
    %1007 = arith.mulf %1004, %1004 : vector<2x1xf32>
    %1008 = arith.subf %1006, %1007 : vector<2x1xf32>
    %cst_398 = arith.constant 0.000000e+00 : f32
    %1009 = vector.broadcast %cst_398 : f32 to vector<2x1xf32>
    %1010 = arith.maximumf %1008, %1009 : vector<2x1xf32>
    %1011 = vector.broadcast %1004 : vector<2x1xf32> to vector<2x128xf32>
    %1012 = arith.subf %992, %1011 : vector<2x128xf32>
    %cst_399 = arith.constant 9.99999974E-6 : f32
    %1013 = vector.broadcast %cst_399 : f32 to vector<2x1xf32>
    %1014 = arith.addf %1010, %1013 : vector<2x1xf32>
    %1015 = math.rsqrt %1014 : vector<2x1xf32>
    %1016 = vector.broadcast %1015 : vector<2x1xf32> to vector<2x128xf32>
    %1017 = arith.mulf %1012, %1016 : vector<2x128xf32>
    %1018 = vector.broadcast %993 : vector<1x128xf32> to vector<2x128xf32>
    %1019 = arith.mulf %1017, %1018 : vector<2x128xf32>
    %1020 = vector.broadcast %994 : vector<1x128xf32> to vector<2x128xf32>
    %1021 = arith.addf %1019, %1020 : vector<2x128xf32>
    %cst_400 = arith.constant dense<0xFF800000> : vector<2xf32>
    %1022 = vector.multi_reduction <maximumf>, %888, %cst_400 [1] : vector<2x128xf32> to vector<2xf32>
    %1023 = vector.shape_cast %1022 : vector<2xf32> to vector<2x1xf32>
    %1024 = vector.broadcast %1023 : vector<2x1xf32> to vector<2x128xf32>
    %1025 = arith.cmpf oeq, %888, %1024 : vector<2x128xf32>
    %c128_i32_401 = arith.constant 128 : i32
    %1026 = vector.broadcast %c128_i32_401 : i32 to vector<2x128xi32>
    %1027 = arith.select %1025, %634, %1026 : vector<2x128xi1>, vector<2x128xi32>
    %cst_402 = arith.constant dense<2147483647> : vector<2xi32>
    %1028 = vector.multi_reduction <minsi>, %1027, %cst_402 [1] : vector<2x128xi32> to vector<2xi32>
    %1029 = vector.shape_cast %1028 : vector<2xi32> to vector<2x1xi32>
    %1030 = vector.broadcast %1029 : vector<2x1xi32> to vector<2x32xi32>
    %1031 = arith.cmpi eq, %635, %1030 : vector<2x32xi32>
    %1032 = arith.extui %1031 : vector<2x32xi1> to vector<2x32xi32>
    %1033 = arith.sitofp %1032 : vector<2x32xi32> to vector<2x32xf32>
    %1034 = arith.truncf %1033 : vector<2x32xf32> to vector<2x32xbf16>
    %c0_403 = arith.constant 0 : index
    %c0_404 = arith.constant 0 : index
    %1035 = vector.load %arg22[%c0_403, %c0_404] : memref<32x128xbf16, #tpu.memory_space<vmem>>, vector<32x128xbf16>
    %cst_405 = arith.constant dense<0.000000e+00> : vector<2x128xf32>
    %1036 = tpu.matmul %1034, %1035, %cst_405 {dimension_numbers = #tpu.dot_dimension_numbers<[1], [0], [0], [1], [0, 0, 1, 1], [], []>} : vector<2x32xbf16>, vector<32x128xbf16>, vector<2x128xf32> -> vector<2x128xf32>
    %1037 = tpu.concatenate %1036, %876 in 1 : vector<2x128xf32>, vector<2x128xf32> -> vector<2x256xf32>
    %c0_406 = arith.constant 0 : index
    %c0_407 = arith.constant 0 : index
    %1038 = vector.load %arg21[%c0_406, %c0_407] : memref<256x512xbf16, #tpu.memory_space<vmem>>, vector<256x512xbf16>
    %1039 = arith.truncf %1037 : vector<2x256xf32> to vector<2x256xbf16>
    %cst_408 = arith.constant dense<0.000000e+00> : vector<2x512xf32>
    %1040 = tpu.matmul %1039, %1038, %cst_408 {dimension_numbers = #tpu.dot_dimension_numbers<[1], [0], [0], [1], [0, 0, 1, 1], [], []>} : vector<2x256xbf16>, vector<256x512xbf16>, vector<2x512xf32> -> vector<2x512xf32>
    %c12_409 = arith.constant 12 : index
    %c0_410 = arith.constant 0 : index
    %1041 = vector.load %arg23[%c12_409, %c0_410] : memref<16x512xf32, #tpu.memory_space<vmem>>, vector<1x512xf32>
    %1042 = vector.broadcast %1041 : vector<1x512xf32> to vector<2x512xf32>
    %1043 = arith.addf %1040, %1042 : vector<2x512xf32>
    %1044 = vector.extract_strided_slice %1043 {offsets = [0, 0], sizes = [2, 128], strides = [1, 1]} : vector<2x512xf32> to vector<2x128xf32>
    %1045 = arith.negf %1044 : vector<2x128xf32>
    %1046 = math.exp %1045 : vector<2x128xf32>
    %cst_411 = arith.constant 1.000000e+00 : f32
    %1047 = vector.broadcast %cst_411 : f32 to vector<2x128xf32>
    %1048 = arith.addf %1047, %1046 : vector<2x128xf32>
    %1049 = arith.divf %1047, %1048 : vector<2x128xf32>
    %1050 = vector.extract_strided_slice %1043 {offsets = [0, 128], sizes = [2, 128], strides = [1, 1]} : vector<2x512xf32> to vector<2x128xf32>
    %1051 = arith.negf %1050 : vector<2x128xf32>
    %1052 = math.exp %1051 : vector<2x128xf32>
    %cst_412 = arith.constant 1.000000e+00 : f32
    %1053 = vector.broadcast %cst_412 : f32 to vector<2x128xf32>
    %1054 = arith.addf %1053, %1052 : vector<2x128xf32>
    %1055 = arith.divf %1053, %1054 : vector<2x128xf32>
    %1056 = vector.extract_strided_slice %1043 {offsets = [0, 256], sizes = [2, 128], strides = [1, 1]} : vector<2x512xf32> to vector<2x128xf32>
    %1057 = math.tanh %1056 : vector<2x128xf32>
    %1058 = vector.extract_strided_slice %1043 {offsets = [0, 384], sizes = [2, 128], strides = [1, 1]} : vector<2x512xf32> to vector<2x128xf32>
    %1059 = arith.negf %1058 : vector<2x128xf32>
    %1060 = math.exp %1059 : vector<2x128xf32>
    %cst_413 = arith.constant 1.000000e+00 : f32
    %1061 = vector.broadcast %cst_413 : f32 to vector<2x128xf32>
    %1062 = arith.addf %1061, %1060 : vector<2x128xf32>
    %1063 = arith.divf %1061, %1062 : vector<2x128xf32>
    %1064 = arith.mulf %1055, %874 : vector<2x128xf32>
    %1065 = arith.mulf %1049, %1057 : vector<2x128xf32>
    %1066 = arith.addf %1064, %1065 : vector<2x128xf32>
    %1067 = math.tanh %1066 : vector<2x128xf32>
    %1068 = arith.mulf %1063, %1067 : vector<2x128xf32>
    %c0_414 = arith.constant 0 : index
    %c0_415 = arith.constant 0 : index
    %1069 = vector.load %arg17[%c0_414, %c0_415] : memref<128x256xbf16, #tpu.memory_space<vmem>>, vector<128x256xbf16>
    %1070 = arith.truncf %1068 : vector<2x128xf32> to vector<2x128xbf16>
    %cst_416 = arith.constant dense<0.000000e+00> : vector<2x256xf32>
    %1071 = tpu.matmul %1070, %1069, %cst_416 {dimension_numbers = #tpu.dot_dimension_numbers<[1], [0], [0], [1], [0, 0, 1, 1], [], []>} : vector<2x128xbf16>, vector<128x256xbf16>, vector<2x256xf32> -> vector<2x256xf32>
    %1072 = vector.extract_strided_slice %1071 {offsets = [0, 0], sizes = [2, 128], strides = [1, 1]} : vector<2x256xf32> to vector<2x128xf32>
    %c0_417 = arith.constant 0 : index
    %c0_418 = arith.constant 0 : index
    %1073 = vector.load %arg23[%c0_417, %c0_418] : memref<16x512xf32, #tpu.memory_space<vmem>>, vector<1x128xf32>
    %1074 = vector.broadcast %1073 : vector<1x128xf32> to vector<2x128xf32>
    %1075 = arith.addf %1072, %1074 : vector<2x128xf32>
    %1076 = arith.addf %1068, %1075 : vector<2x128xf32>
    %c2_419 = arith.constant 2 : index
    %c0_420 = arith.constant 0 : index
    %1077 = vector.load %arg23[%c2_419, %c0_420] : memref<16x512xf32, #tpu.memory_space<vmem>>, vector<1x128xf32>
    %c3_421 = arith.constant 3 : index
    %c0_422 = arith.constant 0 : index
    %1078 = vector.load %arg23[%c3_421, %c0_422] : memref<16x512xf32, #tpu.memory_space<vmem>>, vector<1x128xf32>
    %1079 = arith.mulf %1076, %1076 : vector<2x128xf32>
    %1080 = vector.shape_cast %1076 : vector<2x128xf32> to vector<1x2x128xf32>
    %1081 = vector.shape_cast %1079 : vector<2x128xf32> to vector<1x2x128xf32>
    %1082 = tpu.concatenate %1080, %1081 in 0 : vector<1x2x128xf32>, vector<1x2x128xf32> -> vector<2x2x128xf32>
    %cst_423 = arith.constant dense<0.000000e+00> : vector<2x2xf32>
    %1083 = vector.multi_reduction <add>, %1082, %cst_423 [2] : vector<2x2x128xf32> to vector<2x2xf32>
    %1084 = vector.shape_cast %1083 : vector<2x2xf32> to vector<2x2x1xf32>
    %cst_424 = arith.constant 7.812500e-03 : f32
    %1085 = vector.broadcast %cst_424 : f32 to vector<2x2x1xf32>
    %1086 = arith.mulf %1084, %1085 : vector<2x2x1xf32>
    %1087 = vector.extract_strided_slice %1086 {offsets = [0, 0, 0], sizes = [1, 2, 1], strides = [1, 1, 1]} : vector<2x2x1xf32> to vector<1x2x1xf32>
    %1088 = vector.shape_cast %1087 : vector<1x2x1xf32> to vector<2x1xf32>
    %1089 = vector.extract_strided_slice %1086 {offsets = [1, 0, 0], sizes = [1, 2, 1], strides = [1, 1, 1]} : vector<2x2x1xf32> to vector<1x2x1xf32>
    %1090 = vector.shape_cast %1089 : vector<1x2x1xf32> to vector<2x1xf32>
    %1091 = arith.mulf %1088, %1088 : vector<2x1xf32>
    %1092 = arith.subf %1090, %1091 : vector<2x1xf32>
    %cst_425 = arith.constant 0.000000e+00 : f32
    %1093 = vector.broadcast %cst_425 : f32 to vector<2x1xf32>
    %1094 = arith.maximumf %1092, %1093 : vector<2x1xf32>
    %1095 = vector.broadcast %1088 : vector<2x1xf32> to vector<2x128xf32>
    %1096 = arith.subf %1076, %1095 : vector<2x128xf32>
    %cst_426 = arith.constant 9.99999974E-6 : f32
    %1097 = vector.broadcast %cst_426 : f32 to vector<2x1xf32>
    %1098 = arith.addf %1094, %1097 : vector<2x1xf32>
    %1099 = math.rsqrt %1098 : vector<2x1xf32>
    %1100 = vector.broadcast %1099 : vector<2x1xf32> to vector<2x128xf32>
    %1101 = arith.mulf %1096, %1100 : vector<2x128xf32>
    %1102 = vector.broadcast %1077 : vector<1x128xf32> to vector<2x128xf32>
    %1103 = arith.mulf %1101, %1102 : vector<2x128xf32>
    %1104 = vector.broadcast %1078 : vector<1x128xf32> to vector<2x128xf32>
    %1105 = arith.addf %1103, %1104 : vector<2x128xf32>
    %1106 = arith.addf %1105, %633 : vector<2x128xf32>
    %c4_427 = arith.constant 4 : index
    %c0_428 = arith.constant 0 : index
    %1107 = vector.load %arg23[%c4_427, %c0_428] : memref<16x512xf32, #tpu.memory_space<vmem>>, vector<1x128xf32>
    %c5_429 = arith.constant 5 : index
    %c0_430 = arith.constant 0 : index
    %1108 = vector.load %arg23[%c5_429, %c0_430] : memref<16x512xf32, #tpu.memory_space<vmem>>, vector<1x128xf32>
    %1109 = arith.mulf %1106, %1106 : vector<2x128xf32>
    %1110 = vector.shape_cast %1106 : vector<2x128xf32> to vector<1x2x128xf32>
    %1111 = vector.shape_cast %1109 : vector<2x128xf32> to vector<1x2x128xf32>
    %1112 = tpu.concatenate %1110, %1111 in 0 : vector<1x2x128xf32>, vector<1x2x128xf32> -> vector<2x2x128xf32>
    %cst_431 = arith.constant dense<0.000000e+00> : vector<2x2xf32>
    %1113 = vector.multi_reduction <add>, %1112, %cst_431 [2] : vector<2x2x128xf32> to vector<2x2xf32>
    %1114 = vector.shape_cast %1113 : vector<2x2xf32> to vector<2x2x1xf32>
    %cst_432 = arith.constant 7.812500e-03 : f32
    %1115 = vector.broadcast %cst_432 : f32 to vector<2x2x1xf32>
    %1116 = arith.mulf %1114, %1115 : vector<2x2x1xf32>
    %1117 = vector.extract_strided_slice %1116 {offsets = [0, 0, 0], sizes = [1, 2, 1], strides = [1, 1, 1]} : vector<2x2x1xf32> to vector<1x2x1xf32>
    %1118 = vector.shape_cast %1117 : vector<1x2x1xf32> to vector<2x1xf32>
    %1119 = vector.extract_strided_slice %1116 {offsets = [1, 0, 0], sizes = [1, 2, 1], strides = [1, 1, 1]} : vector<2x2x1xf32> to vector<1x2x1xf32>
    %1120 = vector.shape_cast %1119 : vector<1x2x1xf32> to vector<2x1xf32>
    %1121 = arith.mulf %1118, %1118 : vector<2x1xf32>
    %1122 = arith.subf %1120, %1121 : vector<2x1xf32>
    %cst_433 = arith.constant 0.000000e+00 : f32
    %1123 = vector.broadcast %cst_433 : f32 to vector<2x1xf32>
    %1124 = arith.maximumf %1122, %1123 : vector<2x1xf32>
    %1125 = vector.broadcast %1118 : vector<2x1xf32> to vector<2x128xf32>
    %1126 = arith.subf %1106, %1125 : vector<2x128xf32>
    %cst_434 = arith.constant 9.99999974E-6 : f32
    %1127 = vector.broadcast %cst_434 : f32 to vector<2x1xf32>
    %1128 = arith.addf %1124, %1127 : vector<2x1xf32>
    %1129 = math.rsqrt %1128 : vector<2x1xf32>
    %1130 = vector.broadcast %1129 : vector<2x1xf32> to vector<2x128xf32>
    %1131 = arith.mulf %1126, %1130 : vector<2x128xf32>
    %1132 = vector.broadcast %1107 : vector<1x128xf32> to vector<2x128xf32>
    %1133 = arith.mulf %1131, %1132 : vector<2x128xf32>
    %1134 = vector.broadcast %1108 : vector<1x128xf32> to vector<2x128xf32>
    %1135 = arith.addf %1133, %1134 : vector<2x128xf32>
    %c0_435 = arith.constant 0 : index
    %c0_436 = arith.constant 0 : index
    %1136 = vector.load %arg19[%c0_435, %c0_436] : memref<128x256xbf16, #tpu.memory_space<vmem>>, vector<128x256xbf16>
    %1137 = arith.truncf %1135 : vector<2x128xf32> to vector<2x128xbf16>
    %cst_437 = arith.constant dense<0.000000e+00> : vector<2x256xf32>
    %1138 = tpu.matmul %1137, %1136, %cst_437 {dimension_numbers = #tpu.dot_dimension_numbers<[1], [0], [0], [1], [0, 0, 1, 1], [], []>} : vector<2x128xbf16>, vector<128x256xbf16>, vector<2x256xf32> -> vector<2x256xf32>
    %c10_438 = arith.constant 10 : index
    %c0_439 = arith.constant 0 : index
    %1139 = vector.load %arg23[%c10_438, %c0_439] : memref<16x512xf32, #tpu.memory_space<vmem>>, vector<1x256xf32>
    %1140 = vector.broadcast %1139 : vector<1x256xf32> to vector<2x256xf32>
    %1141 = arith.addf %1138, %1140 : vector<2x256xf32>
    %cst_440 = arith.constant 0.000000e+00 : f32
    %1142 = vector.broadcast %cst_440 : f32 to vector<2x256xf32>
    %1143 = arith.maximumf %1141, %1142 : vector<2x256xf32>
    %c0_441 = arith.constant 0 : index
    %c0_442 = arith.constant 0 : index
    %1144 = vector.load %arg20[%c0_441, %c0_442] : memref<256x128xbf16, #tpu.memory_space<vmem>>, vector<256x128xbf16>
    %1145 = arith.truncf %1143 : vector<2x256xf32> to vector<2x256xbf16>
    %cst_443 = arith.constant dense<0.000000e+00> : vector<2x128xf32>
    %1146 = tpu.matmul %1145, %1144, %cst_443 {dimension_numbers = #tpu.dot_dimension_numbers<[1], [0], [0], [1], [0, 0, 1, 1], [], []>} : vector<2x256xbf16>, vector<256x128xbf16>, vector<2x128xf32> -> vector<2x128xf32>
    %c11_444 = arith.constant 11 : index
    %c0_445 = arith.constant 0 : index
    %1147 = vector.load %arg23[%c11_444, %c0_445] : memref<16x512xf32, #tpu.memory_space<vmem>>, vector<1x128xf32>
    %1148 = vector.broadcast %1147 : vector<1x128xf32> to vector<2x128xf32>
    %1149 = arith.addf %1146, %1148 : vector<2x128xf32>
    %1150 = arith.addf %1135, %1149 : vector<2x128xf32>
    %c6_446 = arith.constant 6 : index
    %c0_447 = arith.constant 0 : index
    %1151 = vector.load %arg23[%c6_446, %c0_447] : memref<16x512xf32, #tpu.memory_space<vmem>>, vector<1x128xf32>
    %c7_448 = arith.constant 7 : index
    %c0_449 = arith.constant 0 : index
    %1152 = vector.load %arg23[%c7_448, %c0_449] : memref<16x512xf32, #tpu.memory_space<vmem>>, vector<1x128xf32>
    %1153 = arith.mulf %1150, %1150 : vector<2x128xf32>
    %1154 = vector.shape_cast %1150 : vector<2x128xf32> to vector<1x2x128xf32>
    %1155 = vector.shape_cast %1153 : vector<2x128xf32> to vector<1x2x128xf32>
    %1156 = tpu.concatenate %1154, %1155 in 0 : vector<1x2x128xf32>, vector<1x2x128xf32> -> vector<2x2x128xf32>
    %cst_450 = arith.constant dense<0.000000e+00> : vector<2x2xf32>
    %1157 = vector.multi_reduction <add>, %1156, %cst_450 [2] : vector<2x2x128xf32> to vector<2x2xf32>
    %1158 = vector.shape_cast %1157 : vector<2x2xf32> to vector<2x2x1xf32>
    %cst_451 = arith.constant 7.812500e-03 : f32
    %1159 = vector.broadcast %cst_451 : f32 to vector<2x2x1xf32>
    %1160 = arith.mulf %1158, %1159 : vector<2x2x1xf32>
    %1161 = vector.extract_strided_slice %1160 {offsets = [0, 0, 0], sizes = [1, 2, 1], strides = [1, 1, 1]} : vector<2x2x1xf32> to vector<1x2x1xf32>
    %1162 = vector.shape_cast %1161 : vector<1x2x1xf32> to vector<2x1xf32>
    %1163 = vector.extract_strided_slice %1160 {offsets = [1, 0, 0], sizes = [1, 2, 1], strides = [1, 1, 1]} : vector<2x2x1xf32> to vector<1x2x1xf32>
    %1164 = vector.shape_cast %1163 : vector<1x2x1xf32> to vector<2x1xf32>
    %1165 = arith.mulf %1162, %1162 : vector<2x1xf32>
    %1166 = arith.subf %1164, %1165 : vector<2x1xf32>
    %cst_452 = arith.constant 0.000000e+00 : f32
    %1167 = vector.broadcast %cst_452 : f32 to vector<2x1xf32>
    %1168 = arith.maximumf %1166, %1167 : vector<2x1xf32>
    %1169 = vector.broadcast %1162 : vector<2x1xf32> to vector<2x128xf32>
    %1170 = arith.subf %1150, %1169 : vector<2x128xf32>
    %cst_453 = arith.constant 9.99999974E-6 : f32
    %1171 = vector.broadcast %cst_453 : f32 to vector<2x1xf32>
    %1172 = arith.addf %1168, %1171 : vector<2x1xf32>
    %1173 = math.rsqrt %1172 : vector<2x1xf32>
    %1174 = vector.broadcast %1173 : vector<2x1xf32> to vector<2x128xf32>
    %1175 = arith.mulf %1170, %1174 : vector<2x128xf32>
    %1176 = vector.broadcast %1151 : vector<1x128xf32> to vector<2x128xf32>
    %1177 = arith.mulf %1175, %1176 : vector<2x128xf32>
    %1178 = vector.broadcast %1152 : vector<1x128xf32> to vector<2x128xf32>
    %1179 = arith.addf %1177, %1178 : vector<2x128xf32>
    %c8_454 = arith.constant 8 : index
    %c0_455 = arith.constant 0 : index
    %1180 = vector.load %arg23[%c8_454, %c0_455] : memref<16x512xf32, #tpu.memory_space<vmem>>, vector<1x128xf32>
    %c9_456 = arith.constant 9 : index
    %c0_457 = arith.constant 0 : index
    %1181 = vector.load %arg23[%c9_456, %c0_457] : memref<16x512xf32, #tpu.memory_space<vmem>>, vector<1x128xf32>
    %1182 = arith.mulf %1179, %1179 : vector<2x128xf32>
    %1183 = vector.shape_cast %1179 : vector<2x128xf32> to vector<1x2x128xf32>
    %1184 = vector.shape_cast %1182 : vector<2x128xf32> to vector<1x2x128xf32>
    %1185 = tpu.concatenate %1183, %1184 in 0 : vector<1x2x128xf32>, vector<1x2x128xf32> -> vector<2x2x128xf32>
    %cst_458 = arith.constant dense<0.000000e+00> : vector<2x2xf32>
    %1186 = vector.multi_reduction <add>, %1185, %cst_458 [2] : vector<2x2x128xf32> to vector<2x2xf32>
    %1187 = vector.shape_cast %1186 : vector<2x2xf32> to vector<2x2x1xf32>
    %cst_459 = arith.constant 7.812500e-03 : f32
    %1188 = vector.broadcast %cst_459 : f32 to vector<2x2x1xf32>
    %1189 = arith.mulf %1187, %1188 : vector<2x2x1xf32>
    %1190 = vector.extract_strided_slice %1189 {offsets = [0, 0, 0], sizes = [1, 2, 1], strides = [1, 1, 1]} : vector<2x2x1xf32> to vector<1x2x1xf32>
    %1191 = vector.shape_cast %1190 : vector<1x2x1xf32> to vector<2x1xf32>
    %1192 = vector.extract_strided_slice %1189 {offsets = [1, 0, 0], sizes = [1, 2, 1], strides = [1, 1, 1]} : vector<2x2x1xf32> to vector<1x2x1xf32>
    %1193 = vector.shape_cast %1192 : vector<1x2x1xf32> to vector<2x1xf32>
    %1194 = arith.mulf %1191, %1191 : vector<2x1xf32>
    %1195 = arith.subf %1193, %1194 : vector<2x1xf32>
    %cst_460 = arith.constant 0.000000e+00 : f32
    %1196 = vector.broadcast %cst_460 : f32 to vector<2x1xf32>
    %1197 = arith.maximumf %1195, %1196 : vector<2x1xf32>
    %1198 = vector.broadcast %1191 : vector<2x1xf32> to vector<2x128xf32>
    %1199 = arith.subf %1179, %1198 : vector<2x128xf32>
    %cst_461 = arith.constant 9.99999974E-6 : f32
    %1200 = vector.broadcast %cst_461 : f32 to vector<2x1xf32>
    %1201 = arith.addf %1197, %1200 : vector<2x1xf32>
    %1202 = math.rsqrt %1201 : vector<2x1xf32>
    %1203 = vector.broadcast %1202 : vector<2x1xf32> to vector<2x128xf32>
    %1204 = arith.mulf %1199, %1203 : vector<2x128xf32>
    %1205 = vector.broadcast %1180 : vector<1x128xf32> to vector<2x128xf32>
    %1206 = arith.mulf %1204, %1205 : vector<2x128xf32>
    %1207 = vector.broadcast %1181 : vector<1x128xf32> to vector<2x128xf32>
    %1208 = arith.addf %1206, %1207 : vector<2x128xf32>
    %1209 = tpu.concatenate %651, %829, %1021, %1208 in 0 : vector<2x128xf32>, vector<2x128xf32>, vector<2x128xf32>, vector<2x128xf32> -> vector<8x128xf32>
    %c0_462 = arith.constant 0 : index
    %c128 = arith.constant 128 : index
    %1210 = vector.load %arg17[%c0_462, %c128] : memref<128x256xbf16, #tpu.memory_space<vmem>>, vector<128x128xbf16>
    %1211 = arith.truncf %1209 : vector<8x128xf32> to vector<8x128xbf16>
    %cst_463 = arith.constant dense<0.000000e+00> : vector<8x128xf32>
    %1212 = tpu.matmul %1211, %1210, %cst_463 {dimension_numbers = #tpu.dot_dimension_numbers<[1], [0], [0], [1], [0, 0, 1, 1], [], []>} : vector<8x128xbf16>, vector<128x128xbf16>, vector<8x128xf32> -> vector<8x128xf32>
    %1213 = vector.broadcast %652 : vector<1x128xf32> to vector<8x128xf32>
    %1214 = arith.addf %1212, %1213 : vector<8x128xf32>
    %c0_464 = arith.constant 0 : index
    %c0_465 = arith.constant 0 : index
    %1215 = vector.load %arg16[%c0_464, %c0_465] : memref<8x128xf32, #tpu.memory_space<vmem>>, vector<8x128xf32>
    tpu.vector_store %arg16[%c0_464, %c0_465], %1214 {strides = array<i32>} : memref<8x128xf32, #tpu.memory_space<vmem>>, vector<8x128xf32>,
    return
  }
  func.func @transform_0(%arg0: i32) -> (i32, i32) {
    %c0_i32 = arith.constant 0 : i32
    %c0_i32_0 = arith.constant 0 : i32
    %c0_i32_1 = arith.constant 0 : i32
    return %c0_i32, %c0_i32_0 : i32, i32
  }
  func.func @transform_1(%arg0: i32) -> (i32, i32) {
    %c0_i32 = arith.constant 0 : i32
    %c0_i32_0 = arith.constant 0 : i32
    %c0_i32_1 = arith.constant 0 : i32
    return %c0_i32, %c0_i32_0 : i32, i32
  }
  func.func @transform_2(%arg0: i32) -> (i32, i32) {
    %c0_i32 = arith.constant 0 : i32
    %c0_i32_0 = arith.constant 0 : i32
    %c0_i32_1 = arith.constant 0 : i32
    return %c0_i32, %c0_i32_0 : i32, i32
  }
  func.func @transform_3(%arg0: i32) -> (i32, i32) {
    %c0_i32 = arith.constant 0 : i32
    %c0_i32_0 = arith.constant 0 : i32
    %c0_i32_1 = arith.constant 0 : i32
    return %c0_i32, %c0_i32_0 : i32, i32
  }
  func.func @transform_4(%arg0: i32) -> (i32, i32, i32) {
    %c0_i32 = arith.constant 0 : i32
    %c0_i32_0 = arith.constant 0 : i32
    %c0_i32_1 = arith.constant 0 : i32
    %c0_i32_2 = arith.constant 0 : i32
    return %c0_i32, %c0_i32_0, %c0_i32_1 : i32, i32, i32
  }
  func.func @transform_5(%arg0: i32) -> (i32, i32, i32) {
    %c0_i32 = arith.constant 0 : i32
    %c0_i32_0 = arith.constant 0 : i32
    %c0_i32_1 = arith.constant 0 : i32
    %c0_i32_2 = arith.constant 0 : i32
    return %c0_i32, %c0_i32_0, %c0_i32_1 : i32, i32, i32
  }
  func.func @transform_6(%arg0: i32) -> (i32, i32, i32) {
    %c0_i32 = arith.constant 0 : i32
    %c0_i32_0 = arith.constant 0 : i32
    %c0_i32_1 = arith.constant 0 : i32
    %c0_i32_2 = arith.constant 0 : i32
    return %c0_i32, %c0_i32_0, %c0_i32_1 : i32, i32, i32
  }
  func.func @transform_7(%arg0: i32) -> (i32, i32, i32) {
    %c0_i32 = arith.constant 0 : i32
    %c0_i32_0 = arith.constant 0 : i32
    %c0_i32_1 = arith.constant 0 : i32
    %c0_i32_2 = arith.constant 0 : i32
    return %c0_i32, %c0_i32_0, %c0_i32_1 : i32, i32, i32
  }
  func.func @transform_15(%arg0: i32) -> (i32, i32) {
    %c0_i32 = arith.constant 0 : i32
    %c0_i32_0 = arith.constant 0 : i32
    %c0_i32_1 = arith.constant 0 : i32
    return %c0_i32, %c0_i32_0 : i32, i32
  }
}

</mosaic_0001>

<llo_original>
// kernel: model_forward.1
$region0: #{model_forward.1}
  #allocation0 [shape = 'u32[]', space=smem, size = 0x4, offset = 0x4, fixed_abs, tag = 'smem constant byte address 0x4 - core index']
  #allocation1 [shape = 'u32[144,128]{1,0:T(1,128)}', space=vmem, size = 0x12000, scoped, tag = 'internal scratch']
  #allocation2 [shape = 'bf16[128,256]{1,0:T(16,128)(2,1)}', space=vmem, size = 0x10000, scoped, tag = 'scratch operand']
  #allocation3 [shape = 'bf16[128,128]{1,0:T(16,128)(2,1)}', space=vmem, size = 0x8000, scoped, tag = 'scratch operand']
  #allocation4 [shape = 'bf16[128,256]{1,0:T(16,128)(2,1)}', space=vmem, size = 0x10000, scoped, tag = 'scratch operand']
  #allocation5 [shape = 'bf16[256,128]{1,0:T(16,128)(2,1)}', space=vmem, size = 0x10000, scoped, tag = 'scratch operand']
  #allocation6 [shape = 'bf16[256,512]{1,0:T(16,128)(2,1)}', space=vmem, size = 0x40000, scoped, tag = 'scratch operand']
  #allocation7 [shape = 'bf16[32,128]{1,0:T(16,128)(2,1)}', space=vmem, size = 0x2000, scoped, tag = 'scratch operand']
  #allocation8 [shape = 'f32[16,512]{1,0:T(8,128)}', space=vmem, size = 0x8000, scoped, tag = 'scratch operand']
  #allocation9 [shape = 's32[7]{0}', space=sflag, size = 0x1c, scoped, tag = 'scratch operand']
  #allocation10 [shape = 's32[]', space=sflag, size = 0x4, offset = 0, fixed_abs, tag = 'sflag constant byte address 0x0 - dummy sync flag']
  #allocation11 [shape = 's32[]', space=sflag, size = 0x4, offset = 0, fixed_abs, tag = 'sflag constant byte address 0x0 - dummy sync flag']
  #allocation12 [shape = 's32[]', space=sflag, size = 0x4, offset = 0, fixed_abs, tag = 'sflag constant byte address 0x0 - dummy sync flag']
  #allocation13 [shape = 's32[]', space=sflag, size = 0x4, offset = 0, fixed_abs, tag = 'sflag constant byte address 0x0 - dummy sync flag']
  #allocation14 [shape = 's32[]', space=sflag, size = 0x4, offset = 0, fixed_abs, tag = 'sflag constant byte address 0x0 - dummy sync flag']
  #allocation15 [shape = 's32[]', space=sflag, size = 0x4, offset = 0, fixed_abs, tag = 'sflag constant byte address 0x0 - dummy sync flag']
  #allocation16 [shape = 's32[]', space=sflag, size = 0x4, offset = 0, fixed_abs, tag = 'sflag constant byte address 0x0 - dummy sync flag']
  %s0 = inlined_call_operand.vmem [shape: bf16[512,32], index: 0, kind: input, shape index: {}]
  %s1 = inlined_call_operand.vmem [shape: bf16[32,128], index: 1, kind: input, shape index: {}]
  %s2 = inlined_call_operand.vmem [shape: bf16[128,128], index: 2, kind: input, shape index: {}]
  %s3 = inlined_call_operand.vmem [shape: f32[8,128], index: 3, kind: input, shape index: {}]
  %s4 = inlined_call_operand.vmem [shape: bf16[6,128,128], index: 4, kind: input, shape index: {}]
  %s5 = inlined_call_operand.vmem [shape: bf16[6,128,256], index: 5, kind: input, shape index: {}]
  %s6 = inlined_call_operand.vmem [shape: bf16[6,256,128], index: 6, kind: input, shape index: {}]
  %s7 = inlined_call_operand.vmem [shape: f32[6,8,256], index: 7, kind: input, shape index: {}]
  %s8 = inlined_call_operand.vmem [shape: bf16[128,256], index: 8, kind: input, shape index: {}]
  %s9 = inlined_call_operand.vmem [shape: bf16[128,128], index: 9, kind: input, shape index: {}]
  %s10 = inlined_call_operand.vmem [shape: bf16[128,256], index: 10, kind: input, shape index: {}]
  %s11 = inlined_call_operand.vmem [shape: bf16[256,128], index: 11, kind: input, shape index: {}]
  %s12 = inlined_call_operand.vmem [shape: bf16[256,512], index: 12, kind: input, shape index: {}]
  %s13 = inlined_call_operand.vmem [shape: bf16[32,128], index: 13, kind: input, shape index: {}]
  %s14 = inlined_call_operand.vmem [shape: f32[16,512], index: 14, kind: input, shape index: {}]
  %s15 = inlined_call_operand.vmem [shape: f32[8,128], index: 15, kind: output, shape index: {}]
  %s16 = sld [smem:[#allocation0]]
  $region289: #{model_forward.1} parent=0
    _
  %s18 = ssub.s32 1, %s16
  %s19 = scalar_select 0, %s18, %s16
  // Predicated region
  $region2: #{model_forward.1} parent=0 // pred_check
    _
  $region3: #{model_forward.1} parent=0 // pred_check_branch
    %21 = sbr.rel (0) target = $region5
  $region4: #{model_forward.1} parent=0 // pred_region
    _
  $region5: #{model_forward.1} parent=0 // pred_fallthru
    _
  // Predicated region
  $region6: #{model_forward.1} parent=0 // pred_check
    _
  $region7: #{model_forward.1} parent=0 // pred_check_branch
    %23 = sbr.rel (0) target = $region9
  $region8: #{model_forward.1} parent=0 // pred_region
    _
  $region9: #{model_forward.1} parent=0 // pred_fallthru
    _
  // Predicated region
  $region10: #{model_forward.1} parent=0 // pred_check
    _
  $region11: #{model_forward.1} parent=0 // pred_check_branch
    %25 = sbr.rel (0) target = $region13
  $region12: #{model_forward.1} parent=0 // pred_region
    _
  $region13: #{model_forward.1} parent=0 // pred_fallthru
    _
  // Predicated region
  $region14: #{model_forward.1} parent=0 // pred_check
    _
  $region15: #{model_forward.1} parent=0 // pred_check_branch
    %27 = sbr.rel (0) target = $region17
  $region16: #{model_forward.1} parent=0 // pred_region
    _
  $region17: #{model_forward.1} parent=0 // pred_fallthru
    _
  // Predicated region
  $region18: #{model_forward.1} parent=0 // pred_check
    _
  $region19: #{model_forward.1} parent=0 // pred_check_branch
    %29 = sbr.rel (0) target = $region21
  $region20: #{model_forward.1} parent=0 // pred_region
    _
  $region21: #{model_forward.1} parent=0 // pred_fallthru
    _
  // Predicated region
  $region22: #{model_forward.1} parent=0 // pred_check
    _
  $region23: #{model_forward.1} parent=0 // pred_check_branch
    %31 = sbr.rel (0) target = $region25
  $region24: #{model_forward.1} parent=0 // pred_region
    _
  $region25: #{model_forward.1} parent=0 // pred_fallthru
    _
  // Predicated region
  $region26: #{model_forward.1} parent=0 // pred_check
    _
  $region27: #{model_forward.1} parent=0 // pred_check_branch
    %33 = sbr.rel (0) target = $region29
  $region28: #{model_forward.1} parent=0 // pred_region
    _
  $region29: #{model_forward.1} parent=0 // pred_fallthru
    _
  // Predicated region
  $region30: #{model_forward.1} parent=0 // pred_check
    _
  $region31: #{model_forward.1} parent=0 // pred_check_branch
    %35 = sbr.rel (0) target = $region33
  $region32: #{model_forward.1} parent=0 // pred_region
    _
  $region33: #{model_forward.1} parent=0 // pred_fallthru
    _
  %p38 = scmp.lt.u32.totalorder 4, 8
  %p39 = pneg %p38
  // Predicated region
  $region34: #{model_forward.1} parent=0 // pred_check
    _
  $region35: #{model_forward.1} parent=0 // pred_check_branch
    %41 = sbr.rel (%p38) target = $region37
  $region36: #{model_forward.1} parent=0 // pred_region
    %s118 = sand.u32 4, 7
    %p119 = scmp.eq.s32.totalorder %s118, 0
    %p120 = pneg %p119
    // Predicated region
    $region49: #{model_forward.1} parent=36 // pred_check
      _
    $region50: #{model_forward.1} parent=36 // pred_check_branch
      %122 = sbr.rel (%p119) target = $region52
    $region51: #{model_forward.1} parent=36 // pred_region
      %s123 = sand.u32 4, 7
      %s124 = ssub.s32 4, %s123
      %s125 = scalar_lea.vmem %s8, %s124
      %s126 = ssub.s32 4, %s123
      %s127 = scalar_lea.vmem [#allocation2], %s126
      loop: start=0, step=1, limit=1
      $region53: #{model_forward.1} parent=51 // loop_pre_header
        _
      $region54: #{model_forward.1} parent=51 // loop_header
        %s129 = sphi 0, %s133
        %p130 = scmp.ge.s32.totalorder %s129, 1
        %s134 = sphi %s8, %s8
        %s135 = sphi [#allocation2], [#allocation2]
      $region55: #{model_forward.1} parent=51 // loop_header_branch
        %132 = sbr.rel (%p130) target = $region59
      $region56: #{model_forward.1} parent=51 // loop_body
        _
      $region57: #{model_forward.1} parent=51 // loop_footer
        %s133 = sadd.s32 1, %s129
      $region58: #{model_forward.1} parent=51 // loop_footer_branch
        %128 = sbr.rel target = $region54
      $region59: #{model_forward.1} parent=51 // loop_exit
        _
      %s136 = sshllo.u32 0, %s123
      loop: start=0, step=1, limit=1
      $region60: #{model_forward.1} parent=51 // loop_pre_header
        _
      $region61: #{model_forward.1} parent=51 // loop_header
        %s138 = sphi 0, %s142
        %p139 = scmp.ge.s32.totalorder %s138, 1
        %s143 = sphi %s125, %s125
        %s144 = sphi %s127, %s127
      $region62: #{model_forward.1} parent=51 // loop_header_branch
        %141 = sbr.rel (%p139) target = $region66
      $region63: #{model_forward.1} parent=51 // loop_body
        %v145 = vld [vmem:[%s143] sm:%s136]
        %146 = vst [vmem:[%s144] sm:%s136] %v145
        %v147 = vld [vmem:[%s143 + $0x8] sm:%s136]
        %148 = vst [vmem:[%s144 + $0x4] sm:%s136] %v147
        %v149 = vld [vmem:[%s143 + $0x4] sm:%s136]
        %150 = vst [vmem:[%s144 + $0x8] sm:%s136] %v149
        %v151 = vld [vmem:[%s143 + $0xc] sm:%s136]
        %152 = vst [vmem:[%s144 + $0xc] sm:%s136] %v151
        %v153 = vld [vmem:[%s143 + $0x10] sm:%s136]
        %154 = vst [vmem:[%s144 + $0x10] sm:%s136] %v153
        %v155 = vld [vmem:[%s143 + $0x18] sm:%s136]
        %156 = vst [vmem:[%s144 + $0x14] sm:%s136] %v155
        %v157 = vld [vmem:[%s143 + $0x14] sm:%s136]
        %158 = vst [vmem:[%s144 + $0x18] sm:%s136] %v157
        %v159 = vld [vmem:[%s143 + $0x1c] sm:%s136]
        %160 = vst [vmem:[%s144 + $0x1c] sm:%s136] %v159
        %v161 = vld [vmem:[%s143 + $0x20] sm:%s136]
        %162 = vst [vmem:[%s144 + $0x20] sm:%s136] %v161
        %v163 = vld [vmem:[%s143 + $0x28] sm:%s136]
        %164 = vst [vmem:[%s144 + $0x24] sm:%s136] %v163
        %v165 = vld [vmem:[%s143 + $0x24] sm:%s136]
        %166 = vst [vmem:[%s144 + $0x28] sm:%s136] %v165
        %v167 = vld [vmem:[%s143 + $0x2c] sm:%s136]
        %168 = vst [vmem:[%s144 + $0x2c] sm:%s136] %v167
        %v169 = vld [vmem:[%s143 + $0x30] sm:%s136]
        %170 = vst [vmem:[%s144 + $0x30] sm:%s136] %v169
        %v171 = vld [vmem:[%s143 + $0x38] sm:%s136]
        %172 = vst [vmem:[%s144 + $0x34] sm:%s136] %v171
        %v173 = vld [vmem:[%s143 + $0x34] sm:%s136]
        %174 = vst [vmem:[%s144 + $0x38] sm:%s136] %v173
        %v175 = vld [vmem:[%s143 + $0x3c] sm:%s136]
        %176 = vst [vmem:[%s144 + $0x3c] sm:%s136] %v175
        %v177 = vld [vmem:[%s143 + $0x40] sm:%s136]
        %178 = vst [vmem:[%s144 + $0x40] sm:%s136] %v177
        %v179 = vld [vmem:[%s143 + $0x48] sm:%s136]
        %180 = vst [vmem:[%s144 + $0x44] sm:%s136] %v179
        %v181 = vld [vmem:[%s143 + $0x44] sm:%s136]
        %182 = vst [vmem:[%s144 + $0x48] sm:%s136] %v181
        %v183 = vld [vmem:[%s143 + $0x4c] sm:%s136]
        %184 = vst [vmem:[%s144 + $0x4c] sm:%s136] %v183
        %v185 = vld [vmem:[%s143 + $0x50] sm:%s136]
        %186 = vst [vmem:[%s144 + $0x50] sm:%s136] %v185
        %v187 = vld [vmem:[%s143 + $0x58] sm:%s136]
        %188 = vst [vmem:[%s144 + $0x54] sm:%s136] %v187
        %v189 = vld [vmem:[%s143 + $0x54] sm:%s136]
        %190 = vst [vmem:[%s144 + $0x58] sm:%s136] %v189
        %v191 = vld [vmem:[%s143 + $0x5c] sm:%s136]
        %192 = vst [vmem:[%s144 + $0x5c] sm:%s136] %v191
        %v193 = vld [vmem:[%s143 + $0x60] sm:%s136]
        %194 = vst [vmem:[%s144 + $0x60] sm:%s136] %v193
        %v195 = vld [vmem:[%s143 + $0x68] sm:%s136]
        %196 = vst [vmem:[%s144 + $0x64] sm:%s136] %v195
        %v197 = vld [vmem:[%s143 + $0x64] sm:%s136]
        %198 = vst [vmem:[%s144 + $0x68] sm:%s136] %v197
        %v199 = vld [vmem:[%s143 + $0x6c] sm:%s136]
        %200 = vst [vmem:[%s144 + $0x6c] sm:%s136] %v199
        %v201 = vld [vmem:[%s143 + $0x70] sm:%s136]
        %202 = vst [vmem:[%s144 + $0x70] sm:%s136] %v201
        %v203 = vld [vmem:[%s143 + $0x78] sm:%s136]
        %204 = vst [vmem:[%s144 + $0x74] sm:%s136] %v203
        %v205 = vld [vmem:[%s143 + $0x74] sm:%s136]
        %206 = vst [vmem:[%s144 + $0x78] sm:%s136] %v205
        %v207 = vld [vmem:[%s143 + $0x7c] sm:%s136]
        %208 = vst [vmem:[%s144 + $0x7c] sm:%s136] %v207
      $region64: #{model_forward.1} parent=51 // loop_footer
        %s142 = sadd.s32 1, %s138
      $region65: #{model_forward.1} parent=51 // loop_footer_branch
        %137 = sbr.rel target = $region61
      $region66: #{model_forward.1} parent=51 // loop_exit
        _
    $region52: #{model_forward.1} parent=36 // pred_fallthru
      _
  $region37: #{model_forward.1} parent=0 // pred_fallthru
    _
  // Predicated region
  $region38: #{model_forward.1} parent=0 // pred_check
    %p42 = pneg %p38
  $region39: #{model_forward.1} parent=0 // pred_check_branch
    %44 = sbr.rel (%p42) target = $region41
  $region40: #{model_forward.1} parent=0 // pred_region
    %s45 = sshllo.u32 0, 4
    loop: start=0, step=1, limit=1
    $region42: #{model_forward.1} parent=40 // loop_pre_header
      _
    $region43: #{model_forward.1} parent=40 // loop_header
      %s47 = sphi 0, %s51
      %p48 = scmp.ge.s32.totalorder %s47, 1
      %s52 = sphi %s8, %s8
      %s53 = sphi [#allocation2], [#allocation2]
    $region44: #{model_forward.1} parent=40 // loop_header_branch
      %50 = sbr.rel (%p48) target = $region48
    $region45: #{model_forward.1} parent=40 // loop_body
      %v54 = vld [vmem:[%s52] sm:%s45]
      %55 = vst [vmem:[%s53] sm:%s45] %v54
      %v56 = vld [vmem:[%s52 + $0x8] sm:%s45]
      %57 = vst [vmem:[%s53 + $0x4] sm:%s45] %v56
      %v58 = vld [vmem:[%s52 + $0x4] sm:%s45]
      %59 = vst [vmem:[%s53 + $0x8] sm:%s45] %v58
      %v60 = vld [vmem:[%s52 + $0xc] sm:%s45]
      %61 = vst [vmem:[%s53 + $0xc] sm:%s45] %v60
      %v62 = vld [vmem:[%s52 + $0x10] sm:%s45]
      %63 = vst [vmem:[%s53 + $0x10] sm:%s45] %v62
      %v64 = vld [vmem:[%s52 + $0x18] sm:%s45]
      %65 = vst [vmem:[%s53 + $0x14] sm:%s45] %v64
      %v66 = vld [vmem:[%s52 + $0x14] sm:%s45]
      %67 = vst [vmem:[%s53 + $0x18] sm:%s45] %v66
      %v68 = vld [vmem:[%s52 + $0x1c] sm:%s45]
      %69 = vst [vmem:[%s53 + $0x1c] sm:%s45] %v68
      %v70 = vld [vmem:[%s52 + $0x20] sm:%s45]
      %71 = vst [vmem:[%s53 + $0x20] sm:%s45] %v70
      %v72 = vld [vmem:[%s52 + $0x28] sm:%s45]
      %73 = vst [vmem:[%s53 + $0x24] sm:%s45] %v72
      %v74 = vld [vmem:[%s52 + $0x24] sm:%s45]
      %75 = vst [vmem:[%s53 + $0x28] sm:%s45] %v74
      %v76 = vld [vmem:[%s52 + $0x2c] sm:%s45]
      %77 = vst [vmem:[%s53 + $0x2c] sm:%s45] %v76
      %v78 = vld [vmem:[%s52 + $0x30] sm:%s45]
      %79 = vst [vmem:[%s53 + $0x30] sm:%s45] %v78
      %v80 = vld [vmem:[%s52 + $0x38] sm:%s45]
      %81 = vst [vmem:[%s53 + $0x34] sm:%s45] %v80
      %v82 = vld [vmem:[%s52 + $0x34] sm:%s45]
      %83 = vst [vmem:[%s53 + $0x38] sm:%s45] %v82
      %v84 = vld [vmem:[%s52 + $0x3c] sm:%s45]
      %85 = vst [vmem:[%s53 + $0x3c] sm:%s45] %v84
      %v86 = vld [vmem:[%s52 + $0x40] sm:%s45]
      %87 = vst [vmem:[%s53 + $0x40] sm:%s45] %v86
      %v88 = vld [vmem:[%s52 + $0x48] sm:%s45]
      %89 = vst [vmem:[%s53 + $0x44] sm:%s45] %v88
      %v90 = vld [vmem:[%s52 + $0x44] sm:%s45]
      %91 = vst [vmem:[%s53 + $0x48] sm:%s45] %v90
      %v92 = vld [vmem:[%s52 + $0x4c] sm:%s45]
      %93 = vst [vmem:[%s53 + $0x4c] sm:%s45] %v92
      %v94 = vld [vmem:[%s52 + $0x50] sm:%s45]
      %95 = vst [vmem:[%s53 + $0x50] sm:%s45] %v94
      %v96 = vld [vmem:[%s52 + $0x58] sm:%s45]
      %97 = vst [vmem:[%s53 + $0x54] sm:%s45] %v96
      %v98 = vld [vmem:[%s52 + $0x54] sm:%s45]
      %99 = vst [vmem:[%s53 + $0x58] sm:%s45] %v98
      %v100 = vld [vmem:[%s52 + $0x5c] sm:%s45]
      %101 = vst [vmem:[%s53 + $0x5c] sm:%s45] %v100
      %v102 = vld [vmem:[%s52 + $0x60] sm:%s45]
      %103 = vst [vmem:[%s53 + $0x60] sm:%s45] %v102
      %v104 = vld [vmem:[%s52 + $0x68] sm:%s45]
      %105 = vst [vmem:[%s53 + $0x64] sm:%s45] %v104
      %v106 = vld [vmem:[%s52 + $0x64] sm:%s45]
      %107 = vst [vmem:[%s53 + $0x68] sm:%s45] %v106
      %v108 = vld [vmem:[%s52 + $0x6c] sm:%s45]
      %109 = vst [vmem:[%s53 + $0x6c] sm:%s45] %v108
      %v110 = vld [vmem:[%s52 + $0x70] sm:%s45]
      %111 = vst [vmem:[%s53 + $0x70] sm:%s45] %v110
      %v112 = vld [vmem:[%s52 + $0x78] sm:%s45]
      %113 = vst [vmem:[%s53 + $0x74] sm:%s45] %v112
      %v114 = vld [vmem:[%s52 + $0x74] sm:%s45]
      %115 = vst [vmem:[%s53 + $0x78] sm:%s45] %v114
      %v116 = vld [vmem:[%s52 + $0x7c] sm:%s45]
      %117 = vst [vmem:[%s53 + $0x7c] sm:%s45] %v116
    $region46: #{model_forward.1} parent=40 // loop_footer
      %s51 = sadd.s32 1, %s47
    $region47: #{model_forward.1} parent=40 // loop_footer_branch
      %46 = sbr.rel target = $region43
    $region48: #{model_forward.1} parent=40 // loop_exit
      _
  $region41: #{model_forward.1} parent=0 // pred_fallthru
    _
  // Predicated region
  $region67: #{model_forward.1} parent=0 // pred_check
    _
  $region68: #{model_forward.1} parent=0 // pred_check_branch
    %211 = sbr.rel (0) target = $region70
  $region69: #{model_forward.1} parent=0 // pred_region
    %212 = vsyncadd [#allocation9], 2048
  $region70: #{model_forward.1} parent=0 // pred_fallthru
    _
  %s213 = scalar_lea.sflag [#allocation9], 1
  %p215 = scmp.lt.u32.totalorder 64, 8
  %p216 = pneg %p215
  // Predicated region
  $region71: #{model_forward.1} parent=0 // pred_check
    _
  $region72: #{model_forward.1} parent=0 // pred_check_branch
    %218 = sbr.rel (%p215) target = $region74
  $region73: #{model_forward.1} parent=0 // pred_region
    %s233 = sand.u32 64, 7
    %p234 = scmp.eq.s32.totalorder %s233, 0
    // Predicated region
    $region86: #{model_forward.1} parent=73 // pred_check
      %p235 = pneg %p234
    $region87: #{model_forward.1} parent=73 // pred_check_branch
      %237 = sbr.rel (%p235) target = $region89
    $region88: #{model_forward.1} parent=73 // pred_region
      loop: start=0, step=1, limit=1
      $region90: #{model_forward.1} parent=88 // loop_pre_header
        _
      $region91: #{model_forward.1} parent=88 // loop_header
        %s239 = sphi 0, %s243
        %p240 = scmp.ge.s32.totalorder %s239, 1
        %s244 = sphi %s9, %s9
        %s245 = sphi [#allocation3], [#allocation3]
      $region92: #{model_forward.1} parent=88 // loop_header_branch
        %242 = sbr.rel (%p240) target = $region96
      $region93: #{model_forward.1} parent=88 // loop_body
        %v246 = vld [vmem:[%s244] sm:$0xff]
        %247 = vst [vmem:[%s245] sm:$0xff] %v246
        %v248 = vld [vmem:[%s244 + $0x8] sm:$0xff]
        %249 = vst [vmem:[%s245 + $0x8] sm:$0xff] %v248
        %v250 = vld [vmem:[%s244 + $0x10] sm:$0xff]
        %251 = vst [vmem:[%s245 + $0x10] sm:$0xff] %v250
        %v252 = vld [vmem:[%s244 + $0x18] sm:$0xff]
        %253 = vst [vmem:[%s245 + $0x18] sm:$0xff] %v252
        %v254 = vld [vmem:[%s244 + $0x20] sm:$0xff]
        %255 = vst [vmem:[%s245 + $0x20] sm:$0xff] %v254
        %v256 = vld [vmem:[%s244 + $0x28] sm:$0xff]
        %257 = vst [vmem:[%s245 + $0x28] sm:$0xff] %v256
        %v258 = vld [vmem:[%s244 + $0x30] sm:$0xff]
        %259 = vst [vmem:[%s245 + $0x30] sm:$0xff] %v258
        %v260 = vld [vmem:[%s244 + $0x38] sm:$0xff]
        %261 = vst [vmem:[%s245 + $0x38] sm:$0xff] %v260
      $region94: #{model_forward.1} parent=88 // loop_footer
        %s243 = sadd.s32 1, %s239
      $region95: #{model_forward.1} parent=88 // loop_footer_branch
        %238 = sbr.rel target = $region91
      $region96: #{model_forward.1} parent=88 // loop_exit
        _
    $region89: #{model_forward.1} parent=73 // pred_fallthru
      _
    %p262 = pneg %p234
    // Predicated region
    $region97: #{model_forward.1} parent=73 // pred_check
      _
    $region98: #{model_forward.1} parent=73 // pred_check_branch
      %264 = sbr.rel (%p234) target = $region100
    $region99: #{model_forward.1} parent=73 // pred_region
      %s265 = sand.u32 64, 7
    $region100: #{model_forward.1} parent=73 // pred_fallthru
      _
  $region74: #{model_forward.1} parent=0 // pred_fallthru
    _
  // Predicated region
  $region75: #{model_forward.1} parent=0 // pred_check
    %p219 = pneg %p215
  $region76: #{model_forward.1} parent=0 // pred_check_branch
    %221 = sbr.rel (%p219) target = $region78
  $region77: #{model_forward.1} parent=0 // pred_region
    %s222 = sshllo.u32 0, 64
    loop: start=0, step=1, limit=1
    $region79: #{model_forward.1} parent=77 // loop_pre_header
      _
    $region80: #{model_forward.1} parent=77 // loop_header
      %s224 = sphi 0, %s228
      %p225 = scmp.ge.s32.totalorder %s224, 1
      %s229 = sphi %s9, %s9
      %s230 = sphi [#allocation3], [#allocation3]
    $region81: #{model_forward.1} parent=77 // loop_header_branch
      %227 = sbr.rel (%p225) target = $region85
    $region82: #{model_forward.1} parent=77 // loop_body
      %v231 = vld [vmem:[%s229] sm:%s222]
      %232 = vst [vmem:[%s230] sm:%s222] %v231
    $region83: #{model_forward.1} parent=77 // loop_footer
      %s228 = sadd.s32 1, %s224
    $region84: #{model_forward.1} parent=77 // loop_footer_branch
      %223 = sbr.rel target = $region80
    $region85: #{model_forward.1} parent=77 // loop_exit
      _
  $region78: #{model_forward.1} parent=0 // pred_fallthru
    _
  // Predicated region
  $region101: #{model_forward.1} parent=0 // pred_check
    _
  $region102: #{model_forward.1} parent=0 // pred_check_branch
    %268 = sbr.rel (0) target = $region104
  $region103: #{model_forward.1} parent=0 // pred_region
    %269 = vsyncadd %s213, 1024
  $region104: #{model_forward.1} parent=0 // pred_fallthru
    _
  %s270 = scalar_lea.sflag [#allocation9], 2
  %p272 = scmp.lt.u32.totalorder 4, 8
  %p273 = pneg %p272
  // Predicated region
  $region105: #{model_forward.1} parent=0 // pred_check
    _
  $region106: #{model_forward.1} parent=0 // pred_check_branch
    %275 = sbr.rel (%p272) target = $region108
  $region107: #{model_forward.1} parent=0 // pred_region
    %s352 = sand.u32 4, 7
    %p353 = scmp.eq.s32.totalorder %s352, 0
    %p354 = pneg %p353
    // Predicated region
    $region120: #{model_forward.1} parent=107 // pred_check
      _
    $region121: #{model_forward.1} parent=107 // pred_check_branch
      %356 = sbr.rel (%p353) target = $region123
    $region122: #{model_forward.1} parent=107 // pred_region
      %s357 = sand.u32 4, 7
      %s358 = ssub.s32 4, %s357
      %s359 = scalar_lea.vmem %s10, %s358
      %s360 = ssub.s32 4, %s357
      %s361 = scalar_lea.vmem [#allocation4], %s360
      loop: start=0, step=1, limit=1
      $region124: #{model_forward.1} parent=122 // loop_pre_header
        _
      $region125: #{model_forward.1} parent=122 // loop_header
        %s363 = sphi 0, %s367
        %p364 = scmp.ge.s32.totalorder %s363, 1
        %s368 = sphi %s10, %s10
        %s369 = sphi [#allocation4], [#allocation4]
      $region126: #{model_forward.1} parent=122 // loop_header_branch
        %366 = sbr.rel (%p364) target = $region130
      $region127: #{model_forward.1} parent=122 // loop_body
        _
      $region128: #{model_forward.1} parent=122 // loop_footer
        %s367 = sadd.s32 1, %s363
      $region129: #{model_forward.1} parent=122 // loop_footer_branch
        %362 = sbr.rel target = $region125
      $region130: #{model_forward.1} parent=122 // loop_exit
        _
      %s370 = sshllo.u32 0, %s357
      loop: start=0, step=1, limit=1
      $region131: #{model_forward.1} parent=122 // loop_pre_header
        _
      $region132: #{model_forward.1} parent=122 // loop_header
        %s372 = sphi 0, %s376
        %p373 = scmp.ge.s32.totalorder %s372, 1
        %s377 = sphi %s359, %s359
        %s378 = sphi %s361, %s361
      $region133: #{model_forward.1} parent=122 // loop_header_branch
        %375 = sbr.rel (%p373) target = $region137
      $region134: #{model_forward.1} parent=122 // loop_body
        %v379 = vld [vmem:[%s377] sm:%s370]
        %380 = vst [vmem:[%s378] sm:%s370] %v379
        %v381 = vld [vmem:[%s377 + $0x8] sm:%s370]
        %382 = vst [vmem:[%s378 + $0x4] sm:%s370] %v381
        %v383 = vld [vmem:[%s377 + $0x4] sm:%s370]
        %384 = vst [vmem:[%s378 + $0x8] sm:%s370] %v383
        %v385 = vld [vmem:[%s377 + $0xc] sm:%s370]
        %386 = vst [vmem:[%s378 + $0xc] sm:%s370] %v385
        %v387 = vld [vmem:[%s377 + $0x10] sm:%s370]
        %388 = vst [vmem:[%s378 + $0x10] sm:%s370] %v387
        %v389 = vld [vmem:[%s377 + $0x18] sm:%s370]
        %390 = vst [vmem:[%s378 + $0x14] sm:%s370] %v389
        %v391 = vld [vmem:[%s377 + $0x14] sm:%s370]
        %392 = vst [vmem:[%s378 + $0x18] sm:%s370] %v391
        %v393 = vld [vmem:[%s377 + $0x1c] sm:%s370]
        %394 = vst [vmem:[%s378 + $0x1c] sm:%s370] %v393
        %v395 = vld [vmem:[%s377 + $0x20] sm:%s370]
        %396 = vst [vmem:[%s378 + $0x20] sm:%s370] %v395
        %v397 = vld [vmem:[%s377 + $0x28] sm:%s370]
        %398 = vst [vmem:[%s378 + $0x24] sm:%s370] %v397
        %v399 = vld [vmem:[%s377 + $0x24] sm:%s370]
        %400 = vst [vmem:[%s378 + $0x28] sm:%s370] %v399
        %v401 = vld [vmem:[%s377 + $0x2c] sm:%s370]
        %402 = vst [vmem:[%s378 + $0x2c] sm:%s370] %v401
        %v403 = vld [vmem:[%s377 + $0x30] sm:%s370]
        %404 = vst [vmem:[%s378 + $0x30] sm:%s370] %v403
        %v405 = vld [vmem:[%s377 + $0x38] sm:%s370]
        %406 = vst [vmem:[%s378 + $0x34] sm:%s370] %v405
        %v407 = vld [vmem:[%s377 + $0x34] sm:%s370]
        %408 = vst [vmem:[%s378 + $0x38] sm:%s370] %v407
        %v409 = vld [vmem:[%s377 + $0x3c] sm:%s370]
        %410 = vst [vmem:[%s378 + $0x3c] sm:%s370] %v409
        %v411 = vld [vmem:[%s377 + $0x40] sm:%s370]
        %412 = vst [vmem:[%s378 + $0x40] sm:%s370] %v411
        %v413 = vld [vmem:[%s377 + $0x48] sm:%s370]
        %414 = vst [vmem:[%s378 + $0x44] sm:%s370] %v413
        %v415 = vld [vmem:[%s377 + $0x44] sm:%s370]
        %416 = vst [vmem:[%s378 + $0x48] sm:%s370] %v415
        %v417 = vld [vmem:[%s377 + $0x4c] sm:%s370]
        %418 = vst [vmem:[%s378 + $0x4c] sm:%s370] %v417
        %v419 = vld [vmem:[%s377 + $0x50] sm:%s370]
        %420 = vst [vmem:[%s378 + $0x50] sm:%s370] %v419
        %v421 = vld [vmem:[%s377 + $0x58] sm:%s370]
        %422 = vst [vmem:[%s378 + $0x54] sm:%s370] %v421
        %v423 = vld [vmem:[%s377 + $0x54] sm:%s370]
        %424 = vst [vmem:[%s378 + $0x58] sm:%s370] %v423
        %v425 = vld [vmem:[%s377 + $0x5c] sm:%s370]
        %426 = vst [vmem:[%s378 + $0x5c] sm:%s370] %v425
        %v427 = vld [vmem:[%s377 + $0x60] sm:%s370]
        %428 = vst [vmem:[%s378 + $0x60] sm:%s370] %v427
        %v429 = vld [vmem:[%s377 + $0x68] sm:%s370]
        %430 = vst [vmem:[%s378 + $0x64] sm:%s370] %v429
        %v431 = vld [vmem:[%s377 + $0x64] sm:%s370]
        %432 = vst [vmem:[%s378 + $0x68] sm:%s370] %v431
        %v433 = vld [vmem:[%s377 + $0x6c] sm:%s370]
        %434 = vst [vmem:[%s378 + $0x6c] sm:%s370] %v433
        %v435 = vld [vmem:[%s377 + $0x70] sm:%s370]
        %436 = vst [vmem:[%s378 + $0x70] sm:%s370] %v435
        %v437 = vld [vmem:[%s377 + $0x78] sm:%s370]
        %438 = vst [vmem:[%s378 + $0x74] sm:%s370] %v437
        %v439 = vld [vmem:[%s377 + $0x74] sm:%s370]
        %440 = vst [vmem:[%s378 + $0x78] sm:%s370] %v439
        %v441 = vld [vmem:[%s377 + $0x7c] sm:%s370]
        %442 = vst [vmem:[%s378 + $0x7c] sm:%s370] %v441
      $region135: #{model_forward.1} parent=122 // loop_footer
        %s376 = sadd.s32 1, %s372
      $region136: #{model_forward.1} parent=122 // loop_footer_branch
        %371 = sbr.rel target = $region132
      $region137: #{model_forward.1} parent=122 // loop_exit
        _
    $region123: #{model_forward.1} parent=107 // pred_fallthru
      _
  $region108: #{model_forward.1} parent=0 // pred_fallthru
    _
  // Predicated region
  $region109: #{model_forward.1} parent=0 // pred_check
    %p276 = pneg %p272
  $region110: #{model_forward.1} parent=0 // pred_check_branch
    %278 = sbr.rel (%p276) target = $region112
  $region111: #{model_forward.1} parent=0 // pred_region
    %s279 = sshllo.u32 0, 4
    loop: start=0, step=1, limit=1
    $region113: #{model_forward.1} parent=111 // loop_pre_header
      _
    $region114: #{model_forward.1} parent=111 // loop_header
      %s281 = sphi 0, %s285
      %p282 = scmp.ge.s32.totalorder %s281, 1
      %s286 = sphi %s10, %s10
      %s287 = sphi [#allocation4], [#allocation4]
    $region115: #{model_forward.1} parent=111 // loop_header_branch
      %284 = sbr.rel (%p282) target = $region119
    $region116: #{model_forward.1} parent=111 // loop_body
      %v288 = vld [vmem:[%s286] sm:%s279]
      %289 = vst [vmem:[%s287] sm:%s279] %v288
      %v290 = vld [vmem:[%s286 + $0x8] sm:%s279]
      %291 = vst [vmem:[%s287 + $0x4] sm:%s279] %v290
      %v292 = vld [vmem:[%s286 + $0x4] sm:%s279]
      %293 = vst [vmem:[%s287 + $0x8] sm:%s279] %v292
      %v294 = vld [vmem:[%s286 + $0xc] sm:%s279]
      %295 = vst [vmem:[%s287 + $0xc] sm:%s279] %v294
      %v296 = vld [vmem:[%s286 + $0x10] sm:%s279]
      %297 = vst [vmem:[%s287 + $0x10] sm:%s279] %v296
      %v298 = vld [vmem:[%s286 + $0x18] sm:%s279]
      %299 = vst [vmem:[%s287 + $0x14] sm:%s279] %v298
      %v300 = vld [vmem:[%s286 + $0x14] sm:%s279]
      %301 = vst [vmem:[%s287 + $0x18] sm:%s279] %v300
      %v302 = vld [vmem:[%s286 + $0x1c] sm:%s279]
      %303 = vst [vmem:[%s287 + $0x1c] sm:%s279] %v302
      %v304 = vld [vmem:[%s286 + $0x20] sm:%s279]
      %305 = vst [vmem:[%s287 + $0x20] sm:%s279] %v304
      %v306 = vld [vmem:[%s286 + $0x28] sm:%s279]
      %307 = vst [vmem:[%s287 + $0x24] sm:%s279] %v306
      %v308 = vld [vmem:[%s286 + $0x24] sm:%s279]
      %309 = vst [vmem:[%s287 + $0x28] sm:%s279] %v308
      %v310 = vld [vmem:[%s286 + $0x2c] sm:%s279]
      %311 = vst [vmem:[%s287 + $0x2c] sm:%s279] %v310
      %v312 = vld [vmem:[%s286 + $0x30] sm:%s279]
      %313 = vst [vmem:[%s287 + $0x30] sm:%s279] %v312
      %v314 = vld [vmem:[%s286 + $0x38] sm:%s279]
      %315 = vst [vmem:[%s287 + $0x34] sm:%s279] %v314
      %v316 = vld [vmem:[%s286 + $0x34] sm:%s279]
      %317 = vst [vmem:[%s287 + $0x38] sm:%s279] %v316
      %v318 = vld [vmem:[%s286 + $0x3c] sm:%s279]
      %319 = vst [vmem:[%s287 + $0x3c] sm:%s279] %v318
      %v320 = vld [vmem:[%s286 + $0x40] sm:%s279]
      %321 = vst [vmem:[%s287 + $0x40] sm:%s279] %v320
      %v322 = vld [vmem:[%s286 + $0x48] sm:%s279]
      %323 = vst [vmem:[%s287 + $0x44] sm:%s279] %v322
      %v324 = vld [vmem:[%s286 + $0x44] sm:%s279]
      %325 = vst [vmem:[%s287 + $0x48] sm:%s279] %v324
      %v326 = vld [vmem:[%s286 + $0x4c] sm:%s279]
      %327 = vst [vmem:[%s287 + $0x4c] sm:%s279] %v326
      %v328 = vld [vmem:[%s286 + $0x50] sm:%s279]
      %329 = vst [vmem:[%s287 + $0x50] sm:%s279] %v328
      %v330 = vld [vmem:[%s286 + $0x58] sm:%s279]
      %331 = vst [vmem:[%s287 + $0x54] sm:%s279] %v330
      %v332 = vld [vmem:[%s286 + $0x54] sm:%s279]
      %333 = vst [vmem:[%s287 + $0x58] sm:%s279] %v332
      %v334 = vld [vmem:[%s286 + $0x5c] sm:%s279]
      %335 = vst [vmem:[%s287 + $0x5c] sm:%s279] %v334
      %v336 = vld [vmem:[%s286 + $0x60] sm:%s279]
      %337 = vst [vmem:[%s287 + $0x60] sm:%s279] %v336
      %v338 = vld [vmem:[%s286 + $0x68] sm:%s279]
      %339 = vst [vmem:[%s287 + $0x64] sm:%s279] %v338
      %v340 = vld [vmem:[%s286 + $0x64] sm:%s279]
      %341 = vst [vmem:[%s287 + $0x68] sm:%s279] %v340
      %v342 = vld [vmem:[%s286 + $0x6c] sm:%s279]
      %343 = vst [vmem:[%s287 + $0x6c] sm:%s279] %v342
      %v344 = vld [vmem:[%s286 + $0x70] sm:%s279]
      %345 = vst [vmem:[%s287 + $0x70] sm:%s279] %v344
      %v346 = vld [vmem:[%s286 + $0x78] sm:%s279]
      %347 = vst [vmem:[%s287 + $0x74] sm:%s279] %v346
      %v348 = vld [vmem:[%s286 + $0x74] sm:%s279]
      %349 = vst [vmem:[%s287 + $0x78] sm:%s279] %v348
      %v350 = vld [vmem:[%s286 + $0x7c] sm:%s279]
      %351 = vst [vmem:[%s287 + $0x7c] sm:%s279] %v350
    $region117: #{model_forward.1} parent=111 // loop_footer
      %s285 = sadd.s32 1, %s281
    $region118: #{model_forward.1} parent=111 // loop_footer_branch
      %280 = sbr.rel target = $region114
    $region119: #{model_forward.1} parent=111 // loop_exit
      _
  $region112: #{model_forward.1} parent=0 // pred_fallthru
    _
  // Predicated region
  $region138: #{model_forward.1} parent=0 // pred_check
    _
  $region139: #{model_forward.1} parent=0 // pred_check_branch
    %445 = sbr.rel (0) target = $region141
  $region140: #{model_forward.1} parent=0 // pred_region
    %446 = vsyncadd %s270, 2048
  $region141: #{model_forward.1} parent=0 // pred_fallthru
    _
  %s447 = scalar_lea.sflag [#allocation9], 3
  %p449 = scmp.lt.u32.totalorder 128, 8
  %p450 = pneg %p449
  // Predicated region
  $region142: #{model_forward.1} parent=0 // pred_check
    _
  $region143: #{model_forward.1} parent=0 // pred_check_branch
    %452 = sbr.rel (%p449) target = $region145
  $region144: #{model_forward.1} parent=0 // pred_region
    %s467 = sand.u32 128, 7
    %p468 = scmp.eq.s32.totalorder %s467, 0
    // Predicated region
    $region157: #{model_forward.1} parent=144 // pred_check
      %p469 = pneg %p468
    $region158: #{model_forward.1} parent=144 // pred_check_branch
      %471 = sbr.rel (%p469) target = $region160
    $region159: #{model_forward.1} parent=144 // pred_region
      loop: start=0, step=1, limit=1
      $region161: #{model_forward.1} parent=159 // loop_pre_header
        _
      $region162: #{model_forward.1} parent=159 // loop_header
        %s473 = sphi 0, %s477
        %p474 = scmp.ge.s32.totalorder %s473, 1
        %s478 = sphi %s11, %s11
        %s479 = sphi [#allocation5], [#allocation5]
      $region163: #{model_forward.1} parent=159 // loop_header_branch
        %476 = sbr.rel (%p474) target = $region167
      $region164: #{model_forward.1} parent=159 // loop_body
        %v480 = vld [vmem:[%s478] sm:$0xff]
        %481 = vst [vmem:[%s479] sm:$0xff] %v480
        %v482 = vld [vmem:[%s478 + $0x8] sm:$0xff]
        %483 = vst [vmem:[%s479 + $0x8] sm:$0xff] %v482
        %v484 = vld [vmem:[%s478 + $0x10] sm:$0xff]
        %485 = vst [vmem:[%s479 + $0x10] sm:$0xff] %v484
        %v486 = vld [vmem:[%s478 + $0x18] sm:$0xff]
        %487 = vst [vmem:[%s479 + $0x18] sm:$0xff] %v486
        %v488 = vld [vmem:[%s478 + $0x20] sm:$0xff]
        %489 = vst [vmem:[%s479 + $0x20] sm:$0xff] %v488
        %v490 = vld [vmem:[%s478 + $0x28] sm:$0xff]
        %491 = vst [vmem:[%s479 + $0x28] sm:$0xff] %v490
        %v492 = vld [vmem:[%s478 + $0x30] sm:$0xff]
        %493 = vst [vmem:[%s479 + $0x30] sm:$0xff] %v492
        %v494 = vld [vmem:[%s478 + $0x38] sm:$0xff]
        %495 = vst [vmem:[%s479 + $0x38] sm:$0xff] %v494
        %v496 = vld [vmem:[%s478 + $0x40] sm:$0xff]
        %497 = vst [vmem:[%s479 + $0x40] sm:$0xff] %v496
        %v498 = vld [vmem:[%s478 + $0x48] sm:$0xff]
        %499 = vst [vmem:[%s479 + $0x48] sm:$0xff] %v498
        %v500 = vld [vmem:[%s478 + $0x50] sm:$0xff]
        %501 = vst [vmem:[%s479 + $0x50] sm:$0xff] %v500
        %v502 = vld [vmem:[%s478 + $0x58] sm:$0xff]
        %503 = vst [vmem:[%s479 + $0x58] sm:$0xff] %v502
        %v504 = vld [vmem:[%s478 + $0x60] sm:$0xff]
        %505 = vst [vmem:[%s479 + $0x60] sm:$0xff] %v504
        %v506 = vld [vmem:[%s478 + $0x68] sm:$0xff]
        %507 = vst [vmem:[%s479 + $0x68] sm:$0xff] %v506
        %v508 = vld [vmem:[%s478 + $0x70] sm:$0xff]
        %509 = vst [vmem:[%s479 + $0x70] sm:$0xff] %v508
        %v510 = vld [vmem:[%s478 + $0x78] sm:$0xff]
        %511 = vst [vmem:[%s479 + $0x78] sm:$0xff] %v510
      $region165: #{model_forward.1} parent=159 // loop_footer
        %s477 = sadd.s32 1, %s473
      $region166: #{model_forward.1} parent=159 // loop_footer_branch
        %472 = sbr.rel target = $region162
      $region167: #{model_forward.1} parent=159 // loop_exit
        _
    $region160: #{model_forward.1} parent=144 // pred_fallthru
      _
    %p512 = pneg %p468
    // Predicated region
    $region168: #{model_forward.1} parent=144 // pred_check
      _
    $region169: #{model_forward.1} parent=144 // pred_check_branch
      %514 = sbr.rel (%p468) target = $region171
    $region170: #{model_forward.1} parent=144 // pred_region
      %s515 = sand.u32 128, 7
    $region171: #{model_forward.1} parent=144 // pred_fallthru
      _
  $region145: #{model_forward.1} parent=0 // pred_fallthru
    _
  // Predicated region
  $region146: #{model_forward.1} parent=0 // pred_check
    %p453 = pneg %p449
  $region147: #{model_forward.1} parent=0 // pred_check_branch
    %455 = sbr.rel (%p453) target = $region149
  $region148: #{model_forward.1} parent=0 // pred_region
    %s456 = sshllo.u32 0, 128
    loop: start=0, step=1, limit=1
    $region150: #{model_forward.1} parent=148 // loop_pre_header
      _
    $region151: #{model_forward.1} parent=148 // loop_header
      %s458 = sphi 0, %s462
      %p459 = scmp.ge.s32.totalorder %s458, 1
      %s463 = sphi %s11, %s11
      %s464 = sphi [#allocation5], [#allocation5]
    $region152: #{model_forward.1} parent=148 // loop_header_branch
      %461 = sbr.rel (%p459) target = $region156
    $region153: #{model_forward.1} parent=148 // loop_body
      %v465 = vld [vmem:[%s463] sm:%s456]
      %466 = vst [vmem:[%s464] sm:%s456] %v465
    $region154: #{model_forward.1} parent=148 // loop_footer
      %s462 = sadd.s32 1, %s458
    $region155: #{model_forward.1} parent=148 // loop_footer_branch
      %457 = sbr.rel target = $region151
    $region156: #{model_forward.1} parent=148 // loop_exit
      _
  $region149: #{model_forward.1} parent=0 // pred_fallthru
    _
  // Predicated region
  $region172: #{model_forward.1} parent=0 // pred_check
    _
  $region173: #{model_forward.1} parent=0 // pred_check_branch
    %518 = sbr.rel (0) target = $region175
  $region174: #{model_forward.1} parent=0 // pred_region
    %519 = vsyncadd %s447, 2048
  $region175: #{model_forward.1} parent=0 // pred_fallthru
    _
  %s520 = scalar_lea.sflag [#allocation9], 4
  %p522 = scmp.lt.u32.totalorder 4, 8
  %p523 = pneg %p522
  // Predicated region
  $region176: #{model_forward.1} parent=0 // pred_check
    _
  $region177: #{model_forward.1} parent=0 // pred_check_branch
    %525 = sbr.rel (%p522) target = $region179
  $region178: #{model_forward.1} parent=0 // pred_region
    %s794 = sand.u32 4, 7
    %p795 = scmp.eq.s32.totalorder %s794, 0
    %p796 = pneg %p795
    // Predicated region
    $region191: #{model_forward.1} parent=178 // pred_check
      _
    $region192: #{model_forward.1} parent=178 // pred_check_branch
      %798 = sbr.rel (%p795) target = $region194
    $region193: #{model_forward.1} parent=178 // pred_region
      %s799 = sand.u32 4, 7
      %s800 = ssub.s32 4, %s799
      %s801 = scalar_lea.vmem %s12, %s800
      %s802 = ssub.s32 4, %s799
      %s803 = scalar_lea.vmem [#allocation6], %s802
      loop: start=0, step=1, limit=1
      $region195: #{model_forward.1} parent=193 // loop_pre_header
        _
      $region196: #{model_forward.1} parent=193 // loop_header
        %s805 = sphi 0, %s809
        %p806 = scmp.ge.s32.totalorder %s805, 1
        %s810 = sphi %s12, %s12
        %s811 = sphi [#allocation6], [#allocation6]
      $region197: #{model_forward.1} parent=193 // loop_header_branch
        %808 = sbr.rel (%p806) target = $region201
      $region198: #{model_forward.1} parent=193 // loop_body
        _
      $region199: #{model_forward.1} parent=193 // loop_footer
        %s809 = sadd.s32 1, %s805
      $region200: #{model_forward.1} parent=193 // loop_footer_branch
        %804 = sbr.rel target = $region196
      $region201: #{model_forward.1} parent=193 // loop_exit
        _
      %s812 = sshllo.u32 0, %s799
      loop: start=0, step=1, limit=1
      $region202: #{model_forward.1} parent=193 // loop_pre_header
        _
      $region203: #{model_forward.1} parent=193 // loop_header
        %s814 = sphi 0, %s818
        %p815 = scmp.ge.s32.totalorder %s814, 1
        %s819 = sphi %s801, %s801
        %s820 = sphi %s803, %s803
      $region204: #{model_forward.1} parent=193 // loop_header_branch
        %817 = sbr.rel (%p815) target = $region208
      $region205: #{model_forward.1} parent=193 // loop_body
        %v821 = vld [vmem:[%s819] sm:%s812]
        %822 = vst [vmem:[%s820] sm:%s812] %v821
        %v823 = vld [vmem:[%s819 + $0x10] sm:%s812]
        %824 = vst [vmem:[%s820 + $0x4] sm:%s812] %v823
        %v825 = vld [vmem:[%s819 + $0x4] sm:%s812]
        %826 = vst [vmem:[%s820 + $0x8] sm:%s812] %v825
        %v827 = vld [vmem:[%s819 + $0x14] sm:%s812]
        %828 = vst [vmem:[%s820 + $0xc] sm:%s812] %v827
        %v829 = vld [vmem:[%s819 + $0x8] sm:%s812]
        %830 = vst [vmem:[%s820 + $0x10] sm:%s812] %v829
        %v831 = vld [vmem:[%s819 + $0x18] sm:%s812]
        %832 = vst [vmem:[%s820 + $0x14] sm:%s812] %v831
        %v833 = vld [vmem:[%s819 + $0xc] sm:%s812]
        %834 = vst [vmem:[%s820 + $0x18] sm:%s812] %v833
        %v835 = vld [vmem:[%s819 + $0x1c] sm:%s812]
        %836 = vst [vmem:[%s820 + $0x1c] sm:%s812] %v835
        %v837 = vld [vmem:[%s819 + $0x20] sm:%s812]
        %838 = vst [vmem:[%s820 + $0x20] sm:%s812] %v837
        %v839 = vld [vmem:[%s819 + $0x30] sm:%s812]
        %840 = vst [vmem:[%s820 + $0x24] sm:%s812] %v839
        %v841 = vld [vmem:[%s819 + $0x24] sm:%s812]
        %842 = vst [vmem:[%s820 + $0x28] sm:%s812] %v841
        %v843 = vld [vmem:[%s819 + $0x34] sm:%s812]
        %844 = vst [vmem:[%s820 + $0x2c] sm:%s812] %v843
        %v845 = vld [vmem:[%s819 + $0x28] sm:%s812]
        %846 = vst [vmem:[%s820 + $0x30] sm:%s812] %v845
        %v847 = vld [vmem:[%s819 + $0x38] sm:%s812]
        %848 = vst [vmem:[%s820 + $0x34] sm:%s812] %v847
        %v849 = vld [vmem:[%s819 + $0x2c] sm:%s812]
        %850 = vst [vmem:[%s820 + $0x38] sm:%s812] %v849
        %v851 = vld [vmem:[%s819 + $0x3c] sm:%s812]
        %852 = vst [vmem:[%s820 + $0x3c] sm:%s812] %v851
        %v853 = vld [vmem:[%s819 + $0x40] sm:%s812]
        %854 = vst [vmem:[%s820 + $0x40] sm:%s812] %v853
        %v855 = vld [vmem:[%s819 + $0x50] sm:%s812]
        %856 = vst [vmem:[%s820 + $0x44] sm:%s812] %v855
        %v857 = vld [vmem:[%s819 + $0x44] sm:%s812]
        %858 = vst [vmem:[%s820 + $0x48] sm:%s812] %v857
        %v859 = vld [vmem:[%s819 + $0x54] sm:%s812]
        %860 = vst [vmem:[%s820 + $0x4c] sm:%s812] %v859
        %v861 = vld [vmem:[%s819 + $0x48] sm:%s812]
        %862 = vst [vmem:[%s820 + $0x50] sm:%s812] %v861
        %v863 = vld [vmem:[%s819 + $0x58] sm:%s812]
        %864 = vst [vmem:[%s820 + $0x54] sm:%s812] %v863
        %v865 = vld [vmem:[%s819 + $0x4c] sm:%s812]
        %866 = vst [vmem:[%s820 + $0x58] sm:%s812] %v865
        %v867 = vld [vmem:[%s819 + $0x5c] sm:%s812]
        %868 = vst [vmem:[%s820 + $0x5c] sm:%s812] %v867
        %v869 = vld [vmem:[%s819 + $0x60] sm:%s812]
        %870 = vst [vmem:[%s820 + $0x60] sm:%s812] %v869
        %v871 = vld [vmem:[%s819 + $0x70] sm:%s812]
        %872 = vst [vmem:[%s820 + $0x64] sm:%s812] %v871
        %v873 = vld [vmem:[%s819 + $0x64] sm:%s812]
        %874 = vst [vmem:[%s820 + $0x68] sm:%s812] %v873
        %v875 = vld [vmem:[%s819 + $0x74] sm:%s812]
        %876 = vst [vmem:[%s820 + $0x6c] sm:%s812] %v875
        %v877 = vld [vmem:[%s819 + $0x68] sm:%s812]
        %878 = vst [vmem:[%s820 + $0x70] sm:%s812] %v877
        %v879 = vld [vmem:[%s819 + $0x78] sm:%s812]
        %880 = vst [vmem:[%s820 + $0x74] sm:%s812] %v879
        %v881 = vld [vmem:[%s819 + $0x6c] sm:%s812]
        %882 = vst [vmem:[%s820 + $0x78] sm:%s812] %v881
        %v883 = vld [vmem:[%s819 + $0x7c] sm:%s812]
        %884 = vst [vmem:[%s820 + $0x7c] sm:%s812] %v883
        %v885 = vld [vmem:[%s819 + $0x80] sm:%s812]
        %886 = vst [vmem:[%s820 + $0x80] sm:%s812] %v885
        %v887 = vld [vmem:[%s819 + $0x90] sm:%s812]
        %888 = vst [vmem:[%s820 + $0x84] sm:%s812] %v887
        %v889 = vld [vmem:[%s819 + $0x84] sm:%s812]
        %890 = vst [vmem:[%s820 + $0x88] sm:%s812] %v889
        %v891 = vld [vmem:[%s819 + $0x94] sm:%s812]
        %892 = vst [vmem:[%s820 + $0x8c] sm:%s812] %v891
        %v893 = vld [vmem:[%s819 + $0x88] sm:%s812]
        %894 = vst [vmem:[%s820 + $0x90] sm:%s812] %v893
        %v895 = vld [vmem:[%s819 + $0x98] sm:%s812]
        %896 = vst [vmem:[%s820 + $0x94] sm:%s812] %v895
        %v897 = vld [vmem:[%s819 + $0x8c] sm:%s812]
        %898 = vst [vmem:[%s820 + $0x98] sm:%s812] %v897
        %v899 = vld [vmem:[%s819 + $0x9c] sm:%s812]
        %900 = vst [vmem:[%s820 + $0x9c] sm:%s812] %v899
        %v901 = vld [vmem:[%s819 + $0xa0] sm:%s812]
        %902 = vst [vmem:[%s820 + $0xa0] sm:%s812] %v901
        %v903 = vld [vmem:[%s819 + $0xb0] sm:%s812]
        %904 = vst [vmem:[%s820 + $0xa4] sm:%s812] %v903
        %v905 = vld [vmem:[%s819 + $0xa4] sm:%s812]
        %906 = vst [vmem:[%s820 + $0xa8] sm:%s812] %v905
        %v907 = vld [vmem:[%s819 + $0xb4] sm:%s812]
        %908 = vst [vmem:[%s820 + $0xac] sm:%s812] %v907
        %v909 = vld [vmem:[%s819 + $0xa8] sm:%s812]
        %910 = vst [vmem:[%s820 + $0xb0] sm:%s812] %v909
        %v911 = vld [vmem:[%s819 + $0xb8] sm:%s812]
        %912 = vst [vmem:[%s820 + $0xb4] sm:%s812] %v911
        %v913 = vld [vmem:[%s819 + $0xac] sm:%s812]
        %914 = vst [vmem:[%s820 + $0xb8] sm:%s812] %v913
        %v915 = vld [vmem:[%s819 + $0xbc] sm:%s812]
        %916 = vst [vmem:[%s820 + $0xbc] sm:%s812] %v915
        %v917 = vld [vmem:[%s819 + $0xc0] sm:%s812]
        %918 = vst [vmem:[%s820 + $0xc0] sm:%s812] %v917
        %v919 = vld [vmem:[%s819 + $0xd0] sm:%s812]
        %920 = vst [vmem:[%s820 + $0xc4] sm:%s812] %v919
        %v921 = vld [vmem:[%s819 + $0xc4] sm:%s812]
        %922 = vst [vmem:[%s820 + $0xc8] sm:%s812] %v921
        %v923 = vld [vmem:[%s819 + $0xd4] sm:%s812]
        %924 = vst [vmem:[%s820 + $0xcc] sm:%s812] %v923
        %v925 = vld [vmem:[%s819 + $0xc8] sm:%s812]
        %926 = vst [vmem:[%s820 + $0xd0] sm:%s812] %v925
        %v927 = vld [vmem:[%s819 + $0xd8] sm:%s812]
        %928 = vst [vmem:[%s820 + $0xd4] sm:%s812] %v927
        %v929 = vld [vmem:[%s819 + $0xcc] sm:%s812]
        %930 = vst [vmem:[%s820 + $0xd8] sm:%s812] %v929
        %v931 = vld [vmem:[%s819 + $0xdc] sm:%s812]
        %932 = vst [vmem:[%s820 + $0xdc] sm:%s812] %v931
        %v933 = vld [vmem:[%s819 + $0xe0] sm:%s812]
        %934 = vst [vmem:[%s820 + $0xe0] sm:%s812] %v933
        %v935 = vld [vmem:[%s819 + $0xf0] sm:%s812]
        %936 = vst [vmem:[%s820 + $0xe4] sm:%s812] %v935
        %v937 = vld [vmem:[%s819 + $0xe4] sm:%s812]
        %938 = vst [vmem:[%s820 + $0xe8] sm:%s812] %v937
        %v939 = vld [vmem:[%s819 + $0xf4] sm:%s812]
        %940 = vst [vmem:[%s820 + $0xec] sm:%s812] %v939
        %v941 = vld [vmem:[%s819 + $0xe8] sm:%s812]
        %942 = vst [vmem:[%s820 + $0xf0] sm:%s812] %v941
        %v943 = vld [vmem:[%s819 + $0xf8] sm:%s812]
        %944 = vst [vmem:[%s820 + $0xf4] sm:%s812] %v943
        %v945 = vld [vmem:[%s819 + $0xec] sm:%s812]
        %946 = vst [vmem:[%s820 + $0xf8] sm:%s812] %v945
        %v947 = vld [vmem:[%s819 + $0xfc] sm:%s812]
        %948 = vst [vmem:[%s820 + $0xfc] sm:%s812] %v947
        %v949 = vld [vmem:[%s819 + $0x100] sm:%s812]
        %950 = vst [vmem:[%s820 + $0x100] sm:%s812] %v949
        %v951 = vld [vmem:[%s819 + $0x110] sm:%s812]
        %952 = vst [vmem:[%s820 + $0x104] sm:%s812] %v951
        %v953 = vld [vmem:[%s819 + $0x104] sm:%s812]
        %954 = vst [vmem:[%s820 + $0x108] sm:%s812] %v953
        %v955 = vld [vmem:[%s819 + $0x114] sm:%s812]
        %956 = vst [vmem:[%s820 + $0x10c] sm:%s812] %v955
        %v957 = vld [vmem:[%s819 + $0x108] sm:%s812]
        %958 = vst [vmem:[%s820 + $0x110] sm:%s812] %v957
        %v959 = vld [vmem:[%s819 + $0x118] sm:%s812]
        %960 = vst [vmem:[%s820 + $0x114] sm:%s812] %v959
        %v961 = vld [vmem:[%s819 + $0x10c] sm:%s812]
        %962 = vst [vmem:[%s820 + $0x118] sm:%s812] %v961
        %v963 = vld [vmem:[%s819 + $0x11c] sm:%s812]
        %964 = vst [vmem:[%s820 + $0x11c] sm:%s812] %v963
        %v965 = vld [vmem:[%s819 + $0x120] sm:%s812]
        %966 = vst [vmem:[%s820 + $0x120] sm:%s812] %v965
        %v967 = vld [vmem:[%s819 + $0x130] sm:%s812]
        %968 = vst [vmem:[%s820 + $0x124] sm:%s812] %v967
        %v969 = vld [vmem:[%s819 + $0x124] sm:%s812]
        %970 = vst [vmem:[%s820 + $0x128] sm:%s812] %v969
        %v971 = vld [vmem:[%s819 + $0x134] sm:%s812]
        %972 = vst [vmem:[%s820 + $0x12c] sm:%s812] %v971
        %v973 = vld [vmem:[%s819 + $0x128] sm:%s812]
        %974 = vst [vmem:[%s820 + $0x130] sm:%s812] %v973
        %v975 = vld [vmem:[%s819 + $0x138] sm:%s812]
        %976 = vst [vmem:[%s820 + $0x134] sm:%s812] %v975
        %v977 = vld [vmem:[%s819 + $0x12c] sm:%s812]
        %978 = vst [vmem:[%s820 + $0x138] sm:%s812] %v977
        %v979 = vld [vmem:[%s819 + $0x13c] sm:%s812]
        %980 = vst [vmem:[%s820 + $0x13c] sm:%s812] %v979
        %v981 = vld [vmem:[%s819 + $0x140] sm:%s812]
        %982 = vst [vmem:[%s820 + $0x140] sm:%s812] %v981
        %v983 = vld [vmem:[%s819 + $0x150] sm:%s812]
        %984 = vst [vmem:[%s820 + $0x144] sm:%s812] %v983
        %v985 = vld [vmem:[%s819 + $0x144] sm:%s812]
        %986 = vst [vmem:[%s820 + $0x148] sm:%s812] %v985
        %v987 = vld [vmem:[%s819 + $0x154] sm:%s812]
        %988 = vst [vmem:[%s820 + $0x14c] sm:%s812] %v987
        %v989 = vld [vmem:[%s819 + $0x148] sm:%s812]
        %990 = vst [vmem:[%s820 + $0x150] sm:%s812] %v989
        %v991 = vld [vmem:[%s819 + $0x158] sm:%s812]
        %992 = vst [vmem:[%s820 + $0x154] sm:%s812] %v991
        %v993 = vld [vmem:[%s819 + $0x14c] sm:%s812]
        %994 = vst [vmem:[%s820 + $0x158] sm:%s812] %v993
        %v995 = vld [vmem:[%s819 + $0x15c] sm:%s812]
        %996 = vst [vmem:[%s820 + $0x15c] sm:%s812] %v995
        %v997 = vld [vmem:[%s819 + $0x160] sm:%s812]
        %998 = vst [vmem:[%s820 + $0x160] sm:%s812] %v997
        %v999 = vld [vmem:[%s819 + $0x170] sm:%s812]
        %1000 = vst [vmem:[%s820 + $0x164] sm:%s812] %v999
        %v1001 = vld [vmem:[%s819 + $0x164] sm:%s812]
        %1002 = vst [vmem:[%s820 + $0x168] sm:%s812] %v1001
        %v1003 = vld [vmem:[%s819 + $0x174] sm:%s812]
        %1004 = vst [vmem:[%s820 + $0x16c] sm:%s812] %v1003
        %v1005 = vld [vmem:[%s819 + $0x168] sm:%s812]
        %1006 = vst [vmem:[%s820 + $0x170] sm:%s812] %v1005
        %v1007 = vld [vmem:[%s819 + $0x178] sm:%s812]
        %1008 = vst [vmem:[%s820 + $0x174] sm:%s812] %v1007
        %v1009 = vld [vmem:[%s819 + $0x16c] sm:%s812]
        %1010 = vst [vmem:[%s820 + $0x178] sm:%s812] %v1009
        %v1011 = vld [vmem:[%s819 + $0x17c] sm:%s812]
        %1012 = vst [vmem:[%s820 + $0x17c] sm:%s812] %v1011
        %v1013 = vld [vmem:[%s819 + $0x180] sm:%s812]
        %1014 = vst [vmem:[%s820 + $0x180] sm:%s812] %v1013
        %v1015 = vld [vmem:[%s819 + $0x190] sm:%s812]
        %1016 = vst [vmem:[%s820 + $0x184] sm:%s812] %v1015
        %v1017 = vld [vmem:[%s819 + $0x184] sm:%s812]
        %1018 = vst [vmem:[%s820 + $0x188] sm:%s812] %v1017
        %v1019 = vld [vmem:[%s819 + $0x194] sm:%s812]
        %1020 = vst [vmem:[%s820 + $0x18c] sm:%s812] %v1019
        %v1021 = vld [vmem:[%s819 + $0x188] sm:%s812]
        %1022 = vst [vmem:[%s820 + $0x190] sm:%s812] %v1021
        %v1023 = vld [vmem:[%s819 + $0x198] sm:%s812]
        %1024 = vst [vmem:[%s820 + $0x194] sm:%s812] %v1023
        %v1025 = vld [vmem:[%s819 + $0x18c] sm:%s812]
        %1026 = vst [vmem:[%s820 + $0x198] sm:%s812] %v1025
        %v1027 = vld [vmem:[%s819 + $0x19c] sm:%s812]
        %1028 = vst [vmem:[%s820 + $0x19c] sm:%s812] %v1027
        %v1029 = vld [vmem:[%s819 + $0x1a0] sm:%s812]
        %1030 = vst [vmem:[%s820 + $0x1a0] sm:%s812] %v1029
        %v1031 = vld [vmem:[%s819 + $0x1b0] sm:%s812]
        %1032 = vst [vmem:[%s820 + $0x1a4] sm:%s812] %v1031
        %v1033 = vld [vmem:[%s819 + $0x1a4] sm:%s812]
        %1034 = vst [vmem:[%s820 + $0x1a8] sm:%s812] %v1033
        %v1035 = vld [vmem:[%s819 + $0x1b4] sm:%s812]
        %1036 = vst [vmem:[%s820 + $0x1ac] sm:%s812] %v1035
        %v1037 = vld [vmem:[%s819 + $0x1a8] sm:%s812]
        %1038 = vst [vmem:[%s820 + $0x1b0] sm:%s812] %v1037
        %v1039 = vld [vmem:[%s819 + $0x1b8] sm:%s812]
        %1040 = vst [vmem:[%s820 + $0x1b4] sm:%s812] %v1039
        %v1041 = vld [vmem:[%s819 + $0x1ac] sm:%s812]
        %1042 = vst [vmem:[%s820 + $0x1b8] sm:%s812] %v1041
        %v1043 = vld [vmem:[%s819 + $0x1bc] sm:%s812]
        %1044 = vst [vmem:[%s820 + $0x1bc] sm:%s812] %v1043
        %v1045 = vld [vmem:[%s819 + $0x1c0] sm:%s812]
        %1046 = vst [vmem:[%s820 + $0x1c0] sm:%s812] %v1045
        %v1047 = vld [vmem:[%s819 + $0x1d0] sm:%s812]
        %1048 = vst [vmem:[%s820 + $0x1c4] sm:%s812] %v1047
        %v1049 = vld [vmem:[%s819 + $0x1c4] sm:%s812]
        %1050 = vst [vmem:[%s820 + $0x1c8] sm:%s812] %v1049
        %v1051 = vld [vmem:[%s819 + $0x1d4] sm:%s812]
        %1052 = vst [vmem:[%s820 + $0x1cc] sm:%s812] %v1051
        %v1053 = vld [vmem:[%s819 + $0x1c8] sm:%s812]
        %1054 = vst [vmem:[%s820 + $0x1d0] sm:%s812] %v1053
        %v1055 = vld [vmem:[%s819 + $0x1d8] sm:%s812]
        %1056 = vst [vmem:[%s820 + $0x1d4] sm:%s812] %v1055
        %v1057 = vld [vmem:[%s819 + $0x1cc] sm:%s812]
        %1058 = vst [vmem:[%s820 + $0x1d8] sm:%s812] %v1057
        %v1059 = vld [vmem:[%s819 + $0x1dc] sm:%s812]
        %1060 = vst [vmem:[%s820 + $0x1dc] sm:%s812] %v1059
        %v1061 = vld [vmem:[%s819 + $0x1e0] sm:%s812]
        %1062 = vst [vmem:[%s820 + $0x1e0] sm:%s812] %v1061
        %v1063 = vld [vmem:[%s819 + $0x1f0] sm:%s812]
        %1064 = vst [vmem:[%s820 + $0x1e4] sm:%s812] %v1063
        %v1065 = vld [vmem:[%s819 + $0x1e4] sm:%s812]
        %1066 = vst [vmem:[%s820 + $0x1e8] sm:%s812] %v1065
        %v1067 = vld [vmem:[%s819 + $0x1f4] sm:%s812]
        %1068 = vst [vmem:[%s820 + $0x1ec] sm:%s812] %v1067
        %v1069 = vld [vmem:[%s819 + $0x1e8] sm:%s812]
        %1070 = vst [vmem:[%s820 + $0x1f0] sm:%s812] %v1069
        %v1071 = vld [vmem:[%s819 + $0x1f8] sm:%s812]
        %1072 = vst [vmem:[%s820 + $0x1f4] sm:%s812] %v1071
        %v1073 = vld [vmem:[%s819 + $0x1ec] sm:%s812]
        %1074 = vst [vmem:[%s820 + $0x1f8] sm:%s812] %v1073
        %v1075 = vld [vmem:[%s819 + $0x1fc] sm:%s812]
        %1076 = vst [vmem:[%s820 + $0x1fc] sm:%s812] %v1075
      $region206: #{model_forward.1} parent=193 // loop_footer
        %s818 = sadd.s32 1, %s814
      $region207: #{model_forward.1} parent=193 // loop_footer_branch
        %813 = sbr.rel target = $region203
      $region208: #{model_forward.1} parent=193 // loop_exit
        _
    $region194: #{model_forward.1} parent=178 // pred_fallthru
      _
  $region179: #{model_forward.1} parent=0 // pred_fallthru
    _
  // Predicated region
  $region180: #{model_forward.1} parent=0 // pred_check
    %p526 = pneg %p522
  $region181: #{model_forward.1} parent=0 // pred_check_branch
    %528 = sbr.rel (%p526) target = $region183
  $region182: #{model_forward.1} parent=0 // pred_region
    %s529 = sshllo.u32 0, 4
    loop: start=0, step=1, limit=1
    $region184: #{model_forward.1} parent=182 // loop_pre_header
      _
    $region185: #{model_forward.1} parent=182 // loop_header
      %s531 = sphi 0, %s535
      %p532 = scmp.ge.s32.totalorder %s531, 1
      %s536 = sphi %s12, %s12
      %s537 = sphi [#allocation6], [#allocation6]
    $region186: #{model_forward.1} parent=182 // loop_header_branch
      %534 = sbr.rel (%p532) target = $region190
    $region187: #{model_forward.1} parent=182 // loop_body
      %v538 = vld [vmem:[%s536] sm:%s529]
      %539 = vst [vmem:[%s537] sm:%s529] %v538
      %v540 = vld [vmem:[%s536 + $0x10] sm:%s529]
      %541 = vst [vmem:[%s537 + $0x4] sm:%s529] %v540
      %v542 = vld [vmem:[%s536 + $0x4] sm:%s529]
      %543 = vst [vmem:[%s537 + $0x8] sm:%s529] %v542
      %v544 = vld [vmem:[%s536 + $0x14] sm:%s529]
      %545 = vst [vmem:[%s537 + $0xc] sm:%s529] %v544
      %v546 = vld [vmem:[%s536 + $0x8] sm:%s529]
      %547 = vst [vmem:[%s537 + $0x10] sm:%s529] %v546
      %v548 = vld [vmem:[%s536 + $0x18] sm:%s529]
      %549 = vst [vmem:[%s537 + $0x14] sm:%s529] %v548
      %v550 = vld [vmem:[%s536 + $0xc] sm:%s529]
      %551 = vst [vmem:[%s537 + $0x18] sm:%s529] %v550
      %v552 = vld [vmem:[%s536 + $0x1c] sm:%s529]
      %553 = vst [vmem:[%s537 + $0x1c] sm:%s529] %v552
      %v554 = vld [vmem:[%s536 + $0x20] sm:%s529]
      %555 = vst [vmem:[%s537 + $0x20] sm:%s529] %v554
      %v556 = vld [vmem:[%s536 + $0x30] sm:%s529]
      %557 = vst [vmem:[%s537 + $0x24] sm:%s529] %v556
      %v558 = vld [vmem:[%s536 + $0x24] sm:%s529]
      %559 = vst [vmem:[%s537 + $0x28] sm:%s529] %v558
      %v560 = vld [vmem:[%s536 + $0x34] sm:%s529]
      %561 = vst [vmem:[%s537 + $0x2c] sm:%s529] %v560
      %v562 = vld [vmem:[%s536 + $0x28] sm:%s529]
      %563 = vst [vmem:[%s537 + $0x30] sm:%s529] %v562
      %v564 = vld [vmem:[%s536 + $0x38] sm:%s529]
      %565 = vst [vmem:[%s537 + $0x34] sm:%s529] %v564
      %v566 = vld [vmem:[%s536 + $0x2c] sm:%s529]
      %567 = vst [vmem:[%s537 + $0x38] sm:%s529] %v566
      %v568 = vld [vmem:[%s536 + $0x3c] sm:%s529]
      %569 = vst [vmem:[%s537 + $0x3c] sm:%s529] %v568
      %v570 = vld [vmem:[%s536 + $0x40] sm:%s529]
      %571 = vst [vmem:[%s537 + $0x40] sm:%s529] %v570
      %v572 = vld [vmem:[%s536 + $0x50] sm:%s529]
      %573 = vst [vmem:[%s537 + $0x44] sm:%s529] %v572
      %v574 = vld [vmem:[%s536 + $0x44] sm:%s529]
      %575 = vst [vmem:[%s537 + $0x48] sm:%s529] %v574
      %v576 = vld [vmem:[%s536 + $0x54] sm:%s529]
      %577 = vst [vmem:[%s537 + $0x4c] sm:%s529] %v576
      %v578 = vld [vmem:[%s536 + $0x48] sm:%s529]
      %579 = vst [vmem:[%s537 + $0x50] sm:%s529] %v578
      %v580 = vld [vmem:[%s536 + $0x58] sm:%s529]
      %581 = vst [vmem:[%s537 + $0x54] sm:%s529] %v580
      %v582 = vld [vmem:[%s536 + $0x4c] sm:%s529]
      %583 = vst [vmem:[%s537 + $0x58] sm:%s529] %v582
      %v584 = vld [vmem:[%s536 + $0x5c] sm:%s529]
      %585 = vst [vmem:[%s537 + $0x5c] sm:%s529] %v584
      %v586 = vld [vmem:[%s536 + $0x60] sm:%s529]
      %587 = vst [vmem:[%s537 + $0x60] sm:%s529] %v586
      %v588 = vld [vmem:[%s536 + $0x70] sm:%s529]
      %589 = vst [vmem:[%s537 + $0x64] sm:%s529] %v588
      %v590 = vld [vmem:[%s536 + $0x64] sm:%s529]
      %591 = vst [vmem:[%s537 + $0x68] sm:%s529] %v590
      %v592 = vld [vmem:[%s536 + $0x74] sm:%s529]
      %593 = vst [vmem:[%s537 + $0x6c] sm:%s529] %v592
      %v594 = vld [vmem:[%s536 + $0x68] sm:%s529]
      %595 = vst [vmem:[%s537 + $0x70] sm:%s529] %v594
      %v596 = vld [vmem:[%s536 + $0x78] sm:%s529]
      %597 = vst [vmem:[%s537 + $0x74] sm:%s529] %v596
      %v598 = vld [vmem:[%s536 + $0x6c] sm:%s529]
      %599 = vst [vmem:[%s537 + $0x78] sm:%s529] %v598
      %v600 = vld [vmem:[%s536 + $0x7c] sm:%s529]
      %601 = vst [vmem:[%s537 + $0x7c] sm:%s529] %v600
      %v602 = vld [vmem:[%s536 + $0x80] sm:%s529]
      %603 = vst [vmem:[%s537 + $0x80] sm:%s529] %v602
      %v604 = vld [vmem:[%s536 + $0x90] sm:%s529]
      %605 = vst [vmem:[%s537 + $0x84] sm:%s529] %v604
      %v606 = vld [vmem:[%s536 + $0x84] sm:%s529]
      %607 = vst [vmem:[%s537 + $0x88] sm:%s529] %v606
      %v608 = vld [vmem:[%s536 + $0x94] sm:%s529]
      %609 = vst [vmem:[%s537 + $0x8c] sm:%s529] %v608
      %v610 = vld [vmem:[%s536 + $0x88] sm:%s529]
      %611 = vst [vmem:[%s537 + $0x90] sm:%s529] %v610
      %v612 = vld [vmem:[%s536 + $0x98] sm:%s529]
      %613 = vst [vmem:[%s537 + $0x94] sm:%s529] %v612
      %v614 = vld [vmem:[%s536 + $0x8c] sm:%s529]
      %615 = vst [vmem:[%s537 + $0x98] sm:%s529] %v614
      %v616 = vld [vmem:[%s536 + $0x9c] sm:%s529]
      %617 = vst [vmem:[%s537 + $0x9c] sm:%s529] %v616
      %v618 = vld [vmem:[%s536 + $0xa0] sm:%s529]
      %619 = vst [vmem:[%s537 + $0xa0] sm:%s529] %v618
      %v620 = vld [vmem:[%s536 + $0xb0] sm:%s529]
      %621 = vst [vmem:[%s537 + $0xa4] sm:%s529] %v620
      %v622 = vld [vmem:[%s536 + $0xa4] sm:%s529]
      %623 = vst [vmem:[%s537 + $0xa8] sm:%s529] %v622
      %v624 = vld [vmem:[%s536 + $0xb4] sm:%s529]
      %625 = vst [vmem:[%s537 + $0xac] sm:%s529] %v624
      %v626 = vld [vmem:[%s536 + $0xa8] sm:%s529]
      %627 = vst [vmem:[%s537 + $0xb0] sm:%s529] %v626
      %v628 = vld [vmem:[%s536 + $0xb8] sm:%s529]
      %629 = vst [vmem:[%s537 + $0xb4] sm:%s529] %v628
      %v630 = vld [vmem:[%s536 + $0xac] sm:%s529]
      %631 = vst [vmem:[%s537 + $0xb8] sm:%s529] %v630
      %v632 = vld [vmem:[%s536 + $0xbc] sm:%s529]
      %633 = vst [vmem:[%s537 + $0xbc] sm:%s529] %v632
      %v634 = vld [vmem:[%s536 + $0xc0] sm:%s529]
      %635 = vst [vmem:[%s537 + $0xc0] sm:%s529] %v634
      %v636 = vld [vmem:[%s536 + $0xd0] sm:%s529]
      %637 = vst [vmem:[%s537 + $0xc4] sm:%s529] %v636
      %v638 = vld [vmem:[%s536 + $0xc4] sm:%s529]
      %639 = vst [vmem:[%s537 + $0xc8] sm:%s529] %v638
      %v640 = vld [vmem:[%s536 + $0xd4] sm:%s529]
      %641 = vst [vmem:[%s537 + $0xcc] sm:%s529] %v640
      %v642 = vld [vmem:[%s536 + $0xc8] sm:%s529]
      %643 = vst [vmem:[%s537 + $0xd0] sm:%s529] %v642
      %v644 = vld [vmem:[%s536 + $0xd8] sm:%s529]
      %645 = vst [vmem:[%s537 + $0xd4] sm:%s529] %v644
      %v646 = vld [vmem:[%s536 + $0xcc] sm:%s529]
      %647 = vst [vmem:[%s537 + $0xd8] sm:%s529] %v646
      %v648 = vld [vmem:[%s536 + $0xdc] sm:%s529]
      %649 = vst [vmem:[%s537 + $0xdc] sm:%s529] %v648
      %v650 = vld [vmem:[%s536 + $0xe0] sm:%s529]
      %651 = vst [vmem:[%s537 + $0xe0] sm:%s529] %v650
      %v652 = vld [vmem:[%s536 + $0xf0] sm:%s529]
      %653 = vst [vmem:[%s537 + $0xe4] sm:%s529] %v652
      %v654 = vld [vmem:[%s536 + $0xe4] sm:%s529]
      %655 = vst [vmem:[%s537 + $0xe8] sm:%s529] %v654
      %v656 = vld [vmem:[%s536 + $0xf4] sm:%s529]
      %657 = vst [vmem:[%s537 + $0xec] sm:%s529] %v656
      %v658 = vld [vmem:[%s536 + $0xe8] sm:%s529]
      %659 = vst [vmem:[%s537 + $0xf0] sm:%s529] %v658
      %v660 = vld [vmem:[%s536 + $0xf8] sm:%s529]
      %661 = vst [vmem:[%s537 + $0xf4] sm:%s529] %v660
      %v662 = vld [vmem:[%s536 + $0xec] sm:%s529]
      %663 = vst [vmem:[%s537 + $0xf8] sm:%s529] %v662
      %v664 = vld [vmem:[%s536 + $0xfc] sm:%s529]
      %665 = vst [vmem:[%s537 + $0xfc] sm:%s529] %v664
      %v666 = vld [vmem:[%s536 + $0x100] sm:%s529]
      %667 = vst [vmem:[%s537 + $0x100] sm:%s529] %v666
      %v668 = vld [vmem:[%s536 + $0x110] sm:%s529]
      %669 = vst [vmem:[%s537 + $0x104] sm:%s529] %v668
      %v670 = vld [vmem:[%s536 + $0x104] sm:%s529]
      %671 = vst [vmem:[%s537 + $0x108] sm:%s529] %v670
      %v672 = vld [vmem:[%s536 + $0x114] sm:%s529]
      %673 = vst [vmem:[%s537 + $0x10c] sm:%s529] %v672
      %v674 = vld [vmem:[%s536 + $0x108] sm:%s529]
      %675 = vst [vmem:[%s537 + $0x110] sm:%s529] %v674
      %v676 = vld [vmem:[%s536 + $0x118] sm:%s529]
      %677 = vst [vmem:[%s537 + $0x114] sm:%s529] %v676
      %v678 = vld [vmem:[%s536 + $0x10c] sm:%s529]
      %679 = vst [vmem:[%s537 + $0x118] sm:%s529] %v678
      %v680 = vld [vmem:[%s536 + $0x11c] sm:%s529]
      %681 = vst [vmem:[%s537 + $0x11c] sm:%s529] %v680
      %v682 = vld [vmem:[%s536 + $0x120] sm:%s529]
      %683 = vst [vmem:[%s537 + $0x120] sm:%s529] %v682
      %v684 = vld [vmem:[%s536 + $0x130] sm:%s529]
      %685 = vst [vmem:[%s537 + $0x124] sm:%s529] %v684
      %v686 = vld [vmem:[%s536 + $0x124] sm:%s529]
      %687 = vst [vmem:[%s537 + $0x128] sm:%s529] %v686
      %v688 = vld [vmem:[%s536 + $0x134] sm:%s529]
      %689 = vst [vmem:[%s537 + $0x12c] sm:%s529] %v688
      %v690 = vld [vmem:[%s536 + $0x128] sm:%s529]
      %691 = vst [vmem:[%s537 + $0x130] sm:%s529] %v690
      %v692 = vld [vmem:[%s536 + $0x138] sm:%s529]
      %693 = vst [vmem:[%s537 + $0x134] sm:%s529] %v692
      %v694 = vld [vmem:[%s536 + $0x12c] sm:%s529]
      %695 = vst [vmem:[%s537 + $0x138] sm:%s529] %v694
      %v696 = vld [vmem:[%s536 + $0x13c] sm:%s529]
      %697 = vst [vmem:[%s537 + $0x13c] sm:%s529] %v696
      %v698 = vld [vmem:[%s536 + $0x140] sm:%s529]
      %699 = vst [vmem:[%s537 + $0x140] sm:%s529] %v698
      %v700 = vld [vmem:[%s536 + $0x150] sm:%s529]
      %701 = vst [vmem:[%s537 + $0x144] sm:%s529] %v700
      %v702 = vld [vmem:[%s536 + $0x144] sm:%s529]
      %703 = vst [vmem:[%s537 + $0x148] sm:%s529] %v702
      %v704 = vld [vmem:[%s536 + $0x154] sm:%s529]
      %705 = vst [vmem:[%s537 + $0x14c] sm:%s529] %v704
      %v706 = vld [vmem:[%s536 + $0x148] sm:%s529]
      %707 = vst [vmem:[%s537 + $0x150] sm:%s529] %v706
      %v708 = vld [vmem:[%s536 + $0x158] sm:%s529]
      %709 = vst [vmem:[%s537 + $0x154] sm:%s529] %v708
      %v710 = vld [vmem:[%s536 + $0x14c] sm:%s529]
      %711 = vst [vmem:[%s537 + $0x158] sm:%s529] %v710
      %v712 = vld [vmem:[%s536 + $0x15c] sm:%s529]
      %713 = vst [vmem:[%s537 + $0x15c] sm:%s529] %v712
      %v714 = vld [vmem:[%s536 + $0x160] sm:%s529]
      %715 = vst [vmem:[%s537 + $0x160] sm:%s529] %v714
      %v716 = vld [vmem:[%s536 + $0x170] sm:%s529]
      %717 = vst [vmem:[%s537 + $0x164] sm:%s529] %v716
      %v718 = vld [vmem:[%s536 + $0x164] sm:%s529]
      %719 = vst [vmem:[%s537 + $0x168] sm:%s529] %v718
      %v720 = vld [vmem:[%s536 + $0x174] sm:%s529]
      %721 = vst [vmem:[%s537 + $0x16c] sm:%s529] %v720
      %v722 = vld [vmem:[%s536 + $0x168] sm:%s529]
      %723 = vst [vmem:[%s537 + $0x170] sm:%s529] %v722
      %v724 = vld [vmem:[%s536 + $0x178] sm:%s529]
      %725 = vst [vmem:[%s537 + $0x174] sm:%s529] %v724
      %v726 = vld [vmem:[%s536 + $0x16c] sm:%s529]
      %727 = vst [vmem:[%s537 + $0x178] sm:%s529] %v726
      %v728 = vld [vmem:[%s536 + $0x17c] sm:%s529]
      %729 = vst [vmem:[%s537 + $0x17c] sm:%s529] %v728
      %v730 = vld [vmem:[%s536 + $0x180] sm:%s529]
      %731 = vst [vmem:[%s537 + $0x180] sm:%s529] %v730
      %v732 = vld [vmem:[%s536 + $0x190] sm:%s529]
      %733 = vst [vmem:[%s537 + $0x184] sm:%s529] %v732
      %v734 = vld [vmem:[%s536 + $0x184] sm:%s529]
      %735 = vst [vmem:[%s537 + $0x188] sm:%s529] %v734
      %v736 = vld [vmem:[%s536 + $0x194] sm:%s529]
      %737 = vst [vmem:[%s537 + $0x18c] sm:%s529] %v736
      %v738 = vld [vmem:[%s536 + $0x188] sm:%s529]
      %739 = vst [vmem:[%s537 + $0x190] sm:%s529] %v738
      %v740 = vld [vmem:[%s536 + $0x198] sm:%s529]
      %741 = vst [vmem:[%s537 + $0x194] sm:%s529] %v740
      %v742 = vld [vmem:[%s536 + $0x18c] sm:%s529]
      %743 = vst [vmem:[%s537 + $0x198] sm:%s529] %v742
      %v744 = vld [vmem:[%s536 + $0x19c] sm:%s529]
      %745 = vst [vmem:[%s537 + $0x19c] sm:%s529] %v744
      %v746 = vld [vmem:[%s536 + $0x1a0] sm:%s529]
      %747 = vst [vmem:[%s537 + $0x1a0] sm:%s529] %v746
      %v748 = vld [vmem:[%s536 + $0x1b0] sm:%s529]
      %749 = vst [vmem:[%s537 + $0x1a4] sm:%s529] %v748
      %v750 = vld [vmem:[%s536 + $0x1a4] sm:%s529]
      %751 = vst [vmem:[%s537 + $0x1a8] sm:%s529] %v750
      %v752 = vld [vmem:[%s536 + $0x1b4] sm:%s529]
      %753 = vst [vmem:[%s537 + $0x1ac] sm:%s529] %v752
      %v754 = vld [vmem:[%s536 + $0x1a8] sm:%s529]
      %755 = vst [vmem:[%s537 + $0x1b0] sm:%s529] %v754
      %v756 = vld [vmem:[%s536 + $0x1b8] sm:%s529]
      %757 = vst [vmem:[%s537 + $0x1b4] sm:%s529] %v756
      %v758 = vld [vmem:[%s536 + $0x1ac] sm:%s529]
      %759 = vst [vmem:[%s537 + $0x1b8] sm:%s529] %v758
      %v760 = vld [vmem:[%s536 + $0x1bc] sm:%s529]
      %761 = vst [vmem:[%s537 + $0x1bc] sm:%s529] %v760
      %v762 = vld [vmem:[%s536 + $0x1c0] sm:%s529]
      %763 = vst [vmem:[%s537 + $0x1c0] sm:%s529] %v762
      %v764 = vld [vmem:[%s536 + $0x1d0] sm:%s529]
      %765 = vst [vmem:[%s537 + $0x1c4] sm:%s529] %v764
      %v766 = vld [vmem:[%s536 + $0x1c4] sm:%s529]
      %767 = vst [vmem:[%s537 + $0x1c8] sm:%s529] %v766
      %v768 = vld [vmem:[%s536 + $0x1d4] sm:%s529]
      %769 = vst [vmem:[%s537 + $0x1cc] sm:%s529] %v768
      %v770 = vld [vmem:[%s536 + $0x1c8] sm:%s529]
      %771 = vst [vmem:[%s537 + $0x1d0] sm:%s529] %v770
      %v772 = vld [vmem:[%s536 + $0x1d8] sm:%s529]
      %773 = vst [vmem:[%s537 + $0x1d4] sm:%s529] %v772
      %v774 = vld [vmem:[%s536 + $0x1cc] sm:%s529]
      %775 = vst [vmem:[%s537 + $0x1d8] sm:%s529] %v774
      %v776 = vld [vmem:[%s536 + $0x1dc] sm:%s529]
      %777 = vst [vmem:[%s537 + $0x1dc] sm:%s529] %v776
      %v778 = vld [vmem:[%s536 + $0x1e0] sm:%s529]
      %779 = vst [vmem:[%s537 + $0x1e0] sm:%s529] %v778
      %v780 = vld [vmem:[%s536 + $0x1f0] sm:%s529]
      %781 = vst [vmem:[%s537 + $0x1e4] sm:%s529] %v780
      %v782 = vld [vmem:[%s536 + $0x1e4] sm:%s529]
      %783 = vst [vmem:[%s537 + $0x1e8] sm:%s529] %v782
      %v784 = vld [vmem:[%s536 + $0x1f4] sm:%s529]
      %785 = vst [vmem:[%s537 + $0x1ec] sm:%s529] %v784
      %v786 = vld [vmem:[%s536 + $0x1e8] sm:%s529]
      %787 = vst [vmem:[%s537 + $0x1f0] sm:%s529] %v786
      %v788 = vld [vmem:[%s536 + $0x1f8] sm:%s529]
      %789 = vst [vmem:[%s537 + $0x1f4] sm:%s529] %v788
      %v790 = vld [vmem:[%s536 + $0x1ec] sm:%s529]
      %791 = vst [vmem:[%s537 + $0x1f8] sm:%s529] %v790
      %v792 = vld [vmem:[%s536 + $0x1fc] sm:%s529]
      %793 = vst [vmem:[%s537 + $0x1fc] sm:%s529] %v792
    $region188: #{model_forward.1} parent=182 // loop_footer
      %s535 = sadd.s32 1, %s531
    $region189: #{model_forward.1} parent=182 // loop_footer_branch
      %530 = sbr.rel target = $region185
    $region190: #{model_forward.1} parent=182 // loop_exit
      _
  $region183: #{model_forward.1} parent=0 // pred_fallthru
    _
  // Predicated region
  $region209: #{model_forward.1} parent=0 // pred_check
    _
  $region210: #{model_forward.1} parent=0 // pred_check_branch
    %1079 = sbr.rel (0) target = $region212
  $region211: #{model_forward.1} parent=0 // pred_region
    %1080 = vsyncadd %s520, 8192
  $region212: #{model_forward.1} parent=0 // pred_fallthru
    _
  %s1081 = scalar_lea.sflag [#allocation9], 5
  %p1083 = scmp.lt.u32.totalorder 16, 8
  %p1084 = pneg %p1083
  // Predicated region
  $region213: #{model_forward.1} parent=0 // pred_check
    _
  $region214: #{model_forward.1} parent=0 // pred_check_branch
    %1086 = sbr.rel (%p1083) target = $region216
  $region215: #{model_forward.1} parent=0 // pred_region
    %s1101 = sand.u32 16, 7
    %p1102 = scmp.eq.s32.totalorder %s1101, 0
    // Predicated region
    $region228: #{model_forward.1} parent=215 // pred_check
      %p1103 = pneg %p1102
    $region229: #{model_forward.1} parent=215 // pred_check_branch
      %1105 = sbr.rel (%p1103) target = $region231
    $region230: #{model_forward.1} parent=215 // pred_region
      loop: start=0, step=1, limit=1
      $region232: #{model_forward.1} parent=230 // loop_pre_header
        _
      $region233: #{model_forward.1} parent=230 // loop_header
        %s1107 = sphi 0, %s1111
        %p1108 = scmp.ge.s32.totalorder %s1107, 1
        %s1112 = sphi %s13, %s13
        %s1113 = sphi [#allocation7], [#allocation7]
      $region234: #{model_forward.1} parent=230 // loop_header_branch
        %1110 = sbr.rel (%p1108) target = $region238
      $region235: #{model_forward.1} parent=230 // loop_body
        %v1114 = vld [vmem:[%s1112] sm:$0xff]
        %1115 = vst [vmem:[%s1113] sm:$0xff] %v1114
        %v1116 = vld [vmem:[%s1112 + $0x8] sm:$0xff]
        %1117 = vst [vmem:[%s1113 + $0x8] sm:$0xff] %v1116
      $region236: #{model_forward.1} parent=230 // loop_footer
        %s1111 = sadd.s32 1, %s1107
      $region237: #{model_forward.1} parent=230 // loop_footer_branch
        %1106 = sbr.rel target = $region233
      $region238: #{model_forward.1} parent=230 // loop_exit
        _
    $region231: #{model_forward.1} parent=215 // pred_fallthru
      _
    %p1118 = pneg %p1102
    // Predicated region
    $region239: #{model_forward.1} parent=215 // pred_check
      _
    $region240: #{model_forward.1} parent=215 // pred_check_branch
      %1120 = sbr.rel (%p1102) target = $region242
    $region241: #{model_forward.1} parent=215 // pred_region
      %s1121 = sand.u32 16, 7
    $region242: #{model_forward.1} parent=215 // pred_fallthru
      _
  $region216: #{model_forward.1} parent=0 // pred_fallthru
    _
  // Predicated region
  $region217: #{model_forward.1} parent=0 // pred_check
    %p1087 = pneg %p1083
  $region218: #{model_forward.1} parent=0 // pred_check_branch
    %1089 = sbr.rel (%p1087) target = $region220
  $region219: #{model_forward.1} parent=0 // pred_region
    %s1090 = sshllo.u32 0, 16
    loop: start=0, step=1, limit=1
    $region221: #{model_forward.1} parent=219 // loop_pre_header
      _
    $region222: #{model_forward.1} parent=219 // loop_header
      %s1092 = sphi 0, %s1096
      %p1093 = scmp.ge.s32.totalorder %s1092, 1
      %s1097 = sphi %s13, %s13
      %s1098 = sphi [#allocation7], [#allocation7]
    $region223: #{model_forward.1} parent=219 // loop_header_branch
      %1095 = sbr.rel (%p1093) target = $region227
    $region224: #{model_forward.1} parent=219 // loop_body
      %v1099 = vld [vmem:[%s1097] sm:%s1090]
      %1100 = vst [vmem:[%s1098] sm:%s1090] %v1099
    $region225: #{model_forward.1} parent=219 // loop_footer
      %s1096 = sadd.s32 1, %s1092
    $region226: #{model_forward.1} parent=219 // loop_footer_branch
      %1091 = sbr.rel target = $region222
    $region227: #{model_forward.1} parent=219 // loop_exit
      _
  $region220: #{model_forward.1} parent=0 // pred_fallthru
    _
  // Predicated region
  $region243: #{model_forward.1} parent=0 // pred_check
    _
  $region244: #{model_forward.1} parent=0 // pred_check_branch
    %1124 = sbr.rel (0) target = $region246
  $region245: #{model_forward.1} parent=0 // pred_region
    %1125 = vsyncadd %s1081, 256
  $region246: #{model_forward.1} parent=0 // pred_fallthru
    _
  %s1126 = scalar_lea.sflag [#allocation9], 6
  %p1128 = scmp.lt.u32.totalorder 64, 8
  %p1129 = pneg %p1128
  // Predicated region
  $region247: #{model_forward.1} parent=0 // pred_check
    _
  $region248: #{model_forward.1} parent=0 // pred_check_branch
    %1131 = sbr.rel (%p1128) target = $region250
  $region249: #{model_forward.1} parent=0 // pred_region
    %s1146 = sand.u32 64, 7
    %p1147 = scmp.eq.s32.totalorder %s1146, 0
    // Predicated region
    $region262: #{model_forward.1} parent=249 // pred_check
      %p1148 = pneg %p1147
    $region263: #{model_forward.1} parent=249 // pred_check_branch
      %1150 = sbr.rel (%p1148) target = $region265
    $region264: #{model_forward.1} parent=249 // pred_region
      loop: start=0, step=1, limit=1
      $region266: #{model_forward.1} parent=264 // loop_pre_header
        _
      $region267: #{model_forward.1} parent=264 // loop_header
        %s1152 = sphi 0, %s1156
        %p1153 = scmp.ge.s32.totalorder %s1152, 1
        %s1157 = sphi %s14, %s14
        %s1158 = sphi [#allocation8], [#allocation8]
      $region268: #{model_forward.1} parent=264 // loop_header_branch
        %1155 = sbr.rel (%p1153) target = $region272
      $region269: #{model_forward.1} parent=264 // loop_body
        %v1159 = vld [vmem:[%s1157] sm:$0xff]
        %1160 = vst [vmem:[%s1158] sm:$0xff] %v1159
        %v1161 = vld [vmem:[%s1157 + $0x8] sm:$0xff]
        %1162 = vst [vmem:[%s1158 + $0x8] sm:$0xff] %v1161
        %v1163 = vld [vmem:[%s1157 + $0x10] sm:$0xff]
        %1164 = vst [vmem:[%s1158 + $0x10] sm:$0xff] %v1163
        %v1165 = vld [vmem:[%s1157 + $0x18] sm:$0xff]
        %1166 = vst [vmem:[%s1158 + $0x18] sm:$0xff] %v1165
        %v1167 = vld [vmem:[%s1157 + $0x20] sm:$0xff]
        %1168 = vst [vmem:[%s1158 + $0x20] sm:$0xff] %v1167
        %v1169 = vld [vmem:[%s1157 + $0x28] sm:$0xff]
        %1170 = vst [vmem:[%s1158 + $0x28] sm:$0xff] %v1169
        %v1171 = vld [vmem:[%s1157 + $0x30] sm:$0xff]
        %1172 = vst [vmem:[%s1158 + $0x30] sm:$0xff] %v1171
        %v1173 = vld [vmem:[%s1157 + $0x38] sm:$0xff]
        %1174 = vst [vmem:[%s1158 + $0x38] sm:$0xff] %v1173
      $region270: #{model_forward.1} parent=264 // loop_footer
        %s1156 = sadd.s32 1, %s1152
      $region271: #{model_forward.1} parent=264 // loop_footer_branch
        %1151 = sbr.rel target = $region267
      $region272: #{model_forward.1} parent=264 // loop_exit
        _
    $region265: #{model_forward.1} parent=249 // pred_fallthru
      _
    %p1175 = pneg %p1147
    // Predicated region
    $region273: #{model_forward.1} parent=249 // pred_check
      _
    $region274: #{model_forward.1} parent=249 // pred_check_branch
      %1177 = sbr.rel (%p1147) target = $region276
    $region275: #{model_forward.1} parent=249 // pred_region
      %s1178 = sand.u32 64, 7
    $region276: #{model_forward.1} parent=249 // pred_fallthru
      _
  $region250: #{model_forward.1} parent=0 // pred_fallthru
    _
  // Predicated region
  $region251: #{model_forward.1} parent=0 // pred_check
    %p1132 = pneg %p1128
  $region252: #{model_forward.1} parent=0 // pred_check_branch
    %1134 = sbr.rel (%p1132) target = $region254
  $region253: #{model_forward.1} parent=0 // pred_region
    %s1135 = sshllo.u32 0, 64
    loop: start=0, step=1, limit=1
    $region255: #{model_forward.1} parent=253 // loop_pre_header
      _
    $region256: #{model_forward.1} parent=253 // loop_header
      %s1137 = sphi 0, %s1141
      %p1138 = scmp.ge.s32.totalorder %s1137, 1
      %s1142 = sphi %s14, %s14
      %s1143 = sphi [#allocation8], [#allocation8]
    $region257: #{model_forward.1} parent=253 // loop_header_branch
      %1140 = sbr.rel (%p1138) target = $region261
    $region258: #{model_forward.1} parent=253 // loop_body
      %v1144 = vld [vmem:[%s1142] sm:%s1135]
      %1145 = vst [vmem:[%s1143] sm:%s1135] %v1144
    $region259: #{model_forward.1} parent=253 // loop_footer
      %s1141 = sadd.s32 1, %s1137
    $region260: #{model_forward.1} parent=253 // loop_footer_branch
      %1136 = sbr.rel target = $region256
    $region261: #{model_forward.1} parent=253 // loop_exit
      _
  $region254: #{model_forward.1} parent=0 // pred_fallthru
    _
  // Predicated region
  $region277: #{model_forward.1} parent=0 // pred_check
    _
  $region278: #{model_forward.1} parent=0 // pred_check_branch
    %1181 = sbr.rel (0) target = $region280
  $region279: #{model_forward.1} parent=0 // pred_region
    %1182 = vsyncadd %s1126, 1024
  $region280: #{model_forward.1} parent=0 // pred_fallthru
    _
  %v1183 = vld [vmem:[%s0] sm:$0xf]
  %v1184 = vld [vmem:[%s0 + $0x4] sm:$0xf]
  %v1185 = vld [vmem:[%s0 + $0x8] sm:$0xf]
  %v1186 = vld [vmem:[%s0 + $0xc] sm:$0xf]
  %v1187 = vld [vmem:[%s0 + $0x10] sm:$0xf]
  %v1188 = vld [vmem:[%s0 + $0x14] sm:$0xf]
  %v1189 = vld [vmem:[%s0 + $0x18] sm:$0xf]
  %v1190 = vld [vmem:[%s0 + $0x1c] sm:$0xf]
  %v1191 = vld [vmem:[%s0 + $0x20] sm:$0xf]
  %v1192 = vld [vmem:[%s0 + $0x24] sm:$0xf]
  %v1193 = vld [vmem:[%s0 + $0x28] sm:$0xf]
  %v1194 = vld [vmem:[%s0 + $0x2c] sm:$0xf]
  %v1195 = vld [vmem:[%s0 + $0x30] sm:$0xf]
  %v1196 = vld [vmem:[%s0 + $0x34] sm:$0xf]
  %v1197 = vld [vmem:[%s0 + $0x38] sm:$0xf]
  %v1198 = vld [vmem:[%s0 + $0x3c] sm:$0xf]
  %v1199 = vld [vmem:[%s0 + $0x40] sm:$0xf]
  %v1200 = vld [vmem:[%s0 + $0x44] sm:$0xf]
  %v1201 = vld [vmem:[%s0 + $0x48] sm:$0xf]
  %v1202 = vld [vmem:[%s0 + $0x4c] sm:$0xf]
  %v1203 = vld [vmem:[%s0 + $0x50] sm:$0xf]
  %v1204 = vld [vmem:[%s0 + $0x54] sm:$0xf]
  %v1205 = vld [vmem:[%s0 + $0x58] sm:$0xf]
  %v1206 = vld [vmem:[%s0 + $0x5c] sm:$0xf]
  %v1207 = vld [vmem:[%s0 + $0x60] sm:$0xf]
  %v1208 = vld [vmem:[%s0 + $0x64] sm:$0xf]
  %v1209 = vld [vmem:[%s0 + $0x68] sm:$0xf]
  %v1210 = vld [vmem:[%s0 + $0x6c] sm:$0xf]
  %v1211 = vld [vmem:[%s0 + $0x70] sm:$0xf]
  %v1212 = vld [vmem:[%s0 + $0x74] sm:$0xf]
  %v1213 = vld [vmem:[%s0 + $0x78] sm:$0xf]
  %v1214 = vld [vmem:[%s0 + $0x7c] sm:$0xf]
  %v1215 = vld [vmem:[%s0 + $0x80] sm:$0xf]
  %v1216 = vld [vmem:[%s0 + $0x84] sm:$0xf]
  %v1217 = vld [vmem:[%s0 + $0x88] sm:$0xf]
  %v1218 = vld [vmem:[%s0 + $0x8c] sm:$0xf]
  %v1219 = vld [vmem:[%s0 + $0x90] sm:$0xf]
  %v1220 = vld [vmem:[%s0 + $0x94] sm:$0xf]
  %v1221 = vld [vmem:[%s0 + $0x98] sm:$0xf]
  %v1222 = vld [vmem:[%s0 + $0x9c] sm:$0xf]
  %v1223 = vld [vmem:[%s0 + $0xa0] sm:$0xf]
  %v1224 = vld [vmem:[%s0 + $0xa4] sm:$0xf]
  %v1225 = vld [vmem:[%s0 + $0xa8] sm:$0xf]
  %v1226 = vld [vmem:[%s0 + $0xac] sm:$0xf]
  %v1227 = vld [vmem:[%s0 + $0xb0] sm:$0xf]
  %v1228 = vld [vmem:[%s0 + $0xb4] sm:$0xf]
  %v1229 = vld [vmem:[%s0 + $0xb8] sm:$0xf]
  %v1230 = vld [vmem:[%s0 + $0xbc] sm:$0xf]
  %v1231 = vld [vmem:[%s0 + $0xc0] sm:$0xf]
  %v1232 = vld [vmem:[%s0 + $0xc4] sm:$0xf]
  %v1233 = vld [vmem:[%s0 + $0xc8] sm:$0xf]
  %v1234 = vld [vmem:[%s0 + $0xcc] sm:$0xf]
  %v1235 = vld [vmem:[%s0 + $0xd0] sm:$0xf]
  %v1236 = vld [vmem:[%s0 + $0xd4] sm:$0xf]
  %v1237 = vld [vmem:[%s0 + $0xd8] sm:$0xf]
  %v1238 = vld [vmem:[%s0 + $0xdc] sm:$0xf]
  %v1239 = vld [vmem:[%s0 + $0xe0] sm:$0xf]
  %v1240 = vld [vmem:[%s0 + $0xe4] sm:$0xf]
  %v1241 = vld [vmem:[%s0 + $0xe8] sm:$0xf]
  %v1242 = vld [vmem:[%s0 + $0xec] sm:$0xf]
  %v1243 = vld [vmem:[%s0 + $0xf0] sm:$0xf]
  %v1244 = vld [vmem:[%s0 + $0xf4] sm:$0xf]
  %v1245 = vld [vmem:[%s0 + $0xf8] sm:$0xf]
  %v1246 = vld [vmem:[%s0 + $0xfc] sm:$0xf]
  %v1247 = vld [vmem:[%s1] sm:$0xf]
  %v1248 = vld [vmem:[%s1 + $0x4] sm:$0xf]
  %v1249 = vld [vmem:[%s1 + $0x8] sm:$0xf]
  %v1250 = vld [vmem:[%s1 + $0xc] sm:$0xf]
  %v1251 = vld [vmem:[%s3] sm:$0x1]
  %v1252 = vlaneseq
  %v1253 = vshrl.u32 %v1252, 7
  %v1254 = vsub.s32 0, %v1253
  %v1255 = vrot.slane %v1251, %v1254
  %v1320 = vunpack.c.l.b16 %v1183
  %v1321 = vunpack.c.l.b16 %v1184
  %v1322 = vunpack.c.l.b16 %v1185
  %v1323 = vunpack.c.l.b16 %v1186
  %v1324 = vunpack.c.l.b16 %v1187
  %v1325 = vunpack.c.l.b16 %v1188
  %v1326 = vunpack.c.l.b16 %v1189
  %v1327 = vunpack.c.l.b16 %v1190
  %v1328 = vunpack.c.l.b16 %v1191
  %v1329 = vunpack.c.l.b16 %v1192
  %v1330 = vunpack.c.l.b16 %v1193
  %v1331 = vunpack.c.l.b16 %v1194
  %v1332 = vunpack.c.l.b16 %v1195
  %v1333 = vunpack.c.l.b16 %v1196
  %v1334 = vunpack.c.l.b16 %v1197
  %v1335 = vunpack.c.l.b16 %v1198
  %v1336 = vunpack.c.l.b16 %v1199
  %v1337 = vunpack.c.l.b16 %v1200
  %v1338 = vunpack.c.l.b16 %v1201
  %v1339 = vunpack.c.l.b16 %v1202
  %v1340 = vunpack.c.l.b16 %v1203
  %v1341 = vunpack.c.l.b16 %v1204
  %v1342 = vunpack.c.l.b16 %v1205
  %v1343 = vunpack.c.l.b16 %v1206
  %v1344 = vunpack.c.l.b16 %v1207
  %v1345 = vunpack.c.l.b16 %v1208
  %v1346 = vunpack.c.l.b16 %v1209
  %v1347 = vunpack.c.l.b16 %v1210
  %v1348 = vunpack.c.l.b16 %v1211
  %v1349 = vunpack.c.l.b16 %v1212
  %v1350 = vunpack.c.l.b16 %v1213
  %v1351 = vunpack.c.l.b16 %v1214
  %v1352 = vunpack.c.l.b16 %v1215
  %v1353 = vunpack.c.l.b16 %v1216
  %v1354 = vunpack.c.l.b16 %v1217
  %v1355 = vunpack.c.l.b16 %v1218
  %v1356 = vunpack.c.l.b16 %v1219
  %v1357 = vunpack.c.l.b16 %v1220
  %v1358 = vunpack.c.l.b16 %v1221
  %v1359 = vunpack.c.l.b16 %v1222
  %v1360 = vunpack.c.l.b16 %v1223
  %v1361 = vunpack.c.l.b16 %v1224
  %v1362 = vunpack.c.l.b16 %v1225
  %v1363 = vunpack.c.l.b16 %v1226
  %v1364 = vunpack.c.l.b16 %v1227
  %v1365 = vunpack.c.l.b16 %v1228
  %v1366 = vunpack.c.l.b16 %v1229
  %v1367 = vunpack.c.l.b16 %v1230
  %v1368 = vunpack.c.l.b16 %v1231
  %v1369 = vunpack.c.l.b16 %v1232
  %v1370 = vunpack.c.l.b16 %v1233
  %v1371 = vunpack.c.l.b16 %v1234
  %v1372 = vunpack.c.l.b16 %v1235
  %v1373 = vunpack.c.l.b16 %v1236
  %v1374 = vunpack.c.l.b16 %v1237
  %v1375 = vunpack.c.l.b16 %v1238
  %v1376 = vunpack.c.l.b16 %v1239
  %v1377 = vunpack.c.l.b16 %v1240
  %v1378 = vunpack.c.l.b16 %v1241
  %v1379 = vunpack.c.l.b16 %v1242
  %v1380 = vunpack.c.l.b16 %v1243
  %v1381 = vunpack.c.l.b16 %v1244
  %v1382 = vunpack.c.l.b16 %v1245
  %v1383 = vunpack.c.l.b16 %v1246
  %v1384 = vpack.c.b16 %v1321, %v1320
  %v1385 = vpack.c.b16 %v1323, %v1322
  %v1386 = vpack.c.b16 %v1325, %v1324
  %v1387 = vpack.c.b16 %v1327, %v1326
  %v1388 = vpack.c.b16 %v1329, %v1328
  %v1389 = vpack.c.b16 %v1331, %v1330
  %v1390 = vpack.c.b16 %v1333, %v1332
  %v1391 = vpack.c.b16 %v1335, %v1334
  %v1392 = vpack.c.b16 %v1337, %v1336
  %v1393 = vpack.c.b16 %v1339, %v1338
  %v1394 = vpack.c.b16 %v1341, %v1340
  %v1395 = vpack.c.b16 %v1343, %v1342
  %v1396 = vpack.c.b16 %v1345, %v1344
  %v1397 = vpack.c.b16 %v1347, %v1346
  %v1398 = vpack.c.b16 %v1349, %v1348
  %v1399 = vpack.c.b16 %v1351, %v1350
  %v1400 = vpack.c.b16 %v1353, %v1352
  %v1401 = vpack.c.b16 %v1355, %v1354
  %v1402 = vpack.c.b16 %v1357, %v1356
  %v1403 = vpack.c.b16 %v1359, %v1358
  %v1404 = vpack.c.b16 %v1361, %v1360
  %v1405 = vpack.c.b16 %v1363, %v1362
  %v1406 = vpack.c.b16 %v1365, %v1364
  %v1407 = vpack.c.b16 %v1367, %v1366
  %v1408 = vpack.c.b16 %v1369, %v1368
  %v1409 = vpack.c.b16 %v1371, %v1370
  %v1410 = vpack.c.b16 %v1373, %v1372
  %v1411 = vpack.c.b16 %v1375, %v1374
  %v1412 = vpack.c.b16 %v1377, %v1376
  %v1413 = vpack.c.b16 %v1379, %v1378
  %v1414 = vpack.c.b16 %v1381, %v1380
  %v1415 = vpack.c.b16 %v1383, %v1382
  %v1420 = vunpack.c.l.b16 %v1247
  %v1421 = vunpack.c.l.b16 %v1248
  %v1422 = vunpack.c.l.b16 %v1249
  %v1423 = vunpack.c.l.b16 %v1250
  %v1424 = vpack.c.b16 %v1421, %v1420
  %v1425 = vpack.c.b16 %v1423, %v1422
  %vm1428 = vcmask 261120
  %v1430 = vsel %vm1428, %v1384, 0
  %v1433 = vsel %vm1428, %v1385, 0
  %v1436 = vsel %vm1428, %v1386, 0
  %v1439 = vsel %vm1428, %v1387, 0
  %v1442 = vsel %vm1428, %v1388, 0
  %v1445 = vsel %vm1428, %v1389, 0
  %v1448 = vsel %vm1428, %v1390, 0
  %v1451 = vsel %vm1428, %v1391, 0
  %v1454 = vsel %vm1428, %v1392, 0
  %v1457 = vsel %vm1428, %v1393, 0
  %v1460 = vsel %vm1428, %v1394, 0
  %v1463 = vsel %vm1428, %v1395, 0
  %v1466 = vsel %vm1428, %v1396, 0
  %v1469 = vsel %vm1428, %v1397, 0
  %v1472 = vsel %vm1428, %v1398, 0
  %v1475 = vsel %vm1428, %v1399, 0
  %v1478 = vsel %vm1428, %v1400, 0
  %v1481 = vsel %vm1428, %v1401, 0
  %v1484 = vsel %vm1428, %v1402, 0
  %v1487 = vsel %vm1428, %v1403, 0
  %v1490 = vsel %vm1428, %v1404, 0
  %v1493 = vsel %vm1428, %v1405, 0
  %v1496 = vsel %vm1428, %v1406, 0
  %v1499 = vsel %vm1428, %v1407, 0
  %v1502 = vsel %vm1428, %v1408, 0
  %v1505 = vsel %vm1428, %v1409, 0
  %v1508 = vsel %vm1428, %v1410, 0
  %v1511 = vsel %vm1428, %v1411, 0
  %v1514 = vsel %vm1428, %v1412, 0
  %v1517 = vsel %vm1428, %v1413, 0
  %v1520 = vsel %vm1428, %v1414, 0
  %v1523 = vsel %vm1428, %v1415, 0
  %1525 = vmatprep.subr.bf16.mxu0 0
  %1526 = vmatpush1.bf16.msra.mxu0 %v1424
  %1527 = vmatprep.subr.bf16.mxu0 0
  %1528 = vmatpush1.bf16.msra.mxu0 %v1425
  %1529 = vmatprep.subr.bf16.mxu0 0
  %1530 = vmatpush1.bf16.msra.mxu0 0
  %1531 = vmatprep.subr.bf16.mxu0 0
  %1532 = vmatpush1.bf16.msra.mxu0 0
  %1533 = vmatprep.subr.bf16.mxu0 0
  %1534 = vmatpush1.bf16.msra.mxu0 0
  %1535 = vmatprep.subr.bf16.mxu0 0
  %1536 = vmatpush1.bf16.msra.mxu0 0
  %1537 = vmatprep.subr.bf16.mxu0 0
  %1538 = vmatpush1.bf16.msra.mxu0 0
  %1539 = vmatprep.subr.bf16.mxu0 0
  %1540 = vmatpush1.bf16.msra.mxu0 0
  %1541 = vmatprep.subr.bf16.mxu0 0
  %1542 = vmatpush1.bf16.msra.mxu0 0
  %1543 = vmatprep.subr.bf16.mxu0 0
  %1544 = vmatpush1.bf16.msra.mxu0 0
  %1545 = vmatprep.subr.bf16.mxu0 0
  %1546 = vmatpush1.bf16.msra.mxu0 0
  %1547 = vmatprep.subr.bf16.mxu0 0
  %1548 = vmatpush1.bf16.msra.mxu0 0
  %1549 = vmatprep.subr.bf16.mxu0 0
  %1550 = vmatpush1.bf16.msra.mxu0 0
  %1551 = vmatprep.subr.bf16.mxu0 0
  %1552 = vmatpush1.bf16.msra.mxu0 0
  %1553 = vmatprep.subr.bf16.mxu0 0
  %1554 = vmatpush1.bf16.msra.mxu0 0
  %1555 = vmatprep.subr.bf16.mxu0 0
  %1556 = vmatpush1.bf16.msra.mxu0 0
  %1557 = vmatprep.mubr.bf16.mxu0 0
  %1558 = vmatmul.mubr.bf16.gmra.mrb[0].mxu0 %v1430
  %v1559 = vpop.f32.mrb[0].mxu0
  %v1560 = vadd.f32 %v1255, %v1559
  %v1561 = vpop.f32.mrb[0].mxu0
  %v1562 = vpop.f32.mrb[0].mxu0
  %v1563 = vadd.f32 %v1255, %v1562
  %v1564 = vpop.f32.mrb[0].mxu0
  %1565 = vmatprep.mubr.bf16.mxu0 0
  %1566 = vmatmul.mubr.bf16.gmra.mrb[0].mxu0 %v1433
  %v1567 = vpop.f32.mrb[0].mxu0
  %v1568 = vadd.f32 %v1255, %v1567
  %v1569 = vpop.f32.mrb[0].mxu0
  %v1570 = vpop.f32.mrb[0].mxu0
  %v1571 = vadd.f32 %v1255, %v1570
  %v1572 = vpop.f32.mrb[0].mxu0
  %1573 = vmatprep.mubr.bf16.mxu0 0
  %1574 = vmatmul.mubr.bf16.gmra.mrb[0].mxu0 %v1436
  %v1575 = vpop.f32.mrb[0].mxu0
  %v1576 = vadd.f32 %v1255, %v1575
  %v1577 = vpop.f32.mrb[0].mxu0
  %v1578 = vpop.f32.mrb[0].mxu0
  %v1579 = vadd.f32 %v1255, %v1578
  %v1580 = vpop.f32.mrb[0].mxu0
  %1581 = vmatprep.mubr.bf16.mxu0 0
  %1582 = vmatmul.mubr.bf16.gmra.mrb[0].mxu0 %v1439
  %v1583 = vpop.f32.mrb[0].mxu0
  %v1584 = vadd.f32 %v1255, %v1583
  %v1585 = vpop.f32.mrb[0].mxu0
  %v1586 = vpop.f32.mrb[0].mxu0
  %v1587 = vadd.f32 %v1255, %v1586
  %v1588 = vpop.f32.mrb[0].mxu0
  %1589 = vmatprep.mubr.bf16.mxu0 0
  %1590 = vmatmul.mubr.bf16.gmra.mrb[0].mxu0 %v1442
  %v1591 = vpop.f32.mrb[0].mxu0
  %v1592 = vadd.f32 %v1255, %v1591
  %v1593 = vpop.f32.mrb[0].mxu0
  %v1594 = vpop.f32.mrb[0].mxu0
  %v1595 = vadd.f32 %v1255, %v1594
  %v1596 = vpop.f32.mrb[0].mxu0
  %1597 = vmatprep.mubr.bf16.mxu0 0
  %1598 = vmatmul.mubr.bf16.gmra.mrb[0].mxu0 %v1445
  %v1599 = vpop.f32.mrb[0].mxu0
  %v1600 = vadd.f32 %v1255, %v1599
  %v1601 = vpop.f32.mrb[0].mxu0
  %v1602 = vpop.f32.mrb[0].mxu0
  %v1603 = vadd.f32 %v1255, %v1602
  %v1604 = vpop.f32.mrb[0].mxu0
  %1605 = vmatprep.mubr.bf16.mxu0 0
  %1606 = vmatmul.mubr.bf16.gmra.mrb[0].mxu0 %v1448
  %v1607 = vpop.f32.mrb[0].mxu0
  %v1608 = vadd.f32 %v1255, %v1607
  %v1609 = vpop.f32.mrb[0].mxu0
  %v1610 = vpop.f32.mrb[0].mxu0
  %v1611 = vadd.f32 %v1255, %v1610
  %v1612 = vpop.f32.mrb[0].mxu0
  %1613 = vmatprep.mubr.bf16.mxu0 0
  %1614 = vmatmul.mubr.bf16.gmra.mrb[0].mxu0 %v1451
  %v1615 = vpop.f32.mrb[0].mxu0
  %v1616 = vadd.f32 %v1255, %v1615
  %v1617 = vpop.f32.mrb[0].mxu0
  %v1618 = vpop.f32.mrb[0].mxu0
  %v1619 = vadd.f32 %v1255, %v1618
  %v1620 = vpop.f32.mrb[0].mxu0
  %1621 = vmatprep.mubr.bf16.mxu0 0
  %1622 = vmatmul.mubr.bf16.gmra.mrb[0].mxu0 %v1454
  %v1623 = vpop.f32.mrb[0].mxu0
  %v1624 = vadd.f32 %v1255, %v1623
  %v1625 = vpop.f32.mrb[0].mxu0
  %v1626 = vpop.f32.mrb[0].mxu0
  %v1627 = vadd.f32 %v1255, %v1626
  %v1628 = vpop.f32.mrb[0].mxu0
  %1629 = vmatprep.mubr.bf16.mxu0 0
  %1630 = vmatmul.mubr.bf16.gmra.mrb[0].mxu0 %v1457
  %v1631 = vpop.f32.mrb[0].mxu0
  %v1632 = vadd.f32 %v1255, %v1631
  %v1633 = vpop.f32.mrb[0].mxu0
  %v1634 = vpop.f32.mrb[0].mxu0
  %v1635 = vadd.f32 %v1255, %v1634
  %v1636 = vpop.f32.mrb[0].mxu0
  %1637 = vmatprep.mubr.bf16.mxu0 0
  %1638 = vmatmul.mubr.bf16.gmra.mrb[0].mxu0 %v1460
  %v1639 = vpop.f32.mrb[0].mxu0
  %v1640 = vadd.f32 %v1255, %v1639
  %v1641 = vpop.f32.mrb[0].mxu0
  %v1642 = vpop.f32.mrb[0].mxu0
  %v1643 = vadd.f32 %v1255, %v1642
  %v1644 = vpop.f32.mrb[0].mxu0
  %1645 = vmatprep.mubr.bf16.mxu0 0
  %1646 = vmatmul.mubr.bf16.gmra.mrb[0].mxu0 %v1463
  %v1647 = vpop.f32.mrb[0].mxu0
  %v1648 = vadd.f32 %v1255, %v1647
  %v1649 = vpop.f32.mrb[0].mxu0
  %v1650 = vpop.f32.mrb[0].mxu0
  %v1651 = vadd.f32 %v1255, %v1650
  %v1652 = vpop.f32.mrb[0].mxu0
  %1653 = vmatprep.mubr.bf16.mxu0 0
  %1654 = vmatmul.mubr.bf16.gmra.mrb[0].mxu0 %v1466
  %v1655 = vpop.f32.mrb[0].mxu0
  %v1656 = vadd.f32 %v1255, %v1655
  %v1657 = vpop.f32.mrb[0].mxu0
  %v1658 = vpop.f32.mrb[0].mxu0
  %v1659 = vadd.f32 %v1255, %v1658
  %v1660 = vpop.f32.mrb[0].mxu0
  %1661 = vmatprep.mubr.bf16.mxu0 0
  %1662 = vmatmul.mubr.bf16.gmra.mrb[0].mxu0 %v1469
  %v1663 = vpop.f32.mrb[0].mxu0
  %v1664 = vadd.f32 %v1255, %v1663
  %v1665 = vpop.f32.mrb[0].mxu0
  %v1666 = vpop.f32.mrb[0].mxu0
  %v1667 = vadd.f32 %v1255, %v1666
  %v1668 = vpop.f32.mrb[0].mxu0
  %1669 = vmatprep.mubr.bf16.mxu0 0
  %1670 = vmatmul.mubr.bf16.gmra.mrb[0].mxu0 %v1472
  %v1671 = vpop.f32.mrb[0].mxu0
  %v1672 = vadd.f32 %v1255, %v1671
  %v1673 = vpop.f32.mrb[0].mxu0
  %v1674 = vpop.f32.mrb[0].mxu0
  %v1675 = vadd.f32 %v1255, %v1674
  %v1676 = vpop.f32.mrb[0].mxu0
  %1677 = vmatprep.mubr.bf16.mxu0 0
  %1678 = vmatmul.mubr.bf16.gmra.mrb[0].mxu0 %v1475
  %v1679 = vpop.f32.mrb[0].mxu0
  %v1680 = vadd.f32 %v1255, %v1679
  %v1681 = vpop.f32.mrb[0].mxu0
  %v1682 = vpop.f32.mrb[0].mxu0
  %v1683 = vadd.f32 %v1255, %v1682
  %v1684 = vpop.f32.mrb[0].mxu0
  %1685 = vmatprep.mubr.bf16.mxu0 0
  %1686 = vmatmul.mubr.bf16.gmra.mrb[0].mxu0 %v1478
  %v1687 = vpop.f32.mrb[0].mxu0
  %v1688 = vadd.f32 %v1255, %v1687
  %v1689 = vpop.f32.mrb[0].mxu0
  %v1690 = vpop.f32.mrb[0].mxu0
  %v1691 = vadd.f32 %v1255, %v1690
  %v1692 = vpop.f32.mrb[0].mxu0
  %1693 = vmatprep.mubr.bf16.mxu0 0
  %1694 = vmatmul.mubr.bf16.gmra.mrb[0].mxu0 %v1481
  %v1695 = vpop.f32.mrb[0].mxu0
  %v1696 = vadd.f32 %v1255, %v1695
  %v1697 = vpop.f32.mrb[0].mxu0
  %v1698 = vpop.f32.mrb[0].mxu0
  %v1699 = vadd.f32 %v1255, %v1698
  %v1700 = vpop.f32.mrb[0].mxu0
  %1701 = vmatprep.mubr.bf16.mxu0 0
  %1702 = vmatmul.mubr.bf16.gmra.mrb[0].mxu0 %v1484
  %v1703 = vpop.f32.mrb[0].mxu0
  %v1704 = vadd.f32 %v1255, %v1703
  %v1705 = vpop.f32.mrb[0].mxu0
  %v1706 = vpop.f32.mrb[0].mxu0
  %v1707 = vadd.f32 %v1255, %v1706
  %v1708 = vpop.f32.mrb[0].mxu0
  %1709 = vmatprep.mubr.bf16.mxu0 0
  %1710 = vmatmul.mubr.bf16.gmra.mrb[0].mxu0 %v1487
  %v1711 = vpop.f32.mrb[0].mxu0
  %v1712 = vadd.f32 %v1255, %v1711
  %v1713 = vpop.f32.mrb[0].mxu0
  %v1714 = vpop.f32.mrb[0].mxu0
  %v1715 = vadd.f32 %v1255, %v1714
  %v1716 = vpop.f32.mrb[0].mxu0
  %1717 = vmatprep.mubr.bf16.mxu0 0
  %1718 = vmatmul.mubr.bf16.gmra.mrb[0].mxu0 %v1490
  %v1719 = vpop.f32.mrb[0].mxu0
  %v1720 = vadd.f32 %v1255, %v1719
  %v1721 = vpop.f32.mrb[0].mxu0
  %v1722 = vpop.f32.mrb[0].mxu0
  %v1723 = vadd.f32 %v1255, %v1722
  %v1724 = vpop.f32.mrb[0].mxu0
  %1725 = vmatprep.mubr.bf16.mxu0 0
  %1726 = vmatmul.mubr.bf16.gmra.mrb[0].mxu0 %v1493
  %v1727 = vpop.f32.mrb[0].mxu0
  %v1728 = vadd.f32 %v1255, %v1727
  %v1729 = vpop.f32.mrb[0].mxu0
  %v1730 = vpop.f32.mrb[0].mxu0
  %v1731 = vadd.f32 %v1255, %v1730
  %v1732 = vpop.f32.mrb[0].mxu0
  %1733 = vmatprep.mubr.bf16.mxu0 0
  %1734 = vmatmul.mubr.bf16.gmra.mrb[0].mxu0 %v1496
  %v1735 = vpop.f32.mrb[0].mxu0
  %v1736 = vadd.f32 %v1255, %v1735
  %v1737 = vpop.f32.mrb[0].mxu0
  %v1738 = vpop.f32.mrb[0].mxu0
  %v1739 = vadd.f32 %v1255, %v1738
  %v1740 = vpop.f32.mrb[0].mxu0
  %1741 = vmatprep.mubr.bf16.mxu0 0
  %1742 = vmatmul.mubr.bf16.gmra.mrb[0].mxu0 %v1499
  %v1743 = vpop.f32.mrb[0].mxu0
  %v1744 = vadd.f32 %v1255, %v1743
  %v1745 = vpop.f32.mrb[0].mxu0
  %v1746 = vpop.f32.mrb[0].mxu0
  %v1747 = vadd.f32 %v1255, %v1746
  %v1748 = vpop.f32.mrb[0].mxu0
  %1749 = vmatprep.mubr.bf16.mxu0 0
  %1750 = vmatmul.mubr.bf16.gmra.mrb[0].mxu0 %v1502
  %v1751 = vpop.f32.mrb[0].mxu0
  %v1752 = vadd.f32 %v1255, %v1751
  %v1753 = vpop.f32.mrb[0].mxu0
  %v1754 = vpop.f32.mrb[0].mxu0
  %v1755 = vadd.f32 %v1255, %v1754
  %v1756 = vpop.f32.mrb[0].mxu0
  %1757 = vmatprep.mubr.bf16.mxu0 0
  %1758 = vmatmul.mubr.bf16.gmra.mrb[0].mxu0 %v1505
  %v1759 = vpop.f32.mrb[0].mxu0
  %v1760 = vadd.f32 %v1255, %v1759
  %v1761 = vpop.f32.mrb[0].mxu0
  %v1762 = vpop.f32.mrb[0].mxu0
  %v1763 = vadd.f32 %v1255, %v1762
  %v1764 = vpop.f32.mrb[0].mxu0
  %1765 = vmatprep.mubr.bf16.mxu0 0
  %1766 = vmatmul.mubr.bf16.gmra.mrb[0].mxu0 %v1508
  %v1767 = vpop.f32.mrb[0].mxu0
  %v1768 = vadd.f32 %v1255, %v1767
  %v1769 = vpop.f32.mrb[0].mxu0
  %v1770 = vpop.f32.mrb[0].mxu0
  %v1771 = vadd.f32 %v1255, %v1770
  %v1772 = vpop.f32.mrb[0].mxu0
  %1773 = vmatprep.mubr.bf16.mxu0 0
  %1774 = vmatmul.mubr.bf16.gmra.mrb[0].mxu0 %v1511
  %v1775 = vpop.f32.mrb[0].mxu0
  %v1776 = vadd.f32 %v1255, %v1775
  %v1777 = vpop.f32.mrb[0].mxu0
  %v1778 = vpop.f32.mrb[0].mxu0
  %v1779 = vadd.f32 %v1255, %v1778
  %v1780 = vpop.f32.mrb[0].mxu0
  %1781 = vmatprep.mubr.bf16.mxu0 0
  %1782 = vmatmul.mubr.bf16.gmra.mrb[0].mxu0 %v1514
  %v1783 = vpop.f32.mrb[0].mxu0
  %v1784 = vadd.f32 %v1255, %v1783
  %v1785 = vpop.f32.mrb[0].mxu0
  %v1786 = vpop.f32.mrb[0].mxu0
  %v1787 = vadd.f32 %v1255, %v1786
  %v1788 = vpop.f32.mrb[0].mxu0
  %1789 = vmatprep.mubr.bf16.mxu0 0
  %1790 = vmatmul.mubr.bf16.gmra.mrb[0].mxu0 %v1517
  %v1791 = vpop.f32.mrb[0].mxu0
  %v1792 = vadd.f32 %v1255, %v1791
  %v1793 = vpop.f32.mrb[0].mxu0
  %v1794 = vpop.f32.mrb[0].mxu0
  %v1795 = vadd.f32 %v1255, %v1794
  %v1796 = vpop.f32.mrb[0].mxu0
  %1797 = vmatprep.mubr.bf16.mxu0 0
  %1798 = vmatmul.mubr.bf16.gmra.mrb[0].mxu0 %v1520
  %v1799 = vpop.f32.mrb[0].mxu0
  %v1800 = vadd.f32 %v1255, %v1799
  %v1801 = vpop.f32.mrb[0].mxu0
  %v1802 = vpop.f32.mrb[0].mxu0
  %v1803 = vadd.f32 %v1255, %v1802
  %v1804 = vpop.f32.mrb[0].mxu0
  %1805 = vmatprep.mubr.bf16.mxu0 0
  %1806 = vmatmul.mubr.bf16.gmra.mrb[0].mxu0 %v1523
  %v1807 = vpop.f32.mrb[0].mxu0
  %v1808 = vadd.f32 %v1255, %v1807
  %v1809 = vpop.f32.mrb[0].mxu0
  %v1810 = vpop.f32.mrb[0].mxu0
  %v1811 = vadd.f32 %v1255, %v1810
  %v1812 = vpop.f32.mrb[0].mxu0
  %1813 = vdwg.mxu0
  %v1814 = vmax.f32 %v1560, 0.0
  %v1815 = vmax.f32 %v1563, 0.0
  %v1816 = vmax.f32 %v1568, 0.0
  %v1817 = vmax.f32 %v1571, 0.0
  %v1818 = vmax.f32 %v1576, 0.0
  %v1819 = vmax.f32 %v1579, 0.0
  %v1820 = vmax.f32 %v1584, 0.0
  %v1821 = vmax.f32 %v1587, 0.0
  %v1822 = vmax.f32 %v1592, 0.0
  %v1823 = vmax.f32 %v1595, 0.0
  %v1824 = vmax.f32 %v1600, 0.0
  %v1825 = vmax.f32 %v1603, 0.0
  %v1826 = vmax.f32 %v1608, 0.0
  %v1827 = vmax.f32 %v1611, 0.0
  %v1828 = vmax.f32 %v1616, 0.0
  %v1829 = vmax.f32 %v1619, 0.0
  %v1830 = vmax.f32 %v1624, 0.0
  %v1831 = vmax.f32 %v1627, 0.0
  %v1832 = vmax.f32 %v1632, 0.0
  %v1833 = vmax.f32 %v1635, 0.0
  %v1834 = vmax.f32 %v1640, 0.0
  %v1835 = vmax.f32 %v1643, 0.0
  %v1836 = vmax.f32 %v1648, 0.0
  %v1837 = vmax.f32 %v1651, 0.0
  %v1838 = vmax.f32 %v1656, 0.0
  %v1839 = vmax.f32 %v1659, 0.0
  %v1840 = vmax.f32 %v1664, 0.0
  %v1841 = vmax.f32 %v1667, 0.0
  %v1842 = vmax.f32 %v1672, 0.0
  %v1843 = vmax.f32 %v1675, 0.0
  %v1844 = vmax.f32 %v1680, 0.0
  %v1845 = vmax.f32 %v1683, 0.0
  %v1846 = vmax.f32 %v1688, 0.0
  %v1847 = vmax.f32 %v1691, 0.0
  %v1848 = vmax.f32 %v1696, 0.0
  %v1849 = vmax.f32 %v1699, 0.0
  %v1850 = vmax.f32 %v1704, 0.0
  %v1851 = vmax.f32 %v1707, 0.0
  %v1852 = vmax.f32 %v1712, 0.0
  %v1853 = vmax.f32 %v1715, 0.0
  %v1854 = vmax.f32 %v1720, 0.0
  %v1855 = vmax.f32 %v1723, 0.0
  %v1856 = vmax.f32 %v1728, 0.0
  %v1857 = vmax.f32 %v1731, 0.0
  %v1858 = vmax.f32 %v1736, 0.0
  %v1859 = vmax.f32 %v1739, 0.0
  %v1860 = vmax.f32 %v1744, 0.0
  %v1861 = vmax.f32 %v1747, 0.0
  %v1862 = vmax.f32 %v1752, 0.0
  %v1863 = vmax.f32 %v1755, 0.0
  %v1864 = vmax.f32 %v1760, 0.0
  %v1865 = vmax.f32 %v1763, 0.0
  %v1866 = vmax.f32 %v1768, 0.0
  %v1867 = vmax.f32 %v1771, 0.0
  %v1868 = vmax.f32 %v1776, 0.0
  %v1869 = vmax.f32 %v1779, 0.0
  %v1870 = vmax.f32 %v1784, 0.0
  %v1871 = vmax.f32 %v1787, 0.0
  %v1872 = vmax.f32 %v1792, 0.0
  %v1873 = vmax.f32 %v1795, 0.0
  %v1874 = vmax.f32 %v1800, 0.0
  %v1875 = vmax.f32 %v1803, 0.0
  %v1876 = vmax.f32 %v1808, 0.0
  %v1877 = vmax.f32 %v1811, 0.0
  %v1878 = vlaneseq
  %v1879 = vand.u32 %v1878, 127
  %v1880 = vadd.s32 %v1879, 128
  %v1881 = vadd.s32 %v1879, 256
  %v1882 = vadd.s32 %v1879, 384
  %v1883 = vlaneseq
  %v1884 = vshrl.u32 %v1883, 7
  %v1885 = vmul.u32 %v1884, 256
  %vm1886 = vcmp.ge.s32.totalorder %v1879, %v1885
  %vm1887 = vcmp.ge.s32.totalorder %v1880, %v1885
  %vm1888 = vcmp.ge.s32.totalorder %v1881, %v1885
  %vm1889 = vcmp.ge.s32.totalorder %v1882, %v1885
  %v1890 = vadd.s32 %v1884, 1
  %v1891 = vmul.u32 %v1890, 256
  %vm1892 = vcmp.lt.s32.totalorder %v1879, %v1891
  %vm1893 = vcmp.lt.s32.totalorder %v1880, %v1891
  %vm1894 = vcmp.lt.s32.totalorder %v1881, %v1891
  %vm1895 = vcmp.lt.s32.totalorder %v1882, %v1891
  %vm1896 = vmand %vm1886, %vm1892
  %vm1897 = vmand %vm1887, %vm1893
  %vm1898 = vmand %vm1888, %vm1894
  %vm1899 = vmand %vm1889, %vm1895
  %v1900 = vsel %vm1896, 0.00390625, 0.0
  %v1901 = vsel %vm1897, 0.00390625, 0.0
  %v1902 = vsel %vm1898, 0.00390625, 0.0
  %v1903 = vsel %vm1899, 0.00390625, 0.0
  %v1904 = vpack.c.bf16 %v1815, %v1814
  %v1905 = vpack.c.bf16 %v1817, %v1816
  %v1906 = vpack.c.bf16 %v1819, %v1818
  %v1907 = vpack.c.bf16 %v1821, %v1820
  %v1908 = vpack.c.bf16 %v1823, %v1822
  %v1909 = vpack.c.bf16 %v1825, %v1824
  %v1910 = vpack.c.bf16 %v1827, %v1826
  %v1911 = vpack.c.bf16 %v1829, %v1828
  %v1912 = vpack.c.bf16 %v1831, %v1830
  %v1913 = vpack.c.bf16 %v1833, %v1832
  %v1914 = vpack.c.bf16 %v1835, %v1834
  %v1915 = vpack.c.bf16 %v1837, %v1836
  %v1916 = vpack.c.bf16 %v1839, %v1838
  %v1917 = vpack.c.bf16 %v1841, %v1840
  %v1918 = vpack.c.bf16 %v1843, %v1842
  %v1919 = vpack.c.bf16 %v1845, %v1844
  %v1920 = vpack.c.bf16 %v1847, %v1846
  %v1921 = vpack.c.bf16 %v1849, %v1848
  %v1922 = vpack.c.bf16 %v1851, %v1850
  %v1923 = vpack.c.bf16 %v1853, %v1852
  %v1924 = vpack.c.bf16 %v1855, %v1854
  %v1925 = vpack.c.bf16 %v1857, %v1856
  %v1926 = vpack.c.bf16 %v1859, %v1858
  %v1927 = vpack.c.bf16 %v1861, %v1860
  %v1928 = vpack.c.bf16 %v1863, %v1862
  %v1929 = vpack.c.bf16 %v1865, %v1864
  %v1930 = vpack.c.bf16 %v1867, %v1866
  %v1931 = vpack.c.bf16 %v1869, %v1868
  %v1932 = vpack.c.bf16 %v1871, %v1870
  %v1933 = vpack.c.bf16 %v1873, %v1872
  %v1934 = vpack.c.bf16 %v1875, %v1874
  %v1935 = vpack.c.bf16 %v1877, %v1876
  %v1936 = vpack.c.bf16 %v1900, %v1900
  %v1937 = vpack.c.bf16 %v1901, %v1901
  %v1938 = vpack.c.bf16 %v1902, %v1902
  %v1939 = vpack.c.bf16 %v1903, %v1903
  %1940 = vmatprep.subr.bf16.mxu0 0
  %1941 = vmatpush1.bf16.msra.mxu0 %v1904
  %1942 = vmatprep.subr.bf16.mxu0 0
  %1943 = vmatpush1.bf16.msra.mxu0 %v1905
  %1944 = vmatprep.subr.bf16.mxu0 0
  %1945 = vmatpush1.bf16.msra.mxu0 %v1906
  %1946 = vmatprep.subr.bf16.mxu0 0
  %1947 = vmatpush1.bf16.msra.mxu0 %v1907
  %1948 = vmatprep.subr.bf16.mxu0 0
  %1949 = vmatpush1.bf16.msra.mxu0 %v1908
  %1950 = vmatprep.subr.bf16.mxu0 0
  %1951 = vmatpush1.bf16.msra.mxu0 %v1909
  %1952 = vmatprep.subr.bf16.mxu0 0
  %1953 = vmatpush1.bf16.msra.mxu0 %v1910
  %1954 = vmatprep.subr.bf16.mxu0 0
  %1955 = vmatpush1.bf16.msra.mxu0 %v1911
  %1956 = vmatprep.subr.bf16.mxu0 0
  %1957 = vmatpush1.bf16.msra.mxu0 %v1912
  %1958 = vmatprep.subr.bf16.mxu0 0
  %1959 = vmatpush1.bf16.msra.mxu0 %v1913
  %1960 = vmatprep.subr.bf16.mxu0 0
  %1961 = vmatpush1.bf16.msra.mxu0 %v1914
  %1962 = vmatprep.subr.bf16.mxu0 0
  %1963 = vmatpush1.bf16.msra.mxu0 %v1915
  %1964 = vmatprep.subr.bf16.mxu0 0
  %1965 = vmatpush1.bf16.msra.mxu0 %v1916
  %1966 = vmatprep.subr.bf16.mxu0 0
  %1967 = vmatpush1.bf16.msra.mxu0 %v1917
  %1968 = vmatprep.subr.bf16.mxu0 0
  %1969 = vmatpush1.bf16.msra.mxu0 %v1918
  %1970 = vmatprep.subr.bf16.mxu0 0
  %1971 = vmatpush1.bf16.msra.mxu0 %v1919
  %1972 = vmatprep.mubr.bf16.mxu0 %v1937
  %1973 = vmatmul.mubr.bf16.gmra.mrb[0].mxu0 %v1936
  %v1974 = vpop.f32.mrb[0].mxu0
  %v1975 = vadd.f32 0.0, %v1974
  %v1976 = vpop.f32.mrb[0].mxu0
  %v1977 = vpop.f32.mrb[0].mxu0
  %v1978 = vpop.f32.mrb[0].mxu0
  %1979 = vdwg.mxu0
  %1980 = vmatprep.subr.bf16.mxu0 0
  %1981 = vmatpush1.bf16.msra.mxu0 %v1920
  %1982 = vmatprep.subr.bf16.mxu0 0
  %1983 = vmatpush1.bf16.msra.mxu0 %v1921
  %1984 = vmatprep.subr.bf16.mxu0 0
  %1985 = vmatpush1.bf16.msra.mxu0 %v1922
  %1986 = vmatprep.subr.bf16.mxu0 0
  %1987 = vmatpush1.bf16.msra.mxu0 %v1923
  %1988 = vmatprep.subr.bf16.mxu0 0
  %1989 = vmatpush1.bf16.msra.mxu0 %v1924
  %1990 = vmatprep.subr.bf16.mxu0 0
  %1991 = vmatpush1.bf16.msra.mxu0 %v1925
  %1992 = vmatprep.subr.bf16.mxu0 0
  %1993 = vmatpush1.bf16.msra.mxu0 %v1926
  %1994 = vmatprep.subr.bf16.mxu0 0
  %1995 = vmatpush1.bf16.msra.mxu0 %v1927
  %1996 = vmatprep.subr.bf16.mxu0 0
  %1997 = vmatpush1.bf16.msra.mxu0 %v1928
  %1998 = vmatprep.subr.bf16.mxu0 0
  %1999 = vmatpush1.bf16.msra.mxu0 %v1929
  %2000 = vmatprep.subr.bf16.mxu0 0
  %2001 = vmatpush1.bf16.msra.mxu0 %v1930
  %2002 = vmatprep.subr.bf16.mxu0 0
  %2003 = vmatpush1.bf16.msra.mxu0 %v1931
  %2004 = vmatprep.subr.bf16.mxu0 0
  %2005 = vmatpush1.bf16.msra.mxu0 %v1932
  %2006 = vmatprep.subr.bf16.mxu0 0
  %2007 = vmatpush1.bf16.msra.mxu0 %v1933
  %2008 = vmatprep.subr.bf16.mxu0 0
  %2009 = vmatpush1.bf16.msra.mxu0 %v1934
  %2010 = vmatprep.subr.bf16.mxu0 0
  %2011 = vmatpush1.bf16.msra.mxu0 %v1935
  %2012 = vmatprep.mubr.bf16.mxu0 %v1939
  %2013 = vmatmul.mubr.bf16.gmra.mrb[0].mxu0 %v1938
  %v2014 = vpop.f32.mrb[0].mxu0
  %v2015 = vadd.f32 %v1975, %v2014
  %v2016 = vpop.f32.mrb[0].mxu0
  %v2017 = vpop.f32.mrb[0].mxu0
  %v2018 = vpop.f32.mrb[0].mxu0
  %2019 = vdwg.mxu0
  %v2020 = vld [vmem:[%s2] sm:$0xf]
  %v2021 = vld [vmem:[%s2 + $0x4] sm:$0xf]
  %v2022 = vld [vmem:[%s2 + $0x8] sm:$0xf]
  %v2023 = vld [vmem:[%s2 + $0xc] sm:$0xf]
  %v2024 = vld [vmem:[%s2 + $0x10] sm:$0xf]
  %v2025 = vld [vmem:[%s2 + $0x14] sm:$0xf]
  %v2026 = vld [vmem:[%s2 + $0x18] sm:$0xf]
  %v2027 = vld [vmem:[%s2 + $0x1c] sm:$0xf]
  %v2028 = vld [vmem:[%s2 + $0x20] sm:$0xf]
  %v2029 = vld [vmem:[%s2 + $0x24] sm:$0xf]
  %v2030 = vld [vmem:[%s2 + $0x28] sm:$0xf]
  %v2031 = vld [vmem:[%s2 + $0x2c] sm:$0xf]
  %v2032 = vld [vmem:[%s2 + $0x30] sm:$0xf]
  %v2033 = vld [vmem:[%s2 + $0x34] sm:$0xf]
  %v2034 = vld [vmem:[%s2 + $0x38] sm:$0xf]
  %v2035 = vld [vmem:[%s2 + $0x3c] sm:$0xf]
  %v2036 = vpack.c.bf16 %v2015, %v2015
  %v2037 = vld [vmem:[%s3 + $0x1] sm:$0x1]
  %v2038 = vlaneseq
  %v2039 = vshrl.u32 %v2038, 7
  %v2040 = vsub.s32 0, %v2039
  %v2041 = vrot.slane %v2037, %v2040
  %v2058 = vunpack.c.l.b16 %v2020
  %v2059 = vunpack.c.l.b16 %v2021
  %v2060 = vunpack.c.l.b16 %v2022
  %v2061 = vunpack.c.l.b16 %v2023
  %v2062 = vunpack.c.l.b16 %v2024
  %v2063 = vunpack.c.l.b16 %v2025
  %v2064 = vunpack.c.l.b16 %v2026
  %v2065 = vunpack.c.l.b16 %v2027
  %v2066 = vunpack.c.l.b16 %v2028
  %v2067 = vunpack.c.l.b16 %v2029
  %v2068 = vunpack.c.l.b16 %v2030
  %v2069 = vunpack.c.l.b16 %v2031
  %v2070 = vunpack.c.l.b16 %v2032
  %v2071 = vunpack.c.l.b16 %v2033
  %v2072 = vunpack.c.l.b16 %v2034
  %v2073 = vunpack.c.l.b16 %v2035
  %v2074 = vpack.c.b16 %v2059, %v2058
  %v2075 = vpack.c.b16 %v2061, %v2060
  %v2076 = vpack.c.b16 %v2063, %v2062
  %v2077 = vpack.c.b16 %v2065, %v2064
  %v2078 = vpack.c.b16 %v2067, %v2066
  %v2079 = vpack.c.b16 %v2069, %v2068
  %v2080 = vpack.c.b16 %v2071, %v2070
  %v2081 = vpack.c.b16 %v2073, %v2072
  %2090 = vmatprep.subr.bf16.mxu0 0
  %2091 = vmatpush1.bf16.msra.mxu0 %v2074
  %2092 = vmatprep.subr.bf16.mxu0 0
  %2093 = vmatpush1.bf16.msra.mxu0 %v2075
  %2094 = vmatprep.subr.bf16.mxu0 0
  %2095 = vmatpush1.bf16.msra.mxu0 %v2076
  %2096 = vmatprep.subr.bf16.mxu0 0
  %2097 = vmatpush1.bf16.msra.mxu0 %v2077
  %2098 = vmatprep.subr.bf16.mxu0 0
  %2099 = vmatpush1.bf16.msra.mxu0 %v2078
  %2100 = vmatprep.subr.bf16.mxu0 0
  %2101 = vmatpush1.bf16.msra.mxu0 %v2079
  %2102 = vmatprep.subr.bf16.mxu0 0
  %2103 = vmatpush1.bf16.msra.mxu0 %v2080
  %2104 = vmatprep.subr.bf16.mxu0 0
  %2105 = vmatpush1.bf16.msra.mxu0 %v2081
  %2106 = vmatprep.subr.bf16.mxu0 0
  %2107 = vmatpush1.bf16.msra.mxu0 0
  %2108 = vmatprep.subr.bf16.mxu0 0
  %2109 = vmatpush1.bf16.msra.mxu0 0
  %2110 = vmatprep.subr.bf16.mxu0 0
  %2111 = vmatpush1.bf16.msra.mxu0 0
  %2112 = vmatprep.subr.bf16.mxu0 0
  %2113 = vmatpush1.bf16.msra.mxu0 0
  %2114 = vmatprep.subr.bf16.mxu0 0
  %2115 = vmatpush1.bf16.msra.mxu0 0
  %2116 = vmatprep.subr.bf16.mxu0 0
  %2117 = vmatpush1.bf16.msra.mxu0 0
  %2118 = vmatprep.subr.bf16.mxu0 0
  %2119 = vmatpush1.bf16.msra.mxu0 0
  %2120 = vmatprep.subr.bf16.mxu0 0
  %2121 = vmatpush1.bf16.msra.mxu0 0
  %2122 = vmatprep.mubr.bf16.mxu0 0
  %2123 = vmatmul.mubr.bf16.gmra.mrb[0].mxu0 %v2036
  %v2124 = vpop.f32.mrb[0].mxu0
  %v2125 = vadd.f32 %v2041, %v2124
  %v2126 = vpop.f32.mrb[0].mxu0
  %v2127 = vpop.f32.mrb[0].mxu0
  %v2128 = vpop.f32.mrb[0].mxu0
  %2129 = vdwg.mxu0
  %v2130 = vld [vmem:[%s4] sm:$0xf]
  %v2131 = vld [vmem:[%s4 + $0x4] sm:$0xf]
  %v2132 = vld [vmem:[%s4 + $0x8] sm:$0xf]
  %v2133 = vld [vmem:[%s4 + $0xc] sm:$0xf]
  %v2134 = vld [vmem:[%s4 + $0x10] sm:$0xf]
  %v2135 = vld [vmem:[%s4 + $0x14] sm:$0xf]
  %v2136 = vld [vmem:[%s4 + $0x18] sm:$0xf]
  %v2137 = vld [vmem:[%s4 + $0x1c] sm:$0xf]
  %v2138 = vld [vmem:[%s4 + $0x20] sm:$0xf]
  %v2139 = vld [vmem:[%s4 + $0x24] sm:$0xf]
  %v2140 = vld [vmem:[%s4 + $0x28] sm:$0xf]
  %v2141 = vld [vmem:[%s4 + $0x2c] sm:$0xf]
  %v2142 = vld [vmem:[%s4 + $0x30] sm:$0xf]
  %v2143 = vld [vmem:[%s4 + $0x34] sm:$0xf]
  %v2144 = vld [vmem:[%s4 + $0x38] sm:$0xf]
  %v2145 = vld [vmem:[%s4 + $0x3c] sm:$0xf]
  %v2146 = vpack.c.bf16 %v2125, %v2125
  %v2147 = vld [vmem:[%s7] ss:$0 sm:$0xff]
  %v2164 = vunpack.c.l.b16 %v2130
  %v2165 = vunpack.c.l.b16 %v2131
  %v2166 = vunpack.c.l.b16 %v2132
  %v2167 = vunpack.c.l.b16 %v2133
  %v2168 = vunpack.c.l.b16 %v2134
  %v2169 = vunpack.c.l.b16 %v2135
  %v2170 = vunpack.c.l.b16 %v2136
  %v2171 = vunpack.c.l.b16 %v2137
  %v2172 = vunpack.c.l.b16 %v2138
  %v2173 = vunpack.c.l.b16 %v2139
  %v2174 = vunpack.c.l.b16 %v2140
  %v2175 = vunpack.c.l.b16 %v2141
  %v2176 = vunpack.c.l.b16 %v2142
  %v2177 = vunpack.c.l.b16 %v2143
  %v2178 = vunpack.c.l.b16 %v2144
  %v2179 = vunpack.c.l.b16 %v2145
  %v2180 = vpack.c.b16 %v2165, %v2164
  %v2181 = vpack.c.b16 %v2167, %v2166
  %v2182 = vpack.c.b16 %v2169, %v2168
  %v2183 = vpack.c.b16 %v2171, %v2170
  %v2184 = vpack.c.b16 %v2173, %v2172
  %v2185 = vpack.c.b16 %v2175, %v2174
  %v2186 = vpack.c.b16 %v2177, %v2176
  %v2187 = vpack.c.b16 %v2179, %v2178
  %2196 = vmatprep.subr.bf16.mxu0 0
  %2197 = vmatpush1.bf16.msra.mxu0 %v2180
  %2198 = vmatprep.subr.bf16.mxu0 0
  %2199 = vmatpush1.bf16.msra.mxu0 %v2181
  %2200 = vmatprep.subr.bf16.mxu0 0
  %2201 = vmatpush1.bf16.msra.mxu0 %v2182
  %2202 = vmatprep.subr.bf16.mxu0 0
  %2203 = vmatpush1.bf16.msra.mxu0 %v2183
  %2204 = vmatprep.subr.bf16.mxu0 0
  %2205 = vmatpush1.bf16.msra.mxu0 %v2184
  %2206 = vmatprep.subr.bf16.mxu0 0
  %2207 = vmatpush1.bf16.msra.mxu0 %v2185
  %2208 = vmatprep.subr.bf16.mxu0 0
  %2209 = vmatpush1.bf16.msra.mxu0 %v2186
  %2210 = vmatprep.subr.bf16.mxu0 0
  %2211 = vmatpush1.bf16.msra.mxu0 %v2187
  %2212 = vmatprep.subr.bf16.mxu0 0
  %2213 = vmatpush1.bf16.msra.mxu0 0
  %2214 = vmatprep.subr.bf16.mxu0 0
  %2215 = vmatpush1.bf16.msra.mxu0 0
  %2216 = vmatprep.subr.bf16.mxu0 0
  %2217 = vmatpush1.bf16.msra.mxu0 0
  %2218 = vmatprep.subr.bf16.mxu0 0
  %2219 = vmatpush1.bf16.msra.mxu0 0
  %2220 = vmatprep.subr.bf16.mxu0 0
  %2221 = vmatpush1.bf16.msra.mxu0 0
  %2222 = vmatprep.subr.bf16.mxu0 0
  %2223 = vmatpush1.bf16.msra.mxu0 0
  %2224 = vmatprep.subr.bf16.mxu0 0
  %2225 = vmatpush1.bf16.msra.mxu0 0
  %2226 = vmatprep.subr.bf16.mxu0 0
  %2227 = vmatpush1.bf16.msra.mxu0 0
  %2228 = vmatprep.mubr.bf16.mxu0 0
  %2229 = vmatmul.mubr.bf16.gmra.mrb[0].mxu0 %v2146
  %v2230 = vpop.f32.mrb[0].mxu0
  %v2231 = vadd.f32 %v2147, %v2230
  %v2232 = vpop.f32.mrb[0].mxu0
  %v2233 = vpop.f32.mrb[0].mxu0
  %v2234 = vpop.f32.mrb[0].mxu0
  %2235 = vdwg.mxu0
  %v2236 = vadd.f32 %v2125, %v2231
  %v2237 = vld [vmem:[%s7 + $0x3] ss:$0 sm:$0xff]
  %v2238 = vld [vmem:[%s7 + $0x4] ss:$0 sm:$0xff]
  %v2239 = vmul.f32 %v2236, %v2236
  %vm2240 = vcmask 1041408
  %v2241 = vsel %vm2240, %v2236, 0.0
  %2242 = vadd.xlane.f32.xlu0 %v2241
  %v2243 = vpop.xlane.xlu0 %2242
  %v2244 = vsel %vm2240, %v2239, 0.0
  %2245 = vadd.xlane.f32.xlu0 %v2244
  %v2246 = vpop.xlane.xlu0 %2245
  %v2247 = vmul.f32 %v2243, 0.0078125
  %v2248 = vmul.f32 %v2246, 0.0078125
  %v2249 = vmul.f32 %v2247, %v2247
  %v2250 = vsub.f32 %v2248, %v2249
  %v2251 = vmax.f32 %v2250, 0.0
  %v2252 = vsub.f32 %v2236, %v2247
  %v2253 = vadd.f32 %v2251, 1e-05
  %v2254 = vrsqrt.pop %v2253
  %v2255 = vmul.f32 %v2252, %v2254
  %v2256 = vmul.f32 %v2255, %v2237
  %v2257 = vadd.f32 %v2256, %v2238
  %v2258 = vld [vmem:[%s5] sm:$0xff]
  %v2259 = vld [vmem:[%s5 + $0x8] sm:$0xff]
  %v2260 = vld [vmem:[%s5 + $0x10] sm:$0xff]
  %v2261 = vld [vmem:[%s5 + $0x18] sm:$0xff]
  %v2262 = vld [vmem:[%s5 + $0x20] sm:$0xff]
  %v2263 = vld [vmem:[%s5 + $0x28] sm:$0xff]
  %v2264 = vld [vmem:[%s5 + $0x30] sm:$0xff]
  %v2265 = vld [vmem:[%s5 + $0x38] sm:$0xff]
  %v2266 = vld [vmem:[%s5 + $0x40] sm:$0xff]
  %v2267 = vld [vmem:[%s5 + $0x48] sm:$0xff]
  %v2268 = vld [vmem:[%s5 + $0x50] sm:$0xff]
  %v2269 = vld [vmem:[%s5 + $0x58] sm:$0xff]
  %v2270 = vld [vmem:[%s5 + $0x60] sm:$0xff]
  %v2271 = vld [vmem:[%s5 + $0x68] sm:$0xff]
  %v2272 = vld [vmem:[%s5 + $0x70] sm:$0xff]
  %v2273 = vld [vmem:[%s5 + $0x78] sm:$0xff]
  %v2274 = vpack.c.bf16 %v2257, %v2257
  %s2275 = scalar_lea.vmem %s7, 1
  %v2276 = vld [vmem:[%s2275] ss:$8 sm:$0x3]
  %v2278 = vlaneseq
  %v2279 = vshrl.u32 %v2278, 7
  %v2280 = vsub.s32 0, %v2279
  %v2281 = vrot.slane %v2276, %v2280
  %v2282 = vlaneseq
  %v2283 = vshrl.u32 %v2282, 7
  %v2284 = vsub.s32 1, %v2283
  %v2285 = vrot.slane %v2276, %v2284
  %v2304 = vunpack.c.l.b16 %v2258
  %v2305 = vunpack.c.h.b16 %v2258
  %v2306 = vunpack.c.l.b16 %v2259
  %v2307 = vunpack.c.h.b16 %v2259
  %v2308 = vunpack.c.l.b16 %v2260
  %v2309 = vunpack.c.h.b16 %v2260
  %v2310 = vunpack.c.l.b16 %v2261
  %v2311 = vunpack.c.h.b16 %v2261
  %v2312 = vunpack.c.l.b16 %v2262
  %v2313 = vunpack.c.h.b16 %v2262
  %v2314 = vunpack.c.l.b16 %v2263
  %v2315 = vunpack.c.h.b16 %v2263
  %v2316 = vunpack.c.l.b16 %v2264
  %v2317 = vunpack.c.h.b16 %v2264
  %v2318 = vunpack.c.l.b16 %v2265
  %v2319 = vunpack.c.h.b16 %v2265
  %v2320 = vunpack.c.l.b16 %v2266
  %v2321 = vunpack.c.h.b16 %v2266
  %v2322 = vunpack.c.l.b16 %v2267
  %v2323 = vunpack.c.h.b16 %v2267
  %v2324 = vunpack.c.l.b16 %v2268
  %v2325 = vunpack.c.h.b16 %v2268
  %v2326 = vunpack.c.l.b16 %v2269
  %v2327 = vunpack.c.h.b16 %v2269
  %v2328 = vunpack.c.l.b16 %v2270
  %v2329 = vunpack.c.h.b16 %v2270
  %v2330 = vunpack.c.l.b16 %v2271
  %v2331 = vunpack.c.h.b16 %v2271
  %v2332 = vunpack.c.l.b16 %v2272
  %v2333 = vunpack.c.h.b16 %v2272
  %v2334 = vunpack.c.l.b16 %v2273
  %v2335 = vunpack.c.h.b16 %v2273
  %v2336 = vpack.c.b16 %v2306, %v2304
  %v2337 = vpack.c.b16 %v2307, %v2305
  %v2338 = vpack.c.b16 %v2310, %v2308
  %v2339 = vpack.c.b16 %v2311, %v2309
  %v2340 = vpack.c.b16 %v2314, %v2312
  %v2341 = vpack.c.b16 %v2315, %v2313
  %v2342 = vpack.c.b16 %v2318, %v2316
  %v2343 = vpack.c.b16 %v2319, %v2317
  %v2344 = vpack.c.b16 %v2322, %v2320
  %v2345 = vpack.c.b16 %v2323, %v2321
  %v2346 = vpack.c.b16 %v2326, %v2324
  %v2347 = vpack.c.b16 %v2327, %v2325
  %v2348 = vpack.c.b16 %v2330, %v2328
  %v2349 = vpack.c.b16 %v2331, %v2329
  %v2350 = vpack.c.b16 %v2334, %v2332
  %v2351 = vpack.c.b16 %v2335, %v2333
  %2368 = vmatprep.subr.bf16.mxu0 %v2337
  %2369 = vmatpush1.bf16.msra.mxu0 %v2336
  %2370 = vmatprep.subr.bf16.mxu0 %v2339
  %2371 = vmatpush1.bf16.msra.mxu0 %v2338
  %2372 = vmatprep.subr.bf16.mxu0 %v2341
  %2373 = vmatpush1.bf16.msra.mxu0 %v2340
  %2374 = vmatprep.subr.bf16.mxu0 %v2343
  %2375 = vmatpush1.bf16.msra.mxu0 %v2342
  %2376 = vmatprep.subr.bf16.mxu0 %v2345
  %2377 = vmatpush1.bf16.msra.mxu0 %v2344
  %2378 = vmatprep.subr.bf16.mxu0 %v2347
  %2379 = vmatpush1.bf16.msra.mxu0 %v2346
  %2380 = vmatprep.subr.bf16.mxu0 %v2349
  %2381 = vmatpush1.bf16.msra.mxu0 %v2348
  %2382 = vmatprep.subr.bf16.mxu0 %v2351
  %2383 = vmatpush1.bf16.msra.mxu0 %v2350
  %2384 = vmatprep.subr.bf16.mxu0 0
  %2385 = vmatpush1.bf16.msra.mxu0 0
  %2386 = vmatprep.subr.bf16.mxu0 0
  %2387 = vmatpush1.bf16.msra.mxu0 0
  %2388 = vmatprep.subr.bf16.mxu0 0
  %2389 = vmatpush1.bf16.msra.mxu0 0
  %2390 = vmatprep.subr.bf16.mxu0 0
  %2391 = vmatpush1.bf16.msra.mxu0 0
  %2392 = vmatprep.subr.bf16.mxu0 0
  %2393 = vmatpush1.bf16.msra.mxu0 0
  %2394 = vmatprep.subr.bf16.mxu0 0
  %2395 = vmatpush1.bf16.msra.mxu0 0
  %2396 = vmatprep.subr.bf16.mxu0 0
  %2397 = vmatpush1.bf16.msra.mxu0 0
  %2398 = vmatprep.subr.bf16.mxu0 0
  %2399 = vmatpush1.bf16.msra.mxu0 0
  %2400 = vmatprep.mubr.bf16.mxu0 0
  %2401 = vmatmul.mubr.bf16.gmra.mrb[0].mxu0 %v2274
  %v2402 = vpop.f32.mrb[0].mxu0
  %v2403 = vadd.f32 %v2281, %v2402
  %v2404 = vpop.f32.mrb[0].mxu0
  %v2405 = vadd.f32 %v2285, %v2404
  %v2406 = vpop.f32.mrb[0].mxu0
  %v2407 = vpop.f32.mrb[0].mxu0
  %2408 = vdwg.mxu0
  %v2409 = vmax.f32 %v2403, 0.0
  %v2410 = vmax.f32 %v2405, 0.0
  %v2411 = vld [vmem:[%s6] sm:$0xf]
  %v2412 = vld [vmem:[%s6 + $0x4] sm:$0xf]
  %v2413 = vld [vmem:[%s6 + $0x8] sm:$0xf]
  %v2414 = vld [vmem:[%s6 + $0xc] sm:$0xf]
  %v2415 = vld [vmem:[%s6 + $0x10] sm:$0xf]
  %v2416 = vld [vmem:[%s6 + $0x14] sm:$0xf]
  %v2417 = vld [vmem:[%s6 + $0x18] sm:$0xf]
  %v2418 = vld [vmem:[%s6 + $0x1c] sm:$0xf]
  %v2419 = vld [vmem:[%s6 + $0x20] sm:$0xf]
  %v2420 = vld [vmem:[%s6 + $0x24] sm:$0xf]
  %v2421 = vld [vmem:[%s6 + $0x28] sm:$0xf]
  %v2422 = vld [vmem:[%s6 + $0x2c] sm:$0xf]
  %v2423 = vld [vmem:[%s6 + $0x30] sm:$0xf]
  %v2424 = vld [vmem:[%s6 + $0x34] sm:$0xf]
  %v2425 = vld [vmem:[%s6 + $0x38] sm:$0xf]
  %v2426 = vld [vmem:[%s6 + $0x3c] sm:$0xf]
  %v2427 = vld [vmem:[%s6 + $0x40] sm:$0xf]
  %v2428 = vld [vmem:[%s6 + $0x44] sm:$0xf]
  %v2429 = vld [vmem:[%s6 + $0x48] sm:$0xf]
  %v2430 = vld [vmem:[%s6 + $0x4c] sm:$0xf]
  %v2431 = vld [vmem:[%s6 + $0x50] sm:$0xf]
  %v2432 = vld [vmem:[%s6 + $0x54] sm:$0xf]
  %v2433 = vld [vmem:[%s6 + $0x58] sm:$0xf]
  %v2434 = vld [vmem:[%s6 + $0x5c] sm:$0xf]
  %v2435 = vld [vmem:[%s6 + $0x60] sm:$0xf]
  %v2436 = vld [vmem:[%s6 + $0x64] sm:$0xf]
  %v2437 = vld [vmem:[%s6 + $0x68] sm:$0xf]
  %v2438 = vld [vmem:[%s6 + $0x6c] sm:$0xf]
  %v2439 = vld [vmem:[%s6 + $0x70] sm:$0xf]
  %v2440 = vld [vmem:[%s6 + $0x74] sm:$0xf]
  %v2441 = vld [vmem:[%s6 + $0x78] sm:$0xf]
  %v2442 = vld [vmem:[%s6 + $0x7c] sm:$0xf]
  %v2443 = vpack.c.bf16 %v2409, %v2409
  %v2444 = vpack.c.bf16 %v2410, %v2410
  %v2445 = vld [vmem:[%s7 + $0x2] ss:$0 sm:$0xff]
  %v2478 = vunpack.c.l.b16 %v2411
  %v2479 = vunpack.c.l.b16 %v2412
  %v2480 = vunpack.c.l.b16 %v2413
  %v2481 = vunpack.c.l.b16 %v2414
  %v2482 = vunpack.c.l.b16 %v2415
  %v2483 = vunpack.c.l.b16 %v2416
  %v2484 = vunpack.c.l.b16 %v2417
  %v2485 = vunpack.c.l.b16 %v2418
  %v2486 = vunpack.c.l.b16 %v2419
  %v2487 = vunpack.c.l.b16 %v2420
  %v2488 = vunpack.c.l.b16 %v2421
  %v2489 = vunpack.c.l.b16 %v2422
  %v2490 = vunpack.c.l.b16 %v2423
  %v2491 = vunpack.c.l.b16 %v2424
  %v2492 = vunpack.c.l.b16 %v2425
  %v2493 = vunpack.c.l.b16 %v2426
  %v2494 = vunpack.c.l.b16 %v2427
  %v2495 = vunpack.c.l.b16 %v2428
  %v2496 = vunpack.c.l.b16 %v2429
  %v2497 = vunpack.c.l.b16 %v2430
  %v2498 = vunpack.c.l.b16 %v2431
  %v2499 = vunpack.c.l.b16 %v2432
  %v2500 = vunpack.c.l.b16 %v2433
  %v2501 = vunpack.c.l.b16 %v2434
  %v2502 = vunpack.c.l.b16 %v2435
  %v2503 = vunpack.c.l.b16 %v2436
  %v2504 = vunpack.c.l.b16 %v2437
  %v2505 = vunpack.c.l.b16 %v2438
  %v2506 = vunpack.c.l.b16 %v2439
  %v2507 = vunpack.c.l.b16 %v2440
  %v2508 = vunpack.c.l.b16 %v2441
  %v2509 = vunpack.c.l.b16 %v2442
  %v2510 = vpack.c.b16 %v2479, %v2478
  %v2511 = vpack.c.b16 %v2481, %v2480
  %v2512 = vpack.c.b16 %v2483, %v2482
  %v2513 = vpack.c.b16 %v2485, %v2484
  %v2514 = vpack.c.b16 %v2487, %v2486
  %v2515 = vpack.c.b16 %v2489, %v2488
  %v2516 = vpack.c.b16 %v2491, %v2490
  %v2517 = vpack.c.b16 %v2493, %v2492
  %v2518 = vpack.c.b16 %v2495, %v2494
  %v2519 = vpack.c.b16 %v2497, %v2496
  %v2520 = vpack.c.b16 %v2499, %v2498
  %v2521 = vpack.c.b16 %v2501, %v2500
  %v2522 = vpack.c.b16 %v2503, %v2502
  %v2523 = vpack.c.b16 %v2505, %v2504
  %v2524 = vpack.c.b16 %v2507, %v2506
  %v2525 = vpack.c.b16 %v2509, %v2508
  %2542 = vmatprep.subr.bf16.mxu0 0
  %2543 = vmatpush1.bf16.msra.mxu0 %v2510
  %2544 = vmatprep.subr.bf16.mxu0 0
  %2545 = vmatpush1.bf16.msra.mxu0 %v2511
  %2546 = vmatprep.subr.bf16.mxu0 0
  %2547 = vmatpush1.bf16.msra.mxu0 %v2512
  %2548 = vmatprep.subr.bf16.mxu0 0
  %2549 = vmatpush1.bf16.msra.mxu0 %v2513
  %2550 = vmatprep.subr.bf16.mxu0 0
  %2551 = vmatpush1.bf16.msra.mxu0 %v2514
  %2552 = vmatprep.subr.bf16.mxu0 0
  %2553 = vmatpush1.bf16.msra.mxu0 %v2515
  %2554 = vmatprep.subr.bf16.mxu0 0
  %2555 = vmatpush1.bf16.msra.mxu0 %v2516
  %2556 = vmatprep.subr.bf16.mxu0 0
  %2557 = vmatpush1.bf16.msra.mxu0 %v2517
  %2558 = vmatprep.subr.bf16.mxu0 0
  %2559 = vmatpush1.bf16.msra.mxu0 %v2518
  %2560 = vmatprep.subr.bf16.mxu0 0
  %2561 = vmatpush1.bf16.msra.mxu0 %v2519
  %2562 = vmatprep.subr.bf16.mxu0 0
  %2563 = vmatpush1.bf16.msra.mxu0 %v2520
  %2564 = vmatprep.subr.bf16.mxu0 0
  %2565 = vmatpush1.bf16.msra.mxu0 %v2521
  %2566 = vmatprep.subr.bf16.mxu0 0
  %2567 = vmatpush1.bf16.msra.mxu0 %v2522
  %2568 = vmatprep.subr.bf16.mxu0 0
  %2569 = vmatpush1.bf16.msra.mxu0 %v2523
  %2570 = vmatprep.subr.bf16.mxu0 0
  %2571 = vmatpush1.bf16.msra.mxu0 %v2524
  %2572 = vmatprep.subr.bf16.mxu0 0
  %2573 = vmatpush1.bf16.msra.mxu0 %v2525
  %2574 = vmatprep.mubr.bf16.mxu0 %v2444
  %2575 = vmatmul.mubr.bf16.gmra.mrb[0].mxu0 %v2443
  %v2576 = vpop.f32.mrb[0].mxu0
  %v2577 = vadd.f32 %v2445, %v2576
  %v2578 = vpop.f32.mrb[0].mxu0
  %v2579 = vpop.f32.mrb[0].mxu0
  %v2580 = vpop.f32.mrb[0].mxu0
  %2581 = vdwg.mxu0
  %v2582 = vadd.f32 %v2257, %v2577
  %v2583 = vld [vmem:[%s7 + $0x5] ss:$0 sm:$0xff]
  %v2584 = vld [vmem:[%s7 + $0x6] ss:$0 sm:$0xff]
  %v2585 = vmul.f32 %v2582, %v2582
  %v2586 = vsel %vm2240, %v2582, 0.0
  %2587 = vadd.xlane.f32.xlu0 %v2586
  %v2588 = vpop.xlane.xlu0 %2587
  %v2589 = vsel %vm2240, %v2585, 0.0
  %2590 = vadd.xlane.f32.xlu0 %v2589
  %v2591 = vpop.xlane.xlu0 %2590
  %v2592 = vmul.f32 %v2588, 0.0078125
  %v2593 = vmul.f32 %v2591, 0.0078125
  %v2594 = vmul.f32 %v2592, %v2592
  %v2595 = vsub.f32 %v2593, %v2594
  %v2596 = vmax.f32 %v2595, 0.0
  %v2597 = vsub.f32 %v2582, %v2592
  %v2598 = vadd.f32 %v2596, 1e-05
  %v2599 = vrsqrt.pop %v2598
  %v2600 = vmul.f32 %v2597, %v2599
  %v2601 = vmul.f32 %v2600, %v2583
  %v2602 = vadd.f32 %v2601, %v2584
  %s2603 = scalar_lea.vmem %s4, 64
  %v2604 = vld [vmem:[%s2603] sm:$0xf]
  %v2605 = vld [vmem:[%s2603 + $0x4] sm:$0xf]
  %v2606 = vld [vmem:[%s2603 + $0x8] sm:$0xf]
  %v2607 = vld [vmem:[%s2603 + $0xc] sm:$0xf]
  %v2608 = vld [vmem:[%s2603 + $0x10] sm:$0xf]
  %v2609 = vld [vmem:[%s2603 + $0x14] sm:$0xf]
  %v2610 = vld [vmem:[%s2603 + $0x18] sm:$0xf]
  %v2611 = vld [vmem:[%s2603 + $0x1c] sm:$0xf]
  %v2612 = vld [vmem:[%s2603 + $0x20] sm:$0xf]
  %v2613 = vld [vmem:[%s2603 + $0x24] sm:$0xf]
  %v2614 = vld [vmem:[%s2603 + $0x28] sm:$0xf]
  %v2615 = vld [vmem:[%s2603 + $0x2c] sm:$0xf]
  %v2616 = vld [vmem:[%s2603 + $0x30] sm:$0xf]
  %v2617 = vld [vmem:[%s2603 + $0x34] sm:$0xf]
  %v2618 = vld [vmem:[%s2603 + $0x38] sm:$0xf]
  %v2619 = vld [vmem:[%s2603 + $0x3c] sm:$0xf]
  %v2620 = vpack.c.bf16 %v2602, %v2602
  %s2621 = scalar_lea.vmem %s7, 16
  %v2622 = vld [vmem:[%s2621] ss:$0 sm:$0xff]
  %v2639 = vunpack.c.l.b16 %v2604
  %v2640 = vunpack.c.l.b16 %v2605
  %v2641 = vunpack.c.l.b16 %v2606
  %v2642 = vunpack.c.l.b16 %v2607
  %v2643 = vunpack.c.l.b16 %v2608
  %v2644 = vunpack.c.l.b16 %v2609
  %v2645 = vunpack.c.l.b16 %v2610
  %v2646 = vunpack.c.l.b16 %v2611
  %v2647 = vunpack.c.l.b16 %v2612
  %v2648 = vunpack.c.l.b16 %v2613
  %v2649 = vunpack.c.l.b16 %v2614
  %v2650 = vunpack.c.l.b16 %v2615
  %v2651 = vunpack.c.l.b16 %v2616
  %v2652 = vunpack.c.l.b16 %v2617
  %v2653 = vunpack.c.l.b16 %v2618
  %v2654 = vunpack.c.l.b16 %v2619
  %v2655 = vpack.c.b16 %v2640, %v2639
  %v2656 = vpack.c.b16 %v2642, %v2641
  %v2657 = vpack.c.b16 %v2644, %v2643
  %v2658 = vpack.c.b16 %v2646, %v2645
  %v2659 = vpack.c.b16 %v2648, %v2647
  %v2660 = vpack.c.b16 %v2650, %v2649
  %v2661 = vpack.c.b16 %v2652, %v2651
  %v2662 = vpack.c.b16 %v2654, %v2653
  %2671 = vmatprep.subr.bf16.mxu0 0
  %2672 = vmatpush1.bf16.msra.mxu0 %v2655
  %2673 = vmatprep.subr.bf16.mxu0 0
  %2674 = vmatpush1.bf16.msra.mxu0 %v2656
  %2675 = vmatprep.subr.bf16.mxu0 0
  %2676 = vmatpush1.bf16.msra.mxu0 %v2657
  %2677 = vmatprep.subr.bf16.mxu0 0
  %2678 = vmatpush1.bf16.msra.mxu0 %v2658
  %2679 = vmatprep.subr.bf16.mxu0 0
  %2680 = vmatpush1.bf16.msra.mxu0 %v2659
  %2681 = vmatprep.subr.bf16.mxu0 0
  %2682 = vmatpush1.bf16.msra.mxu0 %v2660
  %2683 = vmatprep.subr.bf16.mxu0 0
  %2684 = vmatpush1.bf16.msra.mxu0 %v2661
  %2685 = vmatprep.subr.bf16.mxu0 0
  %2686 = vmatpush1.bf16.msra.mxu0 %v2662
  %2687 = vmatprep.subr.bf16.mxu0 0
  %2688 = vmatpush1.bf16.msra.mxu0 0
  %2689 = vmatprep.subr.bf16.mxu0 0
  %2690 = vmatpush1.bf16.msra.mxu0 0
  %2691 = vmatprep.subr.bf16.mxu0 0
  %2692 = vmatpush1.bf16.msra.mxu0 0
  %2693 = vmatprep.subr.bf16.mxu0 0
  %2694 = vmatpush1.bf16.msra.mxu0 0
  %2695 = vmatprep.subr.bf16.mxu0 0
  %2696 = vmatpush1.bf16.msra.mxu0 0
  %2697 = vmatprep.subr.bf16.mxu0 0
  %2698 = vmatpush1.bf16.msra.mxu0 0
  %2699 = vmatprep.subr.bf16.mxu0 0
  %2700 = vmatpush1.bf16.msra.mxu0 0
  %2701 = vmatprep.subr.bf16.mxu0 0
  %2702 = vmatpush1.bf16.msra.mxu0 0
  %2703 = vmatprep.mubr.bf16.mxu0 0
  %2704 = vmatmul.mubr.bf16.gmra.mrb[0].mxu0 %v2620
  %v2705 = vpop.f32.mrb[0].mxu0
  %v2706 = vadd.f32 %v2622, %v2705
  %v2707 = vpop.f32.mrb[0].mxu0
  %v2708 = vpop.f32.mrb[0].mxu0
  %v2709 = vpop.f32.mrb[0].mxu0
  %2710 = vdwg.mxu0
  %v2711 = vadd.f32 %v2602, %v2706
  %v2712 = vld [vmem:[%s2621 + $0x3] ss:$0 sm:$0xff]
  %v2713 = vld [vmem:[%s2621 + $0x4] ss:$0 sm:$0xff]
  %v2714 = vmul.f32 %v2711, %v2711
  %v2715 = vsel %vm2240, %v2711, 0.0
  %2716 = vadd.xlane.f32.xlu0 %v2715
  %v2717 = vpop.xlane.xlu0 %2716
  %v2718 = vsel %vm2240, %v2714, 0.0
  %2719 = vadd.xlane.f32.xlu0 %v2718
  %v2720 = vpop.xlane.xlu0 %2719
  %v2721 = vmul.f32 %v2717, 0.0078125
  %v2722 = vmul.f32 %v2720, 0.0078125
  %v2723 = vmul.f32 %v2721, %v2721
  %v2724 = vsub.f32 %v2722, %v2723
  %v2725 = vmax.f32 %v2724, 0.0
  %v2726 = vsub.f32 %v2711, %v2721
  %v2727 = vadd.f32 %v2725, 1e-05
  %v2728 = vrsqrt.pop %v2727
  %v2729 = vmul.f32 %v2726, %v2728
  %v2730 = vmul.f32 %v2729, %v2712
  %v2731 = vadd.f32 %v2730, %v2713
  %s2732 = scalar_lea.vmem %s5, 128
  %v2733 = vld [vmem:[%s2732] sm:$0xff]
  %v2734 = vld [vmem:[%s2732 + $0x8] sm:$0xff]
  %v2735 = vld [vmem:[%s2732 + $0x10] sm:$0xff]
  %v2736 = vld [vmem:[%s2732 + $0x18] sm:$0xff]
  %v2737 = vld [vmem:[%s2732 + $0x20] sm:$0xff]
  %v2738 = vld [vmem:[%s2732 + $0x28] sm:$0xff]
  %v2739 = vld [vmem:[%s2732 + $0x30] sm:$0xff]
  %v2740 = vld [vmem:[%s2732 + $0x38] sm:$0xff]
  %v2741 = vld [vmem:[%s2732 + $0x40] sm:$0xff]
  %v2742 = vld [vmem:[%s2732 + $0x48] sm:$0xff]
  %v2743 = vld [vmem:[%s2732 + $0x50] sm:$0xff]
  %v2744 = vld [vmem:[%s2732 + $0x58] sm:$0xff]
  %v2745 = vld [vmem:[%s2732 + $0x60] sm:$0xff]
  %v2746 = vld [vmem:[%s2732 + $0x68] sm:$0xff]
  %v2747 = vld [vmem:[%s2732 + $0x70] sm:$0xff]
  %v2748 = vld [vmem:[%s2732 + $0x78] sm:$0xff]
  %v2749 = vpack.c.bf16 %v2731, %v2731
  %s2750 = scalar_lea.vmem %s2621, 1
  %v2751 = vld [vmem:[%s2750] ss:$8 sm:$0x3]
  %v2753 = vlaneseq
  %v2754 = vshrl.u32 %v2753, 7
  %v2755 = vsub.s32 0, %v2754
  %v2756 = vrot.slane %v2751, %v2755
  %v2757 = vlaneseq
  %v2758 = vshrl.u32 %v2757, 7
  %v2759 = vsub.s32 1, %v2758
  %v2760 = vrot.slane %v2751, %v2759
  %v2779 = vunpack.c.l.b16 %v2733
  %v2780 = vunpack.c.h.b16 %v2733
  %v2781 = vunpack.c.l.b16 %v2734
  %v2782 = vunpack.c.h.b16 %v2734
  %v2783 = vunpack.c.l.b16 %v2735
  %v2784 = vunpack.c.h.b16 %v2735
  %v2785 = vunpack.c.l.b16 %v2736
  %v2786 = vunpack.c.h.b16 %v2736
  %v2787 = vunpack.c.l.b16 %v2737
  %v2788 = vunpack.c.h.b16 %v2737
  %v2789 = vunpack.c.l.b16 %v2738
  %v2790 = vunpack.c.h.b16 %v2738
  %v2791 = vunpack.c.l.b16 %v2739
  %v2792 = vunpack.c.h.b16 %v2739
  %v2793 = vunpack.c.l.b16 %v2740
  %v2794 = vunpack.c.h.b16 %v2740
  %v2795 = vunpack.c.l.b16 %v2741
  %v2796 = vunpack.c.h.b16 %v2741
  %v2797 = vunpack.c.l.b16 %v2742
  %v2798 = vunpack.c.h.b16 %v2742
  %v2799 = vunpack.c.l.b16 %v2743
  %v2800 = vunpack.c.h.b16 %v2743
  %v2801 = vunpack.c.l.b16 %v2744
  %v2802 = vunpack.c.h.b16 %v2744
  %v2803 = vunpack.c.l.b16 %v2745
  %v2804 = vunpack.c.h.b16 %v2745
  %v2805 = vunpack.c.l.b16 %v2746
  %v2806 = vunpack.c.h.b16 %v2746
  %v2807 = vunpack.c.l.b16 %v2747
  %v2808 = vunpack.c.h.b16 %v2747
  %v2809 = vunpack.c.l.b16 %v2748
  %v2810 = vunpack.c.h.b16 %v2748
  %v2811 = vpack.c.b16 %v2781, %v2779
  %v2812 = vpack.c.b16 %v2782, %v2780
  %v2813 = vpack.c.b16 %v2785, %v2783
  %v2814 = vpack.c.b16 %v2786, %v2784
  %v2815 = vpack.c.b16 %v2789, %v2787
  %v2816 = vpack.c.b16 %v2790, %v2788
  %v2817 = vpack.c.b16 %v2793, %v2791
  %v2818 = vpack.c.b16 %v2794, %v2792
  %v2819 = vpack.c.b16 %v2797, %v2795
  %v2820 = vpack.c.b16 %v2798, %v2796
  %v2821 = vpack.c.b16 %v2801, %v2799
  %v2822 = vpack.c.b16 %v2802, %v2800
  %v2823 = vpack.c.b16 %v2805, %v2803
  %v2824 = vpack.c.b16 %v2806, %v2804
  %v2825 = vpack.c.b16 %v2809, %v2807
  %v2826 = vpack.c.b16 %v2810, %v2808
  %2843 = vmatprep.subr.bf16.mxu0 %v2812
  %2844 = vmatpush1.bf16.msra.mxu0 %v2811
  %2845 = vmatprep.subr.bf16.mxu0 %v2814
  %2846 = vmatpush1.bf16.msra.mxu0 %v2813
  %2847 = vmatprep.subr.bf16.mxu0 %v2816
  %2848 = vmatpush1.bf16.msra.mxu0 %v2815
  %2849 = vmatprep.subr.bf16.mxu0 %v2818
  %2850 = vmatpush1.bf16.msra.mxu0 %v2817
  %2851 = vmatprep.subr.bf16.mxu0 %v2820
  %2852 = vmatpush1.bf16.msra.mxu0 %v2819
  %2853 = vmatprep.subr.bf16.mxu0 %v2822
  %2854 = vmatpush1.bf16.msra.mxu0 %v2821
  %2855 = vmatprep.subr.bf16.mxu0 %v2824
  %2856 = vmatpush1.bf16.msra.mxu0 %v2823
  %2857 = vmatprep.subr.bf16.mxu0 %v2826
  %2858 = vmatpush1.bf16.msra.mxu0 %v2825
  %2859 = vmatprep.subr.bf16.mxu0 0
  %2860 = vmatpush1.bf16.msra.mxu0 0
  %2861 = vmatprep.subr.bf16.mxu0 0
  %2862 = vmatpush1.bf16.msra.mxu0 0
  %2863 = vmatprep.subr.bf16.mxu0 0
  %2864 = vmatpush1.bf16.msra.mxu0 0
  %2865 = vmatprep.subr.bf16.mxu0 0
  %2866 = vmatpush1.bf16.msra.mxu0 0
  %2867 = vmatprep.subr.bf16.mxu0 0
  %2868 = vmatpush1.bf16.msra.mxu0 0
  %2869 = vmatprep.subr.bf16.mxu0 0
  %2870 = vmatpush1.bf16.msra.mxu0 0
  %2871 = vmatprep.subr.bf16.mxu0 0
  %2872 = vmatpush1.bf16.msra.mxu0 0
  %2873 = vmatprep.subr.bf16.mxu0 0
  %2874 = vmatpush1.bf16.msra.mxu0 0
  %2875 = vmatprep.mubr.bf16.mxu0 0
  %2876 = vmatmul.mubr.bf16.gmra.mrb[0].mxu0 %v2749
  %v2877 = vpop.f32.mrb[0].mxu0
  %v2878 = vadd.f32 %v2756, %v2877
  %v2879 = vpop.f32.mrb[0].mxu0
  %v2880 = vadd.f32 %v2760, %v2879
  %v2881 = vpop.f32.mrb[0].mxu0
  %v2882 = vpop.f32.mrb[0].mxu0
  %2883 = vdwg.mxu0
  %v2884 = vmax.f32 %v2878, 0.0
  %v2885 = vmax.f32 %v2880, 0.0
  %s2886 = scalar_lea.vmem %s6, 128
  %v2887 = vld [vmem:[%s2886] sm:$0xf]
  %v2888 = vld [vmem:[%s2886 + $0x4] sm:$0xf]
  %v2889 = vld [vmem:[%s2886 + $0x8] sm:$0xf]
  %v2890 = vld [vmem:[%s2886 + $0xc] sm:$0xf]
  %v2891 = vld [vmem:[%s2886 + $0x10] sm:$0xf]
  %v2892 = vld [vmem:[%s2886 + $0x14] sm:$0xf]
  %v2893 = vld [vmem:[%s2886 + $0x18] sm:$0xf]
  %v2894 = vld [vmem:[%s2886 + $0x1c] sm:$0xf]
  %v2895 = vld [vmem:[%s2886 + $0x20] sm:$0xf]
  %v2896 = vld [vmem:[%s2886 + $0x24] sm:$0xf]
  %v2897 = vld [vmem:[%s2886 + $0x28] sm:$0xf]
  %v2898 = vld [vmem:[%s2886 + $0x2c] sm:$0xf]
  %v2899 = vld [vmem:[%s2886 + $0x30] sm:$0xf]
  %v2900 = vld [vmem:[%s2886 + $0x34] sm:$0xf]
  %v2901 = vld [vmem:[%s2886 + $0x38] sm:$0xf]
  %v2902 = vld [vmem:[%s2886 + $0x3c] sm:$0xf]
  %v2903 = vld [vmem:[%s2886 + $0x40] sm:$0xf]
  %v2904 = vld [vmem:[%s2886 + $0x44] sm:$0xf]
  %v2905 = vld [vmem:[%s2886 + $0x48] sm:$0xf]
  %v2906 = vld [vmem:[%s2886 + $0x4c] sm:$0xf]
  %v2907 = vld [vmem:[%s2886 + $0x50] sm:$0xf]
  %v2908 = vld [vmem:[%s2886 + $0x54] sm:$0xf]
  %v2909 = vld [vmem:[%s2886 + $0x58] sm:$0xf]
  %v2910 = vld [vmem:[%s2886 + $0x5c] sm:$0xf]
  %v2911 = vld [vmem:[%s2886 + $0x60] sm:$0xf]
  %v2912 = vld [vmem:[%s2886 + $0x64] sm:$0xf]
  %v2913 = vld [vmem:[%s2886 + $0x68] sm:$0xf]
  %v2914 = vld [vmem:[%s2886 + $0x6c] sm:$0xf]
  %v2915 = vld [vmem:[%s2886 + $0x70] sm:$0xf]
  %v2916 = vld [vmem:[%s2886 + $0x74] sm:$0xf]
  %v2917 = vld [vmem:[%s2886 + $0x78] sm:$0xf]
  %v2918 = vld [vmem:[%s2886 + $0x7c] sm:$0xf]
  %v2919 = vpack.c.bf16 %v2884, %v2884
  %v2920 = vpack.c.bf16 %v2885, %v2885
  %v2921 = vld [vmem:[%s2621 + $0x2] ss:$0 sm:$0xff]
  %v2954 = vunpack.c.l.b16 %v2887
  %v2955 = vunpack.c.l.b16 %v2888
  %v2956 = vunpack.c.l.b16 %v2889
  %v2957 = vunpack.c.l.b16 %v2890
  %v2958 = vunpack.c.l.b16 %v2891
  %v2959 = vunpack.c.l.b16 %v2892
  %v2960 = vunpack.c.l.b16 %v2893
  %v2961 = vunpack.c.l.b16 %v2894
  %v2962 = vunpack.c.l.b16 %v2895
  %v2963 = vunpack.c.l.b16 %v2896
  %v2964 = vunpack.c.l.b16 %v2897
  %v2965 = vunpack.c.l.b16 %v2898
  %v2966 = vunpack.c.l.b16 %v2899
  %v2967 = vunpack.c.l.b16 %v2900
  %v2968 = vunpack.c.l.b16 %v2901
  %v2969 = vunpack.c.l.b16 %v2902
  %v2970 = vunpack.c.l.b16 %v2903
  %v2971 = vunpack.c.l.b16 %v2904
  %v2972 = vunpack.c.l.b16 %v2905
  %v2973 = vunpack.c.l.b16 %v2906
  %v2974 = vunpack.c.l.b16 %v2907
  %v2975 = vunpack.c.l.b16 %v2908
  %v2976 = vunpack.c.l.b16 %v2909
  %v2977 = vunpack.c.l.b16 %v2910
  %v2978 = vunpack.c.l.b16 %v2911
  %v2979 = vunpack.c.l.b16 %v2912
  %v2980 = vunpack.c.l.b16 %v2913
  %v2981 = vunpack.c.l.b16 %v2914
  %v2982 = vunpack.c.l.b16 %v2915
  %v2983 = vunpack.c.l.b16 %v2916
  %v2984 = vunpack.c.l.b16 %v2917
  %v2985 = vunpack.c.l.b16 %v2918
  %v2986 = vpack.c.b16 %v2955, %v2954
  %v2987 = vpack.c.b16 %v2957, %v2956
  %v2988 = vpack.c.b16 %v2959, %v2958
  %v2989 = vpack.c.b16 %v2961, %v2960
  %v2990 = vpack.c.b16 %v2963, %v2962
  %v2991 = vpack.c.b16 %v2965, %v2964
  %v2992 = vpack.c.b16 %v2967, %v2966
  %v2993 = vpack.c.b16 %v2969, %v2968
  %v2994 = vpack.c.b16 %v2971, %v2970
  %v2995 = vpack.c.b16 %v2973, %v2972
  %v2996 = vpack.c.b16 %v2975, %v2974
  %v2997 = vpack.c.b16 %v2977, %v2976
  %v2998 = vpack.c.b16 %v2979, %v2978
  %v2999 = vpack.c.b16 %v2981, %v2980
  %v3000 = vpack.c.b16 %v2983, %v2982
  %v3001 = vpack.c.b16 %v2985, %v2984
  %3018 = vmatprep.subr.bf16.mxu0 0
  %3019 = vmatpush1.bf16.msra.mxu0 %v2986
  %3020 = vmatprep.subr.bf16.mxu0 0
  %3021 = vmatpush1.bf16.msra.mxu0 %v2987
  %3022 = vmatprep.subr.bf16.mxu0 0
  %3023 = vmatpush1.bf16.msra.mxu0 %v2988
  %3024 = vmatprep.subr.bf16.mxu0 0
  %3025 = vmatpush1.bf16.msra.mxu0 %v2989
  %3026 = vmatprep.subr.bf16.mxu0 0
  %3027 = vmatpush1.bf16.msra.mxu0 %v2990
  %3028 = vmatprep.subr.bf16.mxu0 0
  %3029 = vmatpush1.bf16.msra.mxu0 %v2991
  %3030 = vmatprep.subr.bf16.mxu0 0
  %3031 = vmatpush1.bf16.msra.mxu0 %v2992
  %3032 = vmatprep.subr.bf16.mxu0 0
  %3033 = vmatpush1.bf16.msra.mxu0 %v2993
  %3034 = vmatprep.subr.bf16.mxu0 0
  %3035 = vmatpush1.bf16.msra.mxu0 %v2994
  %3036 = vmatprep.subr.bf16.mxu0 0
  %3037 = vmatpush1.bf16.msra.mxu0 %v2995
  %3038 = vmatprep.subr.bf16.mxu0 0
  %3039 = vmatpush1.bf16.msra.mxu0 %v2996
  %3040 = vmatprep.subr.bf16.mxu0 0
  %3041 = vmatpush1.bf16.msra.mxu0 %v2997
  %3042 = vmatprep.subr.bf16.mxu0 0
  %3043 = vmatpush1.bf16.msra.mxu0 %v2998
  %3044 = vmatprep.subr.bf16.mxu0 0
  %3045 = vmatpush1.bf16.msra.mxu0 %v2999
  %3046 = vmatprep.subr.bf16.mxu0 0
  %3047 = vmatpush1.bf16.msra.mxu0 %v3000
  %3048 = vmatprep.subr.bf16.mxu0 0
  %3049 = vmatpush1.bf16.msra.mxu0 %v3001
  %3050 = vmatprep.mubr.bf16.mxu0 %v2920
  %3051 = vmatmul.mubr.bf16.gmra.mrb[0].mxu0 %v2919
  %v3052 = vpop.f32.mrb[0].mxu0
  %v3053 = vadd.f32 %v2921, %v3052
  %v3054 = vpop.f32.mrb[0].mxu0
  %v3055 = vpop.f32.mrb[0].mxu0
  %v3056 = vpop.f32.mrb[0].mxu0
  %3057 = vdwg.mxu0
  %v3058 = vadd.f32 %v2731, %v3053
  %v3059 = vld [vmem:[%s2621 + $0x5] ss:$0 sm:$0xff]
  %v3060 = vld [vmem:[%s2621 + $0x6] ss:$0 sm:$0xff]
  %v3061 = vmul.f32 %v3058, %v3058
  %v3062 = vsel %vm2240, %v3058, 0.0
  %3063 = vadd.xlane.f32.xlu0 %v3062
  %v3064 = vpop.xlane.xlu0 %3063
  %v3065 = vsel %vm2240, %v3061, 0.0
  %3066 = vadd.xlane.f32.xlu0 %v3065
  %v3067 = vpop.xlane.xlu0 %3066
  %v3068 = vmul.f32 %v3064, 0.0078125
  %v3069 = vmul.f32 %v3067, 0.0078125
  %v3070 = vmul.f32 %v3068, %v3068
  %v3071 = vsub.f32 %v3069, %v3070
  %v3072 = vmax.f32 %v3071, 0.0
  %v3073 = vsub.f32 %v3058, %v3068
  %v3074 = vadd.f32 %v3072, 1e-05
  %v3075 = vrsqrt.pop %v3074
  %v3076 = vmul.f32 %v3073, %v3075
  %v3077 = vmul.f32 %v3076, %v3059
  %v3078 = vadd.f32 %v3077, %v3060
  %s3079 = scalar_lea.vmem %s4, 128
  %v3080 = vld [vmem:[%s3079] sm:$0xf]
  %v3081 = vld [vmem:[%s3079 + $0x4] sm:$0xf]
  %v3082 = vld [vmem:[%s3079 + $0x8] sm:$0xf]
  %v3083 = vld [vmem:[%s3079 + $0xc] sm:$0xf]
  %v3084 = vld [vmem:[%s3079 + $0x10] sm:$0xf]
  %v3085 = vld [vmem:[%s3079 + $0x14] sm:$0xf]
  %v3086 = vld [vmem:[%s3079 + $0x18] sm:$0xf]
  %v3087 = vld [vmem:[%s3079 + $0x1c] sm:$0xf]
  %v3088 = vld [vmem:[%s3079 + $0x20] sm:$0xf]
  %v3089 = vld [vmem:[%s3079 + $0x24] sm:$0xf]
  %v3090 = vld [vmem:[%s3079 + $0x28] sm:$0xf]
  %v3091 = vld [vmem:[%s3079 + $0x2c] sm:$0xf]
  %v3092 = vld [vmem:[%s3079 + $0x30] sm:$0xf]
  %v3093 = vld [vmem:[%s3079 + $0x34] sm:$0xf]
  %v3094 = vld [vmem:[%s3079 + $0x38] sm:$0xf]
  %v3095 = vld [vmem:[%s3079 + $0x3c] sm:$0xf]
  %v3096 = vpack.c.bf16 %v3078, %v3078
  %s3097 = scalar_lea.vmem %s7, 32
  %v3098 = vld [vmem:[%s3097] ss:$0 sm:$0xff]
  %v3115 = vunpack.c.l.b16 %v3080
  %v3116 = vunpack.c.l.b16 %v3081
  %v3117 = vunpack.c.l.b16 %v3082
  %v3118 = vunpack.c.l.b16 %v3083
  %v3119 = vunpack.c.l.b16 %v3084
  %v3120 = vunpack.c.l.b16 %v3085
  %v3121 = vunpack.c.l.b16 %v3086
  %v3122 = vunpack.c.l.b16 %v3087
  %v3123 = vunpack.c.l.b16 %v3088
  %v3124 = vunpack.c.l.b16 %v3089
  %v3125 = vunpack.c.l.b16 %v3090
  %v3126 = vunpack.c.l.b16 %v3091
  %v3127 = vunpack.c.l.b16 %v3092
  %v3128 = vunpack.c.l.b16 %v3093
  %v3129 = vunpack.c.l.b16 %v3094
  %v3130 = vunpack.c.l.b16 %v3095
  %v3131 = vpack.c.b16 %v3116, %v3115
  %v3132 = vpack.c.b16 %v3118, %v3117
  %v3133 = vpack.c.b16 %v3120, %v3119
  %v3134 = vpack.c.b16 %v3122, %v3121
  %v3135 = vpack.c.b16 %v3124, %v3123
  %v3136 = vpack.c.b16 %v3126, %v3125
  %v3137 = vpack.c.b16 %v3128, %v3127
  %v3138 = vpack.c.b16 %v3130, %v3129
  %3147 = vmatprep.subr.bf16.mxu0 0
  %3148 = vmatpush1.bf16.msra.mxu0 %v3131
  %3149 = vmatprep.subr.bf16.mxu0 0
  %3150 = vmatpush1.bf16.msra.mxu0 %v3132
  %3151 = vmatprep.subr.bf16.mxu0 0
  %3152 = vmatpush1.bf16.msra.mxu0 %v3133
  %3153 = vmatprep.subr.bf16.mxu0 0
  %3154 = vmatpush1.bf16.msra.mxu0 %v3134
  %3155 = vmatprep.subr.bf16.mxu0 0
  %3156 = vmatpush1.bf16.msra.mxu0 %v3135
  %3157 = vmatprep.subr.bf16.mxu0 0
  %3158 = vmatpush1.bf16.msra.mxu0 %v3136
  %3159 = vmatprep.subr.bf16.mxu0 0
  %3160 = vmatpush1.bf16.msra.mxu0 %v3137
  %3161 = vmatprep.subr.bf16.mxu0 0
  %3162 = vmatpush1.bf16.msra.mxu0 %v3138
  %3163 = vmatprep.subr.bf16.mxu0 0
  %3164 = vmatpush1.bf16.msra.mxu0 0
  %3165 = vmatprep.subr.bf16.mxu0 0
  %3166 = vmatpush1.bf16.msra.mxu0 0
  %3167 = vmatprep.subr.bf16.mxu0 0
  %3168 = vmatpush1.bf16.msra.mxu0 0
  %3169 = vmatprep.subr.bf16.mxu0 0
  %3170 = vmatpush1.bf16.msra.mxu0 0
  %3171 = vmatprep.subr.bf16.mxu0 0
  %3172 = vmatpush1.bf16.msra.mxu0 0
  %3173 = vmatprep.subr.bf16.mxu0 0
  %3174 = vmatpush1.bf16.msra.mxu0 0
  %3175 = vmatprep.subr.bf16.mxu0 0
  %3176 = vmatpush1.bf16.msra.mxu0 0
  %3177 = vmatprep.subr.bf16.mxu0 0
  %3178 = vmatpush1.bf16.msra.mxu0 0
  %3179 = vmatprep.mubr.bf16.mxu0 0
  %3180 = vmatmul.mubr.bf16.gmra.mrb[0].mxu0 %v3096
  %v3181 = vpop.f32.mrb[0].mxu0
  %v3182 = vadd.f32 %v3098, %v3181
  %v3183 = vpop.f32.mrb[0].mxu0
  %v3184 = vpop.f32.mrb[0].mxu0
  %v3185 = vpop.f32.mrb[0].mxu0
  %3186 = vdwg.mxu0
  %v3187 = vadd.f32 %v3078, %v3182
  %v3188 = vld [vmem:[%s3097 + $0x3] ss:$0 sm:$0xff]
  %v3189 = vld [vmem:[%s3097 + $0x4] ss:$0 sm:$0xff]
  %v3190 = vmul.f32 %v3187, %v3187
  %v3191 = vsel %vm2240, %v3187, 0.0
  %3192 = vadd.xlane.f32.xlu0 %v3191
  %v3193 = vpop.xlane.xlu0 %3192
  %v3194 = vsel %vm2240, %v3190, 0.0
  %3195 = vadd.xlane.f32.xlu0 %v3194
  %v3196 = vpop.xlane.xlu0 %3195
  %v3197 = vmul.f32 %v3193, 0.0078125
  %v3198 = vmul.f32 %v3196, 0.0078125
  %v3199 = vmul.f32 %v3197, %v3197
  %v3200 = vsub.f32 %v3198, %v3199
  %v3201 = vmax.f32 %v3200, 0.0
  %v3202 = vsub.f32 %v3187, %v3197
  %v3203 = vadd.f32 %v3201, 1e-05
  %v3204 = vrsqrt.pop %v3203
  %v3205 = vmul.f32 %v3202, %v3204
  %v3206 = vmul.f32 %v3205, %v3188
  %v3207 = vadd.f32 %v3206, %v3189
  %s3208 = scalar_lea.vmem %s5, 256
  %v3209 = vld [vmem:[%s3208] sm:$0xff]
  %v3210 = vld [vmem:[%s3208 + $0x8] sm:$0xff]
  %v3211 = vld [vmem:[%s3208 + $0x10] sm:$0xff]
  %v3212 = vld [vmem:[%s3208 + $0x18] sm:$0xff]
  %v3213 = vld [vmem:[%s3208 + $0x20] sm:$0xff]
  %v3214 = vld [vmem:[%s3208 + $0x28] sm:$0xff]
  %v3215 = vld [vmem:[%s3208 + $0x30] sm:$0xff]
  %v3216 = vld [vmem:[%s3208 + $0x38] sm:$0xff]
  %v3217 = vld [vmem:[%s3208 + $0x40] sm:$0xff]
  %v3218 = vld [vmem:[%s3208 + $0x48] sm:$0xff]
  %v3219 = vld [vmem:[%s3208 + $0x50] sm:$0xff]
  %v3220 = vld [vmem:[%s3208 + $0x58] sm:$0xff]
  %v3221 = vld [vmem:[%s3208 + $0x60] sm:$0xff]
  %v3222 = vld [vmem:[%s3208 + $0x68] sm:$0xff]
  %v3223 = vld [vmem:[%s3208 + $0x70] sm:$0xff]
  %v3224 = vld [vmem:[%s3208 + $0x78] sm:$0xff]
  %v3225 = vpack.c.bf16 %v3207, %v3207
  %s3226 = scalar_lea.vmem %s3097, 1
  %v3227 = vld [vmem:[%s3226] ss:$8 sm:$0x3]
  %v3229 = vlaneseq
  %v3230 = vshrl.u32 %v3229, 7
  %v3231 = vsub.s32 0, %v3230
  %v3232 = vrot.slane %v3227, %v3231
  %v3233 = vlaneseq
  %v3234 = vshrl.u32 %v3233, 7
  %v3235 = vsub.s32 1, %v3234
  %v3236 = vrot.slane %v3227, %v3235
  %v3255 = vunpack.c.l.b16 %v3209
  %v3256 = vunpack.c.h.b16 %v3209
  %v3257 = vunpack.c.l.b16 %v3210
  %v3258 = vunpack.c.h.b16 %v3210
  %v3259 = vunpack.c.l.b16 %v3211
  %v3260 = vunpack.c.h.b16 %v3211
  %v3261 = vunpack.c.l.b16 %v3212
  %v3262 = vunpack.c.h.b16 %v3212
  %v3263 = vunpack.c.l.b16 %v3213
  %v3264 = vunpack.c.h.b16 %v3213
  %v3265 = vunpack.c.l.b16 %v3214
  %v3266 = vunpack.c.h.b16 %v3214
  %v3267 = vunpack.c.l.b16 %v3215
  %v3268 = vunpack.c.h.b16 %v3215
  %v3269 = vunpack.c.l.b16 %v3216
  %v3270 = vunpack.c.h.b16 %v3216
  %v3271 = vunpack.c.l.b16 %v3217
  %v3272 = vunpack.c.h.b16 %v3217
  %v3273 = vunpack.c.l.b16 %v3218
  %v3274 = vunpack.c.h.b16 %v3218
  %v3275 = vunpack.c.l.b16 %v3219
  %v3276 = vunpack.c.h.b16 %v3219
  %v3277 = vunpack.c.l.b16 %v3220
  %v3278 = vunpack.c.h.b16 %v3220
  %v3279 = vunpack.c.l.b16 %v3221
  %v3280 = vunpack.c.h.b16 %v3221
  %v3281 = vunpack.c.l.b16 %v3222
  %v3282 = vunpack.c.h.b16 %v3222
  %v3283 = vunpack.c.l.b16 %v3223
  %v3284 = vunpack.c.h.b16 %v3223
  %v3285 = vunpack.c.l.b16 %v3224
  %v3286 = vunpack.c.h.b16 %v3224
  %v3287 = vpack.c.b16 %v3257, %v3255
  %v3288 = vpack.c.b16 %v3258, %v3256
  %v3289 = vpack.c.b16 %v3261, %v3259
  %v3290 = vpack.c.b16 %v3262, %v3260
  %v3291 = vpack.c.b16 %v3265, %v3263
  %v3292 = vpack.c.b16 %v3266, %v3264
  %v3293 = vpack.c.b16 %v3269, %v3267
  %v3294 = vpack.c.b16 %v3270, %v3268
  %v3295 = vpack.c.b16 %v3273, %v3271
  %v3296 = vpack.c.b16 %v3274, %v3272
  %v3297 = vpack.c.b16 %v3277, %v3275
  %v3298 = vpack.c.b16 %v3278, %v3276
  %v3299 = vpack.c.b16 %v3281, %v3279
  %v3300 = vpack.c.b16 %v3282, %v3280
  %v3301 = vpack.c.b16 %v3285, %v3283
  %v3302 = vpack.c.b16 %v3286, %v3284
  %3319 = vmatprep.subr.bf16.mxu0 %v3288
  %3320 = vmatpush1.bf16.msra.mxu0 %v3287
  %3321 = vmatprep.subr.bf16.mxu0 %v3290
  %3322 = vmatpush1.bf16.msra.mxu0 %v3289
  %3323 = vmatprep.subr.bf16.mxu0 %v3292
  %3324 = vmatpush1.bf16.msra.mxu0 %v3291
  %3325 = vmatprep.subr.bf16.mxu0 %v3294
  %3326 = vmatpush1.bf16.msra.mxu0 %v3293
  %3327 = vmatprep.subr.bf16.mxu0 %v3296
  %3328 = vmatpush1.bf16.msra.mxu0 %v3295
  %3329 = vmatprep.subr.bf16.mxu0 %v3298
  %3330 = vmatpush1.bf16.msra.mxu0 %v3297
  %3331 = vmatprep.subr.bf16.mxu0 %v3300
  %3332 = vmatpush1.bf16.msra.mxu0 %v3299
  %3333 = vmatprep.subr.bf16.mxu0 %v3302
  %3334 = vmatpush1.bf16.msra.mxu0 %v3301
  %3335 = vmatprep.subr.bf16.mxu0 0
  %3336 = vmatpush1.bf16.msra.mxu0 0
  %3337 = vmatprep.subr.bf16.mxu0 0
  %3338 = vmatpush1.bf16.msra.mxu0 0
  %3339 = vmatprep.subr.bf16.mxu0 0
  %3340 = vmatpush1.bf16.msra.mxu0 0
  %3341 = vmatprep.subr.bf16.mxu0 0
  %3342 = vmatpush1.bf16.msra.mxu0 0
  %3343 = vmatprep.subr.bf16.mxu0 0
  %3344 = vmatpush1.bf16.msra.mxu0 0
  %3345 = vmatprep.subr.bf16.mxu0 0
  %3346 = vmatpush1.bf16.msra.mxu0 0
  %3347 = vmatprep.subr.bf16.mxu0 0
  %3348 = vmatpush1.bf16.msra.mxu0 0
  %3349 = vmatprep.subr.bf16.mxu0 0
  %3350 = vmatpush1.bf16.msra.mxu0 0
  %3351 = vmatprep.mubr.bf16.mxu0 0
  %3352 = vmatmul.mubr.bf16.gmra.mrb[0].mxu0 %v3225
  %v3353 = vpop.f32.mrb[0].mxu0
  %v3354 = vadd.f32 %v3232, %v3353
  %v3355 = vpop.f32.mrb[0].mxu0
  %v3356 = vadd.f32 %v3236, %v3355
  %v3357 = vpop.f32.mrb[0].mxu0
  %v3358 = vpop.f32.mrb[0].mxu0
  %3359 = vdwg.mxu0
  %v3360 = vmax.f32 %v3354, 0.0
  %v3361 = vmax.f32 %v3356, 0.0
  %s3362 = scalar_lea.vmem %s6, 256
  %v3363 = vld [vmem:[%s3362] sm:$0xf]
  %v3364 = vld [vmem:[%s3362 + $0x4] sm:$0xf]
  %v3365 = vld [vmem:[%s3362 + $0x8] sm:$0xf]
  %v3366 = vld [vmem:[%s3362 + $0xc] sm:$0xf]
  %v3367 = vld [vmem:[%s3362 + $0x10] sm:$0xf]
  %v3368 = vld [vmem:[%s3362 + $0x14] sm:$0xf]
  %v3369 = vld [vmem:[%s3362 + $0x18] sm:$0xf]
  %v3370 = vld [vmem:[%s3362 + $0x1c] sm:$0xf]
  %v3371 = vld [vmem:[%s3362 + $0x20] sm:$0xf]
  %v3372 = vld [vmem:[%s3362 + $0x24] sm:$0xf]
  %v3373 = vld [vmem:[%s3362 + $0x28] sm:$0xf]
  %v3374 = vld [vmem:[%s3362 + $0x2c] sm:$0xf]
  %v3375 = vld [vmem:[%s3362 + $0x30] sm:$0xf]
  %v3376 = vld [vmem:[%s3362 + $0x34] sm:$0xf]
  %v3377 = vld [vmem:[%s3362 + $0x38] sm:$0xf]
  %v3378 = vld [vmem:[%s3362 + $0x3c] sm:$0xf]
  %v3379 = vld [vmem:[%s3362 + $0x40] sm:$0xf]
  %v3380 = vld [vmem:[%s3362 + $0x44] sm:$0xf]
  %v3381 = vld [vmem:[%s3362 + $0x48] sm:$0xf]
  %v3382 = vld [vmem:[%s3362 + $0x4c] sm:$0xf]
  %v3383 = vld [vmem:[%s3362 + $0x50] sm:$0xf]
  %v3384 = vld [vmem:[%s3362 + $0x54] sm:$0xf]
  %v3385 = vld [vmem:[%s3362 + $0x58] sm:$0xf]
  %v3386 = vld [vmem:[%s3362 + $0x5c] sm:$0xf]
  %v3387 = vld [vmem:[%s3362 + $0x60] sm:$0xf]
  %v3388 = vld [vmem:[%s3362 + $0x64] sm:$0xf]
  %v3389 = vld [vmem:[%s3362 + $0x68] sm:$0xf]
  %v3390 = vld [vmem:[%s3362 + $0x6c] sm:$0xf]
  %v3391 = vld [vmem:[%s3362 + $0x70] sm:$0xf]
  %v3392 = vld [vmem:[%s3362 + $0x74] sm:$0xf]
  %v3393 = vld [vmem:[%s3362 + $0x78] sm:$0xf]
  %v3394 = vld [vmem:[%s3362 + $0x7c] sm:$0xf]
  %v3395 = vpack.c.bf16 %v3360, %v3360
  %v3396 = vpack.c.bf16 %v3361, %v3361
  %v3397 = vld [vmem:[%s3097 + $0x2] ss:$0 sm:$0xff]
  %v3430 = vunpack.c.l.b16 %v3363
  %v3431 = vunpack.c.l.b16 %v3364
  %v3432 = vunpack.c.l.b16 %v3365
  %v3433 = vunpack.c.l.b16 %v3366
  %v3434 = vunpack.c.l.b16 %v3367
  %v3435 = vunpack.c.l.b16 %v3368
  %v3436 = vunpack.c.l.b16 %v3369
  %v3437 = vunpack.c.l.b16 %v3370
  %v3438 = vunpack.c.l.b16 %v3371
  %v3439 = vunpack.c.l.b16 %v3372
  %v3440 = vunpack.c.l.b16 %v3373
  %v3441 = vunpack.c.l.b16 %v3374
  %v3442 = vunpack.c.l.b16 %v3375
  %v3443 = vunpack.c.l.b16 %v3376
  %v3444 = vunpack.c.l.b16 %v3377
  %v3445 = vunpack.c.l.b16 %v3378
  %v3446 = vunpack.c.l.b16 %v3379
  %v3447 = vunpack.c.l.b16 %v3380
  %v3448 = vunpack.c.l.b16 %v3381
  %v3449 = vunpack.c.l.b16 %v3382
  %v3450 = vunpack.c.l.b16 %v3383
  %v3451 = vunpack.c.l.b16 %v3384
  %v3452 = vunpack.c.l.b16 %v3385
  %v3453 = vunpack.c.l.b16 %v3386
  %v3454 = vunpack.c.l.b16 %v3387
  %v3455 = vunpack.c.l.b16 %v3388
  %v3456 = vunpack.c.l.b16 %v3389
  %v3457 = vunpack.c.l.b16 %v3390
  %v3458 = vunpack.c.l.b16 %v3391
  %v3459 = vunpack.c.l.b16 %v3392
  %v3460 = vunpack.c.l.b16 %v3393
  %v3461 = vunpack.c.l.b16 %v3394
  %v3462 = vpack.c.b16 %v3431, %v3430
  %v3463 = vpack.c.b16 %v3433, %v3432
  %v3464 = vpack.c.b16 %v3435, %v3434
  %v3465 = vpack.c.b16 %v3437, %v3436
  %v3466 = vpack.c.b16 %v3439, %v3438
  %v3467 = vpack.c.b16 %v3441, %v3440
  %v3468 = vpack.c.b16 %v3443, %v3442
  %v3469 = vpack.c.b16 %v3445, %v3444
  %v3470 = vpack.c.b16 %v3447, %v3446
  %v3471 = vpack.c.b16 %v3449, %v3448
  %v3472 = vpack.c.b16 %v3451, %v3450
  %v3473 = vpack.c.b16 %v3453, %v3452
  %v3474 = vpack.c.b16 %v3455, %v3454
  %v3475 = vpack.c.b16 %v3457, %v3456
  %v3476 = vpack.c.b16 %v3459, %v3458
  %v3477 = vpack.c.b16 %v3461, %v3460
  %3494 = vmatprep.subr.bf16.mxu0 0
  %3495 = vmatpush1.bf16.msra.mxu0 %v3462
  %3496 = vmatprep.subr.bf16.mxu0 0
  %3497 = vmatpush1.bf16.msra.mxu0 %v3463
  %3498 = vmatprep.subr.bf16.mxu0 0
  %3499 = vmatpush1.bf16.msra.mxu0 %v3464
  %3500 = vmatprep.subr.bf16.mxu0 0
  %3501 = vmatpush1.bf16.msra.mxu0 %v3465
  %3502 = vmatprep.subr.bf16.mxu0 0
  %3503 = vmatpush1.bf16.msra.mxu0 %v3466
  %3504 = vmatprep.subr.bf16.mxu0 0
  %3505 = vmatpush1.bf16.msra.mxu0 %v3467
  %3506 = vmatprep.subr.bf16.mxu0 0
  %3507 = vmatpush1.bf16.msra.mxu0 %v3468
  %3508 = vmatprep.subr.bf16.mxu0 0
  %3509 = vmatpush1.bf16.msra.mxu0 %v3469
  %3510 = vmatprep.subr.bf16.mxu0 0
  %3511 = vmatpush1.bf16.msra.mxu0 %v3470
  %3512 = vmatprep.subr.bf16.mxu0 0
  %3513 = vmatpush1.bf16.msra.mxu0 %v3471
  %3514 = vmatprep.subr.bf16.mxu0 0
  %3515 = vmatpush1.bf16.msra.mxu0 %v3472
  %3516 = vmatprep.subr.bf16.mxu0 0
  %3517 = vmatpush1.bf16.msra.mxu0 %v3473
  %3518 = vmatprep.subr.bf16.mxu0 0
  %3519 = vmatpush1.bf16.msra.mxu0 %v3474
  %3520 = vmatprep.subr.bf16.mxu0 0
  %3521 = vmatpush1.bf16.msra.mxu0 %v3475
  %3522 = vmatprep.subr.bf16.mxu0 0
  %3523 = vmatpush1.bf16.msra.mxu0 %v3476
  %3524 = vmatprep.subr.bf16.mxu0 0
  %3525 = vmatpush1.bf16.msra.mxu0 %v3477
  %3526 = vmatprep.mubr.bf16.mxu0 %v3396
  %3527 = vmatmul.mubr.bf16.gmra.mrb[0].mxu0 %v3395
  %v3528 = vpop.f32.mrb[0].mxu0
  %v3529 = vadd.f32 %v3397, %v3528
  %v3530 = vpop.f32.mrb[0].mxu0
  %v3531 = vpop.f32.mrb[0].mxu0
  %v3532 = vpop.f32.mrb[0].mxu0
  %3533 = vdwg.mxu0
  %v3534 = vadd.f32 %v3207, %v3529
  %v3535 = vld [vmem:[%s3097 + $0x5] ss:$0 sm:$0xff]
  %v3536 = vld [vmem:[%s3097 + $0x6] ss:$0 sm:$0xff]
  %v3537 = vmul.f32 %v3534, %v3534
  %v3538 = vsel %vm2240, %v3534, 0.0
  %3539 = vadd.xlane.f32.xlu0 %v3538
  %v3540 = vpop.xlane.xlu0 %3539
  %v3541 = vsel %vm2240, %v3537, 0.0
  %3542 = vadd.xlane.f32.xlu0 %v3541
  %v3543 = vpop.xlane.xlu0 %3542
  %v3544 = vmul.f32 %v3540, 0.0078125
  %v3545 = vmul.f32 %v3543, 0.0078125
  %v3546 = vmul.f32 %v3544, %v3544
  %v3547 = vsub.f32 %v3545, %v3546
  %v3548 = vmax.f32 %v3547, 0.0
  %v3549 = vsub.f32 %v3534, %v3544
  %v3550 = vadd.f32 %v3548, 1e-05
  %v3551 = vrsqrt.pop %v3550
  %v3552 = vmul.f32 %v3549, %v3551
  %v3553 = vmul.f32 %v3552, %v3535
  %v3554 = vadd.f32 %v3553, %v3536
  %s3555 = scalar_lea.vmem %s4, 192
  %v3556 = vld [vmem:[%s3555] sm:$0xf]
  %v3557 = vld [vmem:[%s3555 + $0x4] sm:$0xf]
  %v3558 = vld [vmem:[%s3555 + $0x8] sm:$0xf]
  %v3559 = vld [vmem:[%s3555 + $0xc] sm:$0xf]
  %v3560 = vld [vmem:[%s3555 + $0x10] sm:$0xf]
  %v3561 = vld [vmem:[%s3555 + $0x14] sm:$0xf]
  %v3562 = vld [vmem:[%s3555 + $0x18] sm:$0xf]
  %v3563 = vld [vmem:[%s3555 + $0x1c] sm:$0xf]
  %v3564 = vld [vmem:[%s3555 + $0x20] sm:$0xf]
  %v3565 = vld [vmem:[%s3555 + $0x24] sm:$0xf]
  %v3566 = vld [vmem:[%s3555 + $0x28] sm:$0xf]
  %v3567 = vld [vmem:[%s3555 + $0x2c] sm:$0xf]
  %v3568 = vld [vmem:[%s3555 + $0x30] sm:$0xf]
  %v3569 = vld [vmem:[%s3555 + $0x34] sm:$0xf]
  %v3570 = vld [vmem:[%s3555 + $0x38] sm:$0xf]
  %v3571 = vld [vmem:[%s3555 + $0x3c] sm:$0xf]
  %v3572 = vpack.c.bf16 %v3554, %v3554
  %s3573 = scalar_lea.vmem %s7, 48
  %v3574 = vld [vmem:[%s3573] ss:$0 sm:$0xff]
  %v3591 = vunpack.c.l.b16 %v3556
  %v3592 = vunpack.c.l.b16 %v3557
  %v3593 = vunpack.c.l.b16 %v3558
  %v3594 = vunpack.c.l.b16 %v3559
  %v3595 = vunpack.c.l.b16 %v3560
  %v3596 = vunpack.c.l.b16 %v3561
  %v3597 = vunpack.c.l.b16 %v3562
  %v3598 = vunpack.c.l.b16 %v3563
  %v3599 = vunpack.c.l.b16 %v3564
  %v3600 = vunpack.c.l.b16 %v3565
  %v3601 = vunpack.c.l.b16 %v3566
  %v3602 = vunpack.c.l.b16 %v3567
  %v3603 = vunpack.c.l.b16 %v3568
  %v3604 = vunpack.c.l.b16 %v3569
  %v3605 = vunpack.c.l.b16 %v3570
  %v3606 = vunpack.c.l.b16 %v3571
  %v3607 = vpack.c.b16 %v3592, %v3591
  %v3608 = vpack.c.b16 %v3594, %v3593
  %v3609 = vpack.c.b16 %v3596, %v3595
  %v3610 = vpack.c.b16 %v3598, %v3597
  %v3611 = vpack.c.b16 %v3600, %v3599
  %v3612 = vpack.c.b16 %v3602, %v3601
  %v3613 = vpack.c.b16 %v3604, %v3603
  %v3614 = vpack.c.b16 %v3606, %v3605
  %3623 = vmatprep.subr.bf16.mxu0 0
  %3624 = vmatpush1.bf16.msra.mxu0 %v3607
  %3625 = vmatprep.subr.bf16.mxu0 0
  %3626 = vmatpush1.bf16.msra.mxu0 %v3608
  %3627 = vmatprep.subr.bf16.mxu0 0
  %3628 = vmatpush1.bf16.msra.mxu0 %v3609
  %3629 = vmatprep.subr.bf16.mxu0 0
  %3630 = vmatpush1.bf16.msra.mxu0 %v3610
  %3631 = vmatprep.subr.bf16.mxu0 0
  %3632 = vmatpush1.bf16.msra.mxu0 %v3611
  %3633 = vmatprep.subr.bf16.mxu0 0
  %3634 = vmatpush1.bf16.msra.mxu0 %v3612
  %3635 = vmatprep.subr.bf16.mxu0 0
  %3636 = vmatpush1.bf16.msra.mxu0 %v3613
  %3637 = vmatprep.subr.bf16.mxu0 0
  %3638 = vmatpush1.bf16.msra.mxu0 %v3614
  %3639 = vmatprep.subr.bf16.mxu0 0
  %3640 = vmatpush1.bf16.msra.mxu0 0
  %3641 = vmatprep.subr.bf16.mxu0 0
  %3642 = vmatpush1.bf16.msra.mxu0 0
  %3643 = vmatprep.subr.bf16.mxu0 0
  %3644 = vmatpush1.bf16.msra.mxu0 0
  %3645 = vmatprep.subr.bf16.mxu0 0
  %3646 = vmatpush1.bf16.msra.mxu0 0
  %3647 = vmatprep.subr.bf16.mxu0 0
  %3648 = vmatpush1.bf16.msra.mxu0 0
  %3649 = vmatprep.subr.bf16.mxu0 0
  %3650 = vmatpush1.bf16.msra.mxu0 0
  %3651 = vmatprep.subr.bf16.mxu0 0
  %3652 = vmatpush1.bf16.msra.mxu0 0
  %3653 = vmatprep.subr.bf16.mxu0 0
  %3654 = vmatpush1.bf16.msra.mxu0 0
  %3655 = vmatprep.mubr.bf16.mxu0 0
  %3656 = vmatmul.mubr.bf16.gmra.mrb[0].mxu0 %v3572
  %v3657 = vpop.f32.mrb[0].mxu0
  %v3658 = vadd.f32 %v3574, %v3657
  %v3659 = vpop.f32.mrb[0].mxu0
  %v3660 = vpop.f32.mrb[0].mxu0
  %v3661 = vpop.f32.mrb[0].mxu0
  %3662 = vdwg.mxu0
  %v3663 = vadd.f32 %v3554, %v3658
  %v3664 = vld [vmem:[%s3573 + $0x3] ss:$0 sm:$0xff]
  %v3665 = vld [vmem:[%s3573 + $0x4] ss:$0 sm:$0xff]
  %v3666 = vmul.f32 %v3663, %v3663
  %v3667 = vsel %vm2240, %v3663, 0.0
  %3668 = vadd.xlane.f32.xlu0 %v3667
  %v3669 = vpop.xlane.xlu0 %3668
  %v3670 = vsel %vm2240, %v3666, 0.0
  %3671 = vadd.xlane.f32.xlu0 %v3670
  %v3672 = vpop.xlane.xlu0 %3671
  %v3673 = vmul.f32 %v3669, 0.0078125
  %v3674 = vmul.f32 %v3672, 0.0078125
  %v3675 = vmul.f32 %v3673, %v3673
  %v3676 = vsub.f32 %v3674, %v3675
  %v3677 = vmax.f32 %v3676, 0.0
  %v3678 = vsub.f32 %v3663, %v3673
  %v3679 = vadd.f32 %v3677, 1e-05
  %v3680 = vrsqrt.pop %v3679
  %v3681 = vmul.f32 %v3678, %v3680
  %v3682 = vmul.f32 %v3681, %v3664
  %v3683 = vadd.f32 %v3682, %v3665
  %s3684 = scalar_lea.vmem %s5, 384
  %v3685 = vld [vmem:[%s3684] sm:$0xff]
  %v3686 = vld [vmem:[%s3684 + $0x8] sm:$0xff]
  %v3687 = vld [vmem:[%s3684 + $0x10] sm:$0xff]
  %v3688 = vld [vmem:[%s3684 + $0x18] sm:$0xff]
  %v3689 = vld [vmem:[%s3684 + $0x20] sm:$0xff]
  %v3690 = vld [vmem:[%s3684 + $0x28] sm:$0xff]
  %v3691 = vld [vmem:[%s3684 + $0x30] sm:$0xff]
  %v3692 = vld [vmem:[%s3684 + $0x38] sm:$0xff]
  %v3693 = vld [vmem:[%s3684 + $0x40] sm:$0xff]
  %v3694 = vld [vmem:[%s3684 + $0x48] sm:$0xff]
  %v3695 = vld [vmem:[%s3684 + $0x50] sm:$0xff]
  %v3696 = vld [vmem:[%s3684 + $0x58] sm:$0xff]
  %v3697 = vld [vmem:[%s3684 + $0x60] sm:$0xff]
  %v3698 = vld [vmem:[%s3684 + $0x68] sm:$0xff]
  %v3699 = vld [vmem:[%s3684 + $0x70] sm:$0xff]
  %v3700 = vld [vmem:[%s3684 + $0x78] sm:$0xff]
  %v3701 = vpack.c.bf16 %v3683, %v3683
  %s3702 = scalar_lea.vmem %s3573, 1
  %v3703 = vld [vmem:[%s3702] ss:$8 sm:$0x3]
  %v3705 = vlaneseq
  %v3706 = vshrl.u32 %v3705, 7
  %v3707 = vsub.s32 0, %v3706
  %v3708 = vrot.slane %v3703, %v3707
  %v3709 = vlaneseq
  %v3710 = vshrl.u32 %v3709, 7
  %v3711 = vsub.s32 1, %v3710
  %v3712 = vrot.slane %v3703, %v3711
  %v3731 = vunpack.c.l.b16 %v3685
  %v3732 = vunpack.c.h.b16 %v3685
  %v3733 = vunpack.c.l.b16 %v3686
  %v3734 = vunpack.c.h.b16 %v3686
  %v3735 = vunpack.c.l.b16 %v3687
  %v3736 = vunpack.c.h.b16 %v3687
  %v3737 = vunpack.c.l.b16 %v3688
  %v3738 = vunpack.c.h.b16 %v3688
  %v3739 = vunpack.c.l.b16 %v3689
  %v3740 = vunpack.c.h.b16 %v3689
  %v3741 = vunpack.c.l.b16 %v3690
  %v3742 = vunpack.c.h.b16 %v3690
  %v3743 = vunpack.c.l.b16 %v3691
  %v3744 = vunpack.c.h.b16 %v3691
  %v3745 = vunpack.c.l.b16 %v3692
  %v3746 = vunpack.c.h.b16 %v3692
  %v3747 = vunpack.c.l.b16 %v3693
  %v3748 = vunpack.c.h.b16 %v3693
  %v3749 = vunpack.c.l.b16 %v3694
  %v3750 = vunpack.c.h.b16 %v3694
  %v3751 = vunpack.c.l.b16 %v3695
  %v3752 = vunpack.c.h.b16 %v3695
  %v3753 = vunpack.c.l.b16 %v3696
  %v3754 = vunpack.c.h.b16 %v3696
  %v3755 = vunpack.c.l.b16 %v3697
  %v3756 = vunpack.c.h.b16 %v3697
  %v3757 = vunpack.c.l.b16 %v3698
  %v3758 = vunpack.c.h.b16 %v3698
  %v3759 = vunpack.c.l.b16 %v3699
  %v3760 = vunpack.c.h.b16 %v3699
  %v3761 = vunpack.c.l.b16 %v3700
  %v3762 = vunpack.c.h.b16 %v3700
  %v3763 = vpack.c.b16 %v3733, %v3731
  %v3764 = vpack.c.b16 %v3734, %v3732
  %v3765 = vpack.c.b16 %v3737, %v3735
  %v3766 = vpack.c.b16 %v3738, %v3736
  %v3767 = vpack.c.b16 %v3741, %v3739
  %v3768 = vpack.c.b16 %v3742, %v3740
  %v3769 = vpack.c.b16 %v3745, %v3743
  %v3770 = vpack.c.b16 %v3746, %v3744
  %v3771 = vpack.c.b16 %v3749, %v3747
  %v3772 = vpack.c.b16 %v3750, %v3748
  %v3773 = vpack.c.b16 %v3753, %v3751
  %v3774 = vpack.c.b16 %v3754, %v3752
  %v3775 = vpack.c.b16 %v3757, %v3755
  %v3776 = vpack.c.b16 %v3758, %v3756
  %v3777 = vpack.c.b16 %v3761, %v3759
  %v3778 = vpack.c.b16 %v3762, %v3760
  %3795 = vmatprep.subr.bf16.mxu0 %v3764
  %3796 = vmatpush1.bf16.msra.mxu0 %v3763
  %3797 = vmatprep.subr.bf16.mxu0 %v3766
  %3798 = vmatpush1.bf16.msra.mxu0 %v3765
  %3799 = vmatprep.subr.bf16.mxu0 %v3768
  %3800 = vmatpush1.bf16.msra.mxu0 %v3767
  %3801 = vmatprep.subr.bf16.mxu0 %v3770
  %3802 = vmatpush1.bf16.msra.mxu0 %v3769
  %3803 = vmatprep.subr.bf16.mxu0 %v3772
  %3804 = vmatpush1.bf16.msra.mxu0 %v3771
  %3805 = vmatprep.subr.bf16.mxu0 %v3774
  %3806 = vmatpush1.bf16.msra.mxu0 %v3773
  %3807 = vmatprep.subr.bf16.mxu0 %v3776
  %3808 = vmatpush1.bf16.msra.mxu0 %v3775
  %3809 = vmatprep.subr.bf16.mxu0 %v3778
  %3810 = vmatpush1.bf16.msra.mxu0 %v3777
  %3811 = vmatprep.subr.bf16.mxu0 0
  %3812 = vmatpush1.bf16.msra.mxu0 0
  %3813 = vmatprep.subr.bf16.mxu0 0
  %3814 = vmatpush1.bf16.msra.mxu0 0
  %3815 = vmatprep.subr.bf16.mxu0 0
  %3816 = vmatpush1.bf16.msra.mxu0 0
  %3817 = vmatprep.subr.bf16.mxu0 0
  %3818 = vmatpush1.bf16.msra.mxu0 0
  %3819 = vmatprep.subr.bf16.mxu0 0
  %3820 = vmatpush1.bf16.msra.mxu0 0
  %3821 = vmatprep.subr.bf16.mxu0 0
  %3822 = vmatpush1.bf16.msra.mxu0 0
  %3823 = vmatprep.subr.bf16.mxu0 0
  %3824 = vmatpush1.bf16.msra.mxu0 0
  %3825 = vmatprep.subr.bf16.mxu0 0
  %3826 = vmatpush1.bf16.msra.mxu0 0
  %3827 = vmatprep.mubr.bf16.mxu0 0
  %3828 = vmatmul.mubr.bf16.gmra.mrb[0].mxu0 %v3701
  %v3829 = vpop.f32.mrb[0].mxu0
  %v3830 = vadd.f32 %v3708, %v3829
  %v3831 = vpop.f32.mrb[0].mxu0
  %v3832 = vadd.f32 %v3712, %v3831
  %v3833 = vpop.f32.mrb[0].mxu0
  %v3834 = vpop.f32.mrb[0].mxu0
  %3835 = vdwg.mxu0
  %v3836 = vmax.f32 %v3830, 0.0
  %v3837 = vmax.f32 %v3832, 0.0
  %s3838 = scalar_lea.vmem %s6, 384
  %v3839 = vld [vmem:[%s3838] sm:$0xf]
  %v3840 = vld [vmem:[%s3838 + $0x4] sm:$0xf]
  %v3841 = vld [vmem:[%s3838 + $0x8] sm:$0xf]
  %v3842 = vld [vmem:[%s3838 + $0xc] sm:$0xf]
  %v3843 = vld [vmem:[%s3838 + $0x10] sm:$0xf]
  %v3844 = vld [vmem:[%s3838 + $0x14] sm:$0xf]
  %v3845 = vld [vmem:[%s3838 + $0x18] sm:$0xf]
  %v3846 = vld [vmem:[%s3838 + $0x1c] sm:$0xf]
  %v3847 = vld [vmem:[%s3838 + $0x20] sm:$0xf]
  %v3848 = vld [vmem:[%s3838 + $0x24] sm:$0xf]
  %v3849 = vld [vmem:[%s3838 + $0x28] sm:$0xf]
  %v3850 = vld [vmem:[%s3838 + $0x2c] sm:$0xf]
  %v3851 = vld [vmem:[%s3838 + $0x30] sm:$0xf]
  %v3852 = vld [vmem:[%s3838 + $0x34] sm:$0xf]
  %v3853 = vld [vmem:[%s3838 + $0x38] sm:$0xf]
  %v3854 = vld [vmem:[%s3838 + $0x3c] sm:$0xf]
  %v3855 = vld [vmem:[%s3838 + $0x40] sm:$0xf]
  %v3856 = vld [vmem:[%s3838 + $0x44] sm:$0xf]
  %v3857 = vld [vmem:[%s3838 + $0x48] sm:$0xf]
  %v3858 = vld [vmem:[%s3838 + $0x4c] sm:$0xf]
  %v3859 = vld [vmem:[%s3838 + $0x50] sm:$0xf]
  %v3860 = vld [vmem:[%s3838 + $0x54] sm:$0xf]
  %v3861 = vld [vmem:[%s3838 + $0x58] sm:$0xf]
  %v3862 = vld [vmem:[%s3838 + $0x5c] sm:$0xf]
  %v3863 = vld [vmem:[%s3838 + $0x60] sm:$0xf]
  %v3864 = vld [vmem:[%s3838 + $0x64] sm:$0xf]
  %v3865 = vld [vmem:[%s3838 + $0x68] sm:$0xf]
  %v3866 = vld [vmem:[%s3838 + $0x6c] sm:$0xf]
  %v3867 = vld [vmem:[%s3838 + $0x70] sm:$0xf]
  %v3868 = vld [vmem:[%s3838 + $0x74] sm:$0xf]
  %v3869 = vld [vmem:[%s3838 + $0x78] sm:$0xf]
  %v3870 = vld [vmem:[%s3838 + $0x7c] sm:$0xf]
  %v3871 = vpack.c.bf16 %v3836, %v3836
  %v3872 = vpack.c.bf16 %v3837, %v3837
  %v3873 = vld [vmem:[%s3573 + $0x2] ss:$0 sm:$0xff]
  %v3906 = vunpack.c.l.b16 %v3839
  %v3907 = vunpack.c.l.b16 %v3840
  %v3908 = vunpack.c.l.b16 %v3841
  %v3909 = vunpack.c.l.b16 %v3842
  %v3910 = vunpack.c.l.b16 %v3843
  %v3911 = vunpack.c.l.b16 %v3844
  %v3912 = vunpack.c.l.b16 %v3845
  %v3913 = vunpack.c.l.b16 %v3846
  %v3914 = vunpack.c.l.b16 %v3847
  %v3915 = vunpack.c.l.b16 %v3848
  %v3916 = vunpack.c.l.b16 %v3849
  %v3917 = vunpack.c.l.b16 %v3850
  %v3918 = vunpack.c.l.b16 %v3851
  %v3919 = vunpack.c.l.b16 %v3852
  %v3920 = vunpack.c.l.b16 %v3853
  %v3921 = vunpack.c.l.b16 %v3854
  %v3922 = vunpack.c.l.b16 %v3855
  %v3923 = vunpack.c.l.b16 %v3856
  %v3924 = vunpack.c.l.b16 %v3857
  %v3925 = vunpack.c.l.b16 %v3858
  %v3926 = vunpack.c.l.b16 %v3859
  %v3927 = vunpack.c.l.b16 %v3860
  %v3928 = vunpack.c.l.b16 %v3861
  %v3929 = vunpack.c.l.b16 %v3862
  %v3930 = vunpack.c.l.b16 %v3863
  %v3931 = vunpack.c.l.b16 %v3864
  %v3932 = vunpack.c.l.b16 %v3865
  %v3933 = vunpack.c.l.b16 %v3866
  %v3934 = vunpack.c.l.b16 %v3867
  %v3935 = vunpack.c.l.b16 %v3868
  %v3936 = vunpack.c.l.b16 %v3869
  %v3937 = vunpack.c.l.b16 %v3870
  %v3938 = vpack.c.b16 %v3907, %v3906
  %v3939 = vpack.c.b16 %v3909, %v3908
  %v3940 = vpack.c.b16 %v3911, %v3910
  %v3941 = vpack.c.b16 %v3913, %v3912
  %v3942 = vpack.c.b16 %v3915, %v3914
  %v3943 = vpack.c.b16 %v3917, %v3916
  %v3944 = vpack.c.b16 %v3919, %v3918
  %v3945 = vpack.c.b16 %v3921, %v3920
  %v3946 = vpack.c.b16 %v3923, %v3922
  %v3947 = vpack.c.b16 %v3925, %v3924
  %v3948 = vpack.c.b16 %v3927, %v3926
  %v3949 = vpack.c.b16 %v3929, %v3928
  %v3950 = vpack.c.b16 %v3931, %v3930
  %v3951 = vpack.c.b16 %v3933, %v3932
  %v3952 = vpack.c.b16 %v3935, %v3934
  %v3953 = vpack.c.b16 %v3937, %v3936
  %3970 = vmatprep.subr.bf16.mxu0 0
  %3971 = vmatpush1.bf16.msra.mxu0 %v3938
  %3972 = vmatprep.subr.bf16.mxu0 0
  %3973 = vmatpush1.bf16.msra.mxu0 %v3939
  %3974 = vmatprep.subr.bf16.mxu0 0
  %3975 = vmatpush1.bf16.msra.mxu0 %v3940
  %3976 = vmatprep.subr.bf16.mxu0 0
  %3977 = vmatpush1.bf16.msra.mxu0 %v3941
  %3978 = vmatprep.subr.bf16.mxu0 0
  %3979 = vmatpush1.bf16.msra.mxu0 %v3942
  %3980 = vmatprep.subr.bf16.mxu0 0
  %3981 = vmatpush1.bf16.msra.mxu0 %v3943
  %3982 = vmatprep.subr.bf16.mxu0 0
  %3983 = vmatpush1.bf16.msra.mxu0 %v3944
  %3984 = vmatprep.subr.bf16.mxu0 0
  %3985 = vmatpush1.bf16.msra.mxu0 %v3945
  %3986 = vmatprep.subr.bf16.mxu0 0
  %3987 = vmatpush1.bf16.msra.mxu0 %v3946
  %3988 = vmatprep.subr.bf16.mxu0 0
  %3989 = vmatpush1.bf16.msra.mxu0 %v3947
  %3990 = vmatprep.subr.bf16.mxu0 0
  %3991 = vmatpush1.bf16.msra.mxu0 %v3948
  %3992 = vmatprep.subr.bf16.mxu0 0
  %3993 = vmatpush1.bf16.msra.mxu0 %v3949
  %3994 = vmatprep.subr.bf16.mxu0 0
  %3995 = vmatpush1.bf16.msra.mxu0 %v3950
  %3996 = vmatprep.subr.bf16.mxu0 0
  %3997 = vmatpush1.bf16.msra.mxu0 %v3951
  %3998 = vmatprep.subr.bf16.mxu0 0
  %3999 = vmatpush1.bf16.msra.mxu0 %v3952
  %4000 = vmatprep.subr.bf16.mxu0 0
  %4001 = vmatpush1.bf16.msra.mxu0 %v3953
  %4002 = vmatprep.mubr.bf16.mxu0 %v3872
  %4003 = vmatmul.mubr.bf16.gmra.mrb[0].mxu0 %v3871
  %v4004 = vpop.f32.mrb[0].mxu0
  %v4005 = vadd.f32 %v3873, %v4004
  %v4006 = vpop.f32.mrb[0].mxu0
  %v4007 = vpop.f32.mrb[0].mxu0
  %v4008 = vpop.f32.mrb[0].mxu0
  %4009 = vdwg.mxu0
  %v4010 = vadd.f32 %v3683, %v4005
  %v4011 = vld [vmem:[%s3573 + $0x5] ss:$0 sm:$0xff]
  %v4012 = vld [vmem:[%s3573 + $0x6] ss:$0 sm:$0xff]
  %v4013 = vmul.f32 %v4010, %v4010
  %v4014 = vsel %vm2240, %v4010, 0.0
  %4015 = vadd.xlane.f32.xlu0 %v4014
  %v4016 = vpop.xlane.xlu0 %4015
  %v4017 = vsel %vm2240, %v4013, 0.0
  %4018 = vadd.xlane.f32.xlu0 %v4017
  %v4019 = vpop.xlane.xlu0 %4018
  %v4020 = vmul.f32 %v4016, 0.0078125
  %v4021 = vmul.f32 %v4019, 0.0078125
  %v4022 = vmul.f32 %v4020, %v4020
  %v4023 = vsub.f32 %v4021, %v4022
  %v4024 = vmax.f32 %v4023, 0.0
  %v4025 = vsub.f32 %v4010, %v4020
  %v4026 = vadd.f32 %v4024, 1e-05
  %v4027 = vrsqrt.pop %v4026
  %v4028 = vmul.f32 %v4025, %v4027
  %v4029 = vmul.f32 %v4028, %v4011
  %v4030 = vadd.f32 %v4029, %v4012
  %s4031 = scalar_lea.vmem %s4, 256
  %v4032 = vld [vmem:[%s4031] sm:$0xf]
  %v4033 = vld [vmem:[%s4031 + $0x4] sm:$0xf]
  %v4034 = vld [vmem:[%s4031 + $0x8] sm:$0xf]
  %v4035 = vld [vmem:[%s4031 + $0xc] sm:$0xf]
  %v4036 = vld [vmem:[%s4031 + $0x10] sm:$0xf]
  %v4037 = vld [vmem:[%s4031 + $0x14] sm:$0xf]
  %v4038 = vld [vmem:[%s4031 + $0x18] sm:$0xf]
  %v4039 = vld [vmem:[%s4031 + $0x1c] sm:$0xf]
  %v4040 = vld [vmem:[%s4031 + $0x20] sm:$0xf]
  %v4041 = vld [vmem:[%s4031 + $0x24] sm:$0xf]
  %v4042 = vld [vmem:[%s4031 + $0x28] sm:$0xf]
  %v4043 = vld [vmem:[%s4031 + $0x2c] sm:$0xf]
  %v4044 = vld [vmem:[%s4031 + $0x30] sm:$0xf]
  %v4045 = vld [vmem:[%s4031 + $0x34] sm:$0xf]
  %v4046 = vld [vmem:[%s4031 + $0x38] sm:$0xf]
  %v4047 = vld [vmem:[%s4031 + $0x3c] sm:$0xf]
  %v4048 = vpack.c.bf16 %v4030, %v4030
  %s4049 = scalar_lea.vmem %s7, 64
  %v4050 = vld [vmem:[%s4049] ss:$0 sm:$0xff]
  %v4067 = vunpack.c.l.b16 %v4032
  %v4068 = vunpack.c.l.b16 %v4033
  %v4069 = vunpack.c.l.b16 %v4034
  %v4070 = vunpack.c.l.b16 %v4035
  %v4071 = vunpack.c.l.b16 %v4036
  %v4072 = vunpack.c.l.b16 %v4037
  %v4073 = vunpack.c.l.b16 %v4038
  %v4074 = vunpack.c.l.b16 %v4039
  %v4075 = vunpack.c.l.b16 %v4040
  %v4076 = vunpack.c.l.b16 %v4041
  %v4077 = vunpack.c.l.b16 %v4042
  %v4078 = vunpack.c.l.b16 %v4043
  %v4079 = vunpack.c.l.b16 %v4044
  %v4080 = vunpack.c.l.b16 %v4045
  %v4081 = vunpack.c.l.b16 %v4046
  %v4082 = vunpack.c.l.b16 %v4047
  %v4083 = vpack.c.b16 %v4068, %v4067
  %v4084 = vpack.c.b16 %v4070, %v4069
  %v4085 = vpack.c.b16 %v4072, %v4071
  %v4086 = vpack.c.b16 %v4074, %v4073
  %v4087 = vpack.c.b16 %v4076, %v4075
  %v4088 = vpack.c.b16 %v4078, %v4077
  %v4089 = vpack.c.b16 %v4080, %v4079
  %v4090 = vpack.c.b16 %v4082, %v4081
  %4099 = vmatprep.subr.bf16.mxu0 0
  %4100 = vmatpush1.bf16.msra.mxu0 %v4083
  %4101 = vmatprep.subr.bf16.mxu0 0
  %4102 = vmatpush1.bf16.msra.mxu0 %v4084
  %4103 = vmatprep.subr.bf16.mxu0 0
  %4104 = vmatpush1.bf16.msra.mxu0 %v4085
  %4105 = vmatprep.subr.bf16.mxu0 0
  %4106 = vmatpush1.bf16.msra.mxu0 %v4086
  %4107 = vmatprep.subr.bf16.mxu0 0
  %4108 = vmatpush1.bf16.msra.mxu0 %v4087
  %4109 = vmatprep.subr.bf16.mxu0 0
  %4110 = vmatpush1.bf16.msra.mxu0 %v4088
  %4111 = vmatprep.subr.bf16.mxu0 0
  %4112 = vmatpush1.bf16.msra.mxu0 %v4089
  %4113 = vmatprep.subr.bf16.mxu0 0
  %4114 = vmatpush1.bf16.msra.mxu0 %v4090
  %4115 = vmatprep.subr.bf16.mxu0 0
  %4116 = vmatpush1.bf16.msra.mxu0 0
  %4117 = vmatprep.subr.bf16.mxu0 0
  %4118 = vmatpush1.bf16.msra.mxu0 0
  %4119 = vmatprep.subr.bf16.mxu0 0
  %4120 = vmatpush1.bf16.msra.mxu0 0
  %4121 = vmatprep.subr.bf16.mxu0 0
  %4122 = vmatpush1.bf16.msra.mxu0 0
  %4123 = vmatprep.subr.bf16.mxu0 0
  %4124 = vmatpush1.bf16.msra.mxu0 0
  %4125 = vmatprep.subr.bf16.mxu0 0
  %4126 = vmatpush1.bf16.msra.mxu0 0
  %4127 = vmatprep.subr.bf16.mxu0 0
  %4128 = vmatpush1.bf16.msra.mxu0 0
  %4129 = vmatprep.subr.bf16.mxu0 0
  %4130 = vmatpush1.bf16.msra.mxu0 0
  %4131 = vmatprep.mubr.bf16.mxu0 0
  %4132 = vmatmul.mubr.bf16.gmra.mrb[0].mxu0 %v4048
  %v4133 = vpop.f32.mrb[0].mxu0
  %v4134 = vadd.f32 %v4050, %v4133
  %v4135 = vpop.f32.mrb[0].mxu0
  %v4136 = vpop.f32.mrb[0].mxu0
  %v4137 = vpop.f32.mrb[0].mxu0
  %4138 = vdwg.mxu0
  %v4139 = vadd.f32 %v4030, %v4134
  %v4140 = vld [vmem:[%s4049 + $0x3] ss:$0 sm:$0xff]
  %v4141 = vld [vmem:[%s4049 + $0x4] ss:$0 sm:$0xff]
  %v4142 = vmul.f32 %v4139, %v4139
  %v4143 = vsel %vm2240, %v4139, 0.0
  %4144 = vadd.xlane.f32.xlu0 %v4143
  %v4145 = vpop.xlane.xlu0 %4144
  %v4146 = vsel %vm2240, %v4142, 0.0
  %4147 = vadd.xlane.f32.xlu0 %v4146
  %v4148 = vpop.xlane.xlu0 %4147
  %v4149 = vmul.f32 %v4145, 0.0078125
  %v4150 = vmul.f32 %v4148, 0.0078125
  %v4151 = vmul.f32 %v4149, %v4149
  %v4152 = vsub.f32 %v4150, %v4151
  %v4153 = vmax.f32 %v4152, 0.0
  %v4154 = vsub.f32 %v4139, %v4149
  %v4155 = vadd.f32 %v4153, 1e-05
  %v4156 = vrsqrt.pop %v4155
  %v4157 = vmul.f32 %v4154, %v4156
  %v4158 = vmul.f32 %v4157, %v4140
  %v4159 = vadd.f32 %v4158, %v4141
  %s4160 = scalar_lea.vmem %s5, 512
  %v4161 = vld [vmem:[%s4160] sm:$0xff]
  %v4162 = vld [vmem:[%s4160 + $0x8] sm:$0xff]
  %v4163 = vld [vmem:[%s4160 + $0x10] sm:$0xff]
  %v4164 = vld [vmem:[%s4160 + $0x18] sm:$0xff]
  %v4165 = vld [vmem:[%s4160 + $0x20] sm:$0xff]
  %v4166 = vld [vmem:[%s4160 + $0x28] sm:$0xff]
  %v4167 = vld [vmem:[%s4160 + $0x30] sm:$0xff]
  %v4168 = vld [vmem:[%s4160 + $0x38] sm:$0xff]
  %v4169 = vld [vmem:[%s4160 + $0x40] sm:$0xff]
  %v4170 = vld [vmem:[%s4160 + $0x48] sm:$0xff]
  %v4171 = vld [vmem:[%s4160 + $0x50] sm:$0xff]
  %v4172 = vld [vmem:[%s4160 + $0x58] sm:$0xff]
  %v4173 = vld [vmem:[%s4160 + $0x60] sm:$0xff]
  %v4174 = vld [vmem:[%s4160 + $0x68] sm:$0xff]
  %v4175 = vld [vmem:[%s4160 + $0x70] sm:$0xff]
  %v4176 = vld [vmem:[%s4160 + $0x78] sm:$0xff]
  %v4177 = vpack.c.bf16 %v4159, %v4159
  %s4178 = scalar_lea.vmem %s4049, 1
  %v4179 = vld [vmem:[%s4178] ss:$8 sm:$0x3]
  %v4181 = vlaneseq
  %v4182 = vshrl.u32 %v4181, 7
  %v4183 = vsub.s32 0, %v4182
  %v4184 = vrot.slane %v4179, %v4183
  %v4185 = vlaneseq
  %v4186 = vshrl.u32 %v4185, 7
  %v4187 = vsub.s32 1, %v4186
  %v4188 = vrot.slane %v4179, %v4187
  %v4207 = vunpack.c.l.b16 %v4161
  %v4208 = vunpack.c.h.b16 %v4161
  %v4209 = vunpack.c.l.b16 %v4162
  %v4210 = vunpack.c.h.b16 %v4162
  %v4211 = vunpack.c.l.b16 %v4163
  %v4212 = vunpack.c.h.b16 %v4163
  %v4213 = vunpack.c.l.b16 %v4164
  %v4214 = vunpack.c.h.b16 %v4164
  %v4215 = vunpack.c.l.b16 %v4165
  %v4216 = vunpack.c.h.b16 %v4165
  %v4217 = vunpack.c.l.b16 %v4166
  %v4218 = vunpack.c.h.b16 %v4166
  %v4219 = vunpack.c.l.b16 %v4167
  %v4220 = vunpack.c.h.b16 %v4167
  %v4221 = vunpack.c.l.b16 %v4168
  %v4222 = vunpack.c.h.b16 %v4168
  %v4223 = vunpack.c.l.b16 %v4169
  %v4224 = vunpack.c.h.b16 %v4169
  %v4225 = vunpack.c.l.b16 %v4170
  %v4226 = vunpack.c.h.b16 %v4170
  %v4227 = vunpack.c.l.b16 %v4171
  %v4228 = vunpack.c.h.b16 %v4171
  %v4229 = vunpack.c.l.b16 %v4172
  %v4230 = vunpack.c.h.b16 %v4172
  %v4231 = vunpack.c.l.b16 %v4173
  %v4232 = vunpack.c.h.b16 %v4173
  %v4233 = vunpack.c.l.b16 %v4174
  %v4234 = vunpack.c.h.b16 %v4174
  %v4235 = vunpack.c.l.b16 %v4175
  %v4236 = vunpack.c.h.b16 %v4175
  %v4237 = vunpack.c.l.b16 %v4176
  %v4238 = vunpack.c.h.b16 %v4176
  %v4239 = vpack.c.b16 %v4209, %v4207
  %v4240 = vpack.c.b16 %v4210, %v4208
  %v4241 = vpack.c.b16 %v4213, %v4211
  %v4242 = vpack.c.b16 %v4214, %v4212
  %v4243 = vpack.c.b16 %v4217, %v4215
  %v4244 = vpack.c.b16 %v4218, %v4216
  %v4245 = vpack.c.b16 %v4221, %v4219
  %v4246 = vpack.c.b16 %v4222, %v4220
  %v4247 = vpack.c.b16 %v4225, %v4223
  %v4248 = vpack.c.b16 %v4226, %v4224
  %v4249 = vpack.c.b16 %v4229, %v4227
  %v4250 = vpack.c.b16 %v4230, %v4228
  %v4251 = vpack.c.b16 %v4233, %v4231
  %v4252 = vpack.c.b16 %v4234, %v4232
  %v4253 = vpack.c.b16 %v4237, %v4235
  %v4254 = vpack.c.b16 %v4238, %v4236
  %4271 = vmatprep.subr.bf16.mxu0 %v4240
  %4272 = vmatpush1.bf16.msra.mxu0 %v4239
  %4273 = vmatprep.subr.bf16.mxu0 %v4242
  %4274 = vmatpush1.bf16.msra.mxu0 %v4241
  %4275 = vmatprep.subr.bf16.mxu0 %v4244
  %4276 = vmatpush1.bf16.msra.mxu0 %v4243
  %4277 = vmatprep.subr.bf16.mxu0 %v4246
  %4278 = vmatpush1.bf16.msra.mxu0 %v4245
  %4279 = vmatprep.subr.bf16.mxu0 %v4248
  %4280 = vmatpush1.bf16.msra.mxu0 %v4247
  %4281 = vmatprep.subr.bf16.mxu0 %v4250
  %4282 = vmatpush1.bf16.msra.mxu0 %v4249
  %4283 = vmatprep.subr.bf16.mxu0 %v4252
  %4284 = vmatpush1.bf16.msra.mxu0 %v4251
  %4285 = vmatprep.subr.bf16.mxu0 %v4254
  %4286 = vmatpush1.bf16.msra.mxu0 %v4253
  %4287 = vmatprep.subr.bf16.mxu0 0
  %4288 = vmatpush1.bf16.msra.mxu0 0
  %4289 = vmatprep.subr.bf16.mxu0 0
  %4290 = vmatpush1.bf16.msra.mxu0 0
  %4291 = vmatprep.subr.bf16.mxu0 0
  %4292 = vmatpush1.bf16.msra.mxu0 0
  %4293 = vmatprep.subr.bf16.mxu0 0
  %4294 = vmatpush1.bf16.msra.mxu0 0
  %4295 = vmatprep.subr.bf16.mxu0 0
  %4296 = vmatpush1.bf16.msra.mxu0 0
  %4297 = vmatprep.subr.bf16.mxu0 0
  %4298 = vmatpush1.bf16.msra.mxu0 0
  %4299 = vmatprep.subr.bf16.mxu0 0
  %4300 = vmatpush1.bf16.msra.mxu0 0
  %4301 = vmatprep.subr.bf16.mxu0 0
  %4302 = vmatpush1.bf16.msra.mxu0 0
  %4303 = vmatprep.mubr.bf16.mxu0 0
  %4304 = vmatmul.mubr.bf16.gmra.mrb[0].mxu0 %v4177
  %v4305 = vpop.f32.mrb[0].mxu0
  %v4306 = vadd.f32 %v4184, %v4305
  %v4307 = vpop.f32.mrb[0].mxu0
  %v4308 = vadd.f32 %v4188, %v4307
  %v4309 = vpop.f32.mrb[0].mxu0
  %v4310 = vpop.f32.mrb[0].mxu0
  %4311 = vdwg.mxu0
  %v4312 = vmax.f32 %v4306, 0.0
  %v4313 = vmax.f32 %v4308, 0.0
  %s4314 = scalar_lea.vmem %s6, 512
  %v4315 = vld [vmem:[%s4314] sm:$0xf]
  %v4316 = vld [vmem:[%s4314 + $0x4] sm:$0xf]
  %v4317 = vld [vmem:[%s4314 + $0x8] sm:$0xf]
  %v4318 = vld [vmem:[%s4314 + $0xc] sm:$0xf]
  %v4319 = vld [vmem:[%s4314 + $0x10] sm:$0xf]
  %v4320 = vld [vmem:[%s4314 + $0x14] sm:$0xf]
  %v4321 = vld [vmem:[%s4314 + $0x18] sm:$0xf]
  %v4322 = vld [vmem:[%s4314 + $0x1c] sm:$0xf]
  %v4323 = vld [vmem:[%s4314 + $0x20] sm:$0xf]
  %v4324 = vld [vmem:[%s4314 + $0x24] sm:$0xf]
  %v4325 = vld [vmem:[%s4314 + $0x28] sm:$0xf]
  %v4326 = vld [vmem:[%s4314 + $0x2c] sm:$0xf]
  %v4327 = vld [vmem:[%s4314 + $0x30] sm:$0xf]
  %v4328 = vld [vmem:[%s4314 + $0x34] sm:$0xf]
  %v4329 = vld [vmem:[%s4314 + $0x38] sm:$0xf]
  %v4330 = vld [vmem:[%s4314 + $0x3c] sm:$0xf]
  %v4331 = vld [vmem:[%s4314 + $0x40] sm:$0xf]
  %v4332 = vld [vmem:[%s4314 + $0x44] sm:$0xf]
  %v4333 = vld [vmem:[%s4314 + $0x48] sm:$0xf]
  %v4334 = vld [vmem:[%s4314 + $0x4c] sm:$0xf]
  %v4335 = vld [vmem:[%s4314 + $0x50] sm:$0xf]
  %v4336 = vld [vmem:[%s4314 + $0x54] sm:$0xf]
  %v4337 = vld [vmem:[%s4314 + $0x58] sm:$0xf]
  %v4338 = vld [vmem:[%s4314 + $0x5c] sm:$0xf]
  %v4339 = vld [vmem:[%s4314 + $0x60] sm:$0xf]
  %v4340 = vld [vmem:[%s4314 + $0x64] sm:$0xf]
  %v4341 = vld [vmem:[%s4314 + $0x68] sm:$0xf]
  %v4342 = vld [vmem:[%s4314 + $0x6c] sm:$0xf]
  %v4343 = vld [vmem:[%s4314 + $0x70] sm:$0xf]
  %v4344 = vld [vmem:[%s4314 + $0x74] sm:$0xf]
  %v4345 = vld [vmem:[%s4314 + $0x78] sm:$0xf]
  %v4346 = vld [vmem:[%s4314 + $0x7c] sm:$0xf]
  %v4347 = vpack.c.bf16 %v4312, %v4312
  %v4348 = vpack.c.bf16 %v4313, %v4313
  %v4349 = vld [vmem:[%s4049 + $0x2] ss:$0 sm:$0xff]
  %v4382 = vunpack.c.l.b16 %v4315
  %v4383 = vunpack.c.l.b16 %v4316
  %v4384 = vunpack.c.l.b16 %v4317
  %v4385 = vunpack.c.l.b16 %v4318
  %v4386 = vunpack.c.l.b16 %v4319
  %v4387 = vunpack.c.l.b16 %v4320
  %v4388 = vunpack.c.l.b16 %v4321
  %v4389 = vunpack.c.l.b16 %v4322
  %v4390 = vunpack.c.l.b16 %v4323
  %v4391 = vunpack.c.l.b16 %v4324
  %v4392 = vunpack.c.l.b16 %v4325
  %v4393 = vunpack.c.l.b16 %v4326
  %v4394 = vunpack.c.l.b16 %v4327
  %v4395 = vunpack.c.l.b16 %v4328
  %v4396 = vunpack.c.l.b16 %v4329
  %v4397 = vunpack.c.l.b16 %v4330
  %v4398 = vunpack.c.l.b16 %v4331
  %v4399 = vunpack.c.l.b16 %v4332
  %v4400 = vunpack.c.l.b16 %v4333
  %v4401 = vunpack.c.l.b16 %v4334
  %v4402 = vunpack.c.l.b16 %v4335
  %v4403 = vunpack.c.l.b16 %v4336
  %v4404 = vunpack.c.l.b16 %v4337
  %v4405 = vunpack.c.l.b16 %v4338
  %v4406 = vunpack.c.l.b16 %v4339
  %v4407 = vunpack.c.l.b16 %v4340
  %v4408 = vunpack.c.l.b16 %v4341
  %v4409 = vunpack.c.l.b16 %v4342
  %v4410 = vunpack.c.l.b16 %v4343
  %v4411 = vunpack.c.l.b16 %v4344
  %v4412 = vunpack.c.l.b16 %v4345
  %v4413 = vunpack.c.l.b16 %v4346
  %v4414 = vpack.c.b16 %v4383, %v4382
  %v4415 = vpack.c.b16 %v4385, %v4384
  %v4416 = vpack.c.b16 %v4387, %v4386
  %v4417 = vpack.c.b16 %v4389, %v4388
  %v4418 = vpack.c.b16 %v4391, %v4390
  %v4419 = vpack.c.b16 %v4393, %v4392
  %v4420 = vpack.c.b16 %v4395, %v4394
  %v4421 = vpack.c.b16 %v4397, %v4396
  %v4422 = vpack.c.b16 %v4399, %v4398
  %v4423 = vpack.c.b16 %v4401, %v4400
  %v4424 = vpack.c.b16 %v4403, %v4402
  %v4425 = vpack.c.b16 %v4405, %v4404
  %v4426 = vpack.c.b16 %v4407, %v4406
  %v4427 = vpack.c.b16 %v4409, %v4408
  %v4428 = vpack.c.b16 %v4411, %v4410
  %v4429 = vpack.c.b16 %v4413, %v4412
  %4446 = vmatprep.subr.bf16.mxu0 0
  %4447 = vmatpush1.bf16.msra.mxu0 %v4414
  %4448 = vmatprep.subr.bf16.mxu0 0
  %4449 = vmatpush1.bf16.msra.mxu0 %v4415
  %4450 = vmatprep.subr.bf16.mxu0 0
  %4451 = vmatpush1.bf16.msra.mxu0 %v4416
  %4452 = vmatprep.subr.bf16.mxu0 0
  %4453 = vmatpush1.bf16.msra.mxu0 %v4417
  %4454 = vmatprep.subr.bf16.mxu0 0
  %4455 = vmatpush1.bf16.msra.mxu0 %v4418
  %4456 = vmatprep.subr.bf16.mxu0 0
  %4457 = vmatpush1.bf16.msra.mxu0 %v4419
  %4458 = vmatprep.subr.bf16.mxu0 0
  %4459 = vmatpush1.bf16.msra.mxu0 %v4420
  %4460 = vmatprep.subr.bf16.mxu0 0
  %4461 = vmatpush1.bf16.msra.mxu0 %v4421
  %4462 = vmatprep.subr.bf16.mxu0 0
  %4463 = vmatpush1.bf16.msra.mxu0 %v4422
  %4464 = vmatprep.subr.bf16.mxu0 0
  %4465 = vmatpush1.bf16.msra.mxu0 %v4423
  %4466 = vmatprep.subr.bf16.mxu0 0
  %4467 = vmatpush1.bf16.msra.mxu0 %v4424
  %4468 = vmatprep.subr.bf16.mxu0 0
  %4469 = vmatpush1.bf16.msra.mxu0 %v4425
  %4470 = vmatprep.subr.bf16.mxu0 0
  %4471 = vmatpush1.bf16.msra.mxu0 %v4426
  %4472 = vmatprep.subr.bf16.mxu0 0
  %4473 = vmatpush1.bf16.msra.mxu0 %v4427
  %4474 = vmatprep.subr.bf16.mxu0 0
  %4475 = vmatpush1.bf16.msra.mxu0 %v4428
  %4476 = vmatprep.subr.bf16.mxu0 0
  %4477 = vmatpush1.bf16.msra.mxu0 %v4429
  %4478 = vmatprep.mubr.bf16.mxu0 %v4348
  %4479 = vmatmul.mubr.bf16.gmra.mrb[0].mxu0 %v4347
  %v4480 = vpop.f32.mrb[0].mxu0
  %v4481 = vadd.f32 %v4349, %v4480
  %v4482 = vpop.f32.mrb[0].mxu0
  %v4483 = vpop.f32.mrb[0].mxu0
  %v4484 = vpop.f32.mrb[0].mxu0
  %4485 = vdwg.mxu0
  %v4486 = vadd.f32 %v4159, %v4481
  %v4487 = vld [vmem:[%s4049 + $0x5] ss:$0 sm:$0xff]
  %v4488 = vld [vmem:[%s4049 + $0x6] ss:$0 sm:$0xff]
  %v4489 = vmul.f32 %v4486, %v4486
  %v4490 = vsel %vm2240, %v4486, 0.0
  %4491 = vadd.xlane.f32.xlu0 %v4490
  %v4492 = vpop.xlane.xlu0 %4491
  %v4493 = vsel %vm2240, %v4489, 0.0
  %4494 = vadd.xlane.f32.xlu0 %v4493
  %v4495 = vpop.xlane.xlu0 %4494
  %v4496 = vmul.f32 %v4492, 0.0078125
  %v4497 = vmul.f32 %v4495, 0.0078125
  %v4498 = vmul.f32 %v4496, %v4496
  %v4499 = vsub.f32 %v4497, %v4498
  %v4500 = vmax.f32 %v4499, 0.0
  %v4501 = vsub.f32 %v4486, %v4496
  %v4502 = vadd.f32 %v4500, 1e-05
  %v4503 = vrsqrt.pop %v4502
  %v4504 = vmul.f32 %v4501, %v4503
  %v4505 = vmul.f32 %v4504, %v4487
  %v4506 = vadd.f32 %v4505, %v4488
  %s4507 = scalar_lea.vmem %s4, 320
  %v4508 = vld [vmem:[%s4507] sm:$0xf]
  %v4509 = vld [vmem:[%s4507 + $0x4] sm:$0xf]
  %v4510 = vld [vmem:[%s4507 + $0x8] sm:$0xf]
  %v4511 = vld [vmem:[%s4507 + $0xc] sm:$0xf]
  %v4512 = vld [vmem:[%s4507 + $0x10] sm:$0xf]
  %v4513 = vld [vmem:[%s4507 + $0x14] sm:$0xf]
  %v4514 = vld [vmem:[%s4507 + $0x18] sm:$0xf]
  %v4515 = vld [vmem:[%s4507 + $0x1c] sm:$0xf]
  %v4516 = vld [vmem:[%s4507 + $0x20] sm:$0xf]
  %v4517 = vld [vmem:[%s4507 + $0x24] sm:$0xf]
  %v4518 = vld [vmem:[%s4507 + $0x28] sm:$0xf]
  %v4519 = vld [vmem:[%s4507 + $0x2c] sm:$0xf]
  %v4520 = vld [vmem:[%s4507 + $0x30] sm:$0xf]
  %v4521 = vld [vmem:[%s4507 + $0x34] sm:$0xf]
  %v4522 = vld [vmem:[%s4507 + $0x38] sm:$0xf]
  %v4523 = vld [vmem:[%s4507 + $0x3c] sm:$0xf]
  %v4524 = vpack.c.bf16 %v4506, %v4506
  %s4525 = scalar_lea.vmem %s7, 80
  %v4526 = vld [vmem:[%s4525] ss:$0 sm:$0xff]
  %v4543 = vunpack.c.l.b16 %v4508
  %v4544 = vunpack.c.l.b16 %v4509
  %v4545 = vunpack.c.l.b16 %v4510
  %v4546 = vunpack.c.l.b16 %v4511
  %v4547 = vunpack.c.l.b16 %v4512
  %v4548 = vunpack.c.l.b16 %v4513
  %v4549 = vunpack.c.l.b16 %v4514
  %v4550 = vunpack.c.l.b16 %v4515
  %v4551 = vunpack.c.l.b16 %v4516
  %v4552 = vunpack.c.l.b16 %v4517
  %v4553 = vunpack.c.l.b16 %v4518
  %v4554 = vunpack.c.l.b16 %v4519
  %v4555 = vunpack.c.l.b16 %v4520
  %v4556 = vunpack.c.l.b16 %v4521
  %v4557 = vunpack.c.l.b16 %v4522
  %v4558 = vunpack.c.l.b16 %v4523
  %v4559 = vpack.c.b16 %v4544, %v4543
  %v4560 = vpack.c.b16 %v4546, %v4545
  %v4561 = vpack.c.b16 %v4548, %v4547
  %v4562 = vpack.c.b16 %v4550, %v4549
  %v4563 = vpack.c.b16 %v4552, %v4551
  %v4564 = vpack.c.b16 %v4554, %v4553
  %v4565 = vpack.c.b16 %v4556, %v4555
  %v4566 = vpack.c.b16 %v4558, %v4557
  %4575 = vmatprep.subr.bf16.mxu0 0
  %4576 = vmatpush1.bf16.msra.mxu0 %v4559
  %4577 = vmatprep.subr.bf16.mxu0 0
  %4578 = vmatpush1.bf16.msra.mxu0 %v4560
  %4579 = vmatprep.subr.bf16.mxu0 0
  %4580 = vmatpush1.bf16.msra.mxu0 %v4561
  %4581 = vmatprep.subr.bf16.mxu0 0
  %4582 = vmatpush1.bf16.msra.mxu0 %v4562
  %4583 = vmatprep.subr.bf16.mxu0 0
  %4584 = vmatpush1.bf16.msra.mxu0 %v4563
  %4585 = vmatprep.subr.bf16.mxu0 0
  %4586 = vmatpush1.bf16.msra.mxu0 %v4564
  %4587 = vmatprep.subr.bf16.mxu0 0
  %4588 = vmatpush1.bf16.msra.mxu0 %v4565
  %4589 = vmatprep.subr.bf16.mxu0 0
  %4590 = vmatpush1.bf16.msra.mxu0 %v4566
  %4591 = vmatprep.subr.bf16.mxu0 0
  %4592 = vmatpush1.bf16.msra.mxu0 0
  %4593 = vmatprep.subr.bf16.mxu0 0
  %4594 = vmatpush1.bf16.msra.mxu0 0
  %4595 = vmatprep.subr.bf16.mxu0 0
  %4596 = vmatpush1.bf16.msra.mxu0 0
  %4597 = vmatprep.subr.bf16.mxu0 0
  %4598 = vmatpush1.bf16.msra.mxu0 0
  %4599 = vmatprep.subr.bf16.mxu0 0
  %4600 = vmatpush1.bf16.msra.mxu0 0
  %4601 = vmatprep.subr.bf16.mxu0 0
  %4602 = vmatpush1.bf16.msra.mxu0 0
  %4603 = vmatprep.subr.bf16.mxu0 0
  %4604 = vmatpush1.bf16.msra.mxu0 0
  %4605 = vmatprep.subr.bf16.mxu0 0
  %4606 = vmatpush1.bf16.msra.mxu0 0
  %4607 = vmatprep.mubr.bf16.mxu0 0
  %4608 = vmatmul.mubr.bf16.gmra.mrb[0].mxu0 %v4524
  %v4609 = vpop.f32.mrb[0].mxu0
  %v4610 = vadd.f32 %v4526, %v4609
  %v4611 = vpop.f32.mrb[0].mxu0
  %v4612 = vpop.f32.mrb[0].mxu0
  %v4613 = vpop.f32.mrb[0].mxu0
  %4614 = vdwg.mxu0
  %v4615 = vadd.f32 %v4506, %v4610
  %v4616 = vld [vmem:[%s4525 + $0x3] ss:$0 sm:$0xff]
  %v4617 = vld [vmem:[%s4525 + $0x4] ss:$0 sm:$0xff]
  %v4618 = vmul.f32 %v4615, %v4615
  %v4619 = vsel %vm2240, %v4615, 0.0
  %4620 = vadd.xlane.f32.xlu0 %v4619
  %v4621 = vpop.xlane.xlu0 %4620
  %v4622 = vsel %vm2240, %v4618, 0.0
  %4623 = vadd.xlane.f32.xlu0 %v4622
  %v4624 = vpop.xlane.xlu0 %4623
  %v4625 = vmul.f32 %v4621, 0.0078125
  %v4626 = vmul.f32 %v4624, 0.0078125
  %v4627 = vmul.f32 %v4625, %v4625
  %v4628 = vsub.f32 %v4626, %v4627
  %v4629 = vmax.f32 %v4628, 0.0
  %v4630 = vsub.f32 %v4615, %v4625
  %v4631 = vadd.f32 %v4629, 1e-05
  %v4632 = vrsqrt.pop %v4631
  %v4633 = vmul.f32 %v4630, %v4632
  %v4634 = vmul.f32 %v4633, %v4616
  %v4635 = vadd.f32 %v4634, %v4617
  %s4636 = scalar_lea.vmem %s5, 640
  %v4637 = vld [vmem:[%s4636] sm:$0xff]
  %v4638 = vld [vmem:[%s4636 + $0x8] sm:$0xff]
  %v4639 = vld [vmem:[%s4636 + $0x10] sm:$0xff]
  %v4640 = vld [vmem:[%s4636 + $0x18] sm:$0xff]
  %v4641 = vld [vmem:[%s4636 + $0x20] sm:$0xff]
  %v4642 = vld [vmem:[%s4636 + $0x28] sm:$0xff]
  %v4643 = vld [vmem:[%s4636 + $0x30] sm:$0xff]
  %v4644 = vld [vmem:[%s4636 + $0x38] sm:$0xff]
  %v4645 = vld [vmem:[%s4636 + $0x40] sm:$0xff]
  %v4646 = vld [vmem:[%s4636 + $0x48] sm:$0xff]
  %v4647 = vld [vmem:[%s4636 + $0x50] sm:$0xff]
  %v4648 = vld [vmem:[%s4636 + $0x58] sm:$0xff]
  %v4649 = vld [vmem:[%s4636 + $0x60] sm:$0xff]
  %v4650 = vld [vmem:[%s4636 + $0x68] sm:$0xff]
  %v4651 = vld [vmem:[%s4636 + $0x70] sm:$0xff]
  %v4652 = vld [vmem:[%s4636 + $0x78] sm:$0xff]
  %v4653 = vpack.c.bf16 %v4635, %v4635
  %s4654 = scalar_lea.vmem %s4525, 1
  %v4655 = vld [vmem:[%s4654] ss:$8 sm:$0x3]
  %v4657 = vlaneseq
  %v4658 = vshrl.u32 %v4657, 7
  %v4659 = vsub.s32 0, %v4658
  %v4660 = vrot.slane %v4655, %v4659
  %v4661 = vlaneseq
  %v4662 = vshrl.u32 %v4661, 7
  %v4663 = vsub.s32 1, %v4662
  %v4664 = vrot.slane %v4655, %v4663
  %v4683 = vunpack.c.l.b16 %v4637
  %v4684 = vunpack.c.h.b16 %v4637
  %v4685 = vunpack.c.l.b16 %v4638
  %v4686 = vunpack.c.h.b16 %v4638
  %v4687 = vunpack.c.l.b16 %v4639
  %v4688 = vunpack.c.h.b16 %v4639
  %v4689 = vunpack.c.l.b16 %v4640
  %v4690 = vunpack.c.h.b16 %v4640
  %v4691 = vunpack.c.l.b16 %v4641
  %v4692 = vunpack.c.h.b16 %v4641
  %v4693 = vunpack.c.l.b16 %v4642
  %v4694 = vunpack.c.h.b16 %v4642
  %v4695 = vunpack.c.l.b16 %v4643
  %v4696 = vunpack.c.h.b16 %v4643
  %v4697 = vunpack.c.l.b16 %v4644
  %v4698 = vunpack.c.h.b16 %v4644
  %v4699 = vunpack.c.l.b16 %v4645
  %v4700 = vunpack.c.h.b16 %v4645
  %v4701 = vunpack.c.l.b16 %v4646
  %v4702 = vunpack.c.h.b16 %v4646
  %v4703 = vunpack.c.l.b16 %v4647
  %v4704 = vunpack.c.h.b16 %v4647
  %v4705 = vunpack.c.l.b16 %v4648
  %v4706 = vunpack.c.h.b16 %v4648
  %v4707 = vunpack.c.l.b16 %v4649
  %v4708 = vunpack.c.h.b16 %v4649
  %v4709 = vunpack.c.l.b16 %v4650
  %v4710 = vunpack.c.h.b16 %v4650
  %v4711 = vunpack.c.l.b16 %v4651
  %v4712 = vunpack.c.h.b16 %v4651
  %v4713 = vunpack.c.l.b16 %v4652
  %v4714 = vunpack.c.h.b16 %v4652
  %v4715 = vpack.c.b16 %v4685, %v4683
  %v4716 = vpack.c.b16 %v4686, %v4684
  %v4717 = vpack.c.b16 %v4689, %v4687
  %v4718 = vpack.c.b16 %v4690, %v4688
  %v4719 = vpack.c.b16 %v4693, %v4691
  %v4720 = vpack.c.b16 %v4694, %v4692
  %v4721 = vpack.c.b16 %v4697, %v4695
  %v4722 = vpack.c.b16 %v4698, %v4696
  %v4723 = vpack.c.b16 %v4701, %v4699
  %v4724 = vpack.c.b16 %v4702, %v4700
  %v4725 = vpack.c.b16 %v4705, %v4703
  %v4726 = vpack.c.b16 %v4706, %v4704
  %v4727 = vpack.c.b16 %v4709, %v4707
  %v4728 = vpack.c.b16 %v4710, %v4708
  %v4729 = vpack.c.b16 %v4713, %v4711
  %v4730 = vpack.c.b16 %v4714, %v4712
  %4747 = vmatprep.subr.bf16.mxu0 %v4716
  %4748 = vmatpush1.bf16.msra.mxu0 %v4715
  %4749 = vmatprep.subr.bf16.mxu0 %v4718
  %4750 = vmatpush1.bf16.msra.mxu0 %v4717
  %4751 = vmatprep.subr.bf16.mxu0 %v4720
  %4752 = vmatpush1.bf16.msra.mxu0 %v4719
  %4753 = vmatprep.subr.bf16.mxu0 %v4722
  %4754 = vmatpush1.bf16.msra.mxu0 %v4721
  %4755 = vmatprep.subr.bf16.mxu0 %v4724
  %4756 = vmatpush1.bf16.msra.mxu0 %v4723
  %4757 = vmatprep.subr.bf16.mxu0 %v4726
  %4758 = vmatpush1.bf16.msra.mxu0 %v4725
  %4759 = vmatprep.subr.bf16.mxu0 %v4728
  %4760 = vmatpush1.bf16.msra.mxu0 %v4727
  %4761 = vmatprep.subr.bf16.mxu0 %v4730
  %4762 = vmatpush1.bf16.msra.mxu0 %v4729
  %4763 = vmatprep.subr.bf16.mxu0 0
  %4764 = vmatpush1.bf16.msra.mxu0 0
  %4765 = vmatprep.subr.bf16.mxu0 0
  %4766 = vmatpush1.bf16.msra.mxu0 0
  %4767 = vmatprep.subr.bf16.mxu0 0
  %4768 = vmatpush1.bf16.msra.mxu0 0
  %4769 = vmatprep.subr.bf16.mxu0 0
  %4770 = vmatpush1.bf16.msra.mxu0 0
  %4771 = vmatprep.subr.bf16.mxu0 0
  %4772 = vmatpush1.bf16.msra.mxu0 0
  %4773 = vmatprep.subr.bf16.mxu0 0
  %4774 = vmatpush1.bf16.msra.mxu0 0
  %4775 = vmatprep.subr.bf16.mxu0 0
  %4776 = vmatpush1.bf16.msra.mxu0 0
  %4777 = vmatprep.subr.bf16.mxu0 0
  %4778 = vmatpush1.bf16.msra.mxu0 0
  %4779 = vmatprep.mubr.bf16.mxu0 0
  %4780 = vmatmul.mubr.bf16.gmra.mrb[0].mxu0 %v4653
  %v4781 = vpop.f32.mrb[0].mxu0
  %v4782 = vadd.f32 %v4660, %v4781
  %v4783 = vpop.f32.mrb[0].mxu0
  %v4784 = vadd.f32 %v4664, %v4783
  %v4785 = vpop.f32.mrb[0].mxu0
  %v4786 = vpop.f32.mrb[0].mxu0
  %4787 = vdwg.mxu0
  %v4788 = vmax.f32 %v4782, 0.0
  %v4789 = vmax.f32 %v4784, 0.0
  %s4790 = scalar_lea.vmem %s6, 640
  %v4791 = vld [vmem:[%s4790] sm:$0xf]
  %v4792 = vld [vmem:[%s4790 + $0x4] sm:$0xf]
  %v4793 = vld [vmem:[%s4790 + $0x8] sm:$0xf]
  %v4794 = vld [vmem:[%s4790 + $0xc] sm:$0xf]
  %v4795 = vld [vmem:[%s4790 + $0x10] sm:$0xf]
  %v4796 = vld [vmem:[%s4790 + $0x14] sm:$0xf]
  %v4797 = vld [vmem:[%s4790 + $0x18] sm:$0xf]
  %v4798 = vld [vmem:[%s4790 + $0x1c] sm:$0xf]
  %v4799 = vld [vmem:[%s4790 + $0x20] sm:$0xf]
  %v4800 = vld [vmem:[%s4790 + $0x24] sm:$0xf]
  %v4801 = vld [vmem:[%s4790 + $0x28] sm:$0xf]
  %v4802 = vld [vmem:[%s4790 + $0x2c] sm:$0xf]
  %v4803 = vld [vmem:[%s4790 + $0x30] sm:$0xf]
  %v4804 = vld [vmem:[%s4790 + $0x34] sm:$0xf]
  %v4805 = vld [vmem:[%s4790 + $0x38] sm:$0xf]
  %v4806 = vld [vmem:[%s4790 + $0x3c] sm:$0xf]
  %v4807 = vld [vmem:[%s4790 + $0x40] sm:$0xf]
  %v4808 = vld [vmem:[%s4790 + $0x44] sm:$0xf]
  %v4809 = vld [vmem:[%s4790 + $0x48] sm:$0xf]
  %v4810 = vld [vmem:[%s4790 + $0x4c] sm:$0xf]
  %v4811 = vld [vmem:[%s4790 + $0x50] sm:$0xf]
  %v4812 = vld [vmem:[%s4790 + $0x54] sm:$0xf]
  %v4813 = vld [vmem:[%s4790 + $0x58] sm:$0xf]
  %v4814 = vld [vmem:[%s4790 + $0x5c] sm:$0xf]
  %v4815 = vld [vmem:[%s4790 + $0x60] sm:$0xf]
  %v4816 = vld [vmem:[%s4790 + $0x64] sm:$0xf]
  %v4817 = vld [vmem:[%s4790 + $0x68] sm:$0xf]
  %v4818 = vld [vmem:[%s4790 + $0x6c] sm:$0xf]
  %v4819 = vld [vmem:[%s4790 + $0x70] sm:$0xf]
  %v4820 = vld [vmem:[%s4790 + $0x74] sm:$0xf]
  %v4821 = vld [vmem:[%s4790 + $0x78] sm:$0xf]
  %v4822 = vld [vmem:[%s4790 + $0x7c] sm:$0xf]
  %v4823 = vpack.c.bf16 %v4788, %v4788
  %v4824 = vpack.c.bf16 %v4789, %v4789
  %v4825 = vld [vmem:[%s4525 + $0x2] ss:$0 sm:$0xff]
  %v4858 = vunpack.c.l.b16 %v4791
  %v4859 = vunpack.c.l.b16 %v4792
  %v4860 = vunpack.c.l.b16 %v4793
  %v4861 = vunpack.c.l.b16 %v4794
  %v4862 = vunpack.c.l.b16 %v4795
  %v4863 = vunpack.c.l.b16 %v4796
  %v4864 = vunpack.c.l.b16 %v4797
  %v4865 = vunpack.c.l.b16 %v4798
  %v4866 = vunpack.c.l.b16 %v4799
  %v4867 = vunpack.c.l.b16 %v4800
  %v4868 = vunpack.c.l.b16 %v4801
  %v4869 = vunpack.c.l.b16 %v4802
  %v4870 = vunpack.c.l.b16 %v4803
  %v4871 = vunpack.c.l.b16 %v4804
  %v4872 = vunpack.c.l.b16 %v4805
  %v4873 = vunpack.c.l.b16 %v4806
  %v4874 = vunpack.c.l.b16 %v4807
  %v4875 = vunpack.c.l.b16 %v4808
  %v4876 = vunpack.c.l.b16 %v4809
  %v4877 = vunpack.c.l.b16 %v4810
  %v4878 = vunpack.c.l.b16 %v4811
  %v4879 = vunpack.c.l.b16 %v4812
  %v4880 = vunpack.c.l.b16 %v4813
  %v4881 = vunpack.c.l.b16 %v4814
  %v4882 = vunpack.c.l.b16 %v4815
  %v4883 = vunpack.c.l.b16 %v4816
  %v4884 = vunpack.c.l.b16 %v4817
  %v4885 = vunpack.c.l.b16 %v4818
  %v4886 = vunpack.c.l.b16 %v4819
  %v4887 = vunpack.c.l.b16 %v4820
  %v4888 = vunpack.c.l.b16 %v4821
  %v4889 = vunpack.c.l.b16 %v4822
  %v4890 = vpack.c.b16 %v4859, %v4858
  %v4891 = vpack.c.b16 %v4861, %v4860
  %v4892 = vpack.c.b16 %v4863, %v4862
  %v4893 = vpack.c.b16 %v4865, %v4864
  %v4894 = vpack.c.b16 %v4867, %v4866
  %v4895 = vpack.c.b16 %v4869, %v4868
  %v4896 = vpack.c.b16 %v4871, %v4870
  %v4897 = vpack.c.b16 %v4873, %v4872
  %v4898 = vpack.c.b16 %v4875, %v4874
  %v4899 = vpack.c.b16 %v4877, %v4876
  %v4900 = vpack.c.b16 %v4879, %v4878
  %v4901 = vpack.c.b16 %v4881, %v4880
  %v4902 = vpack.c.b16 %v4883, %v4882
  %v4903 = vpack.c.b16 %v4885, %v4884
  %v4904 = vpack.c.b16 %v4887, %v4886
  %v4905 = vpack.c.b16 %v4889, %v4888
  %4922 = vmatprep.subr.bf16.mxu0 0
  %4923 = vmatpush1.bf16.msra.mxu0 %v4890
  %4924 = vmatprep.subr.bf16.mxu0 0
  %4925 = vmatpush1.bf16.msra.mxu0 %v4891
  %4926 = vmatprep.subr.bf16.mxu0 0
  %4927 = vmatpush1.bf16.msra.mxu0 %v4892
  %4928 = vmatprep.subr.bf16.mxu0 0
  %4929 = vmatpush1.bf16.msra.mxu0 %v4893
  %4930 = vmatprep.subr.bf16.mxu0 0
  %4931 = vmatpush1.bf16.msra.mxu0 %v4894
  %4932 = vmatprep.subr.bf16.mxu0 0
  %4933 = vmatpush1.bf16.msra.mxu0 %v4895
  %4934 = vmatprep.subr.bf16.mxu0 0
  %4935 = vmatpush1.bf16.msra.mxu0 %v4896
  %4936 = vmatprep.subr.bf16.mxu0 0
  %4937 = vmatpush1.bf16.msra.mxu0 %v4897
  %4938 = vmatprep.subr.bf16.mxu0 0
  %4939 = vmatpush1.bf16.msra.mxu0 %v4898
  %4940 = vmatprep.subr.bf16.mxu0 0
  %4941 = vmatpush1.bf16.msra.mxu0 %v4899
  %4942 = vmatprep.subr.bf16.mxu0 0
  %4943 = vmatpush1.bf16.msra.mxu0 %v4900
  %4944 = vmatprep.subr.bf16.mxu0 0
  %4945 = vmatpush1.bf16.msra.mxu0 %v4901
  %4946 = vmatprep.subr.bf16.mxu0 0
  %4947 = vmatpush1.bf16.msra.mxu0 %v4902
  %4948 = vmatprep.subr.bf16.mxu0 0
  %4949 = vmatpush1.bf16.msra.mxu0 %v4903
  %4950 = vmatprep.subr.bf16.mxu0 0
  %4951 = vmatpush1.bf16.msra.mxu0 %v4904
  %4952 = vmatprep.subr.bf16.mxu0 0
  %4953 = vmatpush1.bf16.msra.mxu0 %v4905
  %4954 = vmatprep.mubr.bf16.mxu0 %v4824
  %4955 = vmatmul.mubr.bf16.gmra.mrb[0].mxu0 %v4823
  %v4956 = vpop.f32.mrb[0].mxu0
  %v4957 = vadd.f32 %v4825, %v4956
  %v4958 = vpop.f32.mrb[0].mxu0
  %v4959 = vpop.f32.mrb[0].mxu0
  %v4960 = vpop.f32.mrb[0].mxu0
  %4961 = vdwg.mxu0
  %v4962 = vadd.f32 %v4635, %v4957
  %v4963 = vld [vmem:[%s4525 + $0x5] ss:$0 sm:$0xff]
  %v4964 = vld [vmem:[%s4525 + $0x6] ss:$0 sm:$0xff]
  %v4965 = vmul.f32 %v4962, %v4962
  %v4966 = vsel %vm2240, %v4962, 0.0
  %4967 = vadd.xlane.f32.xlu0 %v4966
  %v4968 = vpop.xlane.xlu0 %4967
  %v4969 = vsel %vm2240, %v4965, 0.0
  %4970 = vadd.xlane.f32.xlu0 %v4969
  %v4971 = vpop.xlane.xlu0 %4970
  %v4972 = vmul.f32 %v4968, 0.0078125
  %v4973 = vmul.f32 %v4971, 0.0078125
  %v4974 = vmul.f32 %v4972, %v4972
  %v4975 = vsub.f32 %v4973, %v4974
  %v4976 = vmax.f32 %v4975, 0.0
  %v4977 = vsub.f32 %v4962, %v4972
  %v4978 = vadd.f32 %v4976, 1e-05
  %v4979 = vrsqrt.pop %v4978
  %v4980 = vmul.f32 %v4977, %v4979
  %v4981 = vmul.f32 %v4980, %v4963
  %v4982 = vadd.f32 %v4981, %v4964
  %v4983 = vld [vmem:[%s3 + $0x2] sm:$0x1]
  %v4984 = vld [vmem:[%s3 + $0x3] sm:$0x1]
  %v4985 = vmul.f32 %v4982, %v4982
  %v4986 = vsel %vm2240, %v4982, 0.0
  %4987 = vadd.xlane.f32.xlu0 %v4986
  %v4988 = vpop.xlane.xlu0 %4987
  %v4989 = vsel %vm2240, %v4985, 0.0
  %4990 = vadd.xlane.f32.xlu0 %v4989
  %v4991 = vpop.xlane.xlu0 %4990
  %v4992 = vmul.f32 %v4988, 0.0078125
  %v4993 = vmul.f32 %v4991, 0.0078125
  %v4994 = vmul.f32 %v4992, %v4992
  %v4995 = vsub.f32 %v4993, %v4994
  %v4996 = vmax.f32 %v4995, 0.0
  %v4997 = vsub.f32 %v4982, %v4992
  %v4998 = vadd.f32 %v4996, 1e-05
  %v4999 = vrsqrt.pop %v4998
  %v5000 = vmul.f32 %v4997, %v4999
  %v5001 = vlaneseq
  %v5002 = vshrl.u32 %v5001, 7
  %v5003 = vsub.s32 0, %v5002
  %v5004 = vrot.slane %v4983, %v5003
  %v5005 = vmul.f32 %v5000, %v5004
  %v5006 = vlaneseq
  %v5007 = vshrl.u32 %v5006, 7
  %v5008 = vsub.s32 0, %v5007
  %v5009 = vrot.slane %v4984, %v5008
  %v5010 = vadd.f32 %v5005, %v5009
  %s5011 = smul.u32 4, 16
  %s5012 = smul.u32 %s5011, 2
  %s5013 = sshll.u32 %s5012, 4
  %5014 = dma.done [#allocation9], %s5013
  %s5015 = smul.u32 %s5011, 1
  %s5016 = sshll.u32 %s5015, 4
  %5017 = dma.done %s213, %s5016
  %s5018 = sshll.u32 %s5012, 4
  %5019 = dma.done %s270, %s5018
  %s5020 = smul.u32 4, 32
  %s5021 = smul.u32 %s5020, 1
  %s5022 = sshll.u32 %s5021, 4
  %5023 = dma.done %s447, %s5022
  %s5024 = smul.u32 %s5020, 4
  %s5025 = sshll.u32 %s5024, 4
  %5026 = dma.done %s520, %s5025
  %s5027 = smul.u32 4, 4
  %s5028 = smul.u32 %s5027, 1
  %s5029 = sshll.u32 %s5028, 4
  %5030 = dma.done %s1081, %s5029
  %s5031 = smul.u32 8, 2
  %s5032 = smul.u32 %s5031, 4
  %s5033 = sshll.u32 %s5032, 4
  %5034 = dma.done %s1126, %s5033
  %v5035 = vld [vmem:[#allocation3] sm:$0xff]
  %v5036 = vld [vmem:[#allocation3 + $0x8] sm:$0xff]
  %v5037 = vld [vmem:[#allocation3 + $0x10] sm:$0xff]
  %v5038 = vld [vmem:[#allocation3 + $0x18] sm:$0xff]
  %v5039 = vld [vmem:[#allocation3 + $0x20] sm:$0xff]
  %v5040 = vld [vmem:[#allocation3 + $0x28] sm:$0xff]
  %v5041 = vld [vmem:[#allocation3 + $0x30] sm:$0xff]
  %v5042 = vld [vmem:[#allocation3 + $0x38] sm:$0xff]
  %v5043 = vpack.c.bf16 %v5010, %v5010
  %v5044 = vld [vmem:[#allocation8 + $0x1] ss:$0 sm:$0xff]
  %5045 = vmatprep.subr.bf16.mxu0 0
  %5046 = vmatpush1.bf16.msra.mxu0 %v5035
  %5047 = vmatprep.subr.bf16.mxu0 0
  %5048 = vmatpush1.bf16.msra.mxu0 %v5036
  %5049 = vmatprep.subr.bf16.mxu0 0
  %5050 = vmatpush1.bf16.msra.mxu0 %v5037
  %5051 = vmatprep.subr.bf16.mxu0 0
  %5052 = vmatpush1.bf16.msra.mxu0 %v5038
  %5053 = vmatprep.subr.bf16.mxu0 0
  %5054 = vmatpush1.bf16.msra.mxu0 %v5039
  %5055 = vmatprep.subr.bf16.mxu0 0
  %5056 = vmatpush1.bf16.msra.mxu0 %v5040
  %5057 = vmatprep.subr.bf16.mxu0 0
  %5058 = vmatpush1.bf16.msra.mxu0 %v5041
  %5059 = vmatprep.subr.bf16.mxu0 0
  %5060 = vmatpush1.bf16.msra.mxu0 %v5042
  %5061 = vmatprep.subr.bf16.mxu0 0
  %5062 = vmatpush1.bf16.msra.mxu0 0
  %5063 = vmatprep.subr.bf16.mxu0 0
  %5064 = vmatpush1.bf16.msra.mxu0 0
  %5065 = vmatprep.subr.bf16.mxu0 0
  %5066 = vmatpush1.bf16.msra.mxu0 0
  %5067 = vmatprep.subr.bf16.mxu0 0
  %5068 = vmatpush1.bf16.msra.mxu0 0
  %5069 = vmatprep.subr.bf16.mxu0 0
  %5070 = vmatpush1.bf16.msra.mxu0 0
  %5071 = vmatprep.subr.bf16.mxu0 0
  %5072 = vmatpush1.bf16.msra.mxu0 0
  %5073 = vmatprep.subr.bf16.mxu0 0
  %5074 = vmatpush1.bf16.msra.mxu0 0
  %5075 = vmatprep.subr.bf16.mxu0 0
  %5076 = vmatpush1.bf16.msra.mxu0 0
  %5077 = vmatprep.mubr.bf16.mxu0 0
  %5078 = vmatmul.mubr.bf16.gmra.mrb[0].mxu0 %v5043
  %v5079 = vpop.f32.mrb[0].mxu0
  %v5080 = vadd.f32 %v5044, %v5079
  %v5081 = vpop.f32.mrb[0].mxu0
  %v5082 = vpop.f32.mrb[0].mxu0
  %v5083 = vpop.f32.mrb[0].mxu0
  %5084 = vdwg.mxu0
  %vm5085 = vcmp.lt.s32.totalorder %v1879, 32
  %v5086 = vsel %vm5085, 0.0, -1e+30
  %vm5087 = vcmp.eq.s32.totalorder %v1879, 1
  %v5088 = vsel %vm5087, 1, 0
  %v5089 = vcvt.s32.f32 %v5088
  %v5090 = vpack.c.bf16 %v5089, %v5089
  %v5091 = vld [vmem:[#allocation7] sm:$0xff]
  %v5092 = vld [vmem:[#allocation7 + $0x8] sm:$0xff]
  %v5094 = vsel %vm1428, %v5090, 0
  %5096 = vmatprep.subr.bf16.mxu0 0
  %5097 = vmatpush1.bf16.msra.mxu0 %v5091
  %5098 = vmatprep.subr.bf16.mxu0 0
  %5099 = vmatpush1.bf16.msra.mxu0 %v5092
  %5100 = vmatprep.subr.bf16.mxu0 0
  %5101 = vmatpush1.bf16.msra.mxu0 0
  %5102 = vmatprep.subr.bf16.mxu0 0
  %5103 = vmatpush1.bf16.msra.mxu0 0
  %5104 = vmatprep.subr.bf16.mxu0 0
  %5105 = vmatpush1.bf16.msra.mxu0 0
  %5106 = vmatprep.subr.bf16.mxu0 0
  %5107 = vmatpush1.bf16.msra.mxu0 0
  %5108 = vmatprep.subr.bf16.mxu0 0
  %5109 = vmatpush1.bf16.msra.mxu0 0
  %5110 = vmatprep.subr.bf16.mxu0 0
  %5111 = vmatpush1.bf16.msra.mxu0 0
  %5112 = vmatprep.subr.bf16.mxu0 0
  %5113 = vmatpush1.bf16.msra.mxu0 0
  %5114 = vmatprep.subr.bf16.mxu0 0
  %5115 = vmatpush1.bf16.msra.mxu0 0
  %5116 = vmatprep.subr.bf16.mxu0 0
  %5117 = vmatpush1.bf16.msra.mxu0 0
  %5118 = vmatprep.subr.bf16.mxu0 0
  %5119 = vmatpush1.bf16.msra.mxu0 0
  %5120 = vmatprep.subr.bf16.mxu0 0
  %5121 = vmatpush1.bf16.msra.mxu0 0
  %5122 = vmatprep.subr.bf16.mxu0 0
  %5123 = vmatpush1.bf16.msra.mxu0 0
  %5124 = vmatprep.subr.bf16.mxu0 0
  %5125 = vmatpush1.bf16.msra.mxu0 0
  %5126 = vmatprep.subr.bf16.mxu0 0
  %5127 = vmatpush1.bf16.msra.mxu0 0
  %5128 = vmatprep.mubr.bf16.mxu0 0
  %5129 = vmatmul.mubr.bf16.gmra.mrb[0].mxu0 %v5094
  %v5130 = vpop.f32.mrb[0].mxu0
  %v5131 = vadd.f32 0.0, %v5130
  %v5132 = vpop.f32.mrb[0].mxu0
  %v5133 = vpop.f32.mrb[0].mxu0
  %v5134 = vpop.f32.mrb[0].mxu0
  %5135 = vdwg.mxu0
  %v5136 = vlaneseq
  %v5137 = vshrl.u32 %v5136, 7
  %v5138 = vsub.s32 0, %v5137
  %v5139 = vrot.slane %v5131, %v5138
  %v5140 = vld [vmem:[#allocation8 + $0x25] ss:$0 sm:$0xff]
  %v5141 = vld [vmem:[#allocation6] sm:$0xff]
  %v5142 = vld [vmem:[#allocation6 + $0x8] sm:$0xff]
  %v5143 = vld [vmem:[#allocation6 + $0x10] sm:$0xff]
  %v5144 = vld [vmem:[#allocation6 + $0x18] sm:$0xff]
  %v5145 = vld [vmem:[#allocation6 + $0x20] sm:$0xff]
  %v5146 = vld [vmem:[#allocation6 + $0x28] sm:$0xff]
  %v5147 = vld [vmem:[#allocation6 + $0x30] sm:$0xff]
  %v5148 = vld [vmem:[#allocation6 + $0x38] sm:$0xff]
  %v5149 = vld [vmem:[#allocation6 + $0x40] sm:$0xff]
  %v5150 = vld [vmem:[#allocation6 + $0x48] sm:$0xff]
  %v5151 = vld [vmem:[#allocation6 + $0x50] sm:$0xff]
  %v5152 = vld [vmem:[#allocation6 + $0x58] sm:$0xff]
  %v5153 = vld [vmem:[#allocation6 + $0x60] sm:$0xff]
  %v5154 = vld [vmem:[#allocation6 + $0x68] sm:$0xff]
  %v5155 = vld [vmem:[#allocation6 + $0x70] sm:$0xff]
  %v5156 = vld [vmem:[#allocation6 + $0x78] sm:$0xff]
  %v5157 = vld [vmem:[#allocation6 + $0x80] sm:$0xff]
  %v5158 = vld [vmem:[#allocation6 + $0x88] sm:$0xff]
  %v5159 = vld [vmem:[#allocation6 + $0x90] sm:$0xff]
  %v5160 = vld [vmem:[#allocation6 + $0x98] sm:$0xff]
  %v5161 = vld [vmem:[#allocation6 + $0xa0] sm:$0xff]
  %v5162 = vld [vmem:[#allocation6 + $0xa8] sm:$0xff]
  %v5163 = vld [vmem:[#allocation6 + $0xb0] sm:$0xff]
  %v5164 = vld [vmem:[#allocation6 + $0xb8] sm:$0xff]
  %v5165 = vld [vmem:[#allocation6 + $0xc0] sm:$0xff]
  %v5166 = vld [vmem:[#allocation6 + $0xc8] sm:$0xff]
  %v5167 = vld [vmem:[#allocation6 + $0xd0] sm:$0xff]
  %v5168 = vld [vmem:[#allocation6 + $0xd8] sm:$0xff]
  %v5169 = vld [vmem:[#allocation6 + $0xe0] sm:$0xff]
  %v5170 = vld [vmem:[#allocation6 + $0xe8] sm:$0xff]
  %v5171 = vld [vmem:[#allocation6 + $0xf0] sm:$0xff]
  %v5172 = vld [vmem:[#allocation6 + $0xf8] sm:$0xff]
  %v5173 = vld [vmem:[#allocation6 + $0x100] sm:$0xff]
  %v5174 = vld [vmem:[#allocation6 + $0x108] sm:$0xff]
  %v5175 = vld [vmem:[#allocation6 + $0x110] sm:$0xff]
  %v5176 = vld [vmem:[#allocation6 + $0x118] sm:$0xff]
  %v5177 = vld [vmem:[#allocation6 + $0x120] sm:$0xff]
  %v5178 = vld [vmem:[#allocation6 + $0x128] sm:$0xff]
  %v5179 = vld [vmem:[#allocation6 + $0x130] sm:$0xff]
  %v5180 = vld [vmem:[#allocation6 + $0x138] sm:$0xff]
  %v5181 = vld [vmem:[#allocation6 + $0x140] sm:$0xff]
  %v5182 = vld [vmem:[#allocation6 + $0x148] sm:$0xff]
  %v5183 = vld [vmem:[#allocation6 + $0x150] sm:$0xff]
  %v5184 = vld [vmem:[#allocation6 + $0x158] sm:$0xff]
  %v5185 = vld [vmem:[#allocation6 + $0x160] sm:$0xff]
  %v5186 = vld [vmem:[#allocation6 + $0x168] sm:$0xff]
  %v5187 = vld [vmem:[#allocation6 + $0x170] sm:$0xff]
  %v5188 = vld [vmem:[#allocation6 + $0x178] sm:$0xff]
  %v5189 = vld [vmem:[#allocation6 + $0x180] sm:$0xff]
  %v5190 = vld [vmem:[#allocation6 + $0x188] sm:$0xff]
  %v5191 = vld [vmem:[#allocation6 + $0x190] sm:$0xff]
  %v5192 = vld [vmem:[#allocation6 + $0x198] sm:$0xff]
  %v5193 = vld [vmem:[#allocation6 + $0x1a0] sm:$0xff]
  %v5194 = vld [vmem:[#allocation6 + $0x1a8] sm:$0xff]
  %v5195 = vld [vmem:[#allocation6 + $0x1b0] sm:$0xff]
  %v5196 = vld [vmem:[#allocation6 + $0x1b8] sm:$0xff]
  %v5197 = vld [vmem:[#allocation6 + $0x1c0] sm:$0xff]
  %v5198 = vld [vmem:[#allocation6 + $0x1c8] sm:$0xff]
  %v5199 = vld [vmem:[#allocation6 + $0x1d0] sm:$0xff]
  %v5200 = vld [vmem:[#allocation6 + $0x1d8] sm:$0xff]
  %v5201 = vld [vmem:[#allocation6 + $0x1e0] sm:$0xff]
  %v5202 = vld [vmem:[#allocation6 + $0x1e8] sm:$0xff]
  %v5203 = vld [vmem:[#allocation6 + $0x1f0] sm:$0xff]
  %v5204 = vld [vmem:[#allocation6 + $0x1f8] sm:$0xff]
  %v5205 = vpack.c.bf16 %v5139, %v5139
  %s5206 = scalar_lea.vmem [#allocation8], 36
  %v5207 = vld [vmem:[%s5206] ss:$8 sm:$0xf]
  %v5209 = vlaneseq
  %v5210 = vshrl.u32 %v5209, 7
  %v5211 = vsub.s32 0, %v5210
  %v5212 = vrot.slane %v5207, %v5211
  %v5213 = vlaneseq
  %v5214 = vshrl.u32 %v5213, 7
  %v5215 = vsub.s32 1, %v5214
  %v5216 = vrot.slane %v5207, %v5215
  %v5217 = vlaneseq
  %v5218 = vshrl.u32 %v5217, 7
  %v5219 = vsub.s32 2, %v5218
  %v5220 = vrot.slane %v5207, %v5219
  %v5221 = vlaneseq
  %v5222 = vshrl.u32 %v5221, 7
  %v5223 = vsub.s32 3, %v5222
  %v5224 = vrot.slane %v5207, %v5223
  %5229 = vmatprep.subr.bf16.mxu0 %v5142
  %5230 = vmatpush1.bf16.msra.mxu0 %v5141
  %5231 = vmatprep.subr.bf16.mxu0 %v5146
  %5232 = vmatpush1.bf16.msra.mxu0 %v5145
  %5233 = vmatprep.subr.bf16.mxu0 %v5150
  %5234 = vmatpush1.bf16.msra.mxu0 %v5149
  %5235 = vmatprep.subr.bf16.mxu0 %v5154
  %5236 = vmatpush1.bf16.msra.mxu0 %v5153
  %5237 = vmatprep.subr.bf16.mxu0 %v5158
  %5238 = vmatpush1.bf16.msra.mxu0 %v5157
  %5239 = vmatprep.subr.bf16.mxu0 %v5162
  %5240 = vmatpush1.bf16.msra.mxu0 %v5161
  %5241 = vmatprep.subr.bf16.mxu0 %v5166
  %5242 = vmatpush1.bf16.msra.mxu0 %v5165
  %5243 = vmatprep.subr.bf16.mxu0 %v5170
  %5244 = vmatpush1.bf16.msra.mxu0 %v5169
  %5245 = vmatprep.subr.bf16.mxu0 %v5174
  %5246 = vmatpush1.bf16.msra.mxu0 %v5173
  %5247 = vmatprep.subr.bf16.mxu0 %v5178
  %5248 = vmatpush1.bf16.msra.mxu0 %v5177
  %5249 = vmatprep.subr.bf16.mxu0 %v5182
  %5250 = vmatpush1.bf16.msra.mxu0 %v5181
  %5251 = vmatprep.subr.bf16.mxu0 %v5186
  %5252 = vmatpush1.bf16.msra.mxu0 %v5185
  %5253 = vmatprep.subr.bf16.mxu0 %v5190
  %5254 = vmatpush1.bf16.msra.mxu0 %v5189
  %5255 = vmatprep.subr.bf16.mxu0 %v5194
  %5256 = vmatpush1.bf16.msra.mxu0 %v5193
  %5257 = vmatprep.subr.bf16.mxu0 %v5198
  %5258 = vmatpush1.bf16.msra.mxu0 %v5197
  %5259 = vmatprep.subr.bf16.mxu0 %v5202
  %5260 = vmatpush1.bf16.msra.mxu0 %v5201
  %5261 = vmatprep.mubr.bf16.mxu0 %v2146
  %5262 = vmatmul.mubr.bf16.gmra.mrb[0].mxu0 %v5205
  %v5263 = vpop.f32.mrb[0].mxu0
  %v5264 = vadd.f32 %v5212, %v5263
  %v5265 = vpop.f32.mrb[0].mxu0
  %v5266 = vadd.f32 %v5216, %v5265
  %v5267 = vpop.f32.mrb[0].mxu0
  %v5268 = vpop.f32.mrb[0].mxu0
  %5269 = vdwg.mxu0
  %5270 = vmatprep.subr.bf16.mxu0 %v5144
  %5271 = vmatpush1.bf16.msra.mxu0 %v5143
  %5272 = vmatprep.subr.bf16.mxu0 %v5148
  %5273 = vmatpush1.bf16.msra.mxu0 %v5147
  %5274 = vmatprep.subr.bf16.mxu0 %v5152
  %5275 = vmatpush1.bf16.msra.mxu0 %v5151
  %5276 = vmatprep.subr.bf16.mxu0 %v5156
  %5277 = vmatpush1.bf16.msra.mxu0 %v5155
  %5278 = vmatprep.subr.bf16.mxu0 %v5160
  %5279 = vmatpush1.bf16.msra.mxu0 %v5159
  %5280 = vmatprep.subr.bf16.mxu0 %v5164
  %5281 = vmatpush1.bf16.msra.mxu0 %v5163
  %5282 = vmatprep.subr.bf16.mxu0 %v5168
  %5283 = vmatpush1.bf16.msra.mxu0 %v5167
  %5284 = vmatprep.subr.bf16.mxu0 %v5172
  %5285 = vmatpush1.bf16.msra.mxu0 %v5171
  %5286 = vmatprep.subr.bf16.mxu0 %v5176
  %5287 = vmatpush1.bf16.msra.mxu0 %v5175
  %5288 = vmatprep.subr.bf16.mxu0 %v5180
  %5289 = vmatpush1.bf16.msra.mxu0 %v5179
  %5290 = vmatprep.subr.bf16.mxu0 %v5184
  %5291 = vmatpush1.bf16.msra.mxu0 %v5183
  %5292 = vmatprep.subr.bf16.mxu0 %v5188
  %5293 = vmatpush1.bf16.msra.mxu0 %v5187
  %5294 = vmatprep.subr.bf16.mxu0 %v5192
  %5295 = vmatpush1.bf16.msra.mxu0 %v5191
  %5296 = vmatprep.subr.bf16.mxu0 %v5196
  %5297 = vmatpush1.bf16.msra.mxu0 %v5195
  %5298 = vmatprep.subr.bf16.mxu0 %v5200
  %5299 = vmatpush1.bf16.msra.mxu0 %v5199
  %5300 = vmatprep.subr.bf16.mxu0 %v5204
  %5301 = vmatpush1.bf16.msra.mxu0 %v5203
  %5302 = vmatprep.mubr.bf16.mxu0 %v2146
  %5303 = vmatmul.mubr.bf16.gmra.mrb[0].mxu0 %v5205
  %v5304 = vpop.f32.mrb[0].mxu0
  %v5305 = vadd.f32 %v5220, %v5304
  %v5306 = vpop.f32.mrb[0].mxu0
  %v5307 = vadd.f32 %v5224, %v5306
  %v5308 = vpop.f32.mrb[0].mxu0
  %v5309 = vpop.f32.mrb[0].mxu0
  %5310 = vdwg.mxu0
  %v5311 = vxor.u32 %v5264, 2147483648
  %v5312 = vmul.f32 %v5311, 1.442695
  %v5313 = vpow.pop %v5312
  %v5314 = vadd.f32 %v5313, 1.0
  %v5315 = vrcp.pop %v5314
  %v5316 = vmul.f32 1.0, %v5315
  %v5317 = vxor.u32 %v5266, 2147483648
  %v5318 = vmul.f32 %v5317, 1.442695
  %v5319 = vpow.pop %v5318
  %v5320 = vadd.f32 %v5319, 1.0
  %v5321 = vrcp.pop %v5320
  %v5322 = vmul.f32 1.0, %v5321
  %v5323 = vtanh.pop %v5305
  %v5324 = vxor.u32 %v5307, 2147483648
  %v5325 = vmul.f32 %v5324, 1.442695
  %v5326 = vpow.pop %v5325
  %v5327 = vadd.f32 %v5326, 1.0
  %v5328 = vrcp.pop %v5327
  %v5329 = vmul.f32 1.0, %v5328
  %v5330 = vmul.f32 %v5322, %v2125
  %v5331 = vmul.f32 %v5316, %v5323
  %v5332 = vadd.f32 %v5330, %v5331
  %v5333 = vtanh.pop %v5332
  %v5334 = vmul.f32 %v5329, %v5333
  %v5335 = vld [vmem:[#allocation2] sm:$0xff]
  %v5336 = vld [vmem:[#allocation2 + $0x8] sm:$0xff]
  %v5337 = vld [vmem:[#allocation2 + $0x10] sm:$0xff]
  %v5338 = vld [vmem:[#allocation2 + $0x18] sm:$0xff]
  %v5339 = vld [vmem:[#allocation2 + $0x20] sm:$0xff]
  %v5340 = vld [vmem:[#allocation2 + $0x28] sm:$0xff]
  %v5341 = vld [vmem:[#allocation2 + $0x30] sm:$0xff]
  %v5342 = vld [vmem:[#allocation2 + $0x38] sm:$0xff]
  %v5343 = vld [vmem:[#allocation2 + $0x40] sm:$0xff]
  %v5344 = vld [vmem:[#allocation2 + $0x48] sm:$0xff]
  %v5345 = vld [vmem:[#allocation2 + $0x50] sm:$0xff]
  %v5346 = vld [vmem:[#allocation2 + $0x58] sm:$0xff]
  %v5347 = vld [vmem:[#allocation2 + $0x60] sm:$0xff]
  %v5348 = vld [vmem:[#allocation2 + $0x68] sm:$0xff]
  %v5349 = vld [vmem:[#allocation2 + $0x70] sm:$0xff]
  %v5350 = vld [vmem:[#allocation2 + $0x78] sm:$0xff]
  %v5351 = vpack.c.bf16 %v5334, %v5334
  %5352 = vmatprep.subr.bf16.mxu0 %v5336
  %5353 = vmatpush1.bf16.msra.mxu0 %v5335
  %5354 = vmatprep.subr.bf16.mxu0 %v5338
  %5355 = vmatpush1.bf16.msra.mxu0 %v5337
  %5356 = vmatprep.subr.bf16.mxu0 %v5340
  %5357 = vmatpush1.bf16.msra.mxu0 %v5339
  %5358 = vmatprep.subr.bf16.mxu0 %v5342
  %5359 = vmatpush1.bf16.msra.mxu0 %v5341
  %5360 = vmatprep.subr.bf16.mxu0 %v5344
  %5361 = vmatpush1.bf16.msra.mxu0 %v5343
  %5362 = vmatprep.subr.bf16.mxu0 %v5346
  %5363 = vmatpush1.bf16.msra.mxu0 %v5345
  %5364 = vmatprep.subr.bf16.mxu0 %v5348
  %5365 = vmatpush1.bf16.msra.mxu0 %v5347
  %5366 = vmatprep.subr.bf16.mxu0 %v5350
  %5367 = vmatpush1.bf16.msra.mxu0 %v5349
  %5368 = vmatprep.subr.bf16.mxu0 0
  %5369 = vmatpush1.bf16.msra.mxu0 0
  %5370 = vmatprep.subr.bf16.mxu0 0
  %5371 = vmatpush1.bf16.msra.mxu0 0
  %5372 = vmatprep.subr.bf16.mxu0 0
  %5373 = vmatpush1.bf16.msra.mxu0 0
  %5374 = vmatprep.subr.bf16.mxu0 0
  %5375 = vmatpush1.bf16.msra.mxu0 0
  %5376 = vmatprep.subr.bf16.mxu0 0
  %5377 = vmatpush1.bf16.msra.mxu0 0
  %5378 = vmatprep.subr.bf16.mxu0 0
  %5379 = vmatpush1.bf16.msra.mxu0 0
  %5380 = vmatprep.subr.bf16.mxu0 0
  %5381 = vmatpush1.bf16.msra.mxu0 0
  %5382 = vmatprep.subr.bf16.mxu0 0
  %5383 = vmatpush1.bf16.msra.mxu0 0
  %5384 = vmatprep.mubr.bf16.mxu0 0
  %5385 = vmatmul.mubr.bf16.gmra.mrb[0].mxu0 %v5351
  %v5386 = vpop.f32.mrb[0].mxu0
  %v5387 = vadd.f32 0.0, %v5386
  %v5388 = vpop.f32.mrb[0].mxu0
  %v5389 = vadd.f32 0.0, %v5388
  %v5390 = vpop.f32.mrb[0].mxu0
  %v5391 = vpop.f32.mrb[0].mxu0
  %5392 = vdwg.mxu0
  %v5393 = vld [vmem:[#allocation8] ss:$0 sm:$0xff]
  %v5394 = vadd.f32 %v5387, %v5393
  %v5395 = vadd.f32 %v5389, %v5140
  %v5396 = vadd.f32 %v5395, %v5086
  %v5397 = vadd.f32 %v5334, %v5394
  %v5398 = vld [vmem:[#allocation8 + $0x2] ss:$0 sm:$0xff]
  %v5399 = vld [vmem:[#allocation8 + $0x3] ss:$0 sm:$0xff]
  %v5400 = vmul.f32 %v5397, %v5397
  %v5401 = vsel %vm2240, %v5397, 0.0
  %5402 = vadd.xlane.f32.xlu0 %v5401
  %v5403 = vpop.xlane.xlu0 %5402
  %v5404 = vsel %vm2240, %v5400, 0.0
  %5405 = vadd.xlane.f32.xlu0 %v5404
  %v5406 = vpop.xlane.xlu0 %5405
  %v5407 = vmul.f32 %v5403, 0.0078125
  %v5408 = vmul.f32 %v5406, 0.0078125
  %v5409 = vmul.f32 %v5407, %v5407
  %v5410 = vsub.f32 %v5408, %v5409
  %v5411 = vmax.f32 %v5410, 0.0
  %v5412 = vsub.f32 %v5397, %v5407
  %v5413 = vadd.f32 %v5411, 1e-05
  %v5414 = vrsqrt.pop %v5413
  %v5415 = vmul.f32 %v5412, %v5414
  %v5416 = vmul.f32 %v5415, %v5398
  %v5417 = vadd.f32 %v5416, %v5399
  %v5418 = vadd.f32 %v5417, %v5080
  %v5419 = vld [vmem:[#allocation8 + $0x4] ss:$0 sm:$0xff]
  %v5420 = vld [vmem:[#allocation8 + $0x5] ss:$0 sm:$0xff]
  %v5421 = vmul.f32 %v5418, %v5418
  %v5422 = vsel %vm2240, %v5418, 0.0
  %5423 = vadd.xlane.f32.xlu0 %v5422
  %v5424 = vpop.xlane.xlu0 %5423
  %v5425 = vsel %vm2240, %v5421, 0.0
  %5426 = vadd.xlane.f32.xlu0 %v5425
  %v5427 = vpop.xlane.xlu0 %5426
  %v5428 = vmul.f32 %v5424, 0.0078125
  %v5429 = vmul.f32 %v5427, 0.0078125
  %v5430 = vmul.f32 %v5428, %v5428
  %v5431 = vsub.f32 %v5429, %v5430
  %v5432 = vmax.f32 %v5431, 0.0
  %v5433 = vsub.f32 %v5418, %v5428
  %v5434 = vadd.f32 %v5432, 1e-05
  %v5435 = vrsqrt.pop %v5434
  %v5436 = vmul.f32 %v5433, %v5435
  %v5437 = vmul.f32 %v5436, %v5419
  %v5438 = vadd.f32 %v5437, %v5420
  %v5439 = vld [vmem:[#allocation4] sm:$0xff]
  %v5440 = vld [vmem:[#allocation4 + $0x8] sm:$0xff]
  %v5441 = vld [vmem:[#allocation4 + $0x10] sm:$0xff]
  %v5442 = vld [vmem:[#allocation4 + $0x18] sm:$0xff]
  %v5443 = vld [vmem:[#allocation4 + $0x20] sm:$0xff]
  %v5444 = vld [vmem:[#allocation4 + $0x28] sm:$0xff]
  %v5445 = vld [vmem:[#allocation4 + $0x30] sm:$0xff]
  %v5446 = vld [vmem:[#allocation4 + $0x38] sm:$0xff]
  %v5447 = vld [vmem:[#allocation4 + $0x40] sm:$0xff]
  %v5448 = vld [vmem:[#allocation4 + $0x48] sm:$0xff]
  %v5449 = vld [vmem:[#allocation4 + $0x50] sm:$0xff]
  %v5450 = vld [vmem:[#allocation4 + $0x58] sm:$0xff]
  %v5451 = vld [vmem:[#allocation4 + $0x60] sm:$0xff]
  %v5452 = vld [vmem:[#allocation4 + $0x68] sm:$0xff]
  %v5453 = vld [vmem:[#allocation4 + $0x70] sm:$0xff]
  %v5454 = vld [vmem:[#allocation4 + $0x78] sm:$0xff]
  %v5455 = vpack.c.bf16 %v5438, %v5438
  %s5456 = scalar_lea.vmem [#allocation8], 34
  %v5457 = vld [vmem:[%s5456] ss:$8 sm:$0x3]
  %v5459 = vlaneseq
  %v5460 = vshrl.u32 %v5459, 7
  %v5461 = vsub.s32 0, %v5460
  %v5462 = vrot.slane %v5457, %v5461
  %v5463 = vlaneseq
  %v5464 = vshrl.u32 %v5463, 7
  %v5465 = vsub.s32 1, %v5464
  %v5466 = vrot.slane %v5457, %v5465
  %5469 = vmatprep.subr.bf16.mxu0 %v5440
  %5470 = vmatpush1.bf16.msra.mxu0 %v5439
  %5471 = vmatprep.subr.bf16.mxu0 %v5442
  %5472 = vmatpush1.bf16.msra.mxu0 %v5441
  %5473 = vmatprep.subr.bf16.mxu0 %v5444
  %5474 = vmatpush1.bf16.msra.mxu0 %v5443
  %5475 = vmatprep.subr.bf16.mxu0 %v5446
  %5476 = vmatpush1.bf16.msra.mxu0 %v5445
  %5477 = vmatprep.subr.bf16.mxu0 %v5448
  %5478 = vmatpush1.bf16.msra.mxu0 %v5447
  %5479 = vmatprep.subr.bf16.mxu0 %v5450
  %5480 = vmatpush1.bf16.msra.mxu0 %v5449
  %5481 = vmatprep.subr.bf16.mxu0 %v5452
  %5482 = vmatpush1.bf16.msra.mxu0 %v5451
  %5483 = vmatprep.subr.bf16.mxu0 %v5454
  %5484 = vmatpush1.bf16.msra.mxu0 %v5453
  %5485 = vmatprep.subr.bf16.mxu0 0
  %5486 = vmatpush1.bf16.msra.mxu0 0
  %5487 = vmatprep.subr.bf16.mxu0 0
  %5488 = vmatpush1.bf16.msra.mxu0 0
  %5489 = vmatprep.subr.bf16.mxu0 0
  %5490 = vmatpush1.bf16.msra.mxu0 0
  %5491 = vmatprep.subr.bf16.mxu0 0
  %5492 = vmatpush1.bf16.msra.mxu0 0
  %5493 = vmatprep.subr.bf16.mxu0 0
  %5494 = vmatpush1.bf16.msra.mxu0 0
  %5495 = vmatprep.subr.bf16.mxu0 0
  %5496 = vmatpush1.bf16.msra.mxu0 0
  %5497 = vmatprep.subr.bf16.mxu0 0
  %5498 = vmatpush1.bf16.msra.mxu0 0
  %5499 = vmatprep.subr.bf16.mxu0 0
  %5500 = vmatpush1.bf16.msra.mxu0 0
  %5501 = vmatprep.mubr.bf16.mxu0 0
  %5502 = vmatmul.mubr.bf16.gmra.mrb[0].mxu0 %v5455
  %v5503 = vpop.f32.mrb[0].mxu0
  %v5504 = vadd.f32 %v5462, %v5503
  %v5505 = vpop.f32.mrb[0].mxu0
  %v5506 = vadd.f32 %v5466, %v5505
  %v5507 = vpop.f32.mrb[0].mxu0
  %v5508 = vpop.f32.mrb[0].mxu0
  %5509 = vdwg.mxu0
  %v5510 = vmax.f32 %v5504, 0.0
  %v5511 = vmax.f32 %v5506, 0.0
  %v5512 = vld [vmem:[#allocation5] sm:$0xff]
  %v5513 = vld [vmem:[#allocation5 + $0x8] sm:$0xff]
  %v5514 = vld [vmem:[#allocation5 + $0x10] sm:$0xff]
  %v5515 = vld [vmem:[#allocation5 + $0x18] sm:$0xff]
  %v5516 = vld [vmem:[#allocation5 + $0x20] sm:$0xff]
  %v5517 = vld [vmem:[#allocation5 + $0x28] sm:$0xff]
  %v5518 = vld [vmem:[#allocation5 + $0x30] sm:$0xff]
  %v5519 = vld [vmem:[#allocation5 + $0x38] sm:$0xff]
  %v5520 = vld [vmem:[#allocation5 + $0x40] sm:$0xff]
  %v5521 = vld [vmem:[#allocation5 + $0x48] sm:$0xff]
  %v5522 = vld [vmem:[#allocation5 + $0x50] sm:$0xff]
  %v5523 = vld [vmem:[#allocation5 + $0x58] sm:$0xff]
  %v5524 = vld [vmem:[#allocation5 + $0x60] sm:$0xff]
  %v5525 = vld [vmem:[#allocation5 + $0x68] sm:$0xff]
  %v5526 = vld [vmem:[#allocation5 + $0x70] sm:$0xff]
  %v5527 = vld [vmem:[#allocation5 + $0x78] sm:$0xff]
  %v5528 = vpack.c.bf16 %v5510, %v5510
  %v5529 = vpack.c.bf16 %v5511, %v5511
  %v5530 = vld [vmem:[#allocation8 + $0x23] ss:$0 sm:$0xff]
  %5531 = vmatprep.subr.bf16.mxu0 0
  %5532 = vmatpush1.bf16.msra.mxu0 %v5512
  %5533 = vmatprep.subr.bf16.mxu0 0
  %5534 = vmatpush1.bf16.msra.mxu0 %v5513
  %5535 = vmatprep.subr.bf16.mxu0 0
  %5536 = vmatpush1.bf16.msra.mxu0 %v5514
  %5537 = vmatprep.subr.bf16.mxu0 0
  %5538 = vmatpush1.bf16.msra.mxu0 %v5515
  %5539 = vmatprep.subr.bf16.mxu0 0
  %5540 = vmatpush1.bf16.msra.mxu0 %v5516
  %5541 = vmatprep.subr.bf16.mxu0 0
  %5542 = vmatpush1.bf16.msra.mxu0 %v5517
  %5543 = vmatprep.subr.bf16.mxu0 0
  %5544 = vmatpush1.bf16.msra.mxu0 %v5518
  %5545 = vmatprep.subr.bf16.mxu0 0
  %5546 = vmatpush1.bf16.msra.mxu0 %v5519
  %5547 = vmatprep.subr.bf16.mxu0 0
  %5548 = vmatpush1.bf16.msra.mxu0 %v5520
  %5549 = vmatprep.subr.bf16.mxu0 0
  %5550 = vmatpush1.bf16.msra.mxu0 %v5521
  %5551 = vmatprep.subr.bf16.mxu0 0
  %5552 = vmatpush1.bf16.msra.mxu0 %v5522
  %5553 = vmatprep.subr.bf16.mxu0 0
  %5554 = vmatpush1.bf16.msra.mxu0 %v5523
  %5555 = vmatprep.subr.bf16.mxu0 0
  %5556 = vmatpush1.bf16.msra.mxu0 %v5524
  %5557 = vmatprep.subr.bf16.mxu0 0
  %5558 = vmatpush1.bf16.msra.mxu0 %v5525
  %5559 = vmatprep.subr.bf16.mxu0 0
  %5560 = vmatpush1.bf16.msra.mxu0 %v5526
  %5561 = vmatprep.subr.bf16.mxu0 0
  %5562 = vmatpush1.bf16.msra.mxu0 %v5527
  %5563 = vmatprep.mubr.bf16.mxu0 %v5529
  %5564 = vmatmul.mubr.bf16.gmra.mrb[0].mxu0 %v5528
  %v5565 = vpop.f32.mrb[0].mxu0
  %v5566 = vadd.f32 %v5530, %v5565
  %v5567 = vpop.f32.mrb[0].mxu0
  %v5568 = vpop.f32.mrb[0].mxu0
  %v5569 = vpop.f32.mrb[0].mxu0
  %5570 = vdwg.mxu0
  %v5571 = vadd.f32 %v5438, %v5566
  %v5572 = vld [vmem:[#allocation8 + $0x6] ss:$0 sm:$0xff]
  %v5573 = vld [vmem:[#allocation8 + $0x7] ss:$0 sm:$0xff]
  %v5574 = vmul.f32 %v5571, %v5571
  %v5575 = vsel %vm2240, %v5571, 0.0
  %5576 = vadd.xlane.f32.xlu0 %v5575
  %v5577 = vpop.xlane.xlu0 %5576
  %v5578 = vsel %vm2240, %v5574, 0.0
  %5579 = vadd.xlane.f32.xlu0 %v5578
  %v5580 = vpop.xlane.xlu0 %5579
  %v5581 = vmul.f32 %v5577, 0.0078125
  %v5582 = vmul.f32 %v5580, 0.0078125
  %v5583 = vmul.f32 %v5581, %v5581
  %v5584 = vsub.f32 %v5582, %v5583
  %v5585 = vmax.f32 %v5584, 0.0
  %v5586 = vsub.f32 %v5571, %v5581
  %v5587 = vadd.f32 %v5585, 1e-05
  %v5588 = vrsqrt.pop %v5587
  %v5589 = vmul.f32 %v5586, %v5588
  %v5590 = vmul.f32 %v5589, %v5572
  %v5591 = vadd.f32 %v5590, %v5573
  %v5592 = vld [vmem:[#allocation8 + $0x20] ss:$0 sm:$0xff]
  %v5593 = vld [vmem:[#allocation8 + $0x21] ss:$0 sm:$0xff]
  %v5594 = vmul.f32 %v5591, %v5591
  %v5595 = vsel %vm2240, %v5591, 0.0
  %5596 = vadd.xlane.f32.xlu0 %v5595
  %v5597 = vpop.xlane.xlu0 %5596
  %v5598 = vsel %vm2240, %v5594, 0.0
  %5599 = vadd.xlane.f32.xlu0 %v5598
  %v5600 = vpop.xlane.xlu0 %5599
  %v5601 = vmul.f32 %v5597, 0.0078125
  %v5602 = vmul.f32 %v5600, 0.0078125
  %v5603 = vmul.f32 %v5601, %v5601
  %v5604 = vsub.f32 %v5602, %v5603
  %v5605 = vmax.f32 %v5604, 0.0
  %v5606 = vsub.f32 %v5591, %v5601
  %v5607 = vadd.f32 %v5605, 1e-05
  %v5608 = vrsqrt.pop %v5607
  %v5609 = vmul.f32 %v5606, %v5608
  %v5610 = vmul.f32 %v5609, %v5592
  %v5611 = vadd.f32 %v5610, %v5593
  %v5612 = vsel %vm2240, %v5396, -inf
  %5613 = vmax.xlane.f32.xlu0 %v5612
  %v5614 = vpop.xlane.xlu0 %5613
  %vm5615 = vcmp.eq.f32.partialorder %v5396, %v5614
  %v5616 = vsel %vm5615, %v1879, 128
  %v5617 = vsel %vm2240, %v5616, 2147483647
  %v5618 = vand.u32 %v5617, 65535
  %v5619 = vshra.s32 %v5617, 16
  %v5620 = vcvt.s32.f32 %v5618
  %v5621 = vcvt.s32.f32 %v5619
  %5622 = vmin.xlane.f32.xlu0 %v5621
  %v5623 = vpop.xlane.xlu0 %5622
  %vm5624 = vcmp.eq.f32.partialorder %v5621, %v5623
  %v5625 = vsel %vm5624, %v5620, inf
  %5626 = vmin.xlane.f32.xlu0 %v5625
  %v5627 = vpop.xlane.xlu0 %5626
  %v5628 = vcvt.f32.s32 %v5627
  %v5629 = vcvt.f32.s32 %v5623
  %v5630 = vshll.u32 %v5629, 16
  %v5631 = vadd.s32 %v5630, %v5628
  %vm5632 = vcmp.eq.s32.totalorder %v1879, %v5631
  %v5633 = vsel %vm5632, 1, 0
  %v5634 = vcvt.s32.f32 %v5633
  %v5635 = vpack.c.bf16 %v5634, %v5634
  %v5637 = vsel %vm1428, %v5635, 0
  %5639 = vmatprep.subr.bf16.mxu0 0
  %5640 = vmatpush1.bf16.msra.mxu0 %v5091
  %5641 = vmatprep.subr.bf16.mxu0 0
  %5642 = vmatpush1.bf16.msra.mxu0 %v5092
  %5643 = vmatprep.subr.bf16.mxu0 0
  %5644 = vmatpush1.bf16.msra.mxu0 0
  %5645 = vmatprep.subr.bf16.mxu0 0
  %5646 = vmatpush1.bf16.msra.mxu0 0
  %5647 = vmatprep.subr.bf16.mxu0 0
  %5648 = vmatpush1.bf16.msra.mxu0 0
  %5649 = vmatprep.subr.bf16.mxu0 0
  %5650 = vmatpush1.bf16.msra.mxu0 0
  %5651 = vmatprep.subr.bf16.mxu0 0
  %5652 = vmatpush1.bf16.msra.mxu0 0
  %5653 = vmatprep.subr.bf16.mxu0 0
  %5654 = vmatpush1.bf16.msra.mxu0 0
  %5655 = vmatprep.subr.bf16.mxu0 0
  %5656 = vmatpush1.bf16.msra.mxu0 0
  %5657 = vmatprep.subr.bf16.mxu0 0
  %5658 = vmatpush1.bf16.msra.mxu0 0
  %5659 = vmatprep.subr.bf16.mxu0 0
  %5660 = vmatpush1.bf16.msra.mxu0 0
  %5661 = vmatprep.subr.bf16.mxu0 0
  %5662 = vmatpush1.bf16.msra.mxu0 0
  %5663 = vmatprep.subr.bf16.mxu0 0
  %5664 = vmatpush1.bf16.msra.mxu0 0
  %5665 = vmatprep.subr.bf16.mxu0 0
  %5666 = vmatpush1.bf16.msra.mxu0 0
  %5667 = vmatprep.subr.bf16.mxu0 0
  %5668 = vmatpush1.bf16.msra.mxu0 0
  %5669 = vmatprep.subr.bf16.mxu0 0
  %5670 = vmatpush1.bf16.msra.mxu0 0
  %5671 = vmatprep.mubr.bf16.mxu0 0
  %5672 = vmatmul.mubr.bf16.gmra.mrb[0].mxu0 %v5637
  %v5673 = vpop.f32.mrb[0].mxu0
  %v5674 = vadd.f32 0.0, %v5673
  %v5675 = vpop.f32.mrb[0].mxu0
  %v5676 = vpop.f32.mrb[0].mxu0
  %v5677 = vpop.f32.mrb[0].mxu0
  %5678 = vdwg.mxu0
  %v5679 = vpack.c.bf16 %v5674, %v5674
  %5680 = vmatprep.subr.bf16.mxu0 %v5142
  %5681 = vmatpush1.bf16.msra.mxu0 %v5141
  %5682 = vmatprep.subr.bf16.mxu0 %v5146
  %5683 = vmatpush1.bf16.msra.mxu0 %v5145
  %5684 = vmatprep.subr.bf16.mxu0 %v5150
  %5685 = vmatpush1.bf16.msra.mxu0 %v5149
  %5686 = vmatprep.subr.bf16.mxu0 %v5154
  %5687 = vmatpush1.bf16.msra.mxu0 %v5153
  %5688 = vmatprep.subr.bf16.mxu0 %v5158
  %5689 = vmatpush1.bf16.msra.mxu0 %v5157
  %5690 = vmatprep.subr.bf16.mxu0 %v5162
  %5691 = vmatpush1.bf16.msra.mxu0 %v5161
  %5692 = vmatprep.subr.bf16.mxu0 %v5166
  %5693 = vmatpush1.bf16.msra.mxu0 %v5165
  %5694 = vmatprep.subr.bf16.mxu0 %v5170
  %5695 = vmatpush1.bf16.msra.mxu0 %v5169
  %5696 = vmatprep.subr.bf16.mxu0 %v5174
  %5697 = vmatpush1.bf16.msra.mxu0 %v5173
  %5698 = vmatprep.subr.bf16.mxu0 %v5178
  %5699 = vmatpush1.bf16.msra.mxu0 %v5177
  %5700 = vmatprep.subr.bf16.mxu0 %v5182
  %5701 = vmatpush1.bf16.msra.mxu0 %v5181
  %5702 = vmatprep.subr.bf16.mxu0 %v5186
  %5703 = vmatpush1.bf16.msra.mxu0 %v5185
  %5704 = vmatprep.subr.bf16.mxu0 %v5190
  %5705 = vmatpush1.bf16.msra.mxu0 %v5189
  %5706 = vmatprep.subr.bf16.mxu0 %v5194
  %5707 = vmatpush1.bf16.msra.mxu0 %v5193
  %5708 = vmatprep.subr.bf16.mxu0 %v5198
  %5709 = vmatpush1.bf16.msra.mxu0 %v5197
  %5710 = vmatprep.subr.bf16.mxu0 %v5202
  %5711 = vmatpush1.bf16.msra.mxu0 %v5201
  %5712 = vmatprep.mubr.bf16.mxu0 %v5351
  %5713 = vmatmul.mubr.bf16.gmra.mrb[0].mxu0 %v5679
  %v5714 = vpop.f32.mrb[0].mxu0
  %v5715 = vadd.f32 %v5212, %v5714
  %v5716 = vpop.f32.mrb[0].mxu0
  %v5717 = vadd.f32 %v5216, %v5716
  %v5718 = vpop.f32.mrb[0].mxu0
  %v5719 = vpop.f32.mrb[0].mxu0
  %5720 = vdwg.mxu0
  %5721 = vmatprep.subr.bf16.mxu0 %v5144
  %5722 = vmatpush1.bf16.msra.mxu0 %v5143
  %5723 = vmatprep.subr.bf16.mxu0 %v5148
  %5724 = vmatpush1.bf16.msra.mxu0 %v5147
  %5725 = vmatprep.subr.bf16.mxu0 %v5152
  %5726 = vmatpush1.bf16.msra.mxu0 %v5151
  %5727 = vmatprep.subr.bf16.mxu0 %v5156
  %5728 = vmatpush1.bf16.msra.mxu0 %v5155
  %5729 = vmatprep.subr.bf16.mxu0 %v5160
  %5730 = vmatpush1.bf16.msra.mxu0 %v5159
  %5731 = vmatprep.subr.bf16.mxu0 %v5164
  %5732 = vmatpush1.bf16.msra.mxu0 %v5163
  %5733 = vmatprep.subr.bf16.mxu0 %v5168
  %5734 = vmatpush1.bf16.msra.mxu0 %v5167
  %5735 = vmatprep.subr.bf16.mxu0 %v5172
  %5736 = vmatpush1.bf16.msra.mxu0 %v5171
  %5737 = vmatprep.subr.bf16.mxu0 %v5176
  %5738 = vmatpush1.bf16.msra.mxu0 %v5175
  %5739 = vmatprep.subr.bf16.mxu0 %v5180
  %5740 = vmatpush1.bf16.msra.mxu0 %v5179
  %5741 = vmatprep.subr.bf16.mxu0 %v5184
  %5742 = vmatpush1.bf16.msra.mxu0 %v5183
  %5743 = vmatprep.subr.bf16.mxu0 %v5188
  %5744 = vmatpush1.bf16.msra.mxu0 %v5187
  %5745 = vmatprep.subr.bf16.mxu0 %v5192
  %5746 = vmatpush1.bf16.msra.mxu0 %v5191
  %5747 = vmatprep.subr.bf16.mxu0 %v5196
  %5748 = vmatpush1.bf16.msra.mxu0 %v5195
  %5749 = vmatprep.subr.bf16.mxu0 %v5200
  %5750 = vmatpush1.bf16.msra.mxu0 %v5199
  %5751 = vmatprep.subr.bf16.mxu0 %v5204
  %5752 = vmatpush1.bf16.msra.mxu0 %v5203
  %5753 = vmatprep.mubr.bf16.mxu0 %v5351
  %5754 = vmatmul.mubr.bf16.gmra.mrb[0].mxu0 %v5679
  %v5755 = vpop.f32.mrb[0].mxu0
  %v5756 = vadd.f32 %v5220, %v5755
  %v5757 = vpop.f32.mrb[0].mxu0
  %v5758 = vadd.f32 %v5224, %v5757
  %v5759 = vpop.f32.mrb[0].mxu0
  %v5760 = vpop.f32.mrb[0].mxu0
  %5761 = vdwg.mxu0
  %v5762 = vxor.u32 %v5715, 2147483648
  %v5763 = vmul.f32 %v5762, 1.442695
  %v5764 = vpow.pop %v5763
  %v5765 = vadd.f32 %v5764, 1.0
  %v5766 = vrcp.pop %v5765
  %v5767 = vmul.f32 1.0, %v5766
  %v5768 = vxor.u32 %v5717, 2147483648
  %v5769 = vmul.f32 %v5768, 1.442695
  %v5770 = vpow.pop %v5769
  %v5771 = vadd.f32 %v5770, 1.0
  %v5772 = vrcp.pop %v5771
  %v5773 = vmul.f32 1.0, %v5772
  %v5774 = vtanh.pop %v5756
  %v5775 = vxor.u32 %v5758, 2147483648
  %v5776 = vmul.f32 %v5775, 1.442695
  %v5777 = vpow.pop %v5776
  %v5778 = vadd.f32 %v5777, 1.0
  %v5779 = vrcp.pop %v5778
  %v5780 = vmul.f32 1.0, %v5779
  %v5781 = vmul.f32 %v5773, %v5332
  %v5782 = vmul.f32 %v5767, %v5774
  %v5783 = vadd.f32 %v5781, %v5782
  %v5784 = vtanh.pop %v5783
  %v5785 = vmul.f32 %v5780, %v5784
  %v5786 = vpack.c.bf16 %v5785, %v5785
  %5787 = vmatprep.subr.bf16.mxu0 %v5336
  %5788 = vmatpush1.bf16.msra.mxu0 %v5335
  %5789 = vmatprep.subr.bf16.mxu0 %v5338
  %5790 = vmatpush1.bf16.msra.mxu0 %v5337
  %5791 = vmatprep.subr.bf16.mxu0 %v5340
  %5792 = vmatpush1.bf16.msra.mxu0 %v5339
  %5793 = vmatprep.subr.bf16.mxu0 %v5342
  %5794 = vmatpush1.bf16.msra.mxu0 %v5341
  %5795 = vmatprep.subr.bf16.mxu0 %v5344
  %5796 = vmatpush1.bf16.msra.mxu0 %v5343
  %5797 = vmatprep.subr.bf16.mxu0 %v5346
  %5798 = vmatpush1.bf16.msra.mxu0 %v5345
  %5799 = vmatprep.subr.bf16.mxu0 %v5348
  %5800 = vmatpush1.bf16.msra.mxu0 %v5347
  %5801 = vmatprep.subr.bf16.mxu0 %v5350
  %5802 = vmatpush1.bf16.msra.mxu0 %v5349
  %5803 = vmatprep.subr.bf16.mxu0 0
  %5804 = vmatpush1.bf16.msra.mxu0 0
  %5805 = vmatprep.subr.bf16.mxu0 0
  %5806 = vmatpush1.bf16.msra.mxu0 0
  %5807 = vmatprep.subr.bf16.mxu0 0
  %5808 = vmatpush1.bf16.msra.mxu0 0
  %5809 = vmatprep.subr.bf16.mxu0 0
  %5810 = vmatpush1.bf16.msra.mxu0 0
  %5811 = vmatprep.subr.bf16.mxu0 0
  %5812 = vmatpush1.bf16.msra.mxu0 0
  %5813 = vmatprep.subr.bf16.mxu0 0
  %5814 = vmatpush1.bf16.msra.mxu0 0
  %5815 = vmatprep.subr.bf16.mxu0 0
  %5816 = vmatpush1.bf16.msra.mxu0 0
  %5817 = vmatprep.subr.bf16.mxu0 0
  %5818 = vmatpush1.bf16.msra.mxu0 0
  %5819 = vmatprep.mubr.bf16.mxu0 0
  %5820 = vmatmul.mubr.bf16.gmra.mrb[0].mxu0 %v5786
  %v5821 = vpop.f32.mrb[0].mxu0
  %v5822 = vadd.f32 0.0, %v5821
  %v5823 = vpop.f32.mrb[0].mxu0
  %v5824 = vadd.f32 0.0, %v5823
  %v5825 = vpop.f32.mrb[0].mxu0
  %v5826 = vpop.f32.mrb[0].mxu0
  %5827 = vdwg.mxu0
  %v5828 = vadd.f32 %v5822, %v5393
  %v5829 = vadd.f32 %v5824, %v5140
  %v5830 = vadd.f32 %v5829, %v5086
  %v5831 = vadd.f32 %v5785, %v5828
  %v5832 = vmul.f32 %v5831, %v5831
  %v5833 = vsel %vm2240, %v5831, 0.0
  %5834 = vadd.xlane.f32.xlu0 %v5833
  %v5835 = vpop.xlane.xlu0 %5834
  %v5836 = vsel %vm2240, %v5832, 0.0
  %5837 = vadd.xlane.f32.xlu0 %v5836
  %v5838 = vpop.xlane.xlu0 %5837
  %v5839 = vmul.f32 %v5835, 0.0078125
  %v5840 = vmul.f32 %v5838, 0.0078125
  %v5841 = vmul.f32 %v5839, %v5839
  %v5842 = vsub.f32 %v5840, %v5841
  %v5843 = vmax.f32 %v5842, 0.0
  %v5844 = vsub.f32 %v5831, %v5839
  %v5845 = vadd.f32 %v5843, 1e-05
  %v5846 = vrsqrt.pop %v5845
  %v5847 = vmul.f32 %v5844, %v5846
  %v5848 = vmul.f32 %v5847, %v5398
  %v5849 = vadd.f32 %v5848, %v5399
  %v5850 = vadd.f32 %v5849, %v5080
  %v5851 = vmul.f32 %v5850, %v5850
  %v5852 = vsel %vm2240, %v5850, 0.0
  %5853 = vadd.xlane.f32.xlu0 %v5852
  %v5854 = vpop.xlane.xlu0 %5853
  %v5855 = vsel %vm2240, %v5851, 0.0
  %5856 = vadd.xlane.f32.xlu0 %v5855
  %v5857 = vpop.xlane.xlu0 %5856
  %v5858 = vmul.f32 %v5854, 0.0078125
  %v5859 = vmul.f32 %v5857, 0.0078125
  %v5860 = vmul.f32 %v5858, %v5858
  %v5861 = vsub.f32 %v5859, %v5860
  %v5862 = vmax.f32 %v5861, 0.0
  %v5863 = vsub.f32 %v5850, %v5858
  %v5864 = vadd.f32 %v5862, 1e-05
  %v5865 = vrsqrt.pop %v5864
  %v5866 = vmul.f32 %v5863, %v5865
  %v5867 = vmul.f32 %v5866, %v5419
  %v5868 = vadd.f32 %v5867, %v5420
  %v5869 = vpack.c.bf16 %v5868, %v5868
  %5870 = vmatprep.subr.bf16.mxu0 %v5440
  %5871 = vmatpush1.bf16.msra.mxu0 %v5439
  %5872 = vmatprep.subr.bf16.mxu0 %v5442
  %5873 = vmatpush1.bf16.msra.mxu0 %v5441
  %5874 = vmatprep.subr.bf16.mxu0 %v5444
  %5875 = vmatpush1.bf16.msra.mxu0 %v5443
  %5876 = vmatprep.subr.bf16.mxu0 %v5446
  %5877 = vmatpush1.bf16.msra.mxu0 %v5445
  %5878 = vmatprep.subr.bf16.mxu0 %v5448
  %5879 = vmatpush1.bf16.msra.mxu0 %v5447
  %5880 = vmatprep.subr.bf16.mxu0 %v5450
  %5881 = vmatpush1.bf16.msra.mxu0 %v5449
  %5882 = vmatprep.subr.bf16.mxu0 %v5452
  %5883 = vmatpush1.bf16.msra.mxu0 %v5451
  %5884 = vmatprep.subr.bf16.mxu0 %v5454
  %5885 = vmatpush1.bf16.msra.mxu0 %v5453
  %5886 = vmatprep.subr.bf16.mxu0 0
  %5887 = vmatpush1.bf16.msra.mxu0 0
  %5888 = vmatprep.subr.bf16.mxu0 0
  %5889 = vmatpush1.bf16.msra.mxu0 0
  %5890 = vmatprep.subr.bf16.mxu0 0
  %5891 = vmatpush1.bf16.msra.mxu0 0
  %5892 = vmatprep.subr.bf16.mxu0 0
  %5893 = vmatpush1.bf16.msra.mxu0 0
  %5894 = vmatprep.subr.bf16.mxu0 0
  %5895 = vmatpush1.bf16.msra.mxu0 0
  %5896 = vmatprep.subr.bf16.mxu0 0
  %5897 = vmatpush1.bf16.msra.mxu0 0
  %5898 = vmatprep.subr.bf16.mxu0 0
  %5899 = vmatpush1.bf16.msra.mxu0 0
  %5900 = vmatprep.subr.bf16.mxu0 0
  %5901 = vmatpush1.bf16.msra.mxu0 0
  %5902 = vmatprep.mubr.bf16.mxu0 0
  %5903 = vmatmul.mubr.bf16.gmra.mrb[0].mxu0 %v5869
  %v5904 = vpop.f32.mrb[0].mxu0
  %v5905 = vadd.f32 %v5462, %v5904
  %v5906 = vpop.f32.mrb[0].mxu0
  %v5907 = vadd.f32 %v5466, %v5906
  %v5908 = vpop.f32.mrb[0].mxu0
  %v5909 = vpop.f32.mrb[0].mxu0
  %5910 = vdwg.mxu0
  %v5911 = vmax.f32 %v5905, 0.0
  %v5912 = vmax.f32 %v5907, 0.0
  %v5913 = vpack.c.bf16 %v5911, %v5911
  %v5914 = vpack.c.bf16 %v5912, %v5912
  %5915 = vmatprep.subr.bf16.mxu0 0
  %5916 = vmatpush1.bf16.msra.mxu0 %v5512
  %5917 = vmatprep.subr.bf16.mxu0 0
  %5918 = vmatpush1.bf16.msra.mxu0 %v5513
  %5919 = vmatprep.subr.bf16.mxu0 0
  %5920 = vmatpush1.bf16.msra.mxu0 %v5514
  %5921 = vmatprep.subr.bf16.mxu0 0
  %5922 = vmatpush1.bf16.msra.mxu0 %v5515
  %5923 = vmatprep.subr.bf16.mxu0 0
  %5924 = vmatpush1.bf16.msra.mxu0 %v5516
  %5925 = vmatprep.subr.bf16.mxu0 0
  %5926 = vmatpush1.bf16.msra.mxu0 %v5517
  %5927 = vmatprep.subr.bf16.mxu0 0
  %5928 = vmatpush1.bf16.msra.mxu0 %v5518
  %5929 = vmatprep.subr.bf16.mxu0 0
  %5930 = vmatpush1.bf16.msra.mxu0 %v5519
  %5931 = vmatprep.subr.bf16.mxu0 0
  %5932 = vmatpush1.bf16.msra.mxu0 %v5520
  %5933 = vmatprep.subr.bf16.mxu0 0
  %5934 = vmatpush1.bf16.msra.mxu0 %v5521
  %5935 = vmatprep.subr.bf16.mxu0 0
  %5936 = vmatpush1.bf16.msra.mxu0 %v5522
  %5937 = vmatprep.subr.bf16.mxu0 0
  %5938 = vmatpush1.bf16.msra.mxu0 %v5523
  %5939 = vmatprep.subr.bf16.mxu0 0
  %5940 = vmatpush1.bf16.msra.mxu0 %v5524
  %5941 = vmatprep.subr.bf16.mxu0 0
  %5942 = vmatpush1.bf16.msra.mxu0 %v5525
  %5943 = vmatprep.subr.bf16.mxu0 0
  %5944 = vmatpush1.bf16.msra.mxu0 %v5526
  %5945 = vmatprep.subr.bf16.mxu0 0
  %5946 = vmatpush1.bf16.msra.mxu0 %v5527
  %5947 = vmatprep.mubr.bf16.mxu0 %v5914
  %5948 = vmatmul.mubr.bf16.gmra.mrb[0].mxu0 %v5913
  %v5949 = vpop.f32.mrb[0].mxu0
  %v5950 = vadd.f32 %v5530, %v5949
  %v5951 = vpop.f32.mrb[0].mxu0
  %v5952 = vpop.f32.mrb[0].mxu0
  %v5953 = vpop.f32.mrb[0].mxu0
  %5954 = vdwg.mxu0
  %v5955 = vadd.f32 %v5868, %v5950
  %v5956 = vmul.f32 %v5955, %v5955
  %v5957 = vsel %vm2240, %v5955, 0.0
  %5958 = vadd.xlane.f32.xlu0 %v5957
  %v5959 = vpop.xlane.xlu0 %5958
  %v5960 = vsel %vm2240, %v5956, 0.0
  %5961 = vadd.xlane.f32.xlu0 %v5960
  %v5962 = vpop.xlane.xlu0 %5961
  %v5963 = vmul.f32 %v5959, 0.0078125
  %v5964 = vmul.f32 %v5962, 0.0078125
  %v5965 = vmul.f32 %v5963, %v5963
  %v5966 = vsub.f32 %v5964, %v5965
  %v5967 = vmax.f32 %v5966, 0.0
  %v5968 = vsub.f32 %v5955, %v5963
  %v5969 = vadd.f32 %v5967, 1e-05
  %v5970 = vrsqrt.pop %v5969
  %v5971 = vmul.f32 %v5968, %v5970
  %v5972 = vmul.f32 %v5971, %v5572
  %v5973 = vadd.f32 %v5972, %v5573
  %v5974 = vmul.f32 %v5973, %v5973
  %v5975 = vsel %vm2240, %v5973, 0.0
  %5976 = vadd.xlane.f32.xlu0 %v5975
  %v5977 = vpop.xlane.xlu0 %5976
  %v5978 = vsel %vm2240, %v5974, 0.0
  %5979 = vadd.xlane.f32.xlu0 %v5978
  %v5980 = vpop.xlane.xlu0 %5979
  %v5981 = vmul.f32 %v5977, 0.0078125
  %v5982 = vmul.f32 %v5980, 0.0078125
  %v5983 = vmul.f32 %v5981, %v5981
  %v5984 = vsub.f32 %v5982, %v5983
  %v5985 = vmax.f32 %v5984, 0.0
  %v5986 = vsub.f32 %v5973, %v5981
  %v5987 = vadd.f32 %v5985, 1e-05
  %v5988 = vrsqrt.pop %v5987
  %v5989 = vmul.f32 %v5986, %v5988
  %v5990 = vmul.f32 %v5989, %v5592
  %v5991 = vadd.f32 %v5990, %v5593
  %v5992 = vsel %vm2240, %v5830, -inf
  %5993 = vmax.xlane.f32.xlu0 %v5992
  %v5994 = vpop.xlane.xlu0 %5993
  %vm5995 = vcmp.eq.f32.partialorder %v5830, %v5994
  %v5996 = vsel %vm5995, %v1879, 128
  %v5997 = vsel %vm2240, %v5996, 2147483647
  %v5998 = vand.u32 %v5997, 65535
  %v5999 = vshra.s32 %v5997, 16
  %v6000 = vcvt.s32.f32 %v5998
  %v6001 = vcvt.s32.f32 %v5999
  %6002 = vmin.xlane.f32.xlu0 %v6001
  %v6003 = vpop.xlane.xlu0 %6002
  %vm6004 = vcmp.eq.f32.partialorder %v6001, %v6003
  %v6005 = vsel %vm6004, %v6000, inf
  %6006 = vmin.xlane.f32.xlu0 %v6005
  %v6007 = vpop.xlane.xlu0 %6006
  %v6008 = vcvt.f32.s32 %v6007
  %v6009 = vcvt.f32.s32 %v6003
  %v6010 = vshll.u32 %v6009, 16
  %v6011 = vadd.s32 %v6010, %v6008
  %vm6012 = vcmp.eq.s32.totalorder %v1879, %v6011
  %v6013 = vsel %vm6012, 1, 0
  %v6014 = vcvt.s32.f32 %v6013
  %v6015 = vpack.c.bf16 %v6014, %v6014
  %v6017 = vsel %vm1428, %v6015, 0
  %6019 = vmatprep.subr.bf16.mxu0 0
  %6020 = vmatpush1.bf16.msra.mxu0 %v5091
  %6021 = vmatprep.subr.bf16.mxu0 0
  %6022 = vmatpush1.bf16.msra.mxu0 %v5092
  %6023 = vmatprep.subr.bf16.mxu0 0
  %6024 = vmatpush1.bf16.msra.mxu0 0
  %6025 = vmatprep.subr.bf16.mxu0 0
  %6026 = vmatpush1.bf16.msra.mxu0 0
  %6027 = vmatprep.subr.bf16.mxu0 0
  %6028 = vmatpush1.bf16.msra.mxu0 0
  %6029 = vmatprep.subr.bf16.mxu0 0
  %6030 = vmatpush1.bf16.msra.mxu0 0
  %6031 = vmatprep.subr.bf16.mxu0 0
  %6032 = vmatpush1.bf16.msra.mxu0 0
  %6033 = vmatprep.subr.bf16.mxu0 0
  %6034 = vmatpush1.bf16.msra.mxu0 0
  %6035 = vmatprep.subr.bf16.mxu0 0
  %6036 = vmatpush1.bf16.msra.mxu0 0
  %6037 = vmatprep.subr.bf16.mxu0 0
  %6038 = vmatpush1.bf16.msra.mxu0 0
  %6039 = vmatprep.subr.bf16.mxu0 0
  %6040 = vmatpush1.bf16.msra.mxu0 0
  %6041 = vmatprep.subr.bf16.mxu0 0
  %6042 = vmatpush1.bf16.msra.mxu0 0
  %6043 = vmatprep.subr.bf16.mxu0 0
  %6044 = vmatpush1.bf16.msra.mxu0 0
  %6045 = vmatprep.subr.bf16.mxu0 0
  %6046 = vmatpush1.bf16.msra.mxu0 0
  %6047 = vmatprep.subr.bf16.mxu0 0
  %6048 = vmatpush1.bf16.msra.mxu0 0
  %6049 = vmatprep.subr.bf16.mxu0 0
  %6050 = vmatpush1.bf16.msra.mxu0 0
  %6051 = vmatprep.mubr.bf16.mxu0 0
  %6052 = vmatmul.mubr.bf16.gmra.mrb[0].mxu0 %v6017
  %v6053 = vpop.f32.mrb[0].mxu0
  %v6054 = vadd.f32 0.0, %v6053
  %v6055 = vpop.f32.mrb[0].mxu0
  %v6056 = vpop.f32.mrb[0].mxu0
  %v6057 = vpop.f32.mrb[0].mxu0
  %6058 = vdwg.mxu0
  %v6059 = vpack.c.bf16 %v6054, %v6054
  %6060 = vmatprep.subr.bf16.mxu0 %v5142
  %6061 = vmatpush1.bf16.msra.mxu0 %v5141
  %6062 = vmatprep.subr.bf16.mxu0 %v5146
  %6063 = vmatpush1.bf16.msra.mxu0 %v5145
  %6064 = vmatprep.subr.bf16.mxu0 %v5150
  %6065 = vmatpush1.bf16.msra.mxu0 %v5149
  %6066 = vmatprep.subr.bf16.mxu0 %v5154
  %6067 = vmatpush1.bf16.msra.mxu0 %v5153
  %6068 = vmatprep.subr.bf16.mxu0 %v5158
  %6069 = vmatpush1.bf16.msra.mxu0 %v5157
  %6070 = vmatprep.subr.bf16.mxu0 %v5162
  %6071 = vmatpush1.bf16.msra.mxu0 %v5161
  %6072 = vmatprep.subr.bf16.mxu0 %v5166
  %6073 = vmatpush1.bf16.msra.mxu0 %v5165
  %6074 = vmatprep.subr.bf16.mxu0 %v5170
  %6075 = vmatpush1.bf16.msra.mxu0 %v5169
  %6076 = vmatprep.subr.bf16.mxu0 %v5174
  %6077 = vmatpush1.bf16.msra.mxu0 %v5173
  %6078 = vmatprep.subr.bf16.mxu0 %v5178
  %6079 = vmatpush1.bf16.msra.mxu0 %v5177
  %6080 = vmatprep.subr.bf16.mxu0 %v5182
  %6081 = vmatpush1.bf16.msra.mxu0 %v5181
  %6082 = vmatprep.subr.bf16.mxu0 %v5186
  %6083 = vmatpush1.bf16.msra.mxu0 %v5185
  %6084 = vmatprep.subr.bf16.mxu0 %v5190
  %6085 = vmatpush1.bf16.msra.mxu0 %v5189
  %6086 = vmatprep.subr.bf16.mxu0 %v5194
  %6087 = vmatpush1.bf16.msra.mxu0 %v5193
  %6088 = vmatprep.subr.bf16.mxu0 %v5198
  %6089 = vmatpush1.bf16.msra.mxu0 %v5197
  %6090 = vmatprep.subr.bf16.mxu0 %v5202
  %6091 = vmatpush1.bf16.msra.mxu0 %v5201
  %6092 = vmatprep.mubr.bf16.mxu0 %v5786
  %6093 = vmatmul.mubr.bf16.gmra.mrb[0].mxu0 %v6059
  %v6094 = vpop.f32.mrb[0].mxu0
  %v6095 = vadd.f32 %v5212, %v6094
  %v6096 = vpop.f32.mrb[0].mxu0
  %v6097 = vadd.f32 %v5216, %v6096
  %v6098 = vpop.f32.mrb[0].mxu0
  %v6099 = vpop.f32.mrb[0].mxu0
  %6100 = vdwg.mxu0
  %6101 = vmatprep.subr.bf16.mxu0 %v5144
  %6102 = vmatpush1.bf16.msra.mxu0 %v5143
  %6103 = vmatprep.subr.bf16.mxu0 %v5148
  %6104 = vmatpush1.bf16.msra.mxu0 %v5147
  %6105 = vmatprep.subr.bf16.mxu0 %v5152
  %6106 = vmatpush1.bf16.msra.mxu0 %v5151
  %6107 = vmatprep.subr.bf16.mxu0 %v5156
  %6108 = vmatpush1.bf16.msra.mxu0 %v5155
  %6109 = vmatprep.subr.bf16.mxu0 %v5160
  %6110 = vmatpush1.bf16.msra.mxu0 %v5159
  %6111 = vmatprep.subr.bf16.mxu0 %v5164
  %6112 = vmatpush1.bf16.msra.mxu0 %v5163
  %6113 = vmatprep.subr.bf16.mxu0 %v5168
  %6114 = vmatpush1.bf16.msra.mxu0 %v5167
  %6115 = vmatprep.subr.bf16.mxu0 %v5172
  %6116 = vmatpush1.bf16.msra.mxu0 %v5171
  %6117 = vmatprep.subr.bf16.mxu0 %v5176
  %6118 = vmatpush1.bf16.msra.mxu0 %v5175
  %6119 = vmatprep.subr.bf16.mxu0 %v5180
  %6120 = vmatpush1.bf16.msra.mxu0 %v5179
  %6121 = vmatprep.subr.bf16.mxu0 %v5184
  %6122 = vmatpush1.bf16.msra.mxu0 %v5183
  %6123 = vmatprep.subr.bf16.mxu0 %v5188
  %6124 = vmatpush1.bf16.msra.mxu0 %v5187
  %6125 = vmatprep.subr.bf16.mxu0 %v5192
  %6126 = vmatpush1.bf16.msra.mxu0 %v5191
  %6127 = vmatprep.subr.bf16.mxu0 %v5196
  %6128 = vmatpush1.bf16.msra.mxu0 %v5195
  %6129 = vmatprep.subr.bf16.mxu0 %v5200
  %6130 = vmatpush1.bf16.msra.mxu0 %v5199
  %6131 = vmatprep.subr.bf16.mxu0 %v5204
  %6132 = vmatpush1.bf16.msra.mxu0 %v5203
  %6133 = vmatprep.mubr.bf16.mxu0 %v5786
  %6134 = vmatmul.mubr.bf16.gmra.mrb[0].mxu0 %v6059
  %v6135 = vpop.f32.mrb[0].mxu0
  %v6136 = vadd.f32 %v5220, %v6135
  %v6137 = vpop.f32.mrb[0].mxu0
  %v6138 = vadd.f32 %v5224, %v6137
  %v6139 = vpop.f32.mrb[0].mxu0
  %v6140 = vpop.f32.mrb[0].mxu0
  %6141 = vdwg.mxu0
  %v6142 = vxor.u32 %v6095, 2147483648
  %v6143 = vmul.f32 %v6142, 1.442695
  %v6144 = vpow.pop %v6143
  %v6145 = vadd.f32 %v6144, 1.0
  %v6146 = vrcp.pop %v6145
  %v6147 = vmul.f32 1.0, %v6146
  %v6148 = vxor.u32 %v6097, 2147483648
  %v6149 = vmul.f32 %v6148, 1.442695
  %v6150 = vpow.pop %v6149
  %v6151 = vadd.f32 %v6150, 1.0
  %v6152 = vrcp.pop %v6151
  %v6153 = vmul.f32 1.0, %v6152
  %v6154 = vtanh.pop %v6136
  %v6155 = vxor.u32 %v6138, 2147483648
  %v6156 = vmul.f32 %v6155, 1.442695
  %v6157 = vpow.pop %v6156
  %v6158 = vadd.f32 %v6157, 1.0
  %v6159 = vrcp.pop %v6158
  %v6160 = vmul.f32 1.0, %v6159
  %v6161 = vmul.f32 %v6153, %v5783
  %v6162 = vmul.f32 %v6147, %v6154
  %v6163 = vadd.f32 %v6161, %v6162
  %v6164 = vtanh.pop %v6163
  %v6165 = vmul.f32 %v6160, %v6164
  %v6166 = vpack.c.bf16 %v6165, %v6165
  %6167 = vmatprep.subr.bf16.mxu0 %v5336
  %6168 = vmatpush1.bf16.msra.mxu0 %v5335
  %6169 = vmatprep.subr.bf16.mxu0 %v5338
  %6170 = vmatpush1.bf16.msra.mxu0 %v5337
  %6171 = vmatprep.subr.bf16.mxu0 %v5340
  %6172 = vmatpush1.bf16.msra.mxu0 %v5339
  %6173 = vmatprep.subr.bf16.mxu0 %v5342
  %6174 = vmatpush1.bf16.msra.mxu0 %v5341
  %6175 = vmatprep.subr.bf16.mxu0 %v5344
  %6176 = vmatpush1.bf16.msra.mxu0 %v5343
  %6177 = vmatprep.subr.bf16.mxu0 %v5346
  %6178 = vmatpush1.bf16.msra.mxu0 %v5345
  %6179 = vmatprep.subr.bf16.mxu0 %v5348
  %6180 = vmatpush1.bf16.msra.mxu0 %v5347
  %6181 = vmatprep.subr.bf16.mxu0 %v5350
  %6182 = vmatpush1.bf16.msra.mxu0 %v5349
  %6183 = vmatprep.subr.bf16.mxu0 0
  %6184 = vmatpush1.bf16.msra.mxu0 0
  %6185 = vmatprep.subr.bf16.mxu0 0
  %6186 = vmatpush1.bf16.msra.mxu0 0
  %6187 = vmatprep.subr.bf16.mxu0 0
  %6188 = vmatpush1.bf16.msra.mxu0 0
  %6189 = vmatprep.subr.bf16.mxu0 0
  %6190 = vmatpush1.bf16.msra.mxu0 0
  %6191 = vmatprep.subr.bf16.mxu0 0
  %6192 = vmatpush1.bf16.msra.mxu0 0
  %6193 = vmatprep.subr.bf16.mxu0 0
  %6194 = vmatpush1.bf16.msra.mxu0 0
  %6195 = vmatprep.subr.bf16.mxu0 0
  %6196 = vmatpush1.bf16.msra.mxu0 0
  %6197 = vmatprep.subr.bf16.mxu0 0
  %6198 = vmatpush1.bf16.msra.mxu0 0
  %6199 = vmatprep.mubr.bf16.mxu0 0
  %6200 = vmatmul.mubr.bf16.gmra.mrb[0].mxu0 %v6166
  %v6201 = vpop.f32.mrb[0].mxu0
  %v6202 = vadd.f32 0.0, %v6201
  %v6203 = vpop.f32.mrb[0].mxu0
  %v6204 = vpop.f32.mrb[0].mxu0
  %v6205 = vpop.f32.mrb[0].mxu0
  %6206 = vdwg.mxu0
  %v6207 = vadd.f32 %v6202, %v5393
  %v6208 = vadd.f32 %v6165, %v6207
  %v6209 = vmul.f32 %v6208, %v6208
  %v6210 = vsel %vm2240, %v6208, 0.0
  %6211 = vadd.xlane.f32.xlu0 %v6210
  %v6212 = vpop.xlane.xlu0 %6211
  %v6213 = vsel %vm2240, %v6209, 0.0
  %6214 = vadd.xlane.f32.xlu0 %v6213
  %v6215 = vpop.xlane.xlu0 %6214
  %v6216 = vmul.f32 %v6212, 0.0078125
  %v6217 = vmul.f32 %v6215, 0.0078125
  %v6218 = vmul.f32 %v6216, %v6216
  %v6219 = vsub.f32 %v6217, %v6218
  %v6220 = vmax.f32 %v6219, 0.0
  %v6221 = vsub.f32 %v6208, %v6216
  %v6222 = vadd.f32 %v6220, 1e-05
  %v6223 = vrsqrt.pop %v6222
  %v6224 = vmul.f32 %v6221, %v6223
  %v6225 = vmul.f32 %v6224, %v5398
  %v6226 = vadd.f32 %v6225, %v5399
  %v6227 = vadd.f32 %v6226, %v5080
  %v6228 = vmul.f32 %v6227, %v6227
  %v6229 = vsel %vm2240, %v6227, 0.0
  %6230 = vadd.xlane.f32.xlu0 %v6229
  %v6231 = vpop.xlane.xlu0 %6230
  %v6232 = vsel %vm2240, %v6228, 0.0
  %6233 = vadd.xlane.f32.xlu0 %v6232
  %v6234 = vpop.xlane.xlu0 %6233
  %v6235 = vmul.f32 %v6231, 0.0078125
  %v6236 = vmul.f32 %v6234, 0.0078125
  %v6237 = vmul.f32 %v6235, %v6235
  %v6238 = vsub.f32 %v6236, %v6237
  %v6239 = vmax.f32 %v6238, 0.0
  %v6240 = vsub.f32 %v6227, %v6235
  %v6241 = vadd.f32 %v6239, 1e-05
  %v6242 = vrsqrt.pop %v6241
  %v6243 = vmul.f32 %v6240, %v6242
  %v6244 = vmul.f32 %v6243, %v5419
  %v6245 = vadd.f32 %v6244, %v5420
  %v6246 = vpack.c.bf16 %v6245, %v6245
  %6247 = vmatprep.subr.bf16.mxu0 %v5440
  %6248 = vmatpush1.bf16.msra.mxu0 %v5439
  %6249 = vmatprep.subr.bf16.mxu0 %v5442
  %6250 = vmatpush1.bf16.msra.mxu0 %v5441
  %6251 = vmatprep.subr.bf16.mxu0 %v5444
  %6252 = vmatpush1.bf16.msra.mxu0 %v5443
  %6253 = vmatprep.subr.bf16.mxu0 %v5446
  %6254 = vmatpush1.bf16.msra.mxu0 %v5445
  %6255 = vmatprep.subr.bf16.mxu0 %v5448
  %6256 = vmatpush1.bf16.msra.mxu0 %v5447
  %6257 = vmatprep.subr.bf16.mxu0 %v5450
  %6258 = vmatpush1.bf16.msra.mxu0 %v5449
  %6259 = vmatprep.subr.bf16.mxu0 %v5452
  %6260 = vmatpush1.bf16.msra.mxu0 %v5451
  %6261 = vmatprep.subr.bf16.mxu0 %v5454
  %6262 = vmatpush1.bf16.msra.mxu0 %v5453
  %6263 = vmatprep.subr.bf16.mxu0 0
  %6264 = vmatpush1.bf16.msra.mxu0 0
  %6265 = vmatprep.subr.bf16.mxu0 0
  %6266 = vmatpush1.bf16.msra.mxu0 0
  %6267 = vmatprep.subr.bf16.mxu0 0
  %6268 = vmatpush1.bf16.msra.mxu0 0
  %6269 = vmatprep.subr.bf16.mxu0 0
  %6270 = vmatpush1.bf16.msra.mxu0 0
  %6271 = vmatprep.subr.bf16.mxu0 0
  %6272 = vmatpush1.bf16.msra.mxu0 0
  %6273 = vmatprep.subr.bf16.mxu0 0
  %6274 = vmatpush1.bf16.msra.mxu0 0
  %6275 = vmatprep.subr.bf16.mxu0 0
  %6276 = vmatpush1.bf16.msra.mxu0 0
  %6277 = vmatprep.subr.bf16.mxu0 0
  %6278 = vmatpush1.bf16.msra.mxu0 0
  %6279 = vmatprep.mubr.bf16.mxu0 0
  %6280 = vmatmul.mubr.bf16.gmra.mrb[0].mxu0 %v6246
  %v6281 = vpop.f32.mrb[0].mxu0
  %v6282 = vadd.f32 %v5462, %v6281
  %v6283 = vpop.f32.mrb[0].mxu0
  %v6284 = vadd.f32 %v5466, %v6283
  %v6285 = vpop.f32.mrb[0].mxu0
  %v6286 = vpop.f32.mrb[0].mxu0
  %6287 = vdwg.mxu0
  %v6288 = vmax.f32 %v6282, 0.0
  %v6289 = vmax.f32 %v6284, 0.0
  %v6290 = vpack.c.bf16 %v6288, %v6288
  %v6291 = vpack.c.bf16 %v6289, %v6289
  %6292 = vmatprep.subr.bf16.mxu0 0
  %6293 = vmatpush1.bf16.msra.mxu0 %v5512
  %6294 = vmatprep.subr.bf16.mxu0 0
  %6295 = vmatpush1.bf16.msra.mxu0 %v5513
  %6296 = vmatprep.subr.bf16.mxu0 0
  %6297 = vmatpush1.bf16.msra.mxu0 %v5514
  %6298 = vmatprep.subr.bf16.mxu0 0
  %6299 = vmatpush1.bf16.msra.mxu0 %v5515
  %6300 = vmatprep.subr.bf16.mxu0 0
  %6301 = vmatpush1.bf16.msra.mxu0 %v5516
  %6302 = vmatprep.subr.bf16.mxu0 0
  %6303 = vmatpush1.bf16.msra.mxu0 %v5517
  %6304 = vmatprep.subr.bf16.mxu0 0
  %6305 = vmatpush1.bf16.msra.mxu0 %v5518
  %6306 = vmatprep.subr.bf16.mxu0 0
  %6307 = vmatpush1.bf16.msra.mxu0 %v5519
  %6308 = vmatprep.subr.bf16.mxu0 0
  %6309 = vmatpush1.bf16.msra.mxu0 %v5520
  %6310 = vmatprep.subr.bf16.mxu0 0
  %6311 = vmatpush1.bf16.msra.mxu0 %v5521
  %6312 = vmatprep.subr.bf16.mxu0 0
  %6313 = vmatpush1.bf16.msra.mxu0 %v5522
  %6314 = vmatprep.subr.bf16.mxu0 0
  %6315 = vmatpush1.bf16.msra.mxu0 %v5523
  %6316 = vmatprep.subr.bf16.mxu0 0
  %6317 = vmatpush1.bf16.msra.mxu0 %v5524
  %6318 = vmatprep.subr.bf16.mxu0 0
  %6319 = vmatpush1.bf16.msra.mxu0 %v5525
  %6320 = vmatprep.subr.bf16.mxu0 0
  %6321 = vmatpush1.bf16.msra.mxu0 %v5526
  %6322 = vmatprep.subr.bf16.mxu0 0
  %6323 = vmatpush1.bf16.msra.mxu0 %v5527
  %6324 = vmatprep.mubr.bf16.mxu0 %v6291
  %6325 = vmatmul.mubr.bf16.gmra.mrb[0].mxu0 %v6290
  %v6326 = vpop.f32.mrb[0].mxu0
  %v6327 = vadd.f32 %v5530, %v6326
  %v6328 = vpop.f32.mrb[0].mxu0
  %v6329 = vpop.f32.mrb[0].mxu0
  %v6330 = vpop.f32.mrb[0].mxu0
  %6331 = vdwg.mxu0
  %v6332 = vadd.f32 %v6245, %v6327
  %v6333 = vmul.f32 %v6332, %v6332
  %v6334 = vsel %vm2240, %v6332, 0.0
  %6335 = vadd.xlane.f32.xlu0 %v6334
  %v6336 = vpop.xlane.xlu0 %6335
  %v6337 = vsel %vm2240, %v6333, 0.0
  %6338 = vadd.xlane.f32.xlu0 %v6337
  %v6339 = vpop.xlane.xlu0 %6338
  %v6340 = vmul.f32 %v6336, 0.0078125
  %v6341 = vmul.f32 %v6339, 0.0078125
  %v6342 = vmul.f32 %v6340, %v6340
  %v6343 = vsub.f32 %v6341, %v6342
  %v6344 = vmax.f32 %v6343, 0.0
  %v6345 = vsub.f32 %v6332, %v6340
  %v6346 = vadd.f32 %v6344, 1e-05
  %v6347 = vrsqrt.pop %v6346
  %v6348 = vmul.f32 %v6345, %v6347
  %v6349 = vmul.f32 %v6348, %v5572
  %v6350 = vadd.f32 %v6349, %v5573
  %v6351 = vmul.f32 %v6350, %v6350
  %v6352 = vsel %vm2240, %v6350, 0.0
  %6353 = vadd.xlane.f32.xlu0 %v6352
  %v6354 = vpop.xlane.xlu0 %6353
  %v6355 = vsel %vm2240, %v6351, 0.0
  %6356 = vadd.xlane.f32.xlu0 %v6355
  %v6357 = vpop.xlane.xlu0 %6356
  %v6358 = vmul.f32 %v6354, 0.0078125
  %v6359 = vmul.f32 %v6357, 0.0078125
  %v6360 = vmul.f32 %v6358, %v6358
  %v6361 = vsub.f32 %v6359, %v6360
  %v6362 = vmax.f32 %v6361, 0.0
  %v6363 = vsub.f32 %v6350, %v6358
  %v6364 = vadd.f32 %v6362, 1e-05
  %v6365 = vrsqrt.pop %v6364
  %v6366 = vmul.f32 %v6363, %v6365
  %v6367 = vmul.f32 %v6366, %v5592
  %v6368 = vadd.f32 %v6367, %v5593
  %v6370 = vrot.slane %v5611, 6
  %v6373 = vrot.slane %v5991, 4
  %v6376 = vrot.slane %v6368, 2
  %v6378 = vsel %vm2240, %v5139, %v6370
  %vm6379 = vcmask 1043456
  %v6380 = vsel %vm6379, %v6378, %v6373
  %vm6381 = vcmask 1045504
  %v6382 = vsel %vm6381, %v6380, %v6376
  %v6383 = vpack.c.bf16 %v6382, %v6382
  %6384 = vmatprep.subr.bf16.mxu0 0
  %6385 = vmatpush1.bf16.msra.mxu0 %v5336
  %6386 = vmatprep.subr.bf16.mxu0 0
  %6387 = vmatpush1.bf16.msra.mxu0 %v5338
  %6388 = vmatprep.subr.bf16.mxu0 0
  %6389 = vmatpush1.bf16.msra.mxu0 %v5340
  %6390 = vmatprep.subr.bf16.mxu0 0
  %6391 = vmatpush1.bf16.msra.mxu0 %v5342
  %6392 = vmatprep.subr.bf16.mxu0 0
  %6393 = vmatpush1.bf16.msra.mxu0 %v5344
  %6394 = vmatprep.subr.bf16.mxu0 0
  %6395 = vmatpush1.bf16.msra.mxu0 %v5346
  %6396 = vmatprep.subr.bf16.mxu0 0
  %6397 = vmatpush1.bf16.msra.mxu0 %v5348
  %6398 = vmatprep.subr.bf16.mxu0 0
  %6399 = vmatpush1.bf16.msra.mxu0 %v5350
  %6400 = vmatprep.subr.bf16.mxu0 0
  %6401 = vmatpush1.bf16.msra.mxu0 0
  %6402 = vmatprep.subr.bf16.mxu0 0
  %6403 = vmatpush1.bf16.msra.mxu0 0
  %6404 = vmatprep.subr.bf16.mxu0 0
  %6405 = vmatpush1.bf16.msra.mxu0 0
  %6406 = vmatprep.subr.bf16.mxu0 0
  %6407 = vmatpush1.bf16.msra.mxu0 0
  %6408 = vmatprep.subr.bf16.mxu0 0
  %6409 = vmatpush1.bf16.msra.mxu0 0
  %6410 = vmatprep.subr.bf16.mxu0 0
  %6411 = vmatpush1.bf16.msra.mxu0 0
  %6412 = vmatprep.subr.bf16.mxu0 0
  %6413 = vmatpush1.bf16.msra.mxu0 0
  %6414 = vmatprep.subr.bf16.mxu0 0
  %6415 = vmatpush1.bf16.msra.mxu0 0
  %6416 = vmatprep.mubr.bf16.mxu0 0
  %6417 = vmatmul.mubr.bf16.gmra.mrb[0].mxu0 %v6383
  %v6418 = vpop.f32.mrb[0].mxu0
  %v6419 = vadd.f32 %v5140, %v6418
  %v6420 = vpop.f32.mrb[0].mxu0
  %v6421 = vpop.f32.mrb[0].mxu0
  %v6422 = vpop.f32.mrb[0].mxu0
  %6423 = vdwg.mxu0
  %6424 = vst [vmem:[%s15] sm:$0xff] %v6419
  // Predicated region
  $region281: #{model_forward.1} parent=0 // pred_check
    _
  $region282: #{model_forward.1} parent=0 // pred_check_branch
    %6426 = sbr.rel (0) target = $region284
  $region283: #{model_forward.1} parent=0 // pred_region
    _
  $region284: #{model_forward.1} parent=0 // pred_fallthru
    _
  // Predicated region
  $region285: #{model_forward.1} parent=0 // pred_check
    _
  $region286: #{model_forward.1} parent=0 // pred_check_branch
    %6428 = sbr.rel (0) target = $region288
  $region287: #{model_forward.1} parent=0 // pred_region
    _
  $region288: #{model_forward.1} parent=0 // pred_fallthru
    _
  %6429 = vsyncmov [#allocation9]
  %s6430 = vpop.sfrf %6429
  %p6431 = scmp.eq.s32.totalorder %s6430, 0
  %p6432 = pneg %p6431
  %6434 = shalt.err (%p6432)
  %s6435 = scalar_lea.sflag [#allocation9], 1
  %6436 = vsyncmov %s6435
  %s6437 = vpop.sfrf %6436
  %p6438 = scmp.eq.s32.totalorder %s6437, 0
  %p6439 = pneg %p6438
  %6441 = shalt.err (%p6439)
  %s6442 = scalar_lea.sflag [#allocation9], 2
  %6443 = vsyncmov %s6442
  %s6444 = vpop.sfrf %6443
  %p6445 = scmp.eq.s32.totalorder %s6444, 0
  %p6446 = pneg %p6445
  %6448 = shalt.err (%p6446)
  %s6449 = scalar_lea.sflag [#allocation9], 3
  %6450 = vsyncmov %s6449
  %s6451 = vpop.sfrf %6450
  %p6452 = scmp.eq.s32.totalorder %s6451, 0
  %p6453 = pneg %p6452
  %6455 = shalt.err (%p6453)
  %s6456 = scalar_lea.sflag [#allocation9], 4
  %6457 = vsyncmov %s6456
  %s6458 = vpop.sfrf %6457
  %p6459 = scmp.eq.s32.totalorder %s6458, 0
  %p6460 = pneg %p6459
  %6462 = shalt.err (%p6460)
  %s6463 = scalar_lea.sflag [#allocation9], 5
  %6464 = vsyncmov %s6463
  %s6465 = vpop.sfrf %6464
  %p6466 = scmp.eq.s32.totalorder %s6465, 0
  %p6467 = pneg %p6466
  %6469 = shalt.err (%p6467)
  %s6470 = scalar_lea.sflag [#allocation9], 6
  %6471 = vsyncmov %s6470
  %s6472 = vpop.sfrf %6471
  %p6473 = scmp.eq.s32.totalorder %s6472, 0
  %p6474 = pneg %p6473
  %6476 = shalt.err (%p6474)

</llo_original>
